<compile_context>
chip_gen: v5e
topology: v5e:2x2
jax: 0.10.0
libtpu: 0.0.40
codegen_flags: <defaults>
</compile_context>

<pallas_src>
import math
import functools

import jax
import jax.numpy as jnp
from jax import lax
from jax.experimental import pallas as pl
from jax.experimental.pallas import tpu as pltpu


# ---------------------------------------------------------------------------
# Pallas kernel: full ConvLSTM time recurrence for one layer.
# grid = (batch_tiles, T); the T axis is "arbitrary" (sequential recurrence).
# ---------------------------------------------------------------------------
def _convlstm_layer_kernel(gx_ref, w_ref, hseq_ref, c_ref, h_scr,
                           *, H, W, chid, kh, kw, ph, pw, matmul_dtype):
    # gx_ref:   (M, n_pad) f32        precomputed conv_x(x_t) + bias (lane-dense)
    # w_ref:    (kh*kw, chid, n_pad)  hidden->gates weight per tap (resident)
    # hseq_ref: (M, chid)             h_t output for step t (interior only)
    # c_ref:    (M, chid) f32         resident cell state (constant block index)
    # h_scr:    (Bt, Hp, Wp, chid) f32 persistent zero-padded hidden state
    t = pl.program_id(1)

    @pl.when(t == 0)
    def _():
        # Zero halo + initial hidden/cell state once per batch tile.
        h_scr[...] = jnp.zeros_like(h_scr)
        c_ref[...] = jnp.zeros_like(c_ref)

    Bt = h_scr.shape[0]
    M = Bt * H * W

    # Preactivations = hoisted x projection (+bias) + kh*kw hidden taps,
    # accumulated directly from shifted views of the padded h state on the MXU
    # (no im2col staging buffer -> no masked narrow stores).
    acc = gx_ref[...].astype(jnp.float32)                      # (M, n_pad)
    for dy in range(kh):
        for dx in range(kw):
            hs = h_scr[:, dy:dy + H, dx:dx + W, :]             # (Bt, H, W, chid)
            hs = hs.reshape(M, chid).astype(matmul_dtype)
            acc = acc + jnp.dot(hs, w_ref[dy * kw + dx],
                                preferred_element_type=jnp.float32)

    # Gate nonlinearities only on their own columns (halved EUP work).
    ifo = jax.nn.sigmoid(acc[:, :3 * chid])
    g = jnp.tanh(acc[:, 3 * chid:4 * chid])
    i = ifo[:, 0 * chid:1 * chid]
    f = ifo[:, 1 * chid:2 * chid]
    o = ifo[:, 2 * chid:3 * chid]

    c_prev = c_ref[...]                                        # (M, chid) f32
    c_next = f * c_prev + i * g
    h_next = o * jnp.tanh(c_next)

    c_ref[...] = c_next
    # Recurrent state: write only the interior; the halo stays zero.
    h_scr[:, ph:ph + H, pw:pw + W, :] = h_next.reshape(Bt, H, W, chid)
    # Layer output: unpadded interior straight from h_next.
    hseq_ref[...] = h_next.astype(hseq_ref.dtype)


# ---------------------------------------------------------------------------
# One ConvLSTM layer: hoisted x-projection + one pallas_call for the recurrence.
# ---------------------------------------------------------------------------
def convlstm_layer(x_seq, w, b, *, hidden_dim, kernel_size,
                   matmul_dtype=jnp.bfloat16, out_dtype=None, batch_tiles=1):
    """x_seq: (T, B, H, W, Cin) NHWC sequence.
    w: (kh, kw, Cin + hidden_dim, 4*hidden_dim), b: (4*hidden_dim,)
    Returns (h_seq, c_last): (T, B, H, W, hidden) and (B, H, W, hidden) f32."""
    T, B, H, W, cin = x_seq.shape
    kh, kw = kernel_size
    assert kh % 2 == 1 and kw % 2 == 1, "same-padding ConvLSTM assumes odd kernels"
    ph, pw = kh // 2, kw // 2
    Hp, Wp = H + 2 * ph, W + 2 * pw
    chid = hidden_dim
    n_gates = 4 * chid
    n_pad = -(-n_gates // 128) * 128           # lane-dense / MXU-friendly N
    out_dtype = x_seq.dtype if out_dtype is None else out_dtype

    assert B % batch_tiles == 0
    Bt = B // batch_tiles
    M = Bt * H * W

    # ---- hoisted input->hidden projection: ONE conv over the whole sequence.
    w_x = w[:, :, :cin, :]
    gx = lax.conv_general_dilated(
        x_seq.reshape(T * B, H, W, cin).astype(jnp.float32),
        w_x.astype(jnp.float32),
        window_strides=(1, 1), padding=[(ph, ph), (pw, pw)],
        dimension_numbers=("NHWC", "HWIO", "NHWC"),
        precision=lax.Precision.HIGHEST,
        preferred_element_type=jnp.float32)
    gx = gx + b.astype(jnp.float32)            # bias folded in once
    if n_pad > n_gates:
        gx = jnp.pad(gx, ((0, 0), (0, 0), (0, 0), (0, n_pad - n_gates)))
    gx = gx.reshape(T, B * H * W, n_pad)

    # hidden->gates weights: one (chid, n_pad) matrix per tap, MXU dtype.
    w_h = w[:, :, cin:, :].reshape(kh * kw, chid, n_gates)
    if n_pad > n_gates:
        w_h = jnp.pad(w_h, ((0, 0), (0, 0), (0, n_pad - n_gates)))
    w_h = w_h.astype(matmul_dtype)

    kernel = functools.partial(
        _convlstm_layer_kernel, H=H, W=W, chid=chid, kh=kh, kw=kw,
        ph=ph, pw=pw, matmul_dtype=matmul_dtype)

    # Explicit VMEM budget (v7x scoped default: 32 MiB of 64 MiB physical).
    isz = lambda dt: jnp.dtype(dt).itemsize
    block_bytes = (2 * M * n_pad * 4                        # gates_x (dbl-buffered)
                   + 2 * M * chid * isz(out_dtype)          # hseq out (dbl-buffered)
                   + M * chid * 4                           # resident cell state
                   + kh * kw * chid * n_pad * isz(matmul_dtype)   # resident weights
                   + Bt * Hp * Wp * chid * 4)               # padded h scratch
    vmem_limit = int(min(max(32 << 20, 4 * block_bytes), 64 << 20))

    h_seq, c_last = pl.pallas_call(
        kernel,
        out_shape=(jax.ShapeDtypeStruct((T, B * H * W, chid), out_dtype),
                   jax.ShapeDtypeStruct((B * H * W, chid), jnp.float32)),
        grid=(batch_tiles, T),                 # time axis last (innermost)
        in_specs=[
            pl.BlockSpec((None, M, n_pad), lambda bi, ti: (ti, bi, 0)),
            pl.BlockSpec((kh * kw, chid, n_pad), lambda bi, ti: (0, 0, 0)),
        ],
        out_specs=(
            pl.BlockSpec((None, M, chid), lambda bi, ti: (ti, bi, 0)),
            pl.BlockSpec((M, chid), lambda bi, ti: (bi, 0)),   # resident c
        ),
        scratch_shapes=[pltpu.VMEM((Bt, Hp, Wp, chid), jnp.float32)],
        compiler_params=pltpu.CompilerParams(
            dimension_semantics=("parallel", "arbitrary"),
            vmem_limit_bytes=vmem_limit),
    )(gx, w_h)

    return (h_seq.reshape(T, B, H, W, chid),
            c_last.reshape(B, H, W, chid))


# ---------------------------------------------------------------------------
# Full ConvLSTM forward (matches the PyTorch module, return_all_layers=False)
# ---------------------------------------------------------------------------
def convlstm_forward(x, params, hidden_dims, kernel_sizes, w_fc, b_fc,
                     batch_first=False, matmul_dtype=jnp.bfloat16,
                     act_dtype=None, batch_tiles=None):
    """x: (T, B, C, H, W) if not batch_first else (B, T, C, H, W), NCHW frames.
    params[l] = (w_l, b_l) with w_l (kh, kw, Cin_l + Chid_l, 4*Chid_l).
    Returns (1, B, W) -- the torch module's `out` (fc over channels of the last
    layer's CELL state at spatial row 0).  matmul_dtype=jnp.float32 gives
    near-parity with f32 PyTorch; bfloat16 (default) is the MXU fast path."""
    if not batch_first:
        x = jnp.transpose(x, (1, 0, 2, 3, 4))      # -> (B, T, C, H, W)
    B, T, C, H, W = x.shape
    seq = jnp.transpose(x, (1, 0, 3, 4, 2))        # -> (T, B, H, W, C) NHWC

    if batch_tiles is None:
        # Even split lets the "parallel" axis run on both v7x TensorCores;
        # harmless on single-TC v5e/v6e.
        batch_tiles = 2 if B % 2 == 0 else 1

    cur = seq
    last_c = None
    for (chid, ks), (w, b) in zip(zip(hidden_dims, kernel_sizes), params):
        cur, last_c = convlstm_layer(
            cur, w, b, hidden_dim=chid, kernel_size=ks,
            matmul_dtype=matmul_dtype, out_dtype=act_dtype,
            batch_tiles=batch_tiles)

    # Head (matches torch exactly): fc over channels of c_last, spatial row 0,
    # reshaped to (1, B, W).  Tiny (B*W*16 MACs) -> plain-JAX glue.
    out = jnp.einsum('bwc,c->bw', last_c[:, 0, :, :],
                     w_fc[0].astype(jnp.float32)) + b_fc[0].astype(jnp.float32)
    return out[None, :, :].astype(x.dtype)


# ---------------------------------------------------------------------------
# Pure-JAX reference (direct transcription of the torch module) for testing.
# ---------------------------------------------------------------------------
def convlstm_forward_ref(x, params, hidden_dims, kernel_sizes, w_fc, b_fc,
                         batch_first=False):
    if not batch_first:
        x = jnp.transpose(x, (1, 0, 2, 3, 4))
    B, T, C, H, W = x.shape
    cur = jnp.transpose(x, (1, 0, 3, 4, 2)).astype(jnp.float32)   # (T,B,H,W,C)
    c = None
    for (chid, (kh, kw)), (w, b) in zip(zip(hidden_dims, kernel_sizes), params):
        ph, pw = kh // 2, kw // 2
        h = jnp.zeros((B, H, W, chid), jnp.float32)
        c = jnp.zeros((B, H, W, chid), jnp.float32)
        outs = []
        for t in range(cur.shape[0]):
            comb = jnp.concatenate([cur[t], h], axis=-1)
            conv = lax.conv_general_dilated(
                comb, w.astype(jnp.float32), (1, 1), [(ph, ph), (pw, pw)],
                dimension_numbers=("NHWC", "HWIO", "NHWC"),
                precision=lax.Precision.HIGHEST) + b
            i = jax.nn.sigmoid(conv[..., 0 * chid:1 * chid])
            f = jax.nn.sigmoid(conv[..., 1 * chid:2 * chid])
            o = jax.nn.sigmoid(conv[..., 2 * chid:3 * chid])
            g = jnp.tanh(conv[..., 3 * chid:4 * chid])
            c = f * c + i * g
            h = o * jnp.tanh(c)
            outs.append(h)
        cur = jnp.stack(outs, axis=0)
    out = jnp.einsum('bwc,c->bw', c[:, 0, :, :], w_fc[0]) + b_fc[0]
    return out[None, :, :]


# ---------------------------------------------------------------------------
# Demo / smoke test
# ---------------------------------------------------------------------------
if __name__ == "__main__":
    # Module config (last hidden dim must be 16: fc = nn.Linear(16, 1)).
    B, T, Cin, H, W = 2, 8, 4, 16, 16
    hidden_dims = [32, 16]
    kernel_sizes = [(3, 3), (3, 3)]

    key = jax.random.PRNGKey(0)
    k_x, k_fcw, k_fcb, *k_layers = jax.random.split(key, 3 + 2 * len(hidden_dims))

    # Deterministic parameter init (PyTorch-Conv2d-style uniform bounds).
    params = []
    cur_in = Cin
    for li, chid in enumerate(hidden_dims):
        kh, kw = kernel_sizes[li]
        fan_in = (cur_in + chid) * kh * kw
        bound = 1.0 / math.sqrt(fan_in)
        w = jax.random.uniform(k_layers[2 * li],
                               (kh, kw, cur_in + chid, 4 * chid),
                               jnp.float32, -bound, bound)
        b = jax.random.uniform(k_layers[2 * li + 1], (4 * chid,),
                               jnp.float32, -bound, bound)
        params.append((w, b))
        cur_in = chid

    fc_bound = 1.0 / math.sqrt(hidden_dims[-1])
    w_fc = jax.random.uniform(k_fcw, (1, hidden_dims[-1]), jnp.float32,
                              -fc_bound, fc_bound)
    b_fc = jax.random.uniform(k_fcb, (1,), jnp.float32, -fc_bound, fc_bound)

    # Input in the module's default layout: (T, B, C, H, W), batch_first=False.
    x = jax.random.normal(k_x, (T, B, Cin, H, W), jnp.float32)

    # --- f32 MXU path, checked against the pure-JAX reference ----------------
    fwd_f32 = jax.jit(functools.partial(
        convlstm_forward, hidden_dims=hidden_dims, kernel_sizes=kernel_sizes,
        batch_first=False, matmul_dtype=jnp.float32))
    out_f32 = jax.block_until_ready(fwd_f32(x, params, w_fc=w_fc, b_fc=b_fc))

    ref_fn = jax.jit(functools.partial(
        convlstm_forward_ref, hidden_dims=hidden_dims, kernel_sizes=kernel_sizes,
        batch_first=False))
    out_ref = jax.block_until_ready(ref_fn(x, params, w_fc=w_fc, b_fc=b_fc))

    assert out_f32.shape == (1, B, W), out_f32.shape
    err = float(jnp.max(jnp.abs(out_f32.astype(jnp.float32) - out_ref)))
    assert err < 3e-2, f"mismatch vs reference: max abs err = {err}"

    # --- bf16 MXU fast path (default perf config) ----------------------------
    fwd_bf16 = jax.jit(functools.partial(
        convlstm_forward, hidden_dims=hidden_dims, kernel_sizes=kernel_sizes,
        batch_first=False, matmul_dtype=jnp.bfloat16))
    out_bf16 = jax.block_until_ready(fwd_bf16(x, params, w_fc=w_fc, b_fc=b_fc))
    assert out_bf16.shape == (1, B, W), out_bf16.shape
    assert bool(jnp.all(jnp.isfinite(out_bf16.astype(jnp.float32))))

    print("KERNEL_OK")
</pallas_src>

<mosaic_0001>
module attributes {stable_mosaic.version = 11 : i64} {
  func.func @_convlstm_layer_kernel(%arg0: i32, %arg1: i32, %arg2: memref<1x256x128xf32, #tpu.memory_space<vmem>>, %arg3: memref<9x32x128xf32, #tpu.memory_space<vmem>>, %arg4: memref<1x256x32xf32, #tpu.memory_space<vmem>>, %arg5: memref<256x32xf32, #tpu.memory_space<vmem>>, %arg6: memref<1x18x18x32xf32, #tpu.memory_space<vmem>>) attributes {dimension_semantics = [#tpu.dimension_semantics<parallel>, #tpu.dimension_semantics<arbitrary>], iteration_bounds = array<i64: 2, 8>, scalar_prefetch = 0 : i64, scratch_operands = 1 : i64, tpu.core_type = #tpu.core_type<tc>, window_params = [{transform_indices = @transform_0, window_bounds = array<i64: 1, 256, 128>}, {pipeline_mode = #tpu.pipeline_mode<synchronous>, transform_indices = @transform_1, window_bounds = array<i64: 9, 32, 128>}, {transform_indices = @transform_2, window_bounds = array<i64: 1, 256, 32>}, {transform_indices = @transform_3, window_bounds = array<i64: 256, 32>}]} {
    %c0_i32 = arith.constant 0 : i32
    %0 = arith.cmpi eq, %arg1, %c0_i32 : i32
    %1 = arith.extui %0 : i1 to i32
    %c0_i32_0 = arith.constant 0 : i32
    %2 = arith.cmpi ne, %1, %c0_i32_0 : i32
    scf.if %2 {
      %cst_78 = arith.constant 0.000000e+00 : f32
      %82 = vector.broadcast %cst_78 : f32 to vector<1x18x18x32xf32>
      %c0_79 = arith.constant 0 : index
      %c0_80 = arith.constant 0 : index
      %c0_81 = arith.constant 0 : index
      %c0_82 = arith.constant 0 : index
      %83 = vector.load %arg6[%c0_79, %c0_80, %c0_81, %c0_82] : memref<1x18x18x32xf32, #tpu.memory_space<vmem>>, vector<1x18x18x32xf32>
      tpu.vector_store %arg6[%c0_79, %c0_80, %c0_81, %c0_82], %82 {strides = array<i32>} : memref<1x18x18x32xf32, #tpu.memory_space<vmem>>, vector<1x18x18x32xf32>,
      %cst_83 = arith.constant 0.000000e+00 : f32
      %84 = vector.broadcast %cst_83 : f32 to vector<256x32xf32>
      %c0_84 = arith.constant 0 : index
      %c0_85 = arith.constant 0 : index
      %85 = vector.load %arg5[%c0_84, %c0_85] : memref<256x32xf32, #tpu.memory_space<vmem>>, vector<256x32xf32>
      tpu.vector_store %arg5[%c0_84, %c0_85], %84 {strides = array<i32>} : memref<256x32xf32, #tpu.memory_space<vmem>>, vector<256x32xf32>,
    } else {
    }
    %c0 = arith.constant 0 : index
    %c0_1 = arith.constant 0 : index
    %c0_2 = arith.constant 0 : index
    %3 = vector.load %arg2[%c0, %c0_1, %c0_2] : memref<1x256x128xf32, #tpu.memory_space<vmem>>, vector<1x256x128xf32>
    %4 = vector.shape_cast %3 : vector<1x256x128xf32> to vector<256x128xf32>
    %c0_3 = arith.constant 0 : index
    %c0_4 = arith.constant 0 : index
    %c0_5 = arith.constant 0 : index
    %c0_6 = arith.constant 0 : index
    %5 = vector.load %arg6[%c0_3, %c0_4, %c0_5, %c0_6] : memref<1x18x18x32xf32, #tpu.memory_space<vmem>>, vector<1x16x16x32xf32>
    %6 = vector.shape_cast %5 : vector<1x16x16x32xf32> to vector<256x32xf32>
    %c0_7 = arith.constant 0 : index
    %c0_8 = arith.constant 0 : index
    %c0_9 = arith.constant 0 : index
    %7 = vector.load %arg3[%c0_7, %c0_8, %c0_9] : memref<9x32x128xf32, #tpu.memory_space<vmem>>, vector<1x32x128xf32>
    %8 = vector.shape_cast %7 : vector<1x32x128xf32> to vector<32x128xf32>
    %cst = arith.constant dense<0.000000e+00> : vector<256x128xf32>
    %9 = tpu.matmul %6, %8, %cst {dimension_numbers = #tpu.dot_dimension_numbers<[1], [0], [0], [1], [0, 0, 1, 1], [], []>} : vector<256x32xf32>, vector<32x128xf32>, vector<256x128xf32> -> vector<256x128xf32>
    %10 = arith.addf %4, %9 : vector<256x128xf32>
    %c0_10 = arith.constant 0 : index
    %c0_11 = arith.constant 0 : index
    %c1 = arith.constant 1 : index
    %c0_12 = arith.constant 0 : index
    %11 = vector.load %arg6[%c0_10, %c0_11, %c1, %c0_12] : memref<1x18x18x32xf32, #tpu.memory_space<vmem>>, vector<1x16x16x32xf32>
    %12 = vector.shape_cast %11 : vector<1x16x16x32xf32> to vector<256x32xf32>
    %c1_13 = arith.constant 1 : index
    %c0_14 = arith.constant 0 : index
    %c0_15 = arith.constant 0 : index
    %13 = vector.load %arg3[%c1_13, %c0_14, %c0_15] : memref<9x32x128xf32, #tpu.memory_space<vmem>>, vector<1x32x128xf32>
    %14 = vector.shape_cast %13 : vector<1x32x128xf32> to vector<32x128xf32>
    %cst_16 = arith.constant dense<0.000000e+00> : vector<256x128xf32>
    %15 = tpu.matmul %12, %14, %cst_16 {dimension_numbers = #tpu.dot_dimension_numbers<[1], [0], [0], [1], [0, 0, 1, 1], [], []>} : vector<256x32xf32>, vector<32x128xf32>, vector<256x128xf32> -> vector<256x128xf32>
    %16 = arith.addf %10, %15 : vector<256x128xf32>
    %c0_17 = arith.constant 0 : index
    %c0_18 = arith.constant 0 : index
    %c2 = arith.constant 2 : index
    %c0_19 = arith.constant 0 : index
    %17 = vector.load %arg6[%c0_17, %c0_18, %c2, %c0_19] : memref<1x18x18x32xf32, #tpu.memory_space<vmem>>, vector<1x16x16x32xf32>
    %18 = vector.shape_cast %17 : vector<1x16x16x32xf32> to vector<256x32xf32>
    %c2_20 = arith.constant 2 : index
    %c0_21 = arith.constant 0 : index
    %c0_22 = arith.constant 0 : index
    %19 = vector.load %arg3[%c2_20, %c0_21, %c0_22] : memref<9x32x128xf32, #tpu.memory_space<vmem>>, vector<1x32x128xf32>
    %20 = vector.shape_cast %19 : vector<1x32x128xf32> to vector<32x128xf32>
    %cst_23 = arith.constant dense<0.000000e+00> : vector<256x128xf32>
    %21 = tpu.matmul %18, %20, %cst_23 {dimension_numbers = #tpu.dot_dimension_numbers<[1], [0], [0], [1], [0, 0, 1, 1], [], []>} : vector<256x32xf32>, vector<32x128xf32>, vector<256x128xf32> -> vector<256x128xf32>
    %22 = arith.addf %16, %21 : vector<256x128xf32>
    %c0_24 = arith.constant 0 : index
    %c1_25 = arith.constant 1 : index
    %c0_26 = arith.constant 0 : index
    %c0_27 = arith.constant 0 : index
    %23 = vector.load %arg6[%c0_24, %c1_25, %c0_26, %c0_27] : memref<1x18x18x32xf32, #tpu.memory_space<vmem>>, vector<1x16x16x32xf32>
    %24 = vector.shape_cast %23 : vector<1x16x16x32xf32> to vector<256x32xf32>
    %c3 = arith.constant 3 : index
    %c0_28 = arith.constant 0 : index
    %c0_29 = arith.constant 0 : index
    %25 = vector.load %arg3[%c3, %c0_28, %c0_29] : memref<9x32x128xf32, #tpu.memory_space<vmem>>, vector<1x32x128xf32>
    %26 = vector.shape_cast %25 : vector<1x32x128xf32> to vector<32x128xf32>
    %cst_30 = arith.constant dense<0.000000e+00> : vector<256x128xf32>
    %27 = tpu.matmul %24, %26, %cst_30 {dimension_numbers = #tpu.dot_dimension_numbers<[1], [0], [0], [1], [0, 0, 1, 1], [], []>} : vector<256x32xf32>, vector<32x128xf32>, vector<256x128xf32> -> vector<256x128xf32>
    %28 = arith.addf %22, %27 : vector<256x128xf32>
    %c0_31 = arith.constant 0 : index
    %c1_32 = arith.constant 1 : index
    %c1_33 = arith.constant 1 : index
    %c0_34 = arith.constant 0 : index
    %29 = vector.load %arg6[%c0_31, %c1_32, %c1_33, %c0_34] : memref<1x18x18x32xf32, #tpu.memory_space<vmem>>, vector<1x16x16x32xf32>
    %30 = vector.shape_cast %29 : vector<1x16x16x32xf32> to vector<256x32xf32>
    %c4 = arith.constant 4 : index
    %c0_35 = arith.constant 0 : index
    %c0_36 = arith.constant 0 : index
    %31 = vector.load %arg3[%c4, %c0_35, %c0_36] : memref<9x32x128xf32, #tpu.memory_space<vmem>>, vector<1x32x128xf32>
    %32 = vector.shape_cast %31 : vector<1x32x128xf32> to vector<32x128xf32>
    %cst_37 = arith.constant dense<0.000000e+00> : vector<256x128xf32>
    %33 = tpu.matmul %30, %32, %cst_37 {dimension_numbers = #tpu.dot_dimension_numbers<[1], [0], [0], [1], [0, 0, 1, 1], [], []>} : vector<256x32xf32>, vector<32x128xf32>, vector<256x128xf32> -> vector<256x128xf32>
    %34 = arith.addf %28, %33 : vector<256x128xf32>
    %c0_38 = arith.constant 0 : index
    %c1_39 = arith.constant 1 : index
    %c2_40 = arith.constant 2 : index
    %c0_41 = arith.constant 0 : index
    %35 = vector.load %arg6[%c0_38, %c1_39, %c2_40, %c0_41] : memref<1x18x18x32xf32, #tpu.memory_space<vmem>>, vector<1x16x16x32xf32>
    %36 = vector.shape_cast %35 : vector<1x16x16x32xf32> to vector<256x32xf32>
    %c5 = arith.constant 5 : index
    %c0_42 = arith.constant 0 : index
    %c0_43 = arith.constant 0 : index
    %37 = vector.load %arg3[%c5, %c0_42, %c0_43] : memref<9x32x128xf32, #tpu.memory_space<vmem>>, vector<1x32x128xf32>
    %38 = vector.shape_cast %37 : vector<1x32x128xf32> to vector<32x128xf32>
    %cst_44 = arith.constant dense<0.000000e+00> : vector<256x128xf32>
    %39 = tpu.matmul %36, %38, %cst_44 {dimension_numbers = #tpu.dot_dimension_numbers<[1], [0], [0], [1], [0, 0, 1, 1], [], []>} : vector<256x32xf32>, vector<32x128xf32>, vector<256x128xf32> -> vector<256x128xf32>
    %40 = arith.addf %34, %39 : vector<256x128xf32>
    %c0_45 = arith.constant 0 : index
    %c2_46 = arith.constant 2 : index
    %c0_47 = arith.constant 0 : index
    %c0_48 = arith.constant 0 : index
    %41 = vector.load %arg6[%c0_45, %c2_46, %c0_47, %c0_48] : memref<1x18x18x32xf32, #tpu.memory_space<vmem>>, vector<1x16x16x32xf32>
    %42 = vector.shape_cast %41 : vector<1x16x16x32xf32> to vector<256x32xf32>
    %c6 = arith.constant 6 : index
    %c0_49 = arith.constant 0 : index
    %c0_50 = arith.constant 0 : index
    %43 = vector.load %arg3[%c6, %c0_49, %c0_50] : memref<9x32x128xf32, #tpu.memory_space<vmem>>, vector<1x32x128xf32>
    %44 = vector.shape_cast %43 : vector<1x32x128xf32> to vector<32x128xf32>
    %cst_51 = arith.constant dense<0.000000e+00> : vector<256x128xf32>
    %45 = tpu.matmul %42, %44, %cst_51 {dimension_numbers = #tpu.dot_dimension_numbers<[1], [0], [0], [1], [0, 0, 1, 1], [], []>} : vector<256x32xf32>, vector<32x128xf32>, vector<256x128xf32> -> vector<256x128xf32>
    %46 = arith.addf %40, %45 : vector<256x128xf32>
    %c0_52 = arith.constant 0 : index
    %c2_53 = arith.constant 2 : index
    %c1_54 = arith.constant 1 : index
    %c0_55 = arith.constant 0 : index
    %47 = vector.load %arg6[%c0_52, %c2_53, %c1_54, %c0_55] : memref<1x18x18x32xf32, #tpu.memory_space<vmem>>, vector<1x16x16x32xf32>
    %48 = vector.shape_cast %47 : vector<1x16x16x32xf32> to vector<256x32xf32>
    %c7 = arith.constant 7 : index
    %c0_56 = arith.constant 0 : index
    %c0_57 = arith.constant 0 : index
    %49 = vector.load %arg3[%c7, %c0_56, %c0_57] : memref<9x32x128xf32, #tpu.memory_space<vmem>>, vector<1x32x128xf32>
    %50 = vector.shape_cast %49 : vector<1x32x128xf32> to vector<32x128xf32>
    %cst_58 = arith.constant dense<0.000000e+00> : vector<256x128xf32>
    %51 = tpu.matmul %48, %50, %cst_58 {dimension_numbers = #tpu.dot_dimension_numbers<[1], [0], [0], [1], [0, 0, 1, 1], [], []>} : vector<256x32xf32>, vector<32x128xf32>, vector<256x128xf32> -> vector<256x128xf32>
    %52 = arith.addf %46, %51 : vector<256x128xf32>
    %c0_59 = arith.constant 0 : index
    %c2_60 = arith.constant 2 : index
    %c2_61 = arith.constant 2 : index
    %c0_62 = arith.constant 0 : index
    %53 = vector.load %arg6[%c0_59, %c2_60, %c2_61, %c0_62] : memref<1x18x18x32xf32, #tpu.memory_space<vmem>>, vector<1x16x16x32xf32>
    %54 = vector.shape_cast %53 : vector<1x16x16x32xf32> to vector<256x32xf32>
    %c8 = arith.constant 8 : index
    %c0_63 = arith.constant 0 : index
    %c0_64 = arith.constant 0 : index
    %55 = vector.load %arg3[%c8, %c0_63, %c0_64] : memref<9x32x128xf32, #tpu.memory_space<vmem>>, vector<1x32x128xf32>
    %56 = vector.shape_cast %55 : vector<1x32x128xf32> to vector<32x128xf32>
    %cst_65 = arith.constant dense<0.000000e+00> : vector<256x128xf32>
    %57 = tpu.matmul %54, %56, %cst_65 {dimension_numbers = #tpu.dot_dimension_numbers<[1], [0], [0], [1], [0, 0, 1, 1], [], []>} : vector<256x32xf32>, vector<32x128xf32>, vector<256x128xf32> -> vector<256x128xf32>
    %58 = arith.addf %52, %57 : vector<256x128xf32>
    %59 = vector.extract_strided_slice %58 {offsets = [0, 0], sizes = [256, 96], strides = [1, 1]} : vector<256x128xf32> to vector<256x96xf32>
    %60 = arith.negf %59 : vector<256x96xf32>
    %61 = math.exp %60 : vector<256x96xf32>
    %cst_66 = arith.constant 1.000000e+00 : f32
    %62 = vector.broadcast %cst_66 : f32 to vector<256x96xf32>
    %63 = arith.addf %62, %61 : vector<256x96xf32>
    %64 = arith.divf %62, %63 : vector<256x96xf32>
    %65 = vector.extract_strided_slice %58 {offsets = [0, 96], sizes = [256, 32], strides = [1, 1]} : vector<256x128xf32> to vector<256x32xf32>
    %66 = math.tanh %65 : vector<256x32xf32>
    %67 = vector.extract_strided_slice %64 {offsets = [0, 0], sizes = [256, 32], strides = [1, 1]} : vector<256x96xf32> to vector<256x32xf32>
    %68 = vector.extract_strided_slice %64 {offsets = [0, 32], sizes = [256, 32], strides = [1, 1]} : vector<256x96xf32> to vector<256x32xf32>
    %69 = vector.extract_strided_slice %64 {offsets = [0, 64], sizes = [256, 32], strides = [1, 1]} : vector<256x96xf32> to vector<256x32xf32>
    %c0_67 = arith.constant 0 : index
    %c0_68 = arith.constant 0 : index
    %70 = vector.load %arg5[%c0_67, %c0_68] : memref<256x32xf32, #tpu.memory_space<vmem>>, vector<256x32xf32>
    %71 = arith.mulf %68, %70 : vector<256x32xf32>
    %72 = arith.mulf %67, %66 : vector<256x32xf32>
    %73 = arith.addf %71, %72 : vector<256x32xf32>
    %74 = math.tanh %73 : vector<256x32xf32>
    %75 = arith.mulf %69, %74 : vector<256x32xf32>
    %c0_69 = arith.constant 0 : index
    %c0_70 = arith.constant 0 : index
    %76 = vector.load %arg5[%c0_69, %c0_70] : memref<256x32xf32, #tpu.memory_space<vmem>>, vector<256x32xf32>
    tpu.vector_store %arg5[%c0_69, %c0_70], %73 {strides = array<i32>} : memref<256x32xf32, #tpu.memory_space<vmem>>, vector<256x32xf32>,
    %77 = vector.shape_cast %75 : vector<256x32xf32> to vector<1x16x16x32xf32>
    %c0_71 = arith.constant 0 : index
    %c1_72 = arith.constant 1 : index
    %c1_73 = arith.constant 1 : index
    %c0_74 = arith.constant 0 : index
    %78 = vector.load %arg6[%c0_71, %c1_72, %c1_73, %c0_74] : memref<1x18x18x32xf32, #tpu.memory_space<vmem>>, vector<1x16x16x32xf32>
    tpu.vector_store %arg6[%c0_71, %c1_72, %c1_73, %c0_74], %77 {strides = array<i32>} : memref<1x18x18x32xf32, #tpu.memory_space<vmem>>, vector<1x16x16x32xf32>,
    %c0_75 = arith.constant 0 : index
    %c0_76 = arith.constant 0 : index
    %c0_77 = arith.constant 0 : index
    %79 = vector.load %arg4[%c0_75, %c0_76, %c0_77] : memref<1x256x32xf32, #tpu.memory_space<vmem>>, vector<1x256x32xf32>
    %80 = vector.shape_cast %79 : vector<1x256x32xf32> to vector<256x32xf32>
    %81 = vector.shape_cast %75 : vector<256x32xf32> to vector<1x256x32xf32>
    tpu.vector_store %arg4[%c0_75, %c0_76, %c0_77], %81 {strides = array<i32>} : memref<1x256x32xf32, #tpu.memory_space<vmem>>, vector<1x256x32xf32>,
    return
  }
  func.func @transform_0(%arg0: i32, %arg1: i32) -> (i32, i32, i32) {
    %c0_i32 = arith.constant 0 : i32
    %c0_i32_0 = arith.constant 0 : i32
    return %arg1, %arg0, %c0_i32 : i32, i32, i32
  }
  func.func @transform_1(%arg0: i32, %arg1: i32) -> (i32, i32, i32) {
    %c0_i32 = arith.constant 0 : i32
    %c0_i32_0 = arith.constant 0 : i32
    %c0_i32_1 = arith.constant 0 : i32
    %c0_i32_2 = arith.constant 0 : i32
    return %c0_i32, %c0_i32_0, %c0_i32_1 : i32, i32, i32
  }
  func.func @transform_2(%arg0: i32, %arg1: i32) -> (i32, i32, i32) {
    %c0_i32 = arith.constant 0 : i32
    %c0_i32_0 = arith.constant 0 : i32
    return %arg1, %arg0, %c0_i32 : i32, i32, i32
  }
  func.func @transform_3(%arg0: i32, %arg1: i32) -> (i32, i32) {
    %c0_i32 = arith.constant 0 : i32
    %c0_i32_0 = arith.constant 0 : i32
    return %arg0, %c0_i32 : i32, i32
  }
}

module attributes {stable_mosaic.version = 11 : i64} {
  func.func @_convlstm_layer_kernel(%arg0: i32, %arg1: i32, %arg2: memref<1x256x128xf32, #tpu.memory_space<vmem>>, %arg3: memref<9x16x128xf32, #tpu.memory_space<vmem>>, %arg4: memref<1x256x16xf32, #tpu.memory_space<vmem>>, %arg5: memref<256x16xf32, #tpu.memory_space<vmem>>, %arg6: memref<1x18x18x16xf32, #tpu.memory_space<vmem>>) attributes {dimension_semantics = [#tpu.dimension_semantics<parallel>, #tpu.dimension_semantics<arbitrary>], iteration_bounds = array<i64: 2, 8>, scalar_prefetch = 0 : i64, scratch_operands = 1 : i64, tpu.core_type = #tpu.core_type<tc>, window_params = [{transform_indices = @transform_0, window_bounds = array<i64: 1, 256, 128>}, {pipeline_mode = #tpu.pipeline_mode<synchronous>, transform_indices = @transform_1, window_bounds = array<i64: 9, 16, 128>}, {transform_indices = @transform_2, window_bounds = array<i64: 1, 256, 16>}, {transform_indices = @transform_3, window_bounds = array<i64: 256, 16>}]} {
    %c0_i32 = arith.constant 0 : i32
    %0 = arith.cmpi eq, %arg1, %c0_i32 : i32
    %1 = arith.extui %0 : i1 to i32
    %c0_i32_0 = arith.constant 0 : i32
    %2 = arith.cmpi ne, %1, %c0_i32_0 : i32
    scf.if %2 {
      %cst_78 = arith.constant 0.000000e+00 : f32
      %82 = vector.broadcast %cst_78 : f32 to vector<1x18x18x16xf32>
      %c0_79 = arith.constant 0 : index
      %c0_80 = arith.constant 0 : index
      %c0_81 = arith.constant 0 : index
      %c0_82 = arith.constant 0 : index
      %83 = vector.load %arg6[%c0_79, %c0_80, %c0_81, %c0_82] : memref<1x18x18x16xf32, #tpu.memory_space<vmem>>, vector<1x18x18x16xf32>
      tpu.vector_store %arg6[%c0_79, %c0_80, %c0_81, %c0_82], %82 {strides = array<i32>} : memref<1x18x18x16xf32, #tpu.memory_space<vmem>>, vector<1x18x18x16xf32>,
      %cst_83 = arith.constant 0.000000e+00 : f32
      %84 = vector.broadcast %cst_83 : f32 to vector<256x16xf32>
      %c0_84 = arith.constant 0 : index
      %c0_85 = arith.constant 0 : index
      %85 = vector.load %arg5[%c0_84, %c0_85] : memref<256x16xf32, #tpu.memory_space<vmem>>, vector<256x16xf32>
      tpu.vector_store %arg5[%c0_84, %c0_85], %84 {strides = array<i32>} : memref<256x16xf32, #tpu.memory_space<vmem>>, vector<256x16xf32>,
    } else {
    }
    %c0 = arith.constant 0 : index
    %c0_1 = arith.constant 0 : index
    %c0_2 = arith.constant 0 : index
    %3 = vector.load %arg2[%c0, %c0_1, %c0_2] : memref<1x256x128xf32, #tpu.memory_space<vmem>>, vector<1x256x128xf32>
    %4 = vector.shape_cast %3 : vector<1x256x128xf32> to vector<256x128xf32>
    %c0_3 = arith.constant 0 : index
    %c0_4 = arith.constant 0 : index
    %c0_5 = arith.constant 0 : index
    %c0_6 = arith.constant 0 : index
    %5 = vector.load %arg6[%c0_3, %c0_4, %c0_5, %c0_6] : memref<1x18x18x16xf32, #tpu.memory_space<vmem>>, vector<1x16x16x16xf32>
    %6 = vector.shape_cast %5 : vector<1x16x16x16xf32> to vector<256x16xf32>
    %c0_7 = arith.constant 0 : index
    %c0_8 = arith.constant 0 : index
    %c0_9 = arith.constant 0 : index
    %7 = vector.load %arg3[%c0_7, %c0_8, %c0_9] : memref<9x16x128xf32, #tpu.memory_space<vmem>>, vector<1x16x128xf32>
    %8 = vector.shape_cast %7 : vector<1x16x128xf32> to vector<16x128xf32>
    %cst = arith.constant dense<0.000000e+00> : vector<256x128xf32>
    %9 = tpu.matmul %6, %8, %cst {dimension_numbers = #tpu.dot_dimension_numbers<[1], [0], [0], [1], [0, 0, 1, 1], [], []>} : vector<256x16xf32>, vector<16x128xf32>, vector<256x128xf32> -> vector<256x128xf32>
    %10 = arith.addf %4, %9 : vector<256x128xf32>
    %c0_10 = arith.constant 0 : index
    %c0_11 = arith.constant 0 : index
    %c1 = arith.constant 1 : index
    %c0_12 = arith.constant 0 : index
    %11 = vector.load %arg6[%c0_10, %c0_11, %c1, %c0_12] : memref<1x18x18x16xf32, #tpu.memory_space<vmem>>, vector<1x16x16x16xf32>
    %12 = vector.shape_cast %11 : vector<1x16x16x16xf32> to vector<256x16xf32>
    %c1_13 = arith.constant 1 : index
    %c0_14 = arith.constant 0 : index
    %c0_15 = arith.constant 0 : index
    %13 = vector.load %arg3[%c1_13, %c0_14, %c0_15] : memref<9x16x128xf32, #tpu.memory_space<vmem>>, vector<1x16x128xf32>
    %14 = vector.shape_cast %13 : vector<1x16x128xf32> to vector<16x128xf32>
    %cst_16 = arith.constant dense<0.000000e+00> : vector<256x128xf32>
    %15 = tpu.matmul %12, %14, %cst_16 {dimension_numbers = #tpu.dot_dimension_numbers<[1], [0], [0], [1], [0, 0, 1, 1], [], []>} : vector<256x16xf32>, vector<16x128xf32>, vector<256x128xf32> -> vector<256x128xf32>
    %16 = arith.addf %10, %15 : vector<256x128xf32>
    %c0_17 = arith.constant 0 : index
    %c0_18 = arith.constant 0 : index
    %c2 = arith.constant 2 : index
    %c0_19 = arith.constant 0 : index
    %17 = vector.load %arg6[%c0_17, %c0_18, %c2, %c0_19] : memref<1x18x18x16xf32, #tpu.memory_space<vmem>>, vector<1x16x16x16xf32>
    %18 = vector.shape_cast %17 : vector<1x16x16x16xf32> to vector<256x16xf32>
    %c2_20 = arith.constant 2 : index
    %c0_21 = arith.constant 0 : index
    %c0_22 = arith.constant 0 : index
    %19 = vector.load %arg3[%c2_20, %c0_21, %c0_22] : memref<9x16x128xf32, #tpu.memory_space<vmem>>, vector<1x16x128xf32>
    %20 = vector.shape_cast %19 : vector<1x16x128xf32> to vector<16x128xf32>
    %cst_23 = arith.constant dense<0.000000e+00> : vector<256x128xf32>
    %21 = tpu.matmul %18, %20, %cst_23 {dimension_numbers = #tpu.dot_dimension_numbers<[1], [0], [0], [1], [0, 0, 1, 1], [], []>} : vector<256x16xf32>, vector<16x128xf32>, vector<256x128xf32> -> vector<256x128xf32>
    %22 = arith.addf %16, %21 : vector<256x128xf32>
    %c0_24 = arith.constant 0 : index
    %c1_25 = arith.constant 1 : index
    %c0_26 = arith.constant 0 : index
    %c0_27 = arith.constant 0 : index
    %23 = vector.load %arg6[%c0_24, %c1_25, %c0_26, %c0_27] : memref<1x18x18x16xf32, #tpu.memory_space<vmem>>, vector<1x16x16x16xf32>
    %24 = vector.shape_cast %23 : vector<1x16x16x16xf32> to vector<256x16xf32>
    %c3 = arith.constant 3 : index
    %c0_28 = arith.constant 0 : index
    %c0_29 = arith.constant 0 : index
    %25 = vector.load %arg3[%c3, %c0_28, %c0_29] : memref<9x16x128xf32, #tpu.memory_space<vmem>>, vector<1x16x128xf32>
    %26 = vector.shape_cast %25 : vector<1x16x128xf32> to vector<16x128xf32>
    %cst_30 = arith.constant dense<0.000000e+00> : vector<256x128xf32>
    %27 = tpu.matmul %24, %26, %cst_30 {dimension_numbers = #tpu.dot_dimension_numbers<[1], [0], [0], [1], [0, 0, 1, 1], [], []>} : vector<256x16xf32>, vector<16x128xf32>, vector<256x128xf32> -> vector<256x128xf32>
    %28 = arith.addf %22, %27 : vector<256x128xf32>
    %c0_31 = arith.constant 0 : index
    %c1_32 = arith.constant 1 : index
    %c1_33 = arith.constant 1 : index
    %c0_34 = arith.constant 0 : index
    %29 = vector.load %arg6[%c0_31, %c1_32, %c1_33, %c0_34] : memref<1x18x18x16xf32, #tpu.memory_space<vmem>>, vector<1x16x16x16xf32>
    %30 = vector.shape_cast %29 : vector<1x16x16x16xf32> to vector<256x16xf32>
    %c4 = arith.constant 4 : index
    %c0_35 = arith.constant 0 : index
    %c0_36 = arith.constant 0 : index
    %31 = vector.load %arg3[%c4, %c0_35, %c0_36] : memref<9x16x128xf32, #tpu.memory_space<vmem>>, vector<1x16x128xf32>
    %32 = vector.shape_cast %31 : vector<1x16x128xf32> to vector<16x128xf32>
    %cst_37 = arith.constant dense<0.000000e+00> : vector<256x128xf32>
    %33 = tpu.matmul %30, %32, %cst_37 {dimension_numbers = #tpu.dot_dimension_numbers<[1], [0], [0], [1], [0, 0, 1, 1], [], []>} : vector<256x16xf32>, vector<16x128xf32>, vector<256x128xf32> -> vector<256x128xf32>
    %34 = arith.addf %28, %33 : vector<256x128xf32>
    %c0_38 = arith.constant 0 : index
    %c1_39 = arith.constant 1 : index
    %c2_40 = arith.constant 2 : index
    %c0_41 = arith.constant 0 : index
    %35 = vector.load %arg6[%c0_38, %c1_39, %c2_40, %c0_41] : memref<1x18x18x16xf32, #tpu.memory_space<vmem>>, vector<1x16x16x16xf32>
    %36 = vector.shape_cast %35 : vector<1x16x16x16xf32> to vector<256x16xf32>
    %c5 = arith.constant 5 : index
    %c0_42 = arith.constant 0 : index
    %c0_43 = arith.constant 0 : index
    %37 = vector.load %arg3[%c5, %c0_42, %c0_43] : memref<9x16x128xf32, #tpu.memory_space<vmem>>, vector<1x16x128xf32>
    %38 = vector.shape_cast %37 : vector<1x16x128xf32> to vector<16x128xf32>
    %cst_44 = arith.constant dense<0.000000e+00> : vector<256x128xf32>
    %39 = tpu.matmul %36, %38, %cst_44 {dimension_numbers = #tpu.dot_dimension_numbers<[1], [0], [0], [1], [0, 0, 1, 1], [], []>} : vector<256x16xf32>, vector<16x128xf32>, vector<256x128xf32> -> vector<256x128xf32>
    %40 = arith.addf %34, %39 : vector<256x128xf32>
    %c0_45 = arith.constant 0 : index
    %c2_46 = arith.constant 2 : index
    %c0_47 = arith.constant 0 : index
    %c0_48 = arith.constant 0 : index
    %41 = vector.load %arg6[%c0_45, %c2_46, %c0_47, %c0_48] : memref<1x18x18x16xf32, #tpu.memory_space<vmem>>, vector<1x16x16x16xf32>
    %42 = vector.shape_cast %41 : vector<1x16x16x16xf32> to vector<256x16xf32>
    %c6 = arith.constant 6 : index
    %c0_49 = arith.constant 0 : index
    %c0_50 = arith.constant 0 : index
    %43 = vector.load %arg3[%c6, %c0_49, %c0_50] : memref<9x16x128xf32, #tpu.memory_space<vmem>>, vector<1x16x128xf32>
    %44 = vector.shape_cast %43 : vector<1x16x128xf32> to vector<16x128xf32>
    %cst_51 = arith.constant dense<0.000000e+00> : vector<256x128xf32>
    %45 = tpu.matmul %42, %44, %cst_51 {dimension_numbers = #tpu.dot_dimension_numbers<[1], [0], [0], [1], [0, 0, 1, 1], [], []>} : vector<256x16xf32>, vector<16x128xf32>, vector<256x128xf32> -> vector<256x128xf32>
    %46 = arith.addf %40, %45 : vector<256x128xf32>
    %c0_52 = arith.constant 0 : index
    %c2_53 = arith.constant 2 : index
    %c1_54 = arith.constant 1 : index
    %c0_55 = arith.constant 0 : index
    %47 = vector.load %arg6[%c0_52, %c2_53, %c1_54, %c0_55] : memref<1x18x18x16xf32, #tpu.memory_space<vmem>>, vector<1x16x16x16xf32>
    %48 = vector.shape_cast %47 : vector<1x16x16x16xf32> to vector<256x16xf32>
    %c7 = arith.constant 7 : index
    %c0_56 = arith.constant 0 : index
    %c0_57 = arith.constant 0 : index
    %49 = vector.load %arg3[%c7, %c0_56, %c0_57] : memref<9x16x128xf32, #tpu.memory_space<vmem>>, vector<1x16x128xf32>
    %50 = vector.shape_cast %49 : vector<1x16x128xf32> to vector<16x128xf32>
    %cst_58 = arith.constant dense<0.000000e+00> : vector<256x128xf32>
    %51 = tpu.matmul %48, %50, %cst_58 {dimension_numbers = #tpu.dot_dimension_numbers<[1], [0], [0], [1], [0, 0, 1, 1], [], []>} : vector<256x16xf32>, vector<16x128xf32>, vector<256x128xf32> -> vector<256x128xf32>
    %52 = arith.addf %46, %51 : vector<256x128xf32>
    %c0_59 = arith.constant 0 : index
    %c2_60 = arith.constant 2 : index
    %c2_61 = arith.constant 2 : index
    %c0_62 = arith.constant 0 : index
    %53 = vector.load %arg6[%c0_59, %c2_60, %c2_61, %c0_62] : memref<1x18x18x16xf32, #tpu.memory_space<vmem>>, vector<1x16x16x16xf32>
    %54 = vector.shape_cast %53 : vector<1x16x16x16xf32> to vector<256x16xf32>
    %c8 = arith.constant 8 : index
    %c0_63 = arith.constant 0 : index
    %c0_64 = arith.constant 0 : index
    %55 = vector.load %arg3[%c8, %c0_63, %c0_64] : memref<9x16x128xf32, #tpu.memory_space<vmem>>, vector<1x16x128xf32>
    %56 = vector.shape_cast %55 : vector<1x16x128xf32> to vector<16x128xf32>
    %cst_65 = arith.constant dense<0.000000e+00> : vector<256x128xf32>
    %57 = tpu.matmul %54, %56, %cst_65 {dimension_numbers = #tpu.dot_dimension_numbers<[1], [0], [0], [1], [0, 0, 1, 1], [], []>} : vector<256x16xf32>, vector<16x128xf32>, vector<256x128xf32> -> vector<256x128xf32>
    %58 = arith.addf %52, %57 : vector<256x128xf32>
    %59 = vector.extract_strided_slice %58 {offsets = [0, 0], sizes = [256, 48], strides = [1, 1]} : vector<256x128xf32> to vector<256x48xf32>
    %60 = arith.negf %59 : vector<256x48xf32>
    %61 = math.exp %60 : vector<256x48xf32>
    %cst_66 = arith.constant 1.000000e+00 : f32
    %62 = vector.broadcast %cst_66 : f32 to vector<256x48xf32>
    %63 = arith.addf %62, %61 : vector<256x48xf32>
    %64 = arith.divf %62, %63 : vector<256x48xf32>
    %65 = vector.extract_strided_slice %58 {offsets = [0, 48], sizes = [256, 16], strides = [1, 1]} : vector<256x128xf32> to vector<256x16xf32>
    %66 = math.tanh %65 : vector<256x16xf32>
    %67 = vector.extract_strided_slice %64 {offsets = [0, 0], sizes = [256, 16], strides = [1, 1]} : vector<256x48xf32> to vector<256x16xf32>
    %68 = vector.extract_strided_slice %64 {offsets = [0, 16], sizes = [256, 16], strides = [1, 1]} : vector<256x48xf32> to vector<256x16xf32>
    %69 = vector.extract_strided_slice %64 {offsets = [0, 32], sizes = [256, 16], strides = [1, 1]} : vector<256x48xf32> to vector<256x16xf32>
    %c0_67 = arith.constant 0 : index
    %c0_68 = arith.constant 0 : index
    %70 = vector.load %arg5[%c0_67, %c0_68] : memref<256x16xf32, #tpu.memory_space<vmem>>, vector<256x16xf32>
    %71 = arith.mulf %68, %70 : vector<256x16xf32>
    %72 = arith.mulf %67, %66 : vector<256x16xf32>
    %73 = arith.addf %71, %72 : vector<256x16xf32>
    %74 = math.tanh %73 : vector<256x16xf32>
    %75 = arith.mulf %69, %74 : vector<256x16xf32>
    %c0_69 = arith.constant 0 : index
    %c0_70 = arith.constant 0 : index
    %76 = vector.load %arg5[%c0_69, %c0_70] : memref<256x16xf32, #tpu.memory_space<vmem>>, vector<256x16xf32>
    tpu.vector_store %arg5[%c0_69, %c0_70], %73 {strides = array<i32>} : memref<256x16xf32, #tpu.memory_space<vmem>>, vector<256x16xf32>,
    %77 = vector.shape_cast %75 : vector<256x16xf32> to vector<1x16x16x16xf32>
    %c0_71 = arith.constant 0 : index
    %c1_72 = arith.constant 1 : index
    %c1_73 = arith.constant 1 : index
    %c0_74 = arith.constant 0 : index
    %78 = vector.load %arg6[%c0_71, %c1_72, %c1_73, %c0_74] : memref<1x18x18x16xf32, #tpu.memory_space<vmem>>, vector<1x16x16x16xf32>
    tpu.vector_store %arg6[%c0_71, %c1_72, %c1_73, %c0_74], %77 {strides = array<i32>} : memref<1x18x18x16xf32, #tpu.memory_space<vmem>>, vector<1x16x16x16xf32>,
    %c0_75 = arith.constant 0 : index
    %c0_76 = arith.constant 0 : index
    %c0_77 = arith.constant 0 : index
    %79 = vector.load %arg4[%c0_75, %c0_76, %c0_77] : memref<1x256x16xf32, #tpu.memory_space<vmem>>, vector<1x256x16xf32>
    %80 = vector.shape_cast %79 : vector<1x256x16xf32> to vector<256x16xf32>
    %81 = vector.shape_cast %75 : vector<256x16xf32> to vector<1x256x16xf32>
    tpu.vector_store %arg4[%c0_75, %c0_76, %c0_77], %81 {strides = array<i32>} : memref<1x256x16xf32, #tpu.memory_space<vmem>>, vector<1x256x16xf32>,
    return
  }
  func.func @transform_0(%arg0: i32, %arg1: i32) -> (i32, i32, i32) {
    %c0_i32 = arith.constant 0 : i32
    %c0_i32_0 = arith.constant 0 : i32
    return %arg1, %arg0, %c0_i32 : i32, i32, i32
  }
  func.func @transform_1(%arg0: i32, %arg1: i32) -> (i32, i32, i32) {
    %c0_i32 = arith.constant 0 : i32
    %c0_i32_0 = arith.constant 0 : i32
    %c0_i32_1 = arith.constant 0 : i32
    %c0_i32_2 = arith.constant 0 : i32
    return %c0_i32, %c0_i32_0, %c0_i32_1 : i32, i32, i32
  }
  func.func @transform_2(%arg0: i32, %arg1: i32) -> (i32, i32, i32) {
    %c0_i32 = arith.constant 0 : i32
    %c0_i32_0 = arith.constant 0 : i32
    return %arg1, %arg0, %c0_i32 : i32, i32, i32
  }
  func.func @transform_3(%arg0: i32, %arg1: i32) -> (i32, i32) {
    %c0_i32 = arith.constant 0 : i32
    %c0_i32_0 = arith.constant 0 : i32
    return %arg0, %c0_i32 : i32, i32
  }
}

</mosaic_0001>

<llo_original>
// kernel: convlstm_forward.2
$region0: #{convlstm_forward.2}
  #allocation0 [shape = 'u32[]', space=smem, size = 0x4, offset = 0x4, fixed_abs, tag = 'smem constant byte address 0x4 - core index']
  #allocation1 [shape = 'u32[72,128]{1,0:T(1,128)}', space=vmem, size = 0x9000, scoped, tag = 'internal scratch']
  #allocation2 [shape = 'f32[1,18,18,32]{3,2,1,0:T(8,128)}', space=vmem, size = 0x36000, scoped, tag = 'scratch operand']
  %s0 = inlined_call_operand.vmem [shape: f32[8,512,128], index: 0, kind: input, shape index: {}]
  %s1 = inlined_call_operand.vmem [shape: f32[9,32,128], index: 1, kind: input, shape index: {}]
  %s2 = inlined_call_operand.vmem [shape: f32[8,512,32], index: 2, kind: output, shape index: {0}]
  %s3 = inlined_call_operand.hbm [shape: f32[512,32], index: 3, kind: output, shape index: {1}]
  %4 = xla_tuple %s2, %s3
  %s5 = sld [smem:[#allocation0]]
  $region53: #{convlstm_forward.2} parent=0
    _
  %s7 = ssub.s32 1, %s5
  %s8 = scalar_select 0, %s7, %s5
  $region1: #{convlstm_forward.2} parent=0
    #allocation3 [shape = 'u8[262144]{0}', space=vmem, size = 0x40000, scoped, tag = 'output window, operand 1']
    #allocation4 [shape = 's32[2]{0}', space=sflag, size = 0x8, scoped, tag = 'scoped memory for convlstm_forward.2']
    %9 = vsyncpa [#allocation4], 0
    %s10 = scalar_lea.sflag [#allocation4], 1
    %11 = vsyncpa %s10, 0
    loop: start=0, step=1, limit=18
    $region2: #{convlstm_forward.2} parent=1 // loop_pre_header
      _
    $region3: #{convlstm_forward.2} parent=1 // loop_header
      %s13 = sphi 0, %s17
      %p14 = scmp.ge.s32.totalorder %s13, 18
      %s20 = sphi 0, %s32
      %s21 = sphi 0, %s28
      %s22 = sphi 0, %s20
      %s23 = sphi 0, %s21
      %s24 = sphi 0, %s22
      %s25 = sphi 0, %s23
      %s37 = sphi 0, %s39
      %s40 = sphi 0, %s37
      %s41 = sphi 0, %s40
      %s57 = sphi 0, %s41
      %s61 = sphi 0, %s61
      %s63 = sphi 0, %s61
      %s64 = sphi 0, %s63
      %s78 = sphi 0, %s64
      %s86 = sphi 0, %s88
      %s89 = sphi 0, %s86
      %s90 = sphi 0, %s89
      %s106 = sphi 0, %s90
      %s112 = sphi 0, %s114
      %s115 = sphi 0, %s112
      %s116 = sphi 0, %s115
      %s132 = sphi 0, %s116
    $region4: #{convlstm_forward.2} parent=1 // loop_header_branch
      %16 = sbr.rel (%p14) target = $region8
    $region5: #{convlstm_forward.2} parent=1 // loop_body
      %s18 = ssub.s32 %s13, 1
      %s19 = ssub.s32 %s13, 2
      %s26 = sadd.s32 1, %s21
      %p27 = scmp.ge.s32.totalorder %s26, 8
      %s28 = scalar_select %p27, 0, %s26
      %s29 = sadd.s32 1, %s20
      %s30 = scalar_select %p27, %s29, %s20
      %p31 = scmp.ge.s32.totalorder %s30, 2
      %s32 = scalar_select %p31, 0, %s30
      %s33 = ssub.s32 %s21, %s28
      %s34 = ssub.s32 %s20, %s32
      %s35 = sor.u32 %s33, %s34
      %p36 = scmp.eq.s32.totalorder %s35, 0
      %s38 = sadd.s32 %s37, 1
      %s39 = scalar_select %p36, %s37, %s38
      %p42 = pneg %p36
      %p43 = scmp.eq.s32.totalorder %s13, 15
      %p44 = por %p42, %p43
      %p45 = scmp.ne.s32.totalorder %s37, %s40
      %p46 = scmp.eq.s32.totalorder %s13, 0
      %p47 = por %p45, %p46
      %p48 = scmp.ne.s32.totalorder %s37, %s40
      %p49 = scmp.eq.s32.totalorder %s18, 15
      %p50 = por %p48, %p49
      %p51 = scmp.ne.s32.totalorder %s40, %s41
      %p52 = scmp.eq.s32.totalorder %s18, 0
      %p53 = por %p51, %p52
      %p54 = scmp.ne.s32.totalorder %s40, %s41
      %p55 = scmp.eq.s32.totalorder %s19, 15
      %p56 = por %p54, %p55
      %p58 = scmp.ne.s32.totalorder %s41, %s57
      %p59 = scmp.eq.s32.totalorder %s19, 0
      %p60 = por %p58, %p59
      %s62 = sadd.s32 %s61, 1
      %p65 = scmp.eq.s32.totalorder %s13, 15
      %p66 = scmp.ne.s32.totalorder %s61, %s63
      %p67 = scmp.eq.s32.totalorder %s13, 0
      %p68 = por %p66, %p67
      %p69 = scmp.ne.s32.totalorder %s61, %s63
      %p70 = scmp.eq.s32.totalorder %s18, 15
      %p71 = por %p69, %p70
      %p72 = scmp.ne.s32.totalorder %s63, %s64
      %p73 = scmp.eq.s32.totalorder %s18, 0
      %p74 = por %p72, %p73
      %p75 = scmp.ne.s32.totalorder %s63, %s64
      %p76 = scmp.eq.s32.totalorder %s19, 15
      %p77 = por %p75, %p76
      %p79 = scmp.ne.s32.totalorder %s64, %s78
      %p80 = scmp.eq.s32.totalorder %s19, 0
      %p81 = por %p79, %p80
      %s82 = ssub.s32 %s21, %s28
      %s83 = ssub.s32 %s20, %s32
      %s84 = sor.u32 %s82, %s83
      %p85 = scmp.eq.s32.totalorder %s84, 0
      %s87 = sadd.s32 %s86, 1
      %s88 = scalar_select %p85, %s86, %s87
      %p91 = pneg %p85
      %p92 = scmp.eq.s32.totalorder %s13, 15
      %p93 = por %p91, %p92
      %p94 = scmp.ne.s32.totalorder %s86, %s89
      %p95 = scmp.eq.s32.totalorder %s13, 0
      %p96 = por %p94, %p95
      %p97 = scmp.ne.s32.totalorder %s86, %s89
      %p98 = scmp.eq.s32.totalorder %s18, 15
      %p99 = por %p97, %p98
      %p100 = scmp.ne.s32.totalorder %s89, %s90
      %p101 = scmp.eq.s32.totalorder %s18, 0
      %p102 = por %p100, %p101
      %p103 = scmp.ne.s32.totalorder %s89, %s90
      %p104 = scmp.eq.s32.totalorder %s19, 15
      %p105 = por %p103, %p104
      %p107 = scmp.ne.s32.totalorder %s90, %s106
      %p108 = scmp.eq.s32.totalorder %s19, 0
      %p109 = por %p107, %p108
      %s110 = ssub.s32 %s20, %s32
      %p111 = scmp.eq.s32.totalorder %s110, 0
      %s113 = sadd.s32 %s112, 1
      %s114 = scalar_select %p111, %s112, %s113
      %p117 = pneg %p111
      %p118 = scmp.eq.s32.totalorder %s13, 15
      %p119 = por %p117, %p118
      %p120 = scmp.ne.s32.totalorder %s112, %s115
      %p121 = scmp.eq.s32.totalorder %s13, 0
      %p122 = por %p120, %p121
      %p123 = scmp.ne.s32.totalorder %s112, %s115
      %p124 = scmp.eq.s32.totalorder %s18, 15
      %p125 = por %p123, %p124
      %p126 = scmp.ne.s32.totalorder %s115, %s116
      %p127 = scmp.eq.s32.totalorder %s18, 0
      %p128 = por %p126, %p127
      %p129 = scmp.ne.s32.totalorder %s115, %s116
      %p130 = scmp.eq.s32.totalorder %s19, 15
      %p131 = por %p129, %p130
      %p133 = scmp.ne.s32.totalorder %s116, %s132
      %p134 = scmp.eq.s32.totalorder %s19, 0
      %p135 = por %p133, %p134
      %p136 = scmp.le.s32.totalorder 1, %s13
      %p137 = scmp.lt.s32.totalorder %s13, 17
      %p138 = pnand %p136, %p137
      %p139 = pneg %p138
      // Predicated region
      $region9: #{convlstm_forward.2} parent=5 // pred_check
        _
      $region10: #{convlstm_forward.2} parent=5 // pred_check_branch
        %141 = sbr.rel (%p138) target = $region12
      $region11: #{convlstm_forward.2} parent=5 // pred_region
        %s142 = ssub.s32 %s13, 1
        // Predicated region
        $region13: #{convlstm_forward.2} parent=11 // pred_check
          %p143 = pneg %p74
        $region14: #{convlstm_forward.2} parent=11 // pred_check_branch
          %145 = sbr.rel (%p143) target = $region16
        $region15: #{convlstm_forward.2} parent=11 // pred_region
          _
        $region16: #{convlstm_forward.2} parent=11 // pred_fallthru
          _
      $region12: #{convlstm_forward.2} parent=5 // pred_fallthru
        _
      %p146 = scmp.lt.s32.totalorder %s13, 16
      // Predicated region
      $region17: #{convlstm_forward.2} parent=5 // pred_check
        %p147 = pneg %p146
      $region18: #{convlstm_forward.2} parent=5 // pred_check_branch
        %149 = sbr.rel (%p147) target = $region20
      $region19: #{convlstm_forward.2} parent=5 // pred_region
        // Predicated region
        $region21: #{convlstm_forward.2} parent=19 // pred_check
          %p150 = pneg %p47
        $region22: #{convlstm_forward.2} parent=19 // pred_check_branch
          %152 = sbr.rel (%p150) target = $region24
        $region23: #{convlstm_forward.2} parent=19 // pred_region
          %s153 = smul.u32 32, %s20
          %p154 = scmp.lt.s32.totalorder %s21, 7
          %s155 = scalar_select %p154, %s21, 7
          %p156 = scmp.lt.s32.totalorder %s153, 63
          %s157 = scalar_select %p156, %s153, 63
          %s158 = smul.addr %s155, 64
          %s159 = sadd.s32 %s157, %s158
          %s160 = smul.addr %s159, 8
          %s161 = scalar_lea.vmem %s0, %s160
          %s162 = smul.u32 32, %s20
        $region24: #{convlstm_forward.2} parent=19 // pred_fallthru
          _
      $region20: #{convlstm_forward.2} parent=5 // pred_fallthru
        _
      %p163 = scmp.le.s32.totalorder 1, %s13
      %p164 = scmp.lt.s32.totalorder %s13, 17
      %p165 = pnand %p163, %p164
      %p166 = pneg %p165
      // Predicated region
      $region25: #{convlstm_forward.2} parent=5 // pred_check
        _
      $region26: #{convlstm_forward.2} parent=5 // pred_check_branch
        %168 = sbr.rel (%p165) target = $region28
      $region27: #{convlstm_forward.2} parent=5 // pred_region
        %s169 = ssub.s32 %s13, 1
        %s170 = smul.u32 32, %s22
        %p171 = scmp.lt.s32.totalorder %s23, 7
        %s172 = scalar_select %p171, %s23, 7
        %p173 = scmp.lt.s32.totalorder %s170, 63
        %s174 = scalar_select %p173, %s170, 63
        %s175 = smul.addr %s172, 64
        %s176 = sadd.s32 %s174, %s175
        %s177 = smul.addr %s176, 8
        %s178 = scalar_lea.vmem %s0, %s177
        %p179 = pneg %p53
        %p180 = pneg %p50
        %p181 = pneg %p74
        %p182 = pneg %p71
        %p183 = pneg %p102
        %p184 = pneg %p99
        %s185 = smul.u32 32, %s22
        %p186 = scmp.lt.s32.totalorder %s23, 7
        %s187 = scalar_select %p186, %s23, 7
        %p188 = scmp.lt.s32.totalorder %s185, 63
        %s189 = scalar_select %p188, %s185, 63
        %s190 = smul.addr %s187, 64
        %s191 = sadd.s32 %s189, %s190
        %s192 = smul.addr %s191, 8
        %s193 = scalar_lea.vmem %s2, %s192
        %p194 = pneg %p128
        %p195 = pneg %p125
        %s196 = sand.u32 %s115, 1
        %s197 = scalar_lea.sflag [#allocation4], %s196
        %s198 = sand.u32 %s115, 1
        %s199 = smul.addr %s198, 256
        %s200 = scalar_lea.vmem [#allocation3], %s199
        %s201 = smul.u32 32, %s22
        %p202 = scmp.lt.s32.totalorder %s23, 7
        %s203 = scalar_select %p202, %s23, 7
        %p204 = scmp.lt.s32.totalorder %s201, 63
        %s205 = scalar_select %p204, %s201, 63
        %s206 = smul.addr %s203, 64
        %s207 = sadd.s32 %s205, %s206
        %s208 = smul.addr %s207, 8
        %s209 = scalar_lea.vmem %s0, %s208
        %s210 = smul.u32 32, %s22
        %s211 = smul.u32 32, %s22
        %p212 = scmp.lt.s32.totalorder %s23, 7
        %s213 = scalar_select %p212, %s23, 7
        %p214 = scmp.lt.s32.totalorder %s211, 63
        %s215 = scalar_select %p214, %s211, 63
        %s216 = smul.addr %s213, 64
        %s217 = sadd.s32 %s215, %s216
        %s218 = smul.addr %s217, 8
        %s219 = scalar_lea.vmem %s2, %s218
        %s220 = smul.u32 32, %s22
        %s221 = smul.u32 32, %s22
        %p222 = scmp.eq.s32.totalorder %s23, 0
        // Predicated region
        $region29: #{convlstm_forward.2} parent=27 // pred_check
          %p223 = pneg %p222
        $region30: #{convlstm_forward.2} parent=27 // pred_check_branch
          %225 = sbr.rel (%p223) target = $region32
        $region31: #{convlstm_forward.2} parent=27 // pred_region
          %vm226 = vcmask 261120
          %227 = vst.msk [vmem:[#allocation2] sm:$0xff] %vm226, 0.0
          %228 = vst.msk [vmem:[#allocation2 + $0x8] sm:$0xff] %vm226, 0.0
          %vm229 = vcmask 254976
          %230 = vst.msk [vmem:[#allocation2 + $0x10] sm:$0x3] %vm229, 0.0
          %231 = vst.msk [vmem:[#allocation2 + $0x18] sm:$0xff] %vm226, 0.0
          %232 = vst.msk [vmem:[#allocation2 + $0x20] sm:$0xff] %vm226, 0.0
          %233 = vst.msk [vmem:[#allocation2 + $0x28] sm:$0x3] %vm229, 0.0
          %234 = vst.msk [vmem:[#allocation2 + $0x30] sm:$0xff] %vm226, 0.0
          %235 = vst.msk [vmem:[#allocation2 + $0x38] sm:$0xff] %vm226, 0.0
          %236 = vst.msk [vmem:[#allocation2 + $0x40] sm:$0x3] %vm229, 0.0
          %237 = vst.msk [vmem:[#allocation2 + $0x48] sm:$0xff] %vm226, 0.0
          %238 = vst.msk [vmem:[#allocation2 + $0x50] sm:$0xff] %vm226, 0.0
          %239 = vst.msk [vmem:[#allocation2 + $0x58] sm:$0x3] %vm229, 0.0
          %240 = vst.msk [vmem:[#allocation2 + $0x60] sm:$0xff] %vm226, 0.0
          %241 = vst.msk [vmem:[#allocation2 + $0x68] sm:$0xff] %vm226, 0.0
          %242 = vst.msk [vmem:[#allocation2 + $0x70] sm:$0x3] %vm229, 0.0
          %243 = vst.msk [vmem:[#allocation2 + $0x78] sm:$0xff] %vm226, 0.0
          %244 = vst.msk [vmem:[#allocation2 + $0x80] sm:$0xff] %vm226, 0.0
          %245 = vst.msk [vmem:[#allocation2 + $0x88] sm:$0x3] %vm229, 0.0
          %246 = vst.msk [vmem:[#allocation2 + $0x90] sm:$0xff] %vm226, 0.0
          %247 = vst.msk [vmem:[#allocation2 + $0x98] sm:$0xff] %vm226, 0.0
          %248 = vst.msk [vmem:[#allocation2 + $0xa0] sm:$0x3] %vm229, 0.0
          %249 = vst.msk [vmem:[#allocation2 + $0xa8] sm:$0xff] %vm226, 0.0
          %250 = vst.msk [vmem:[#allocation2 + $0xb0] sm:$0xff] %vm226, 0.0
          %251 = vst.msk [vmem:[#allocation2 + $0xb8] sm:$0x3] %vm229, 0.0
          %252 = vst.msk [vmem:[#allocation2 + $0xc0] sm:$0xff] %vm226, 0.0
          %253 = vst.msk [vmem:[#allocation2 + $0xc8] sm:$0xff] %vm226, 0.0
          %254 = vst.msk [vmem:[#allocation2 + $0xd0] sm:$0x3] %vm229, 0.0
          %255 = vst.msk [vmem:[#allocation2 + $0xd8] sm:$0xff] %vm226, 0.0
          %256 = vst.msk [vmem:[#allocation2 + $0xe0] sm:$0xff] %vm226, 0.0
          %257 = vst.msk [vmem:[#allocation2 + $0xe8] sm:$0x3] %vm229, 0.0
          %258 = vst.msk [vmem:[#allocation2 + $0xf0] sm:$0xff] %vm226, 0.0
          %259 = vst.msk [vmem:[#allocation2 + $0xf8] sm:$0xff] %vm226, 0.0
          %260 = vst.msk [vmem:[#allocation2 + $0x100] sm:$0x3] %vm229, 0.0
          %261 = vst.msk [vmem:[#allocation2 + $0x108] sm:$0xff] %vm226, 0.0
          %262 = vst.msk [vmem:[#allocation2 + $0x110] sm:$0xff] %vm226, 0.0
          %263 = vst.msk [vmem:[#allocation2 + $0x118] sm:$0x3] %vm229, 0.0
          %264 = vst.msk [vmem:[#allocation2 + $0x120] sm:$0xff] %vm226, 0.0
          %265 = vst.msk [vmem:[#allocation2 + $0x128] sm:$0xff] %vm226, 0.0
          %266 = vst.msk [vmem:[#allocation2 + $0x130] sm:$0x3] %vm229, 0.0
          %267 = vst.msk [vmem:[#allocation2 + $0x138] sm:$0xff] %vm226, 0.0
          %268 = vst.msk [vmem:[#allocation2 + $0x140] sm:$0xff] %vm226, 0.0
          %269 = vst.msk [vmem:[#allocation2 + $0x148] sm:$0x3] %vm229, 0.0
          %270 = vst.msk [vmem:[#allocation2 + $0x150] sm:$0xff] %vm226, 0.0
          %271 = vst.msk [vmem:[#allocation2 + $0x158] sm:$0xff] %vm226, 0.0
          %272 = vst.msk [vmem:[#allocation2 + $0x160] sm:$0x3] %vm229, 0.0
          %273 = vst.msk [vmem:[#allocation2 + $0x168] sm:$0xff] %vm226, 0.0
          %274 = vst.msk [vmem:[#allocation2 + $0x170] sm:$0xff] %vm226, 0.0
          %275 = vst.msk [vmem:[#allocation2 + $0x178] sm:$0x3] %vm229, 0.0
          %276 = vst.msk [vmem:[#allocation2 + $0x180] sm:$0xff] %vm226, 0.0
          %277 = vst.msk [vmem:[#allocation2 + $0x188] sm:$0xff] %vm226, 0.0
          %278 = vst.msk [vmem:[#allocation2 + $0x190] sm:$0x3] %vm229, 0.0
          %279 = vst.msk [vmem:[#allocation2 + $0x198] sm:$0xff] %vm226, 0.0
          %280 = vst.msk [vmem:[#allocation2 + $0x1a0] sm:$0xff] %vm226, 0.0
          %281 = vst.msk [vmem:[#allocation2 + $0x1a8] sm:$0x3] %vm229, 0.0
          %282 = vst.msk [vmem:[%s200] sm:$0xff] %vm226, 0.0
          %283 = vst.msk [vmem:[%s200 + $0x8] sm:$0xff] %vm226, 0.0
          %284 = vst.msk [vmem:[%s200 + $0x10] sm:$0xff] %vm226, 0.0
          %285 = vst.msk [vmem:[%s200 + $0x18] sm:$0xff] %vm226, 0.0
          %286 = vst.msk [vmem:[%s200 + $0x20] sm:$0xff] %vm226, 0.0
          %287 = vst.msk [vmem:[%s200 + $0x28] sm:$0xff] %vm226, 0.0
          %288 = vst.msk [vmem:[%s200 + $0x30] sm:$0xff] %vm226, 0.0
          %289 = vst.msk [vmem:[%s200 + $0x38] sm:$0xff] %vm226, 0.0
          %290 = vst.msk [vmem:[%s200 + $0x40] sm:$0xff] %vm226, 0.0
          %291 = vst.msk [vmem:[%s200 + $0x48] sm:$0xff] %vm226, 0.0
          %292 = vst.msk [vmem:[%s200 + $0x50] sm:$0xff] %vm226, 0.0
          %293 = vst.msk [vmem:[%s200 + $0x58] sm:$0xff] %vm226, 0.0
          %294 = vst.msk [vmem:[%s200 + $0x60] sm:$0xff] %vm226, 0.0
          %295 = vst.msk [vmem:[%s200 + $0x68] sm:$0xff] %vm226, 0.0
          %296 = vst.msk [vmem:[%s200 + $0x70] sm:$0xff] %vm226, 0.0
          %297 = vst.msk [vmem:[%s200 + $0x78] sm:$0xff] %vm226, 0.0
          %298 = vst.msk [vmem:[%s200 + $0x80] sm:$0xff] %vm226, 0.0
          %299 = vst.msk [vmem:[%s200 + $0x88] sm:$0xff] %vm226, 0.0
          %300 = vst.msk [vmem:[%s200 + $0x90] sm:$0xff] %vm226, 0.0
          %301 = vst.msk [vmem:[%s200 + $0x98] sm:$0xff] %vm226, 0.0
          %302 = vst.msk [vmem:[%s200 + $0xa0] sm:$0xff] %vm226, 0.0
          %303 = vst.msk [vmem:[%s200 + $0xa8] sm:$0xff] %vm226, 0.0
          %304 = vst.msk [vmem:[%s200 + $0xb0] sm:$0xff] %vm226, 0.0
          %305 = vst.msk [vmem:[%s200 + $0xb8] sm:$0xff] %vm226, 0.0
          %306 = vst.msk [vmem:[%s200 + $0xc0] sm:$0xff] %vm226, 0.0
          %307 = vst.msk [vmem:[%s200 + $0xc8] sm:$0xff] %vm226, 0.0
          %308 = vst.msk [vmem:[%s200 + $0xd0] sm:$0xff] %vm226, 0.0
          %309 = vst.msk [vmem:[%s200 + $0xd8] sm:$0xff] %vm226, 0.0
          %310 = vst.msk [vmem:[%s200 + $0xe0] sm:$0xff] %vm226, 0.0
          %311 = vst.msk [vmem:[%s200 + $0xe8] sm:$0xff] %vm226, 0.0
          %312 = vst.msk [vmem:[%s200 + $0xf0] sm:$0xff] %vm226, 0.0
          %313 = vst.msk [vmem:[%s200 + $0xf8] sm:$0xff] %vm226, 0.0
        $region32: #{convlstm_forward.2} parent=27 // pred_fallthru
          _
        %v314 = vld [vmem:[%s209] sm:$0xff]
        %v315 = vld [vmem:[%s209 + $0x8] sm:$0xff]
        %v316 = vld [vmem:[%s209 + $0x10] sm:$0xff]
        %v317 = vld [vmem:[%s209 + $0x18] sm:$0xff]
        %v318 = vld [vmem:[%s209 + $0x20] sm:$0xff]
        %v319 = vld [vmem:[%s209 + $0x28] sm:$0xff]
        %v320 = vld [vmem:[%s209 + $0x30] sm:$0xff]
        %v321 = vld [vmem:[%s209 + $0x38] sm:$0xff]
        %v322 = vld [vmem:[%s209 + $0x40] sm:$0xff]
        %v323 = vld [vmem:[%s209 + $0x48] sm:$0xff]
        %v324 = vld [vmem:[%s209 + $0x50] sm:$0xff]
        %v325 = vld [vmem:[%s209 + $0x58] sm:$0xff]
        %v326 = vld [vmem:[%s209 + $0x60] sm:$0xff]
        %v327 = vld [vmem:[%s209 + $0x68] sm:$0xff]
        %v328 = vld [vmem:[%s209 + $0x70] sm:$0xff]
        %v329 = vld [vmem:[%s209 + $0x78] sm:$0xff]
        %v330 = vld [vmem:[%s209 + $0x80] sm:$0xff]
        %v331 = vld [vmem:[%s209 + $0x88] sm:$0xff]
        %v332 = vld [vmem:[%s209 + $0x90] sm:$0xff]
        %v333 = vld [vmem:[%s209 + $0x98] sm:$0xff]
        %v334 = vld [vmem:[%s209 + $0xa0] sm:$0xff]
        %v335 = vld [vmem:[%s209 + $0xa8] sm:$0xff]
        %v336 = vld [vmem:[%s209 + $0xb0] sm:$0xff]
        %v337 = vld [vmem:[%s209 + $0xb8] sm:$0xff]
        %v338 = vld [vmem:[%s209 + $0xc0] sm:$0xff]
        %v339 = vld [vmem:[%s209 + $0xc8] sm:$0xff]
        %v340 = vld [vmem:[%s209 + $0xd0] sm:$0xff]
        %v341 = vld [vmem:[%s209 + $0xd8] sm:$0xff]
        %v342 = vld [vmem:[%s209 + $0xe0] sm:$0xff]
        %v343 = vld [vmem:[%s209 + $0xe8] sm:$0xff]
        %v344 = vld [vmem:[%s209 + $0xf0] sm:$0xff]
        %v345 = vld [vmem:[%s209 + $0xf8] sm:$0xff]
        %v346 = vld [vmem:[#allocation2] sm:$0xff]
        %v347 = vld [vmem:[#allocation2 + $0x8] sm:$0xff]
        %v348 = vld [vmem:[#allocation2 + $0x18] sm:$0xff]
        %v349 = vld [vmem:[#allocation2 + $0x20] sm:$0xff]
        %v350 = vld [vmem:[#allocation2 + $0x30] sm:$0xff]
        %v351 = vld [vmem:[#allocation2 + $0x38] sm:$0xff]
        %v352 = vld [vmem:[#allocation2 + $0x48] sm:$0xff]
        %v353 = vld [vmem:[#allocation2 + $0x50] sm:$0xff]
        %v354 = vld [vmem:[#allocation2 + $0x60] sm:$0xff]
        %v355 = vld [vmem:[#allocation2 + $0x68] sm:$0xff]
        %v356 = vld [vmem:[#allocation2 + $0x78] sm:$0xff]
        %v357 = vld [vmem:[#allocation2 + $0x80] sm:$0xff]
        %v358 = vld [vmem:[#allocation2 + $0x90] sm:$0xff]
        %v359 = vld [vmem:[#allocation2 + $0x98] sm:$0xff]
        %v360 = vld [vmem:[#allocation2 + $0xa8] sm:$0xff]
        %v361 = vld [vmem:[#allocation2 + $0xb0] sm:$0xff]
        %v362 = vld [vmem:[#allocation2 + $0xc0] sm:$0xff]
        %v363 = vld [vmem:[#allocation2 + $0xc8] sm:$0xff]
        %v364 = vld [vmem:[#allocation2 + $0xd8] sm:$0xff]
        %v365 = vld [vmem:[#allocation2 + $0xe0] sm:$0xff]
        %v366 = vld [vmem:[#allocation2 + $0xf0] sm:$0xff]
        %v367 = vld [vmem:[#allocation2 + $0xf8] sm:$0xff]
        %v368 = vld [vmem:[#allocation2 + $0x108] sm:$0xff]
        %v369 = vld [vmem:[#allocation2 + $0x110] sm:$0xff]
        %v370 = vld [vmem:[#allocation2 + $0x120] sm:$0xff]
        %v371 = vld [vmem:[#allocation2 + $0x128] sm:$0xff]
        %v372 = vld [vmem:[#allocation2 + $0x138] sm:$0xff]
        %v373 = vld [vmem:[#allocation2 + $0x140] sm:$0xff]
        %v374 = vld [vmem:[#allocation2 + $0x150] sm:$0xff]
        %v375 = vld [vmem:[#allocation2 + $0x158] sm:$0xff]
        %v376 = vld [vmem:[#allocation2 + $0x168] sm:$0xff]
        %v377 = vld [vmem:[#allocation2 + $0x170] sm:$0xff]
        %v378 = vld [vmem:[%s1] sm:$0xff]
        %v379 = vld [vmem:[%s1 + $0x8] sm:$0xff]
        %v380 = vld [vmem:[%s1 + $0x10] sm:$0xff]
        %v381 = vld [vmem:[%s1 + $0x18] sm:$0xff]
        %vm382 = vcmask 261120
        %v384 = vsel %vm382, %v346, 0
        %v387 = vsel %vm382, %v347, 0
        %v390 = vsel %vm382, %v348, 0
        %v393 = vsel %vm382, %v349, 0
        %v396 = vsel %vm382, %v350, 0
        %v399 = vsel %vm382, %v351, 0
        %v402 = vsel %vm382, %v352, 0
        %v405 = vsel %vm382, %v353, 0
        %v408 = vsel %vm382, %v354, 0
        %v411 = vsel %vm382, %v355, 0
        %v414 = vsel %vm382, %v356, 0
        %v417 = vsel %vm382, %v357, 0
        %v420 = vsel %vm382, %v358, 0
        %v423 = vsel %vm382, %v359, 0
        %v426 = vsel %vm382, %v360, 0
        %v429 = vsel %vm382, %v361, 0
        %v432 = vsel %vm382, %v362, 0
        %v435 = vsel %vm382, %v363, 0
        %v438 = vsel %vm382, %v364, 0
        %v441 = vsel %vm382, %v365, 0
        %v444 = vsel %vm382, %v366, 0
        %v447 = vsel %vm382, %v367, 0
        %v450 = vsel %vm382, %v368, 0
        %v453 = vsel %vm382, %v369, 0
        %v456 = vsel %vm382, %v370, 0
        %v459 = vsel %vm382, %v371, 0
        %v462 = vsel %vm382, %v372, 0
        %v465 = vsel %vm382, %v373, 0
        %v468 = vsel %vm382, %v374, 0
        %v471 = vsel %vm382, %v375, 0
        %v474 = vsel %vm382, %v376, 0
        %v477 = vsel %vm382, %v377, 0
        %479 = vmatpush.msra.mxu0 0.0
        %480 = vmatpush.msra.mxu0 0.0
        %481 = vmatpush.msra.mxu0 0.0
        %482 = vmatpush.msra.mxu0 0.0
        %483 = vmatpush.msra.mxu0 0.0
        %484 = vmatpush.msra.mxu0 0.0
        %485 = vmatpush.msra.mxu0 0.0
        %486 = vmatpush.msra.mxu0 0.0
        %487 = vmatpush.msra.mxu0 0.0
        %488 = vmatpush.msra.mxu0 0.0
        %489 = vmatpush.msra.mxu0 0.0
        %490 = vmatpush.msra.mxu0 0.0
        %491 = vmatpush.msra.mxu0 %v381
        %492 = vmatpush.msra.mxu0 %v380
        %493 = vmatpush.msra.mxu0 %v379
        %494 = vmatpush.msra.mxu0 %v378
        %495 = vmatmul.f32.gmra.mxu0 %v384
        %v496 = vpop.f32.mrf.mxu0
        %v497 = vadd.f32 0.0, %v496
        %498 = vmatmul.f32.gmra.mxu0 %v387
        %v499 = vpop.f32.mrf.mxu0
        %v500 = vadd.f32 0.0, %v499
        %501 = vmatmul.f32.gmra.mxu0 %v390
        %v502 = vpop.f32.mrf.mxu0
        %v503 = vadd.f32 0.0, %v502
        %504 = vmatmul.f32.gmra.mxu0 %v393
        %v505 = vpop.f32.mrf.mxu0
        %v506 = vadd.f32 0.0, %v505
        %507 = vmatmul.f32.gmra.mxu0 %v396
        %v508 = vpop.f32.mrf.mxu0
        %v509 = vadd.f32 0.0, %v508
        %510 = vmatmul.f32.gmra.mxu0 %v399
        %v511 = vpop.f32.mrf.mxu0
        %v512 = vadd.f32 0.0, %v511
        %513 = vmatmul.f32.gmra.mxu0 %v402
        %v514 = vpop.f32.mrf.mxu0
        %v515 = vadd.f32 0.0, %v514
        %516 = vmatmul.f32.gmra.mxu0 %v405
        %v517 = vpop.f32.mrf.mxu0
        %v518 = vadd.f32 0.0, %v517
        %519 = vmatmul.f32.gmra.mxu0 %v408
        %v520 = vpop.f32.mrf.mxu0
        %v521 = vadd.f32 0.0, %v520
        %522 = vmatmul.f32.gmra.mxu0 %v411
        %v523 = vpop.f32.mrf.mxu0
        %v524 = vadd.f32 0.0, %v523
        %525 = vmatmul.f32.gmra.mxu0 %v414
        %v526 = vpop.f32.mrf.mxu0
        %v527 = vadd.f32 0.0, %v526
        %528 = vmatmul.f32.gmra.mxu0 %v417
        %v529 = vpop.f32.mrf.mxu0
        %v530 = vadd.f32 0.0, %v529
        %531 = vmatmul.f32.gmra.mxu0 %v420
        %v532 = vpop.f32.mrf.mxu0
        %v533 = vadd.f32 0.0, %v532
        %534 = vmatmul.f32.gmra.mxu0 %v423
        %v535 = vpop.f32.mrf.mxu0
        %v536 = vadd.f32 0.0, %v535
        %537 = vmatmul.f32.gmra.mxu0 %v426
        %v538 = vpop.f32.mrf.mxu0
        %v539 = vadd.f32 0.0, %v538
        %540 = vmatmul.f32.gmra.mxu0 %v429
        %v541 = vpop.f32.mrf.mxu0
        %v542 = vadd.f32 0.0, %v541
        %543 = vmatmul.f32.gmra.mxu0 %v432
        %v544 = vpop.f32.mrf.mxu0
        %v545 = vadd.f32 0.0, %v544
        %546 = vmatmul.f32.gmra.mxu0 %v435
        %v547 = vpop.f32.mrf.mxu0
        %v548 = vadd.f32 0.0, %v547
        %549 = vmatmul.f32.gmra.mxu0 %v438
        %v550 = vpop.f32.mrf.mxu0
        %v551 = vadd.f32 0.0, %v550
        %552 = vmatmul.f32.gmra.mxu0 %v441
        %v553 = vpop.f32.mrf.mxu0
        %v554 = vadd.f32 0.0, %v553
        %555 = vmatmul.f32.gmra.mxu0 %v444
        %v556 = vpop.f32.mrf.mxu0
        %v557 = vadd.f32 0.0, %v556
        %558 = vmatmul.f32.gmra.mxu0 %v447
        %v559 = vpop.f32.mrf.mxu0
        %v560 = vadd.f32 0.0, %v559
        %561 = vmatmul.f32.gmra.mxu0 %v450
        %v562 = vpop.f32.mrf.mxu0
        %v563 = vadd.f32 0.0, %v562
        %564 = vmatmul.f32.gmra.mxu0 %v453
        %v565 = vpop.f32.mrf.mxu0
        %v566 = vadd.f32 0.0, %v565
        %567 = vmatmul.f32.gmra.mxu0 %v456
        %v568 = vpop.f32.mrf.mxu0
        %v569 = vadd.f32 0.0, %v568
        %570 = vmatmul.f32.gmra.mxu0 %v459
        %v571 = vpop.f32.mrf.mxu0
        %v572 = vadd.f32 0.0, %v571
        %573 = vmatmul.f32.gmra.mxu0 %v462
        %v574 = vpop.f32.mrf.mxu0
        %v575 = vadd.f32 0.0, %v574
        %576 = vmatmul.f32.gmra.mxu0 %v465
        %v577 = vpop.f32.mrf.mxu0
        %v578 = vadd.f32 0.0, %v577
        %579 = vmatmul.f32.gmra.mxu0 %v468
        %v580 = vpop.f32.mrf.mxu0
        %v581 = vadd.f32 0.0, %v580
        %582 = vmatmul.f32.gmra.mxu0 %v471
        %v583 = vpop.f32.mrf.mxu0
        %v584 = vadd.f32 0.0, %v583
        %585 = vmatmul.f32.gmra.mxu0 %v474
        %v586 = vpop.f32.mrf.mxu0
        %v587 = vadd.f32 0.0, %v586
        %588 = vmatmul.f32.gmra.mxu0 %v477
        %v589 = vpop.f32.mrf.mxu0
        %v590 = vadd.f32 0.0, %v589
        %591 = vdwg.mxu0
        %v592 = vadd.f32 %v314, %v497
        %v593 = vadd.f32 %v315, %v500
        %v594 = vadd.f32 %v316, %v503
        %v595 = vadd.f32 %v317, %v506
        %v596 = vadd.f32 %v318, %v509
        %v597 = vadd.f32 %v319, %v512
        %v598 = vadd.f32 %v320, %v515
        %v599 = vadd.f32 %v321, %v518
        %v600 = vadd.f32 %v322, %v521
        %v601 = vadd.f32 %v323, %v524
        %v602 = vadd.f32 %v324, %v527
        %v603 = vadd.f32 %v325, %v530
        %v604 = vadd.f32 %v326, %v533
        %v605 = vadd.f32 %v327, %v536
        %v606 = vadd.f32 %v328, %v539
        %v607 = vadd.f32 %v329, %v542
        %v608 = vadd.f32 %v330, %v545
        %v609 = vadd.f32 %v331, %v548
        %v610 = vadd.f32 %v332, %v551
        %v611 = vadd.f32 %v333, %v554
        %v612 = vadd.f32 %v334, %v557
        %v613 = vadd.f32 %v335, %v560
        %v614 = vadd.f32 %v336, %v563
        %v615 = vadd.f32 %v337, %v566
        %v616 = vadd.f32 %v338, %v569
        %v617 = vadd.f32 %v339, %v572
        %v618 = vadd.f32 %v340, %v575
        %v619 = vadd.f32 %v341, %v578
        %v620 = vadd.f32 %v342, %v581
        %v621 = vadd.f32 %v343, %v584
        %v622 = vadd.f32 %v344, %v587
        %v623 = vadd.f32 %v345, %v590
        %v624 = vld [vmem:[#allocation2 + $0x1] sm:$0xff]
        %v625 = vld [vmem:[#allocation2 + $0x9] sm:$0xff]
        %v626 = vld [vmem:[#allocation2 + $0x19] sm:$0xff]
        %v627 = vld [vmem:[#allocation2 + $0x21] sm:$0xff]
        %v628 = vld [vmem:[#allocation2 + $0x31] sm:$0xff]
        %v629 = vld [vmem:[#allocation2 + $0x39] sm:$0xff]
        %v630 = vld [vmem:[#allocation2 + $0x49] sm:$0xff]
        %v631 = vld [vmem:[#allocation2 + $0x51] sm:$0xff]
        %v632 = vld [vmem:[#allocation2 + $0x61] sm:$0xff]
        %v633 = vld [vmem:[#allocation2 + $0x69] sm:$0xff]
        %v634 = vld [vmem:[#allocation2 + $0x79] sm:$0xff]
        %v635 = vld [vmem:[#allocation2 + $0x81] sm:$0xff]
        %v636 = vld [vmem:[#allocation2 + $0x91] sm:$0xff]
        %v637 = vld [vmem:[#allocation2 + $0x99] sm:$0xff]
        %v638 = vld [vmem:[#allocation2 + $0xa9] sm:$0xff]
        %v639 = vld [vmem:[#allocation2 + $0xb1] sm:$0xff]
        %v640 = vld [vmem:[#allocation2 + $0xc1] sm:$0xff]
        %v641 = vld [vmem:[#allocation2 + $0xc9] sm:$0xff]
        %v642 = vld [vmem:[#allocation2 + $0xd9] sm:$0xff]
        %v643 = vld [vmem:[#allocation2 + $0xe1] sm:$0xff]
        %v644 = vld [vmem:[#allocation2 + $0xf1] sm:$0xff]
        %v645 = vld [vmem:[#allocation2 + $0xf9] sm:$0xff]
        %v646 = vld [vmem:[#allocation2 + $0x109] sm:$0xff]
        %v647 = vld [vmem:[#allocation2 + $0x111] sm:$0xff]
        %v648 = vld [vmem:[#allocation2 + $0x121] sm:$0xff]
        %v649 = vld [vmem:[#allocation2 + $0x129] sm:$0xff]
        %v650 = vld [vmem:[#allocation2 + $0x139] sm:$0xff]
        %v651 = vld [vmem:[#allocation2 + $0x141] sm:$0xff]
        %v652 = vld [vmem:[#allocation2 + $0x151] sm:$0xff]
        %v653 = vld [vmem:[#allocation2 + $0x159] sm:$0xff]
        %v654 = vld [vmem:[#allocation2 + $0x169] sm:$0xff]
        %v655 = vld [vmem:[#allocation2 + $0x171] sm:$0xff]
        %s656 = scalar_lea.vmem %s1, 32
        %v657 = vld [vmem:[%s656] sm:$0xff]
        %v658 = vld [vmem:[%s656 + $0x8] sm:$0xff]
        %v659 = vld [vmem:[%s656 + $0x10] sm:$0xff]
        %v660 = vld [vmem:[%s656 + $0x18] sm:$0xff]
        %v662 = vsel %vm382, %v624, 0
        %v665 = vsel %vm382, %v625, 0
        %v668 = vsel %vm382, %v626, 0
        %v671 = vsel %vm382, %v627, 0
        %v674 = vsel %vm382, %v628, 0
        %v677 = vsel %vm382, %v629, 0
        %v680 = vsel %vm382, %v630, 0
        %v683 = vsel %vm382, %v631, 0
        %v686 = vsel %vm382, %v632, 0
        %v689 = vsel %vm382, %v633, 0
        %v692 = vsel %vm382, %v634, 0
        %v695 = vsel %vm382, %v635, 0
        %v698 = vsel %vm382, %v636, 0
        %v701 = vsel %vm382, %v637, 0
        %v704 = vsel %vm382, %v638, 0
        %v707 = vsel %vm382, %v639, 0
        %v710 = vsel %vm382, %v640, 0
        %v713 = vsel %vm382, %v641, 0
        %v716 = vsel %vm382, %v642, 0
        %v719 = vsel %vm382, %v643, 0
        %v722 = vsel %vm382, %v644, 0
        %v725 = vsel %vm382, %v645, 0
        %v728 = vsel %vm382, %v646, 0
        %v731 = vsel %vm382, %v647, 0
        %v734 = vsel %vm382, %v648, 0
        %v737 = vsel %vm382, %v649, 0
        %v740 = vsel %vm382, %v650, 0
        %v743 = vsel %vm382, %v651, 0
        %v746 = vsel %vm382, %v652, 0
        %v749 = vsel %vm382, %v653, 0
        %v752 = vsel %vm382, %v654, 0
        %v755 = vsel %vm382, %v655, 0
        %757 = vmatpush.msra.mxu0 0.0
        %758 = vmatpush.msra.mxu0 0.0
        %759 = vmatpush.msra.mxu0 0.0
        %760 = vmatpush.msra.mxu0 0.0
        %761 = vmatpush.msra.mxu0 0.0
        %762 = vmatpush.msra.mxu0 0.0
        %763 = vmatpush.msra.mxu0 0.0
        %764 = vmatpush.msra.mxu0 0.0
        %765 = vmatpush.msra.mxu0 0.0
        %766 = vmatpush.msra.mxu0 0.0
        %767 = vmatpush.msra.mxu0 0.0
        %768 = vmatpush.msra.mxu0 0.0
        %769 = vmatpush.msra.mxu0 %v660
        %770 = vmatpush.msra.mxu0 %v659
        %771 = vmatpush.msra.mxu0 %v658
        %772 = vmatpush.msra.mxu0 %v657
        %773 = vmatmul.f32.gmra.mxu0 %v662
        %v774 = vpop.f32.mrf.mxu0
        %v775 = vadd.f32 0.0, %v774
        %776 = vmatmul.f32.gmra.mxu0 %v665
        %v777 = vpop.f32.mrf.mxu0
        %v778 = vadd.f32 0.0, %v777
        %779 = vmatmul.f32.gmra.mxu0 %v668
        %v780 = vpop.f32.mrf.mxu0
        %v781 = vadd.f32 0.0, %v780
        %782 = vmatmul.f32.gmra.mxu0 %v671
        %v783 = vpop.f32.mrf.mxu0
        %v784 = vadd.f32 0.0, %v783
        %785 = vmatmul.f32.gmra.mxu0 %v674
        %v786 = vpop.f32.mrf.mxu0
        %v787 = vadd.f32 0.0, %v786
        %788 = vmatmul.f32.gmra.mxu0 %v677
        %v789 = vpop.f32.mrf.mxu0
        %v790 = vadd.f32 0.0, %v789
        %791 = vmatmul.f32.gmra.mxu0 %v680
        %v792 = vpop.f32.mrf.mxu0
        %v793 = vadd.f32 0.0, %v792
        %794 = vmatmul.f32.gmra.mxu0 %v683
        %v795 = vpop.f32.mrf.mxu0
        %v796 = vadd.f32 0.0, %v795
        %797 = vmatmul.f32.gmra.mxu0 %v686
        %v798 = vpop.f32.mrf.mxu0
        %v799 = vadd.f32 0.0, %v798
        %800 = vmatmul.f32.gmra.mxu0 %v689
        %v801 = vpop.f32.mrf.mxu0
        %v802 = vadd.f32 0.0, %v801
        %803 = vmatmul.f32.gmra.mxu0 %v692
        %v804 = vpop.f32.mrf.mxu0
        %v805 = vadd.f32 0.0, %v804
        %806 = vmatmul.f32.gmra.mxu0 %v695
        %v807 = vpop.f32.mrf.mxu0
        %v808 = vadd.f32 0.0, %v807
        %809 = vmatmul.f32.gmra.mxu0 %v698
        %v810 = vpop.f32.mrf.mxu0
        %v811 = vadd.f32 0.0, %v810
        %812 = vmatmul.f32.gmra.mxu0 %v701
        %v813 = vpop.f32.mrf.mxu0
        %v814 = vadd.f32 0.0, %v813
        %815 = vmatmul.f32.gmra.mxu0 %v704
        %v816 = vpop.f32.mrf.mxu0
        %v817 = vadd.f32 0.0, %v816
        %818 = vmatmul.f32.gmra.mxu0 %v707
        %v819 = vpop.f32.mrf.mxu0
        %v820 = vadd.f32 0.0, %v819
        %821 = vmatmul.f32.gmra.mxu0 %v710
        %v822 = vpop.f32.mrf.mxu0
        %v823 = vadd.f32 0.0, %v822
        %824 = vmatmul.f32.gmra.mxu0 %v713
        %v825 = vpop.f32.mrf.mxu0
        %v826 = vadd.f32 0.0, %v825
        %827 = vmatmul.f32.gmra.mxu0 %v716
        %v828 = vpop.f32.mrf.mxu0
        %v829 = vadd.f32 0.0, %v828
        %830 = vmatmul.f32.gmra.mxu0 %v719
        %v831 = vpop.f32.mrf.mxu0
        %v832 = vadd.f32 0.0, %v831
        %833 = vmatmul.f32.gmra.mxu0 %v722
        %v834 = vpop.f32.mrf.mxu0
        %v835 = vadd.f32 0.0, %v834
        %836 = vmatmul.f32.gmra.mxu0 %v725
        %v837 = vpop.f32.mrf.mxu0
        %v838 = vadd.f32 0.0, %v837
        %839 = vmatmul.f32.gmra.mxu0 %v728
        %v840 = vpop.f32.mrf.mxu0
        %v841 = vadd.f32 0.0, %v840
        %842 = vmatmul.f32.gmra.mxu0 %v731
        %v843 = vpop.f32.mrf.mxu0
        %v844 = vadd.f32 0.0, %v843
        %845 = vmatmul.f32.gmra.mxu0 %v734
        %v846 = vpop.f32.mrf.mxu0
        %v847 = vadd.f32 0.0, %v846
        %848 = vmatmul.f32.gmra.mxu0 %v737
        %v849 = vpop.f32.mrf.mxu0
        %v850 = vadd.f32 0.0, %v849
        %851 = vmatmul.f32.gmra.mxu0 %v740
        %v852 = vpop.f32.mrf.mxu0
        %v853 = vadd.f32 0.0, %v852
        %854 = vmatmul.f32.gmra.mxu0 %v743
        %v855 = vpop.f32.mrf.mxu0
        %v856 = vadd.f32 0.0, %v855
        %857 = vmatmul.f32.gmra.mxu0 %v746
        %v858 = vpop.f32.mrf.mxu0
        %v859 = vadd.f32 0.0, %v858
        %860 = vmatmul.f32.gmra.mxu0 %v749
        %v861 = vpop.f32.mrf.mxu0
        %v862 = vadd.f32 0.0, %v861
        %863 = vmatmul.f32.gmra.mxu0 %v752
        %v864 = vpop.f32.mrf.mxu0
        %v865 = vadd.f32 0.0, %v864
        %866 = vmatmul.f32.gmra.mxu0 %v755
        %v867 = vpop.f32.mrf.mxu0
        %v868 = vadd.f32 0.0, %v867
        %869 = vdwg.mxu0
        %v870 = vadd.f32 %v592, %v775
        %v871 = vadd.f32 %v593, %v778
        %v872 = vadd.f32 %v594, %v781
        %v873 = vadd.f32 %v595, %v784
        %v874 = vadd.f32 %v596, %v787
        %v875 = vadd.f32 %v597, %v790
        %v876 = vadd.f32 %v598, %v793
        %v877 = vadd.f32 %v599, %v796
        %v878 = vadd.f32 %v600, %v799
        %v879 = vadd.f32 %v601, %v802
        %v880 = vadd.f32 %v602, %v805
        %v881 = vadd.f32 %v603, %v808
        %v882 = vadd.f32 %v604, %v811
        %v883 = vadd.f32 %v605, %v814
        %v884 = vadd.f32 %v606, %v817
        %v885 = vadd.f32 %v607, %v820
        %v886 = vadd.f32 %v608, %v823
        %v887 = vadd.f32 %v609, %v826
        %v888 = vadd.f32 %v610, %v829
        %v889 = vadd.f32 %v611, %v832
        %v890 = vadd.f32 %v612, %v835
        %v891 = vadd.f32 %v613, %v838
        %v892 = vadd.f32 %v614, %v841
        %v893 = vadd.f32 %v615, %v844
        %v894 = vadd.f32 %v616, %v847
        %v895 = vadd.f32 %v617, %v850
        %v896 = vadd.f32 %v618, %v853
        %v897 = vadd.f32 %v619, %v856
        %v898 = vadd.f32 %v620, %v859
        %v899 = vadd.f32 %v621, %v862
        %v900 = vadd.f32 %v622, %v865
        %v901 = vadd.f32 %v623, %v868
        %v902 = vld [vmem:[#allocation2 + $0x2] sm:$0xff]
        %v903 = vld [vmem:[#allocation2 + $0xa] sm:$0xff]
        %v904 = vld [vmem:[#allocation2 + $0x1a] sm:$0xff]
        %v905 = vld [vmem:[#allocation2 + $0x22] sm:$0xff]
        %v906 = vld [vmem:[#allocation2 + $0x32] sm:$0xff]
        %v907 = vld [vmem:[#allocation2 + $0x3a] sm:$0xff]
        %v908 = vld [vmem:[#allocation2 + $0x4a] sm:$0xff]
        %v909 = vld [vmem:[#allocation2 + $0x52] sm:$0xff]
        %v910 = vld [vmem:[#allocation2 + $0x62] sm:$0xff]
        %v911 = vld [vmem:[#allocation2 + $0x6a] sm:$0xff]
        %v912 = vld [vmem:[#allocation2 + $0x7a] sm:$0xff]
        %v913 = vld [vmem:[#allocation2 + $0x82] sm:$0xff]
        %v914 = vld [vmem:[#allocation2 + $0x92] sm:$0xff]
        %v915 = vld [vmem:[#allocation2 + $0x9a] sm:$0xff]
        %v916 = vld [vmem:[#allocation2 + $0xaa] sm:$0xff]
        %v917 = vld [vmem:[#allocation2 + $0xb2] sm:$0xff]
        %v918 = vld [vmem:[#allocation2 + $0xc2] sm:$0xff]
        %v919 = vld [vmem:[#allocation2 + $0xca] sm:$0xff]
        %v920 = vld [vmem:[#allocation2 + $0xda] sm:$0xff]
        %v921 = vld [vmem:[#allocation2 + $0xe2] sm:$0xff]
        %v922 = vld [vmem:[#allocation2 + $0xf2] sm:$0xff]
        %v923 = vld [vmem:[#allocation2 + $0xfa] sm:$0xff]
        %v924 = vld [vmem:[#allocation2 + $0x10a] sm:$0xff]
        %v925 = vld [vmem:[#allocation2 + $0x112] sm:$0xff]
        %v926 = vld [vmem:[#allocation2 + $0x122] sm:$0xff]
        %v927 = vld [vmem:[#allocation2 + $0x12a] sm:$0xff]
        %v928 = vld [vmem:[#allocation2 + $0x13a] sm:$0xff]
        %v929 = vld [vmem:[#allocation2 + $0x142] sm:$0xff]
        %v930 = vld [vmem:[#allocation2 + $0x152] sm:$0xff]
        %v931 = vld [vmem:[#allocation2 + $0x15a] sm:$0xff]
        %v932 = vld [vmem:[#allocation2 + $0x16a] sm:$0xff]
        %v933 = vld [vmem:[#allocation2 + $0x172] sm:$0xff]
        %s934 = scalar_lea.vmem %s1, 64
        %v935 = vld [vmem:[%s934] sm:$0xff]
        %v936 = vld [vmem:[%s934 + $0x8] sm:$0xff]
        %v937 = vld [vmem:[%s934 + $0x10] sm:$0xff]
        %v938 = vld [vmem:[%s934 + $0x18] sm:$0xff]
        %v940 = vsel %vm382, %v902, 0
        %v943 = vsel %vm382, %v903, 0
        %v946 = vsel %vm382, %v904, 0
        %v949 = vsel %vm382, %v905, 0
        %v952 = vsel %vm382, %v906, 0
        %v955 = vsel %vm382, %v907, 0
        %v958 = vsel %vm382, %v908, 0
        %v961 = vsel %vm382, %v909, 0
        %v964 = vsel %vm382, %v910, 0
        %v967 = vsel %vm382, %v911, 0
        %v970 = vsel %vm382, %v912, 0
        %v973 = vsel %vm382, %v913, 0
        %v976 = vsel %vm382, %v914, 0
        %v979 = vsel %vm382, %v915, 0
        %v982 = vsel %vm382, %v916, 0
        %v985 = vsel %vm382, %v917, 0
        %v988 = vsel %vm382, %v918, 0
        %v991 = vsel %vm382, %v919, 0
        %v994 = vsel %vm382, %v920, 0
        %v997 = vsel %vm382, %v921, 0
        %v1000 = vsel %vm382, %v922, 0
        %v1003 = vsel %vm382, %v923, 0
        %v1006 = vsel %vm382, %v924, 0
        %v1009 = vsel %vm382, %v925, 0
        %v1012 = vsel %vm382, %v926, 0
        %v1015 = vsel %vm382, %v927, 0
        %v1018 = vsel %vm382, %v928, 0
        %v1021 = vsel %vm382, %v929, 0
        %v1024 = vsel %vm382, %v930, 0
        %v1027 = vsel %vm382, %v931, 0
        %v1030 = vsel %vm382, %v932, 0
        %v1033 = vsel %vm382, %v933, 0
        %1035 = vmatpush.msra.mxu0 0.0
        %1036 = vmatpush.msra.mxu0 0.0
        %1037 = vmatpush.msra.mxu0 0.0
        %1038 = vmatpush.msra.mxu0 0.0
        %1039 = vmatpush.msra.mxu0 0.0
        %1040 = vmatpush.msra.mxu0 0.0
        %1041 = vmatpush.msra.mxu0 0.0
        %1042 = vmatpush.msra.mxu0 0.0
        %1043 = vmatpush.msra.mxu0 0.0
        %1044 = vmatpush.msra.mxu0 0.0
        %1045 = vmatpush.msra.mxu0 0.0
        %1046 = vmatpush.msra.mxu0 0.0
        %1047 = vmatpush.msra.mxu0 %v938
        %1048 = vmatpush.msra.mxu0 %v937
        %1049 = vmatpush.msra.mxu0 %v936
        %1050 = vmatpush.msra.mxu0 %v935
        %1051 = vmatmul.f32.gmra.mxu0 %v940
        %v1052 = vpop.f32.mrf.mxu0
        %v1053 = vadd.f32 0.0, %v1052
        %1054 = vmatmul.f32.gmra.mxu0 %v943
        %v1055 = vpop.f32.mrf.mxu0
        %v1056 = vadd.f32 0.0, %v1055
        %1057 = vmatmul.f32.gmra.mxu0 %v946
        %v1058 = vpop.f32.mrf.mxu0
        %v1059 = vadd.f32 0.0, %v1058
        %1060 = vmatmul.f32.gmra.mxu0 %v949
        %v1061 = vpop.f32.mrf.mxu0
        %v1062 = vadd.f32 0.0, %v1061
        %1063 = vmatmul.f32.gmra.mxu0 %v952
        %v1064 = vpop.f32.mrf.mxu0
        %v1065 = vadd.f32 0.0, %v1064
        %1066 = vmatmul.f32.gmra.mxu0 %v955
        %v1067 = vpop.f32.mrf.mxu0
        %v1068 = vadd.f32 0.0, %v1067
        %1069 = vmatmul.f32.gmra.mxu0 %v958
        %v1070 = vpop.f32.mrf.mxu0
        %v1071 = vadd.f32 0.0, %v1070
        %1072 = vmatmul.f32.gmra.mxu0 %v961
        %v1073 = vpop.f32.mrf.mxu0
        %v1074 = vadd.f32 0.0, %v1073
        %1075 = vmatmul.f32.gmra.mxu0 %v964
        %v1076 = vpop.f32.mrf.mxu0
        %v1077 = vadd.f32 0.0, %v1076
        %1078 = vmatmul.f32.gmra.mxu0 %v967
        %v1079 = vpop.f32.mrf.mxu0
        %v1080 = vadd.f32 0.0, %v1079
        %1081 = vmatmul.f32.gmra.mxu0 %v970
        %v1082 = vpop.f32.mrf.mxu0
        %v1083 = vadd.f32 0.0, %v1082
        %1084 = vmatmul.f32.gmra.mxu0 %v973
        %v1085 = vpop.f32.mrf.mxu0
        %v1086 = vadd.f32 0.0, %v1085
        %1087 = vmatmul.f32.gmra.mxu0 %v976
        %v1088 = vpop.f32.mrf.mxu0
        %v1089 = vadd.f32 0.0, %v1088
        %1090 = vmatmul.f32.gmra.mxu0 %v979
        %v1091 = vpop.f32.mrf.mxu0
        %v1092 = vadd.f32 0.0, %v1091
        %1093 = vmatmul.f32.gmra.mxu0 %v982
        %v1094 = vpop.f32.mrf.mxu0
        %v1095 = vadd.f32 0.0, %v1094
        %1096 = vmatmul.f32.gmra.mxu0 %v985
        %v1097 = vpop.f32.mrf.mxu0
        %v1098 = vadd.f32 0.0, %v1097
        %1099 = vmatmul.f32.gmra.mxu0 %v988
        %v1100 = vpop.f32.mrf.mxu0
        %v1101 = vadd.f32 0.0, %v1100
        %1102 = vmatmul.f32.gmra.mxu0 %v991
        %v1103 = vpop.f32.mrf.mxu0
        %v1104 = vadd.f32 0.0, %v1103
        %1105 = vmatmul.f32.gmra.mxu0 %v994
        %v1106 = vpop.f32.mrf.mxu0
        %v1107 = vadd.f32 0.0, %v1106
        %1108 = vmatmul.f32.gmra.mxu0 %v997
        %v1109 = vpop.f32.mrf.mxu0
        %v1110 = vadd.f32 0.0, %v1109
        %1111 = vmatmul.f32.gmra.mxu0 %v1000
        %v1112 = vpop.f32.mrf.mxu0
        %v1113 = vadd.f32 0.0, %v1112
        %1114 = vmatmul.f32.gmra.mxu0 %v1003
        %v1115 = vpop.f32.mrf.mxu0
        %v1116 = vadd.f32 0.0, %v1115
        %1117 = vmatmul.f32.gmra.mxu0 %v1006
        %v1118 = vpop.f32.mrf.mxu0
        %v1119 = vadd.f32 0.0, %v1118
        %1120 = vmatmul.f32.gmra.mxu0 %v1009
        %v1121 = vpop.f32.mrf.mxu0
        %v1122 = vadd.f32 0.0, %v1121
        %1123 = vmatmul.f32.gmra.mxu0 %v1012
        %v1124 = vpop.f32.mrf.mxu0
        %v1125 = vadd.f32 0.0, %v1124
        %1126 = vmatmul.f32.gmra.mxu0 %v1015
        %v1127 = vpop.f32.mrf.mxu0
        %v1128 = vadd.f32 0.0, %v1127
        %1129 = vmatmul.f32.gmra.mxu0 %v1018
        %v1130 = vpop.f32.mrf.mxu0
        %v1131 = vadd.f32 0.0, %v1130
        %1132 = vmatmul.f32.gmra.mxu0 %v1021
        %v1133 = vpop.f32.mrf.mxu0
        %v1134 = vadd.f32 0.0, %v1133
        %1135 = vmatmul.f32.gmra.mxu0 %v1024
        %v1136 = vpop.f32.mrf.mxu0
        %v1137 = vadd.f32 0.0, %v1136
        %1138 = vmatmul.f32.gmra.mxu0 %v1027
        %v1139 = vpop.f32.mrf.mxu0
        %v1140 = vadd.f32 0.0, %v1139
        %1141 = vmatmul.f32.gmra.mxu0 %v1030
        %v1142 = vpop.f32.mrf.mxu0
        %v1143 = vadd.f32 0.0, %v1142
        %1144 = vmatmul.f32.gmra.mxu0 %v1033
        %v1145 = vpop.f32.mrf.mxu0
        %v1146 = vadd.f32 0.0, %v1145
        %1147 = vdwg.mxu0
        %v1148 = vadd.f32 %v870, %v1053
        %v1149 = vadd.f32 %v871, %v1056
        %v1150 = vadd.f32 %v872, %v1059
        %v1151 = vadd.f32 %v873, %v1062
        %v1152 = vadd.f32 %v874, %v1065
        %v1153 = vadd.f32 %v875, %v1068
        %v1154 = vadd.f32 %v876, %v1071
        %v1155 = vadd.f32 %v877, %v1074
        %v1156 = vadd.f32 %v878, %v1077
        %v1157 = vadd.f32 %v879, %v1080
        %v1158 = vadd.f32 %v880, %v1083
        %v1159 = vadd.f32 %v881, %v1086
        %v1160 = vadd.f32 %v882, %v1089
        %v1161 = vadd.f32 %v883, %v1092
        %v1162 = vadd.f32 %v884, %v1095
        %v1163 = vadd.f32 %v885, %v1098
        %v1164 = vadd.f32 %v886, %v1101
        %v1165 = vadd.f32 %v887, %v1104
        %v1166 = vadd.f32 %v888, %v1107
        %v1167 = vadd.f32 %v889, %v1110
        %v1168 = vadd.f32 %v890, %v1113
        %v1169 = vadd.f32 %v891, %v1116
        %v1170 = vadd.f32 %v892, %v1119
        %v1171 = vadd.f32 %v893, %v1122
        %v1172 = vadd.f32 %v894, %v1125
        %v1173 = vadd.f32 %v895, %v1128
        %v1174 = vadd.f32 %v896, %v1131
        %v1175 = vadd.f32 %v897, %v1134
        %v1176 = vadd.f32 %v898, %v1137
        %v1177 = vadd.f32 %v899, %v1140
        %v1178 = vadd.f32 %v900, %v1143
        %v1179 = vadd.f32 %v901, %v1146
        %s1180 = scalar_lea.vmem [#allocation2], 24
        %v1181 = vld [vmem:[%s1180] sm:$0xff]
        %v1182 = vld [vmem:[%s1180 + $0x8] sm:$0xff]
        %v1183 = vld [vmem:[%s1180 + $0x18] sm:$0xff]
        %v1184 = vld [vmem:[%s1180 + $0x20] sm:$0xff]
        %v1185 = vld [vmem:[%s1180 + $0x30] sm:$0xff]
        %v1186 = vld [vmem:[%s1180 + $0x38] sm:$0xff]
        %v1187 = vld [vmem:[%s1180 + $0x48] sm:$0xff]
        %v1188 = vld [vmem:[%s1180 + $0x50] sm:$0xff]
        %v1189 = vld [vmem:[%s1180 + $0x60] sm:$0xff]
        %v1190 = vld [vmem:[%s1180 + $0x68] sm:$0xff]
        %v1191 = vld [vmem:[%s1180 + $0x78] sm:$0xff]
        %v1192 = vld [vmem:[%s1180 + $0x80] sm:$0xff]
        %v1193 = vld [vmem:[%s1180 + $0x90] sm:$0xff]
        %v1194 = vld [vmem:[%s1180 + $0x98] sm:$0xff]
        %v1195 = vld [vmem:[%s1180 + $0xa8] sm:$0xff]
        %v1196 = vld [vmem:[%s1180 + $0xb0] sm:$0xff]
        %v1197 = vld [vmem:[%s1180 + $0xc0] sm:$0xff]
        %v1198 = vld [vmem:[%s1180 + $0xc8] sm:$0xff]
        %v1199 = vld [vmem:[%s1180 + $0xd8] sm:$0xff]
        %v1200 = vld [vmem:[%s1180 + $0xe0] sm:$0xff]
        %v1201 = vld [vmem:[%s1180 + $0xf0] sm:$0xff]
        %v1202 = vld [vmem:[%s1180 + $0xf8] sm:$0xff]
        %v1203 = vld [vmem:[%s1180 + $0x108] sm:$0xff]
        %v1204 = vld [vmem:[%s1180 + $0x110] sm:$0xff]
        %v1205 = vld [vmem:[%s1180 + $0x120] sm:$0xff]
        %v1206 = vld [vmem:[%s1180 + $0x128] sm:$0xff]
        %v1207 = vld [vmem:[%s1180 + $0x138] sm:$0xff]
        %v1208 = vld [vmem:[%s1180 + $0x140] sm:$0xff]
        %v1209 = vld [vmem:[%s1180 + $0x150] sm:$0xff]
        %v1210 = vld [vmem:[%s1180 + $0x158] sm:$0xff]
        %v1211 = vld [vmem:[%s1180 + $0x168] sm:$0xff]
        %v1212 = vld [vmem:[%s1180 + $0x170] sm:$0xff]
        %s1213 = scalar_lea.vmem %s1, 96
        %v1214 = vld [vmem:[%s1213] sm:$0xff]
        %v1215 = vld [vmem:[%s1213 + $0x8] sm:$0xff]
        %v1216 = vld [vmem:[%s1213 + $0x10] sm:$0xff]
        %v1217 = vld [vmem:[%s1213 + $0x18] sm:$0xff]
        %v1219 = vsel %vm382, %v1181, 0
        %v1222 = vsel %vm382, %v1182, 0
        %v1225 = vsel %vm382, %v1183, 0
        %v1228 = vsel %vm382, %v1184, 0
        %v1231 = vsel %vm382, %v1185, 0
        %v1234 = vsel %vm382, %v1186, 0
        %v1237 = vsel %vm382, %v1187, 0
        %v1240 = vsel %vm382, %v1188, 0
        %v1243 = vsel %vm382, %v1189, 0
        %v1246 = vsel %vm382, %v1190, 0
        %v1249 = vsel %vm382, %v1191, 0
        %v1252 = vsel %vm382, %v1192, 0
        %v1255 = vsel %vm382, %v1193, 0
        %v1258 = vsel %vm382, %v1194, 0
        %v1261 = vsel %vm382, %v1195, 0
        %v1264 = vsel %vm382, %v1196, 0
        %v1267 = vsel %vm382, %v1197, 0
        %v1270 = vsel %vm382, %v1198, 0
        %v1273 = vsel %vm382, %v1199, 0
        %v1276 = vsel %vm382, %v1200, 0
        %v1279 = vsel %vm382, %v1201, 0
        %v1282 = vsel %vm382, %v1202, 0
        %v1285 = vsel %vm382, %v1203, 0
        %v1288 = vsel %vm382, %v1204, 0
        %v1291 = vsel %vm382, %v1205, 0
        %v1294 = vsel %vm382, %v1206, 0
        %v1297 = vsel %vm382, %v1207, 0
        %v1300 = vsel %vm382, %v1208, 0
        %v1303 = vsel %vm382, %v1209, 0
        %v1306 = vsel %vm382, %v1210, 0
        %v1309 = vsel %vm382, %v1211, 0
        %v1312 = vsel %vm382, %v1212, 0
        %1314 = vmatpush.msra.mxu0 0.0
        %1315 = vmatpush.msra.mxu0 0.0
        %1316 = vmatpush.msra.mxu0 0.0
        %1317 = vmatpush.msra.mxu0 0.0
        %1318 = vmatpush.msra.mxu0 0.0
        %1319 = vmatpush.msra.mxu0 0.0
        %1320 = vmatpush.msra.mxu0 0.0
        %1321 = vmatpush.msra.mxu0 0.0
        %1322 = vmatpush.msra.mxu0 0.0
        %1323 = vmatpush.msra.mxu0 0.0
        %1324 = vmatpush.msra.mxu0 0.0
        %1325 = vmatpush.msra.mxu0 0.0
        %1326 = vmatpush.msra.mxu0 %v1217
        %1327 = vmatpush.msra.mxu0 %v1216
        %1328 = vmatpush.msra.mxu0 %v1215
        %1329 = vmatpush.msra.mxu0 %v1214
        %1330 = vmatmul.f32.gmra.mxu0 %v1219
        %v1331 = vpop.f32.mrf.mxu0
        %v1332 = vadd.f32 0.0, %v1331
        %1333 = vmatmul.f32.gmra.mxu0 %v1222
        %v1334 = vpop.f32.mrf.mxu0
        %v1335 = vadd.f32 0.0, %v1334
        %1336 = vmatmul.f32.gmra.mxu0 %v1225
        %v1337 = vpop.f32.mrf.mxu0
        %v1338 = vadd.f32 0.0, %v1337
        %1339 = vmatmul.f32.gmra.mxu0 %v1228
        %v1340 = vpop.f32.mrf.mxu0
        %v1341 = vadd.f32 0.0, %v1340
        %1342 = vmatmul.f32.gmra.mxu0 %v1231
        %v1343 = vpop.f32.mrf.mxu0
        %v1344 = vadd.f32 0.0, %v1343
        %1345 = vmatmul.f32.gmra.mxu0 %v1234
        %v1346 = vpop.f32.mrf.mxu0
        %v1347 = vadd.f32 0.0, %v1346
        %1348 = vmatmul.f32.gmra.mxu0 %v1237
        %v1349 = vpop.f32.mrf.mxu0
        %v1350 = vadd.f32 0.0, %v1349
        %1351 = vmatmul.f32.gmra.mxu0 %v1240
        %v1352 = vpop.f32.mrf.mxu0
        %v1353 = vadd.f32 0.0, %v1352
        %1354 = vmatmul.f32.gmra.mxu0 %v1243
        %v1355 = vpop.f32.mrf.mxu0
        %v1356 = vadd.f32 0.0, %v1355
        %1357 = vmatmul.f32.gmra.mxu0 %v1246
        %v1358 = vpop.f32.mrf.mxu0
        %v1359 = vadd.f32 0.0, %v1358
        %1360 = vmatmul.f32.gmra.mxu0 %v1249
        %v1361 = vpop.f32.mrf.mxu0
        %v1362 = vadd.f32 0.0, %v1361
        %1363 = vmatmul.f32.gmra.mxu0 %v1252
        %v1364 = vpop.f32.mrf.mxu0
        %v1365 = vadd.f32 0.0, %v1364
        %1366 = vmatmul.f32.gmra.mxu0 %v1255
        %v1367 = vpop.f32.mrf.mxu0
        %v1368 = vadd.f32 0.0, %v1367
        %1369 = vmatmul.f32.gmra.mxu0 %v1258
        %v1370 = vpop.f32.mrf.mxu0
        %v1371 = vadd.f32 0.0, %v1370
        %1372 = vmatmul.f32.gmra.mxu0 %v1261
        %v1373 = vpop.f32.mrf.mxu0
        %v1374 = vadd.f32 0.0, %v1373
        %1375 = vmatmul.f32.gmra.mxu0 %v1264
        %v1376 = vpop.f32.mrf.mxu0
        %v1377 = vadd.f32 0.0, %v1376
        %1378 = vmatmul.f32.gmra.mxu0 %v1267
        %v1379 = vpop.f32.mrf.mxu0
        %v1380 = vadd.f32 0.0, %v1379
        %1381 = vmatmul.f32.gmra.mxu0 %v1270
        %v1382 = vpop.f32.mrf.mxu0
        %v1383 = vadd.f32 0.0, %v1382
        %1384 = vmatmul.f32.gmra.mxu0 %v1273
        %v1385 = vpop.f32.mrf.mxu0
        %v1386 = vadd.f32 0.0, %v1385
        %1387 = vmatmul.f32.gmra.mxu0 %v1276
        %v1388 = vpop.f32.mrf.mxu0
        %v1389 = vadd.f32 0.0, %v1388
        %1390 = vmatmul.f32.gmra.mxu0 %v1279
        %v1391 = vpop.f32.mrf.mxu0
        %v1392 = vadd.f32 0.0, %v1391
        %1393 = vmatmul.f32.gmra.mxu0 %v1282
        %v1394 = vpop.f32.mrf.mxu0
        %v1395 = vadd.f32 0.0, %v1394
        %1396 = vmatmul.f32.gmra.mxu0 %v1285
        %v1397 = vpop.f32.mrf.mxu0
        %v1398 = vadd.f32 0.0, %v1397
        %1399 = vmatmul.f32.gmra.mxu0 %v1288
        %v1400 = vpop.f32.mrf.mxu0
        %v1401 = vadd.f32 0.0, %v1400
        %1402 = vmatmul.f32.gmra.mxu0 %v1291
        %v1403 = vpop.f32.mrf.mxu0
        %v1404 = vadd.f32 0.0, %v1403
        %1405 = vmatmul.f32.gmra.mxu0 %v1294
        %v1406 = vpop.f32.mrf.mxu0
        %v1407 = vadd.f32 0.0, %v1406
        %1408 = vmatmul.f32.gmra.mxu0 %v1297
        %v1409 = vpop.f32.mrf.mxu0
        %v1410 = vadd.f32 0.0, %v1409
        %1411 = vmatmul.f32.gmra.mxu0 %v1300
        %v1412 = vpop.f32.mrf.mxu0
        %v1413 = vadd.f32 0.0, %v1412
        %1414 = vmatmul.f32.gmra.mxu0 %v1303
        %v1415 = vpop.f32.mrf.mxu0
        %v1416 = vadd.f32 0.0, %v1415
        %1417 = vmatmul.f32.gmra.mxu0 %v1306
        %v1418 = vpop.f32.mrf.mxu0
        %v1419 = vadd.f32 0.0, %v1418
        %1420 = vmatmul.f32.gmra.mxu0 %v1309
        %v1421 = vpop.f32.mrf.mxu0
        %v1422 = vadd.f32 0.0, %v1421
        %1423 = vmatmul.f32.gmra.mxu0 %v1312
        %v1424 = vpop.f32.mrf.mxu0
        %v1425 = vadd.f32 0.0, %v1424
        %1426 = vdwg.mxu0
        %v1427 = vadd.f32 %v1148, %v1332
        %v1428 = vadd.f32 %v1149, %v1335
        %v1429 = vadd.f32 %v1150, %v1338
        %v1430 = vadd.f32 %v1151, %v1341
        %v1431 = vadd.f32 %v1152, %v1344
        %v1432 = vadd.f32 %v1153, %v1347
        %v1433 = vadd.f32 %v1154, %v1350
        %v1434 = vadd.f32 %v1155, %v1353
        %v1435 = vadd.f32 %v1156, %v1356
        %v1436 = vadd.f32 %v1157, %v1359
        %v1437 = vadd.f32 %v1158, %v1362
        %v1438 = vadd.f32 %v1159, %v1365
        %v1439 = vadd.f32 %v1160, %v1368
        %v1440 = vadd.f32 %v1161, %v1371
        %v1441 = vadd.f32 %v1162, %v1374
        %v1442 = vadd.f32 %v1163, %v1377
        %v1443 = vadd.f32 %v1164, %v1380
        %v1444 = vadd.f32 %v1165, %v1383
        %v1445 = vadd.f32 %v1166, %v1386
        %v1446 = vadd.f32 %v1167, %v1389
        %v1447 = vadd.f32 %v1168, %v1392
        %v1448 = vadd.f32 %v1169, %v1395
        %v1449 = vadd.f32 %v1170, %v1398
        %v1450 = vadd.f32 %v1171, %v1401
        %v1451 = vadd.f32 %v1172, %v1404
        %v1452 = vadd.f32 %v1173, %v1407
        %v1453 = vadd.f32 %v1174, %v1410
        %v1454 = vadd.f32 %v1175, %v1413
        %v1455 = vadd.f32 %v1176, %v1416
        %v1456 = vadd.f32 %v1177, %v1419
        %v1457 = vadd.f32 %v1178, %v1422
        %v1458 = vadd.f32 %v1179, %v1425
        %v1459 = vld [vmem:[%s1180 + $0x1] sm:$0xff]
        %v1460 = vld [vmem:[%s1180 + $0x9] sm:$0xff]
        %v1461 = vld [vmem:[%s1180 + $0x19] sm:$0xff]
        %v1462 = vld [vmem:[%s1180 + $0x21] sm:$0xff]
        %v1463 = vld [vmem:[%s1180 + $0x31] sm:$0xff]
        %v1464 = vld [vmem:[%s1180 + $0x39] sm:$0xff]
        %v1465 = vld [vmem:[%s1180 + $0x49] sm:$0xff]
        %v1466 = vld [vmem:[%s1180 + $0x51] sm:$0xff]
        %v1467 = vld [vmem:[%s1180 + $0x61] sm:$0xff]
        %v1468 = vld [vmem:[%s1180 + $0x69] sm:$0xff]
        %v1469 = vld [vmem:[%s1180 + $0x79] sm:$0xff]
        %v1470 = vld [vmem:[%s1180 + $0x81] sm:$0xff]
        %v1471 = vld [vmem:[%s1180 + $0x91] sm:$0xff]
        %v1472 = vld [vmem:[%s1180 + $0x99] sm:$0xff]
        %v1473 = vld [vmem:[%s1180 + $0xa9] sm:$0xff]
        %v1474 = vld [vmem:[%s1180 + $0xb1] sm:$0xff]
        %v1475 = vld [vmem:[%s1180 + $0xc1] sm:$0xff]
        %v1476 = vld [vmem:[%s1180 + $0xc9] sm:$0xff]
        %v1477 = vld [vmem:[%s1180 + $0xd9] sm:$0xff]
        %v1478 = vld [vmem:[%s1180 + $0xe1] sm:$0xff]
        %v1479 = vld [vmem:[%s1180 + $0xf1] sm:$0xff]
        %v1480 = vld [vmem:[%s1180 + $0xf9] sm:$0xff]
        %v1481 = vld [vmem:[%s1180 + $0x109] sm:$0xff]
        %v1482 = vld [vmem:[%s1180 + $0x111] sm:$0xff]
        %v1483 = vld [vmem:[%s1180 + $0x121] sm:$0xff]
        %v1484 = vld [vmem:[%s1180 + $0x129] sm:$0xff]
        %v1485 = vld [vmem:[%s1180 + $0x139] sm:$0xff]
        %v1486 = vld [vmem:[%s1180 + $0x141] sm:$0xff]
        %v1487 = vld [vmem:[%s1180 + $0x151] sm:$0xff]
        %v1488 = vld [vmem:[%s1180 + $0x159] sm:$0xff]
        %v1489 = vld [vmem:[%s1180 + $0x169] sm:$0xff]
        %v1490 = vld [vmem:[%s1180 + $0x171] sm:$0xff]
        %s1491 = scalar_lea.vmem %s1, 128
        %v1492 = vld [vmem:[%s1491] sm:$0xff]
        %v1493 = vld [vmem:[%s1491 + $0x8] sm:$0xff]
        %v1494 = vld [vmem:[%s1491 + $0x10] sm:$0xff]
        %v1495 = vld [vmem:[%s1491 + $0x18] sm:$0xff]
        %v1497 = vsel %vm382, %v1459, 0
        %v1500 = vsel %vm382, %v1460, 0
        %v1503 = vsel %vm382, %v1461, 0
        %v1506 = vsel %vm382, %v1462, 0
        %v1509 = vsel %vm382, %v1463, 0
        %v1512 = vsel %vm382, %v1464, 0
        %v1515 = vsel %vm382, %v1465, 0
        %v1518 = vsel %vm382, %v1466, 0
        %v1521 = vsel %vm382, %v1467, 0
        %v1524 = vsel %vm382, %v1468, 0
        %v1527 = vsel %vm382, %v1469, 0
        %v1530 = vsel %vm382, %v1470, 0
        %v1533 = vsel %vm382, %v1471, 0
        %v1536 = vsel %vm382, %v1472, 0
        %v1539 = vsel %vm382, %v1473, 0
        %v1542 = vsel %vm382, %v1474, 0
        %v1545 = vsel %vm382, %v1475, 0
        %v1548 = vsel %vm382, %v1476, 0
        %v1551 = vsel %vm382, %v1477, 0
        %v1554 = vsel %vm382, %v1478, 0
        %v1557 = vsel %vm382, %v1479, 0
        %v1560 = vsel %vm382, %v1480, 0
        %v1563 = vsel %vm382, %v1481, 0
        %v1566 = vsel %vm382, %v1482, 0
        %v1569 = vsel %vm382, %v1483, 0
        %v1572 = vsel %vm382, %v1484, 0
        %v1575 = vsel %vm382, %v1485, 0
        %v1578 = vsel %vm382, %v1486, 0
        %v1581 = vsel %vm382, %v1487, 0
        %v1584 = vsel %vm382, %v1488, 0
        %v1587 = vsel %vm382, %v1489, 0
        %v1590 = vsel %vm382, %v1490, 0
        %1592 = vmatpush.msra.mxu0 0.0
        %1593 = vmatpush.msra.mxu0 0.0
        %1594 = vmatpush.msra.mxu0 0.0
        %1595 = vmatpush.msra.mxu0 0.0
        %1596 = vmatpush.msra.mxu0 0.0
        %1597 = vmatpush.msra.mxu0 0.0
        %1598 = vmatpush.msra.mxu0 0.0
        %1599 = vmatpush.msra.mxu0 0.0
        %1600 = vmatpush.msra.mxu0 0.0
        %1601 = vmatpush.msra.mxu0 0.0
        %1602 = vmatpush.msra.mxu0 0.0
        %1603 = vmatpush.msra.mxu0 0.0
        %1604 = vmatpush.msra.mxu0 %v1495
        %1605 = vmatpush.msra.mxu0 %v1494
        %1606 = vmatpush.msra.mxu0 %v1493
        %1607 = vmatpush.msra.mxu0 %v1492
        %1608 = vmatmul.f32.gmra.mxu0 %v1497
        %v1609 = vpop.f32.mrf.mxu0
        %v1610 = vadd.f32 0.0, %v1609
        %1611 = vmatmul.f32.gmra.mxu0 %v1500
        %v1612 = vpop.f32.mrf.mxu0
        %v1613 = vadd.f32 0.0, %v1612
        %1614 = vmatmul.f32.gmra.mxu0 %v1503
        %v1615 = vpop.f32.mrf.mxu0
        %v1616 = vadd.f32 0.0, %v1615
        %1617 = vmatmul.f32.gmra.mxu0 %v1506
        %v1618 = vpop.f32.mrf.mxu0
        %v1619 = vadd.f32 0.0, %v1618
        %1620 = vmatmul.f32.gmra.mxu0 %v1509
        %v1621 = vpop.f32.mrf.mxu0
        %v1622 = vadd.f32 0.0, %v1621
        %1623 = vmatmul.f32.gmra.mxu0 %v1512
        %v1624 = vpop.f32.mrf.mxu0
        %v1625 = vadd.f32 0.0, %v1624
        %1626 = vmatmul.f32.gmra.mxu0 %v1515
        %v1627 = vpop.f32.mrf.mxu0
        %v1628 = vadd.f32 0.0, %v1627
        %1629 = vmatmul.f32.gmra.mxu0 %v1518
        %v1630 = vpop.f32.mrf.mxu0
        %v1631 = vadd.f32 0.0, %v1630
        %1632 = vmatmul.f32.gmra.mxu0 %v1521
        %v1633 = vpop.f32.mrf.mxu0
        %v1634 = vadd.f32 0.0, %v1633
        %1635 = vmatmul.f32.gmra.mxu0 %v1524
        %v1636 = vpop.f32.mrf.mxu0
        %v1637 = vadd.f32 0.0, %v1636
        %1638 = vmatmul.f32.gmra.mxu0 %v1527
        %v1639 = vpop.f32.mrf.mxu0
        %v1640 = vadd.f32 0.0, %v1639
        %1641 = vmatmul.f32.gmra.mxu0 %v1530
        %v1642 = vpop.f32.mrf.mxu0
        %v1643 = vadd.f32 0.0, %v1642
        %1644 = vmatmul.f32.gmra.mxu0 %v1533
        %v1645 = vpop.f32.mrf.mxu0
        %v1646 = vadd.f32 0.0, %v1645
        %1647 = vmatmul.f32.gmra.mxu0 %v1536
        %v1648 = vpop.f32.mrf.mxu0
        %v1649 = vadd.f32 0.0, %v1648
        %1650 = vmatmul.f32.gmra.mxu0 %v1539
        %v1651 = vpop.f32.mrf.mxu0
        %v1652 = vadd.f32 0.0, %v1651
        %1653 = vmatmul.f32.gmra.mxu0 %v1542
        %v1654 = vpop.f32.mrf.mxu0
        %v1655 = vadd.f32 0.0, %v1654
        %1656 = vmatmul.f32.gmra.mxu0 %v1545
        %v1657 = vpop.f32.mrf.mxu0
        %v1658 = vadd.f32 0.0, %v1657
        %1659 = vmatmul.f32.gmra.mxu0 %v1548
        %v1660 = vpop.f32.mrf.mxu0
        %v1661 = vadd.f32 0.0, %v1660
        %1662 = vmatmul.f32.gmra.mxu0 %v1551
        %v1663 = vpop.f32.mrf.mxu0
        %v1664 = vadd.f32 0.0, %v1663
        %1665 = vmatmul.f32.gmra.mxu0 %v1554
        %v1666 = vpop.f32.mrf.mxu0
        %v1667 = vadd.f32 0.0, %v1666
        %1668 = vmatmul.f32.gmra.mxu0 %v1557
        %v1669 = vpop.f32.mrf.mxu0
        %v1670 = vadd.f32 0.0, %v1669
        %1671 = vmatmul.f32.gmra.mxu0 %v1560
        %v1672 = vpop.f32.mrf.mxu0
        %v1673 = vadd.f32 0.0, %v1672
        %1674 = vmatmul.f32.gmra.mxu0 %v1563
        %v1675 = vpop.f32.mrf.mxu0
        %v1676 = vadd.f32 0.0, %v1675
        %1677 = vmatmul.f32.gmra.mxu0 %v1566
        %v1678 = vpop.f32.mrf.mxu0
        %v1679 = vadd.f32 0.0, %v1678
        %1680 = vmatmul.f32.gmra.mxu0 %v1569
        %v1681 = vpop.f32.mrf.mxu0
        %v1682 = vadd.f32 0.0, %v1681
        %1683 = vmatmul.f32.gmra.mxu0 %v1572
        %v1684 = vpop.f32.mrf.mxu0
        %v1685 = vadd.f32 0.0, %v1684
        %1686 = vmatmul.f32.gmra.mxu0 %v1575
        %v1687 = vpop.f32.mrf.mxu0
        %v1688 = vadd.f32 0.0, %v1687
        %1689 = vmatmul.f32.gmra.mxu0 %v1578
        %v1690 = vpop.f32.mrf.mxu0
        %v1691 = vadd.f32 0.0, %v1690
        %1692 = vmatmul.f32.gmra.mxu0 %v1581
        %v1693 = vpop.f32.mrf.mxu0
        %v1694 = vadd.f32 0.0, %v1693
        %1695 = vmatmul.f32.gmra.mxu0 %v1584
        %v1696 = vpop.f32.mrf.mxu0
        %v1697 = vadd.f32 0.0, %v1696
        %1698 = vmatmul.f32.gmra.mxu0 %v1587
        %v1699 = vpop.f32.mrf.mxu0
        %v1700 = vadd.f32 0.0, %v1699
        %1701 = vmatmul.f32.gmra.mxu0 %v1590
        %v1702 = vpop.f32.mrf.mxu0
        %v1703 = vadd.f32 0.0, %v1702
        %1704 = vdwg.mxu0
        %v1705 = vadd.f32 %v1427, %v1610
        %v1706 = vadd.f32 %v1428, %v1613
        %v1707 = vadd.f32 %v1429, %v1616
        %v1708 = vadd.f32 %v1430, %v1619
        %v1709 = vadd.f32 %v1431, %v1622
        %v1710 = vadd.f32 %v1432, %v1625
        %v1711 = vadd.f32 %v1433, %v1628
        %v1712 = vadd.f32 %v1434, %v1631
        %v1713 = vadd.f32 %v1435, %v1634
        %v1714 = vadd.f32 %v1436, %v1637
        %v1715 = vadd.f32 %v1437, %v1640
        %v1716 = vadd.f32 %v1438, %v1643
        %v1717 = vadd.f32 %v1439, %v1646
        %v1718 = vadd.f32 %v1440, %v1649
        %v1719 = vadd.f32 %v1441, %v1652
        %v1720 = vadd.f32 %v1442, %v1655
        %v1721 = vadd.f32 %v1443, %v1658
        %v1722 = vadd.f32 %v1444, %v1661
        %v1723 = vadd.f32 %v1445, %v1664
        %v1724 = vadd.f32 %v1446, %v1667
        %v1725 = vadd.f32 %v1447, %v1670
        %v1726 = vadd.f32 %v1448, %v1673
        %v1727 = vadd.f32 %v1449, %v1676
        %v1728 = vadd.f32 %v1450, %v1679
        %v1729 = vadd.f32 %v1451, %v1682
        %v1730 = vadd.f32 %v1452, %v1685
        %v1731 = vadd.f32 %v1453, %v1688
        %v1732 = vadd.f32 %v1454, %v1691
        %v1733 = vadd.f32 %v1455, %v1694
        %v1734 = vadd.f32 %v1456, %v1697
        %v1735 = vadd.f32 %v1457, %v1700
        %v1736 = vadd.f32 %v1458, %v1703
        %v1737 = vld [vmem:[%s1180 + $0x2] sm:$0xff]
        %v1738 = vld [vmem:[%s1180 + $0xa] sm:$0xff]
        %v1739 = vld [vmem:[%s1180 + $0x1a] sm:$0xff]
        %v1740 = vld [vmem:[%s1180 + $0x22] sm:$0xff]
        %v1741 = vld [vmem:[%s1180 + $0x32] sm:$0xff]
        %v1742 = vld [vmem:[%s1180 + $0x3a] sm:$0xff]
        %v1743 = vld [vmem:[%s1180 + $0x4a] sm:$0xff]
        %v1744 = vld [vmem:[%s1180 + $0x52] sm:$0xff]
        %v1745 = vld [vmem:[%s1180 + $0x62] sm:$0xff]
        %v1746 = vld [vmem:[%s1180 + $0x6a] sm:$0xff]
        %v1747 = vld [vmem:[%s1180 + $0x7a] sm:$0xff]
        %v1748 = vld [vmem:[%s1180 + $0x82] sm:$0xff]
        %v1749 = vld [vmem:[%s1180 + $0x92] sm:$0xff]
        %v1750 = vld [vmem:[%s1180 + $0x9a] sm:$0xff]
        %v1751 = vld [vmem:[%s1180 + $0xaa] sm:$0xff]
        %v1752 = vld [vmem:[%s1180 + $0xb2] sm:$0xff]
        %v1753 = vld [vmem:[%s1180 + $0xc2] sm:$0xff]
        %v1754 = vld [vmem:[%s1180 + $0xca] sm:$0xff]
        %v1755 = vld [vmem:[%s1180 + $0xda] sm:$0xff]
        %v1756 = vld [vmem:[%s1180 + $0xe2] sm:$0xff]
        %v1757 = vld [vmem:[%s1180 + $0xf2] sm:$0xff]
        %v1758 = vld [vmem:[%s1180 + $0xfa] sm:$0xff]
        %v1759 = vld [vmem:[%s1180 + $0x10a] sm:$0xff]
        %v1760 = vld [vmem:[%s1180 + $0x112] sm:$0xff]
        %v1761 = vld [vmem:[%s1180 + $0x122] sm:$0xff]
        %v1762 = vld [vmem:[%s1180 + $0x12a] sm:$0xff]
        %v1763 = vld [vmem:[%s1180 + $0x13a] sm:$0xff]
        %v1764 = vld [vmem:[%s1180 + $0x142] sm:$0xff]
        %v1765 = vld [vmem:[%s1180 + $0x152] sm:$0xff]
        %v1766 = vld [vmem:[%s1180 + $0x15a] sm:$0xff]
        %v1767 = vld [vmem:[%s1180 + $0x16a] sm:$0xff]
        %v1768 = vld [vmem:[%s1180 + $0x172] sm:$0xff]
        %s1769 = scalar_lea.vmem %s1, 160
        %v1770 = vld [vmem:[%s1769] sm:$0xff]
        %v1771 = vld [vmem:[%s1769 + $0x8] sm:$0xff]
        %v1772 = vld [vmem:[%s1769 + $0x10] sm:$0xff]
        %v1773 = vld [vmem:[%s1769 + $0x18] sm:$0xff]
        %v1775 = vsel %vm382, %v1737, 0
        %v1778 = vsel %vm382, %v1738, 0
        %v1781 = vsel %vm382, %v1739, 0
        %v1784 = vsel %vm382, %v1740, 0
        %v1787 = vsel %vm382, %v1741, 0
        %v1790 = vsel %vm382, %v1742, 0
        %v1793 = vsel %vm382, %v1743, 0
        %v1796 = vsel %vm382, %v1744, 0
        %v1799 = vsel %vm382, %v1745, 0
        %v1802 = vsel %vm382, %v1746, 0
        %v1805 = vsel %vm382, %v1747, 0
        %v1808 = vsel %vm382, %v1748, 0
        %v1811 = vsel %vm382, %v1749, 0
        %v1814 = vsel %vm382, %v1750, 0
        %v1817 = vsel %vm382, %v1751, 0
        %v1820 = vsel %vm382, %v1752, 0
        %v1823 = vsel %vm382, %v1753, 0
        %v1826 = vsel %vm382, %v1754, 0
        %v1829 = vsel %vm382, %v1755, 0
        %v1832 = vsel %vm382, %v1756, 0
        %v1835 = vsel %vm382, %v1757, 0
        %v1838 = vsel %vm382, %v1758, 0
        %v1841 = vsel %vm382, %v1759, 0
        %v1844 = vsel %vm382, %v1760, 0
        %v1847 = vsel %vm382, %v1761, 0
        %v1850 = vsel %vm382, %v1762, 0
        %v1853 = vsel %vm382, %v1763, 0
        %v1856 = vsel %vm382, %v1764, 0
        %v1859 = vsel %vm382, %v1765, 0
        %v1862 = vsel %vm382, %v1766, 0
        %v1865 = vsel %vm382, %v1767, 0
        %v1868 = vsel %vm382, %v1768, 0
        %1870 = vmatpush.msra.mxu0 0.0
        %1871 = vmatpush.msra.mxu0 0.0
        %1872 = vmatpush.msra.mxu0 0.0
        %1873 = vmatpush.msra.mxu0 0.0
        %1874 = vmatpush.msra.mxu0 0.0
        %1875 = vmatpush.msra.mxu0 0.0
        %1876 = vmatpush.msra.mxu0 0.0
        %1877 = vmatpush.msra.mxu0 0.0
        %1878 = vmatpush.msra.mxu0 0.0
        %1879 = vmatpush.msra.mxu0 0.0
        %1880 = vmatpush.msra.mxu0 0.0
        %1881 = vmatpush.msra.mxu0 0.0
        %1882 = vmatpush.msra.mxu0 %v1773
        %1883 = vmatpush.msra.mxu0 %v1772
        %1884 = vmatpush.msra.mxu0 %v1771
        %1885 = vmatpush.msra.mxu0 %v1770
        %1886 = vmatmul.f32.gmra.mxu0 %v1775
        %v1887 = vpop.f32.mrf.mxu0
        %v1888 = vadd.f32 0.0, %v1887
        %1889 = vmatmul.f32.gmra.mxu0 %v1778
        %v1890 = vpop.f32.mrf.mxu0
        %v1891 = vadd.f32 0.0, %v1890
        %1892 = vmatmul.f32.gmra.mxu0 %v1781
        %v1893 = vpop.f32.mrf.mxu0
        %v1894 = vadd.f32 0.0, %v1893
        %1895 = vmatmul.f32.gmra.mxu0 %v1784
        %v1896 = vpop.f32.mrf.mxu0
        %v1897 = vadd.f32 0.0, %v1896
        %1898 = vmatmul.f32.gmra.mxu0 %v1787
        %v1899 = vpop.f32.mrf.mxu0
        %v1900 = vadd.f32 0.0, %v1899
        %1901 = vmatmul.f32.gmra.mxu0 %v1790
        %v1902 = vpop.f32.mrf.mxu0
        %v1903 = vadd.f32 0.0, %v1902
        %1904 = vmatmul.f32.gmra.mxu0 %v1793
        %v1905 = vpop.f32.mrf.mxu0
        %v1906 = vadd.f32 0.0, %v1905
        %1907 = vmatmul.f32.gmra.mxu0 %v1796
        %v1908 = vpop.f32.mrf.mxu0
        %v1909 = vadd.f32 0.0, %v1908
        %1910 = vmatmul.f32.gmra.mxu0 %v1799
        %v1911 = vpop.f32.mrf.mxu0
        %v1912 = vadd.f32 0.0, %v1911
        %1913 = vmatmul.f32.gmra.mxu0 %v1802
        %v1914 = vpop.f32.mrf.mxu0
        %v1915 = vadd.f32 0.0, %v1914
        %1916 = vmatmul.f32.gmra.mxu0 %v1805
        %v1917 = vpop.f32.mrf.mxu0
        %v1918 = vadd.f32 0.0, %v1917
        %1919 = vmatmul.f32.gmra.mxu0 %v1808
        %v1920 = vpop.f32.mrf.mxu0
        %v1921 = vadd.f32 0.0, %v1920
        %1922 = vmatmul.f32.gmra.mxu0 %v1811
        %v1923 = vpop.f32.mrf.mxu0
        %v1924 = vadd.f32 0.0, %v1923
        %1925 = vmatmul.f32.gmra.mxu0 %v1814
        %v1926 = vpop.f32.mrf.mxu0
        %v1927 = vadd.f32 0.0, %v1926
        %1928 = vmatmul.f32.gmra.mxu0 %v1817
        %v1929 = vpop.f32.mrf.mxu0
        %v1930 = vadd.f32 0.0, %v1929
        %1931 = vmatmul.f32.gmra.mxu0 %v1820
        %v1932 = vpop.f32.mrf.mxu0
        %v1933 = vadd.f32 0.0, %v1932
        %1934 = vmatmul.f32.gmra.mxu0 %v1823
        %v1935 = vpop.f32.mrf.mxu0
        %v1936 = vadd.f32 0.0, %v1935
        %1937 = vmatmul.f32.gmra.mxu0 %v1826
        %v1938 = vpop.f32.mrf.mxu0
        %v1939 = vadd.f32 0.0, %v1938
        %1940 = vmatmul.f32.gmra.mxu0 %v1829
        %v1941 = vpop.f32.mrf.mxu0
        %v1942 = vadd.f32 0.0, %v1941
        %1943 = vmatmul.f32.gmra.mxu0 %v1832
        %v1944 = vpop.f32.mrf.mxu0
        %v1945 = vadd.f32 0.0, %v1944
        %1946 = vmatmul.f32.gmra.mxu0 %v1835
        %v1947 = vpop.f32.mrf.mxu0
        %v1948 = vadd.f32 0.0, %v1947
        %1949 = vmatmul.f32.gmra.mxu0 %v1838
        %v1950 = vpop.f32.mrf.mxu0
        %v1951 = vadd.f32 0.0, %v1950
        %1952 = vmatmul.f32.gmra.mxu0 %v1841
        %v1953 = vpop.f32.mrf.mxu0
        %v1954 = vadd.f32 0.0, %v1953
        %1955 = vmatmul.f32.gmra.mxu0 %v1844
        %v1956 = vpop.f32.mrf.mxu0
        %v1957 = vadd.f32 0.0, %v1956
        %1958 = vmatmul.f32.gmra.mxu0 %v1847
        %v1959 = vpop.f32.mrf.mxu0
        %v1960 = vadd.f32 0.0, %v1959
        %1961 = vmatmul.f32.gmra.mxu0 %v1850
        %v1962 = vpop.f32.mrf.mxu0
        %v1963 = vadd.f32 0.0, %v1962
        %1964 = vmatmul.f32.gmra.mxu0 %v1853
        %v1965 = vpop.f32.mrf.mxu0
        %v1966 = vadd.f32 0.0, %v1965
        %1967 = vmatmul.f32.gmra.mxu0 %v1856
        %v1968 = vpop.f32.mrf.mxu0
        %v1969 = vadd.f32 0.0, %v1968
        %1970 = vmatmul.f32.gmra.mxu0 %v1859
        %v1971 = vpop.f32.mrf.mxu0
        %v1972 = vadd.f32 0.0, %v1971
        %1973 = vmatmul.f32.gmra.mxu0 %v1862
        %v1974 = vpop.f32.mrf.mxu0
        %v1975 = vadd.f32 0.0, %v1974
        %1976 = vmatmul.f32.gmra.mxu0 %v1865
        %v1977 = vpop.f32.mrf.mxu0
        %v1978 = vadd.f32 0.0, %v1977
        %1979 = vmatmul.f32.gmra.mxu0 %v1868
        %v1980 = vpop.f32.mrf.mxu0
        %v1981 = vadd.f32 0.0, %v1980
        %1982 = vdwg.mxu0
        %v1983 = vadd.f32 %v1705, %v1888
        %v1984 = vadd.f32 %v1706, %v1891
        %v1985 = vadd.f32 %v1707, %v1894
        %v1986 = vadd.f32 %v1708, %v1897
        %v1987 = vadd.f32 %v1709, %v1900
        %v1988 = vadd.f32 %v1710, %v1903
        %v1989 = vadd.f32 %v1711, %v1906
        %v1990 = vadd.f32 %v1712, %v1909
        %v1991 = vadd.f32 %v1713, %v1912
        %v1992 = vadd.f32 %v1714, %v1915
        %v1993 = vadd.f32 %v1715, %v1918
        %v1994 = vadd.f32 %v1716, %v1921
        %v1995 = vadd.f32 %v1717, %v1924
        %v1996 = vadd.f32 %v1718, %v1927
        %v1997 = vadd.f32 %v1719, %v1930
        %v1998 = vadd.f32 %v1720, %v1933
        %v1999 = vadd.f32 %v1721, %v1936
        %v2000 = vadd.f32 %v1722, %v1939
        %v2001 = vadd.f32 %v1723, %v1942
        %v2002 = vadd.f32 %v1724, %v1945
        %v2003 = vadd.f32 %v1725, %v1948
        %v2004 = vadd.f32 %v1726, %v1951
        %v2005 = vadd.f32 %v1727, %v1954
        %v2006 = vadd.f32 %v1728, %v1957
        %v2007 = vadd.f32 %v1729, %v1960
        %v2008 = vadd.f32 %v1730, %v1963
        %v2009 = vadd.f32 %v1731, %v1966
        %v2010 = vadd.f32 %v1732, %v1969
        %v2011 = vadd.f32 %v1733, %v1972
        %v2012 = vadd.f32 %v1734, %v1975
        %v2013 = vadd.f32 %v1735, %v1978
        %v2014 = vadd.f32 %v1736, %v1981
        %s2015 = scalar_lea.vmem [#allocation2], 48
        %v2016 = vld [vmem:[%s2015] sm:$0xff]
        %v2017 = vld [vmem:[%s2015 + $0x8] sm:$0xff]
        %v2018 = vld [vmem:[%s2015 + $0x18] sm:$0xff]
        %v2019 = vld [vmem:[%s2015 + $0x20] sm:$0xff]
        %v2020 = vld [vmem:[%s2015 + $0x30] sm:$0xff]
        %v2021 = vld [vmem:[%s2015 + $0x38] sm:$0xff]
        %v2022 = vld [vmem:[%s2015 + $0x48] sm:$0xff]
        %v2023 = vld [vmem:[%s2015 + $0x50] sm:$0xff]
        %v2024 = vld [vmem:[%s2015 + $0x60] sm:$0xff]
        %v2025 = vld [vmem:[%s2015 + $0x68] sm:$0xff]
        %v2026 = vld [vmem:[%s2015 + $0x78] sm:$0xff]
        %v2027 = vld [vmem:[%s2015 + $0x80] sm:$0xff]
        %v2028 = vld [vmem:[%s2015 + $0x90] sm:$0xff]
        %v2029 = vld [vmem:[%s2015 + $0x98] sm:$0xff]
        %v2030 = vld [vmem:[%s2015 + $0xa8] sm:$0xff]
        %v2031 = vld [vmem:[%s2015 + $0xb0] sm:$0xff]
        %v2032 = vld [vmem:[%s2015 + $0xc0] sm:$0xff]
        %v2033 = vld [vmem:[%s2015 + $0xc8] sm:$0xff]
        %v2034 = vld [vmem:[%s2015 + $0xd8] sm:$0xff]
        %v2035 = vld [vmem:[%s2015 + $0xe0] sm:$0xff]
        %v2036 = vld [vmem:[%s2015 + $0xf0] sm:$0xff]
        %v2037 = vld [vmem:[%s2015 + $0xf8] sm:$0xff]
        %v2038 = vld [vmem:[%s2015 + $0x108] sm:$0xff]
        %v2039 = vld [vmem:[%s2015 + $0x110] sm:$0xff]
        %v2040 = vld [vmem:[%s2015 + $0x120] sm:$0xff]
        %v2041 = vld [vmem:[%s2015 + $0x128] sm:$0xff]
        %v2042 = vld [vmem:[%s2015 + $0x138] sm:$0xff]
        %v2043 = vld [vmem:[%s2015 + $0x140] sm:$0xff]
        %v2044 = vld [vmem:[%s2015 + $0x150] sm:$0xff]
        %v2045 = vld [vmem:[%s2015 + $0x158] sm:$0xff]
        %v2046 = vld [vmem:[%s2015 + $0x168] sm:$0xff]
        %v2047 = vld [vmem:[%s2015 + $0x170] sm:$0xff]
        %s2048 = scalar_lea.vmem %s1, 192
        %v2049 = vld [vmem:[%s2048] sm:$0xff]
        %v2050 = vld [vmem:[%s2048 + $0x8] sm:$0xff]
        %v2051 = vld [vmem:[%s2048 + $0x10] sm:$0xff]
        %v2052 = vld [vmem:[%s2048 + $0x18] sm:$0xff]
        %v2054 = vsel %vm382, %v2016, 0
        %v2057 = vsel %vm382, %v2017, 0
        %v2060 = vsel %vm382, %v2018, 0
        %v2063 = vsel %vm382, %v2019, 0
        %v2066 = vsel %vm382, %v2020, 0
        %v2069 = vsel %vm382, %v2021, 0
        %v2072 = vsel %vm382, %v2022, 0
        %v2075 = vsel %vm382, %v2023, 0
        %v2078 = vsel %vm382, %v2024, 0
        %v2081 = vsel %vm382, %v2025, 0
        %v2084 = vsel %vm382, %v2026, 0
        %v2087 = vsel %vm382, %v2027, 0
        %v2090 = vsel %vm382, %v2028, 0
        %v2093 = vsel %vm382, %v2029, 0
        %v2096 = vsel %vm382, %v2030, 0
        %v2099 = vsel %vm382, %v2031, 0
        %v2102 = vsel %vm382, %v2032, 0
        %v2105 = vsel %vm382, %v2033, 0
        %v2108 = vsel %vm382, %v2034, 0
        %v2111 = vsel %vm382, %v2035, 0
        %v2114 = vsel %vm382, %v2036, 0
        %v2117 = vsel %vm382, %v2037, 0
        %v2120 = vsel %vm382, %v2038, 0
        %v2123 = vsel %vm382, %v2039, 0
        %v2126 = vsel %vm382, %v2040, 0
        %v2129 = vsel %vm382, %v2041, 0
        %v2132 = vsel %vm382, %v2042, 0
        %v2135 = vsel %vm382, %v2043, 0
        %v2138 = vsel %vm382, %v2044, 0
        %v2141 = vsel %vm382, %v2045, 0
        %v2144 = vsel %vm382, %v2046, 0
        %v2147 = vsel %vm382, %v2047, 0
        %2149 = vmatpush.msra.mxu0 0.0
        %2150 = vmatpush.msra.mxu0 0.0
        %2151 = vmatpush.msra.mxu0 0.0
        %2152 = vmatpush.msra.mxu0 0.0
        %2153 = vmatpush.msra.mxu0 0.0
        %2154 = vmatpush.msra.mxu0 0.0
        %2155 = vmatpush.msra.mxu0 0.0
        %2156 = vmatpush.msra.mxu0 0.0
        %2157 = vmatpush.msra.mxu0 0.0
        %2158 = vmatpush.msra.mxu0 0.0
        %2159 = vmatpush.msra.mxu0 0.0
        %2160 = vmatpush.msra.mxu0 0.0
        %2161 = vmatpush.msra.mxu0 %v2052
        %2162 = vmatpush.msra.mxu0 %v2051
        %2163 = vmatpush.msra.mxu0 %v2050
        %2164 = vmatpush.msra.mxu0 %v2049
        %2165 = vmatmul.f32.gmra.mxu0 %v2054
        %v2166 = vpop.f32.mrf.mxu0
        %v2167 = vadd.f32 0.0, %v2166
        %2168 = vmatmul.f32.gmra.mxu0 %v2057
        %v2169 = vpop.f32.mrf.mxu0
        %v2170 = vadd.f32 0.0, %v2169
        %2171 = vmatmul.f32.gmra.mxu0 %v2060
        %v2172 = vpop.f32.mrf.mxu0
        %v2173 = vadd.f32 0.0, %v2172
        %2174 = vmatmul.f32.gmra.mxu0 %v2063
        %v2175 = vpop.f32.mrf.mxu0
        %v2176 = vadd.f32 0.0, %v2175
        %2177 = vmatmul.f32.gmra.mxu0 %v2066
        %v2178 = vpop.f32.mrf.mxu0
        %v2179 = vadd.f32 0.0, %v2178
        %2180 = vmatmul.f32.gmra.mxu0 %v2069
        %v2181 = vpop.f32.mrf.mxu0
        %v2182 = vadd.f32 0.0, %v2181
        %2183 = vmatmul.f32.gmra.mxu0 %v2072
        %v2184 = vpop.f32.mrf.mxu0
        %v2185 = vadd.f32 0.0, %v2184
        %2186 = vmatmul.f32.gmra.mxu0 %v2075
        %v2187 = vpop.f32.mrf.mxu0
        %v2188 = vadd.f32 0.0, %v2187
        %2189 = vmatmul.f32.gmra.mxu0 %v2078
        %v2190 = vpop.f32.mrf.mxu0
        %v2191 = vadd.f32 0.0, %v2190
        %2192 = vmatmul.f32.gmra.mxu0 %v2081
        %v2193 = vpop.f32.mrf.mxu0
        %v2194 = vadd.f32 0.0, %v2193
        %2195 = vmatmul.f32.gmra.mxu0 %v2084
        %v2196 = vpop.f32.mrf.mxu0
        %v2197 = vadd.f32 0.0, %v2196
        %2198 = vmatmul.f32.gmra.mxu0 %v2087
        %v2199 = vpop.f32.mrf.mxu0
        %v2200 = vadd.f32 0.0, %v2199
        %2201 = vmatmul.f32.gmra.mxu0 %v2090
        %v2202 = vpop.f32.mrf.mxu0
        %v2203 = vadd.f32 0.0, %v2202
        %2204 = vmatmul.f32.gmra.mxu0 %v2093
        %v2205 = vpop.f32.mrf.mxu0
        %v2206 = vadd.f32 0.0, %v2205
        %2207 = vmatmul.f32.gmra.mxu0 %v2096
        %v2208 = vpop.f32.mrf.mxu0
        %v2209 = vadd.f32 0.0, %v2208
        %2210 = vmatmul.f32.gmra.mxu0 %v2099
        %v2211 = vpop.f32.mrf.mxu0
        %v2212 = vadd.f32 0.0, %v2211
        %2213 = vmatmul.f32.gmra.mxu0 %v2102
        %v2214 = vpop.f32.mrf.mxu0
        %v2215 = vadd.f32 0.0, %v2214
        %2216 = vmatmul.f32.gmra.mxu0 %v2105
        %v2217 = vpop.f32.mrf.mxu0
        %v2218 = vadd.f32 0.0, %v2217
        %2219 = vmatmul.f32.gmra.mxu0 %v2108
        %v2220 = vpop.f32.mrf.mxu0
        %v2221 = vadd.f32 0.0, %v2220
        %2222 = vmatmul.f32.gmra.mxu0 %v2111
        %v2223 = vpop.f32.mrf.mxu0
        %v2224 = vadd.f32 0.0, %v2223
        %2225 = vmatmul.f32.gmra.mxu0 %v2114
        %v2226 = vpop.f32.mrf.mxu0
        %v2227 = vadd.f32 0.0, %v2226
        %2228 = vmatmul.f32.gmra.mxu0 %v2117
        %v2229 = vpop.f32.mrf.mxu0
        %v2230 = vadd.f32 0.0, %v2229
        %2231 = vmatmul.f32.gmra.mxu0 %v2120
        %v2232 = vpop.f32.mrf.mxu0
        %v2233 = vadd.f32 0.0, %v2232
        %2234 = vmatmul.f32.gmra.mxu0 %v2123
        %v2235 = vpop.f32.mrf.mxu0
        %v2236 = vadd.f32 0.0, %v2235
        %2237 = vmatmul.f32.gmra.mxu0 %v2126
        %v2238 = vpop.f32.mrf.mxu0
        %v2239 = vadd.f32 0.0, %v2238
        %2240 = vmatmul.f32.gmra.mxu0 %v2129
        %v2241 = vpop.f32.mrf.mxu0
        %v2242 = vadd.f32 0.0, %v2241
        %2243 = vmatmul.f32.gmra.mxu0 %v2132
        %v2244 = vpop.f32.mrf.mxu0
        %v2245 = vadd.f32 0.0, %v2244
        %2246 = vmatmul.f32.gmra.mxu0 %v2135
        %v2247 = vpop.f32.mrf.mxu0
        %v2248 = vadd.f32 0.0, %v2247
        %2249 = vmatmul.f32.gmra.mxu0 %v2138
        %v2250 = vpop.f32.mrf.mxu0
        %v2251 = vadd.f32 0.0, %v2250
        %2252 = vmatmul.f32.gmra.mxu0 %v2141
        %v2253 = vpop.f32.mrf.mxu0
        %v2254 = vadd.f32 0.0, %v2253
        %2255 = vmatmul.f32.gmra.mxu0 %v2144
        %v2256 = vpop.f32.mrf.mxu0
        %v2257 = vadd.f32 0.0, %v2256
        %2258 = vmatmul.f32.gmra.mxu0 %v2147
        %v2259 = vpop.f32.mrf.mxu0
        %v2260 = vadd.f32 0.0, %v2259
        %2261 = vdwg.mxu0
        %v2262 = vadd.f32 %v1983, %v2167
        %v2263 = vadd.f32 %v1984, %v2170
        %v2264 = vadd.f32 %v1985, %v2173
        %v2265 = vadd.f32 %v1986, %v2176
        %v2266 = vadd.f32 %v1987, %v2179
        %v2267 = vadd.f32 %v1988, %v2182
        %v2268 = vadd.f32 %v1989, %v2185
        %v2269 = vadd.f32 %v1990, %v2188
        %v2270 = vadd.f32 %v1991, %v2191
        %v2271 = vadd.f32 %v1992, %v2194
        %v2272 = vadd.f32 %v1993, %v2197
        %v2273 = vadd.f32 %v1994, %v2200
        %v2274 = vadd.f32 %v1995, %v2203
        %v2275 = vadd.f32 %v1996, %v2206
        %v2276 = vadd.f32 %v1997, %v2209
        %v2277 = vadd.f32 %v1998, %v2212
        %v2278 = vadd.f32 %v1999, %v2215
        %v2279 = vadd.f32 %v2000, %v2218
        %v2280 = vadd.f32 %v2001, %v2221
        %v2281 = vadd.f32 %v2002, %v2224
        %v2282 = vadd.f32 %v2003, %v2227
        %v2283 = vadd.f32 %v2004, %v2230
        %v2284 = vadd.f32 %v2005, %v2233
        %v2285 = vadd.f32 %v2006, %v2236
        %v2286 = vadd.f32 %v2007, %v2239
        %v2287 = vadd.f32 %v2008, %v2242
        %v2288 = vadd.f32 %v2009, %v2245
        %v2289 = vadd.f32 %v2010, %v2248
        %v2290 = vadd.f32 %v2011, %v2251
        %v2291 = vadd.f32 %v2012, %v2254
        %v2292 = vadd.f32 %v2013, %v2257
        %v2293 = vadd.f32 %v2014, %v2260
        %v2294 = vld [vmem:[%s2015 + $0x1] sm:$0xff]
        %v2295 = vld [vmem:[%s2015 + $0x9] sm:$0xff]
        %v2296 = vld [vmem:[%s2015 + $0x19] sm:$0xff]
        %v2297 = vld [vmem:[%s2015 + $0x21] sm:$0xff]
        %v2298 = vld [vmem:[%s2015 + $0x31] sm:$0xff]
        %v2299 = vld [vmem:[%s2015 + $0x39] sm:$0xff]
        %v2300 = vld [vmem:[%s2015 + $0x49] sm:$0xff]
        %v2301 = vld [vmem:[%s2015 + $0x51] sm:$0xff]
        %v2302 = vld [vmem:[%s2015 + $0x61] sm:$0xff]
        %v2303 = vld [vmem:[%s2015 + $0x69] sm:$0xff]
        %v2304 = vld [vmem:[%s2015 + $0x79] sm:$0xff]
        %v2305 = vld [vmem:[%s2015 + $0x81] sm:$0xff]
        %v2306 = vld [vmem:[%s2015 + $0x91] sm:$0xff]
        %v2307 = vld [vmem:[%s2015 + $0x99] sm:$0xff]
        %v2308 = vld [vmem:[%s2015 + $0xa9] sm:$0xff]
        %v2309 = vld [vmem:[%s2015 + $0xb1] sm:$0xff]
        %v2310 = vld [vmem:[%s2015 + $0xc1] sm:$0xff]
        %v2311 = vld [vmem:[%s2015 + $0xc9] sm:$0xff]
        %v2312 = vld [vmem:[%s2015 + $0xd9] sm:$0xff]
        %v2313 = vld [vmem:[%s2015 + $0xe1] sm:$0xff]
        %v2314 = vld [vmem:[%s2015 + $0xf1] sm:$0xff]
        %v2315 = vld [vmem:[%s2015 + $0xf9] sm:$0xff]
        %v2316 = vld [vmem:[%s2015 + $0x109] sm:$0xff]
        %v2317 = vld [vmem:[%s2015 + $0x111] sm:$0xff]
        %v2318 = vld [vmem:[%s2015 + $0x121] sm:$0xff]
        %v2319 = vld [vmem:[%s2015 + $0x129] sm:$0xff]
        %v2320 = vld [vmem:[%s2015 + $0x139] sm:$0xff]
        %v2321 = vld [vmem:[%s2015 + $0x141] sm:$0xff]
        %v2322 = vld [vmem:[%s2015 + $0x151] sm:$0xff]
        %v2323 = vld [vmem:[%s2015 + $0x159] sm:$0xff]
        %v2324 = vld [vmem:[%s2015 + $0x169] sm:$0xff]
        %v2325 = vld [vmem:[%s2015 + $0x171] sm:$0xff]
        %s2326 = scalar_lea.vmem %s1, 224
        %v2327 = vld [vmem:[%s2326] sm:$0xff]
        %v2328 = vld [vmem:[%s2326 + $0x8] sm:$0xff]
        %v2329 = vld [vmem:[%s2326 + $0x10] sm:$0xff]
        %v2330 = vld [vmem:[%s2326 + $0x18] sm:$0xff]
        %v2332 = vsel %vm382, %v2294, 0
        %v2335 = vsel %vm382, %v2295, 0
        %v2338 = vsel %vm382, %v2296, 0
        %v2341 = vsel %vm382, %v2297, 0
        %v2344 = vsel %vm382, %v2298, 0
        %v2347 = vsel %vm382, %v2299, 0
        %v2350 = vsel %vm382, %v2300, 0
        %v2353 = vsel %vm382, %v2301, 0
        %v2356 = vsel %vm382, %v2302, 0
        %v2359 = vsel %vm382, %v2303, 0
        %v2362 = vsel %vm382, %v2304, 0
        %v2365 = vsel %vm382, %v2305, 0
        %v2368 = vsel %vm382, %v2306, 0
        %v2371 = vsel %vm382, %v2307, 0
        %v2374 = vsel %vm382, %v2308, 0
        %v2377 = vsel %vm382, %v2309, 0
        %v2380 = vsel %vm382, %v2310, 0
        %v2383 = vsel %vm382, %v2311, 0
        %v2386 = vsel %vm382, %v2312, 0
        %v2389 = vsel %vm382, %v2313, 0
        %v2392 = vsel %vm382, %v2314, 0
        %v2395 = vsel %vm382, %v2315, 0
        %v2398 = vsel %vm382, %v2316, 0
        %v2401 = vsel %vm382, %v2317, 0
        %v2404 = vsel %vm382, %v2318, 0
        %v2407 = vsel %vm382, %v2319, 0
        %v2410 = vsel %vm382, %v2320, 0
        %v2413 = vsel %vm382, %v2321, 0
        %v2416 = vsel %vm382, %v2322, 0
        %v2419 = vsel %vm382, %v2323, 0
        %v2422 = vsel %vm382, %v2324, 0
        %v2425 = vsel %vm382, %v2325, 0
        %2427 = vmatpush.msra.mxu0 0.0
        %2428 = vmatpush.msra.mxu0 0.0
        %2429 = vmatpush.msra.mxu0 0.0
        %2430 = vmatpush.msra.mxu0 0.0
        %2431 = vmatpush.msra.mxu0 0.0
        %2432 = vmatpush.msra.mxu0 0.0
        %2433 = vmatpush.msra.mxu0 0.0
        %2434 = vmatpush.msra.mxu0 0.0
        %2435 = vmatpush.msra.mxu0 0.0
        %2436 = vmatpush.msra.mxu0 0.0
        %2437 = vmatpush.msra.mxu0 0.0
        %2438 = vmatpush.msra.mxu0 0.0
        %2439 = vmatpush.msra.mxu0 %v2330
        %2440 = vmatpush.msra.mxu0 %v2329
        %2441 = vmatpush.msra.mxu0 %v2328
        %2442 = vmatpush.msra.mxu0 %v2327
        %2443 = vmatmul.f32.gmra.mxu0 %v2332
        %v2444 = vpop.f32.mrf.mxu0
        %v2445 = vadd.f32 0.0, %v2444
        %2446 = vmatmul.f32.gmra.mxu0 %v2335
        %v2447 = vpop.f32.mrf.mxu0
        %v2448 = vadd.f32 0.0, %v2447
        %2449 = vmatmul.f32.gmra.mxu0 %v2338
        %v2450 = vpop.f32.mrf.mxu0
        %v2451 = vadd.f32 0.0, %v2450
        %2452 = vmatmul.f32.gmra.mxu0 %v2341
        %v2453 = vpop.f32.mrf.mxu0
        %v2454 = vadd.f32 0.0, %v2453
        %2455 = vmatmul.f32.gmra.mxu0 %v2344
        %v2456 = vpop.f32.mrf.mxu0
        %v2457 = vadd.f32 0.0, %v2456
        %2458 = vmatmul.f32.gmra.mxu0 %v2347
        %v2459 = vpop.f32.mrf.mxu0
        %v2460 = vadd.f32 0.0, %v2459
        %2461 = vmatmul.f32.gmra.mxu0 %v2350
        %v2462 = vpop.f32.mrf.mxu0
        %v2463 = vadd.f32 0.0, %v2462
        %2464 = vmatmul.f32.gmra.mxu0 %v2353
        %v2465 = vpop.f32.mrf.mxu0
        %v2466 = vadd.f32 0.0, %v2465
        %2467 = vmatmul.f32.gmra.mxu0 %v2356
        %v2468 = vpop.f32.mrf.mxu0
        %v2469 = vadd.f32 0.0, %v2468
        %2470 = vmatmul.f32.gmra.mxu0 %v2359
        %v2471 = vpop.f32.mrf.mxu0
        %v2472 = vadd.f32 0.0, %v2471
        %2473 = vmatmul.f32.gmra.mxu0 %v2362
        %v2474 = vpop.f32.mrf.mxu0
        %v2475 = vadd.f32 0.0, %v2474
        %2476 = vmatmul.f32.gmra.mxu0 %v2365
        %v2477 = vpop.f32.mrf.mxu0
        %v2478 = vadd.f32 0.0, %v2477
        %2479 = vmatmul.f32.gmra.mxu0 %v2368
        %v2480 = vpop.f32.mrf.mxu0
        %v2481 = vadd.f32 0.0, %v2480
        %2482 = vmatmul.f32.gmra.mxu0 %v2371
        %v2483 = vpop.f32.mrf.mxu0
        %v2484 = vadd.f32 0.0, %v2483
        %2485 = vmatmul.f32.gmra.mxu0 %v2374
        %v2486 = vpop.f32.mrf.mxu0
        %v2487 = vadd.f32 0.0, %v2486
        %2488 = vmatmul.f32.gmra.mxu0 %v2377
        %v2489 = vpop.f32.mrf.mxu0
        %v2490 = vadd.f32 0.0, %v2489
        %2491 = vmatmul.f32.gmra.mxu0 %v2380
        %v2492 = vpop.f32.mrf.mxu0
        %v2493 = vadd.f32 0.0, %v2492
        %2494 = vmatmul.f32.gmra.mxu0 %v2383
        %v2495 = vpop.f32.mrf.mxu0
        %v2496 = vadd.f32 0.0, %v2495
        %2497 = vmatmul.f32.gmra.mxu0 %v2386
        %v2498 = vpop.f32.mrf.mxu0
        %v2499 = vadd.f32 0.0, %v2498
        %2500 = vmatmul.f32.gmra.mxu0 %v2389
        %v2501 = vpop.f32.mrf.mxu0
        %v2502 = vadd.f32 0.0, %v2501
        %2503 = vmatmul.f32.gmra.mxu0 %v2392
        %v2504 = vpop.f32.mrf.mxu0
        %v2505 = vadd.f32 0.0, %v2504
        %2506 = vmatmul.f32.gmra.mxu0 %v2395
        %v2507 = vpop.f32.mrf.mxu0
        %v2508 = vadd.f32 0.0, %v2507
        %2509 = vmatmul.f32.gmra.mxu0 %v2398
        %v2510 = vpop.f32.mrf.mxu0
        %v2511 = vadd.f32 0.0, %v2510
        %2512 = vmatmul.f32.gmra.mxu0 %v2401
        %v2513 = vpop.f32.mrf.mxu0
        %v2514 = vadd.f32 0.0, %v2513
        %2515 = vmatmul.f32.gmra.mxu0 %v2404
        %v2516 = vpop.f32.mrf.mxu0
        %v2517 = vadd.f32 0.0, %v2516
        %2518 = vmatmul.f32.gmra.mxu0 %v2407
        %v2519 = vpop.f32.mrf.mxu0
        %v2520 = vadd.f32 0.0, %v2519
        %2521 = vmatmul.f32.gmra.mxu0 %v2410
        %v2522 = vpop.f32.mrf.mxu0
        %v2523 = vadd.f32 0.0, %v2522
        %2524 = vmatmul.f32.gmra.mxu0 %v2413
        %v2525 = vpop.f32.mrf.mxu0
        %v2526 = vadd.f32 0.0, %v2525
        %2527 = vmatmul.f32.gmra.mxu0 %v2416
        %v2528 = vpop.f32.mrf.mxu0
        %v2529 = vadd.f32 0.0, %v2528
        %2530 = vmatmul.f32.gmra.mxu0 %v2419
        %v2531 = vpop.f32.mrf.mxu0
        %v2532 = vadd.f32 0.0, %v2531
        %2533 = vmatmul.f32.gmra.mxu0 %v2422
        %v2534 = vpop.f32.mrf.mxu0
        %v2535 = vadd.f32 0.0, %v2534
        %2536 = vmatmul.f32.gmra.mxu0 %v2425
        %v2537 = vpop.f32.mrf.mxu0
        %v2538 = vadd.f32 0.0, %v2537
        %2539 = vdwg.mxu0
        %v2540 = vadd.f32 %v2262, %v2445
        %v2541 = vadd.f32 %v2263, %v2448
        %v2542 = vadd.f32 %v2264, %v2451
        %v2543 = vadd.f32 %v2265, %v2454
        %v2544 = vadd.f32 %v2266, %v2457
        %v2545 = vadd.f32 %v2267, %v2460
        %v2546 = vadd.f32 %v2268, %v2463
        %v2547 = vadd.f32 %v2269, %v2466
        %v2548 = vadd.f32 %v2270, %v2469
        %v2549 = vadd.f32 %v2271, %v2472
        %v2550 = vadd.f32 %v2272, %v2475
        %v2551 = vadd.f32 %v2273, %v2478
        %v2552 = vadd.f32 %v2274, %v2481
        %v2553 = vadd.f32 %v2275, %v2484
        %v2554 = vadd.f32 %v2276, %v2487
        %v2555 = vadd.f32 %v2277, %v2490
        %v2556 = vadd.f32 %v2278, %v2493
        %v2557 = vadd.f32 %v2279, %v2496
        %v2558 = vadd.f32 %v2280, %v2499
        %v2559 = vadd.f32 %v2281, %v2502
        %v2560 = vadd.f32 %v2282, %v2505
        %v2561 = vadd.f32 %v2283, %v2508
        %v2562 = vadd.f32 %v2284, %v2511
        %v2563 = vadd.f32 %v2285, %v2514
        %v2564 = vadd.f32 %v2286, %v2517
        %v2565 = vadd.f32 %v2287, %v2520
        %v2566 = vadd.f32 %v2288, %v2523
        %v2567 = vadd.f32 %v2289, %v2526
        %v2568 = vadd.f32 %v2290, %v2529
        %v2569 = vadd.f32 %v2291, %v2532
        %v2570 = vadd.f32 %v2292, %v2535
        %v2571 = vadd.f32 %v2293, %v2538
        %v2572 = vld [vmem:[%s2015 + $0x2] sm:$0xff]
        %v2573 = vld [vmem:[%s2015 + $0xa] sm:$0xff]
        %v2574 = vld [vmem:[%s2015 + $0x1a] sm:$0xff]
        %v2575 = vld [vmem:[%s2015 + $0x22] sm:$0xff]
        %v2576 = vld [vmem:[%s2015 + $0x32] sm:$0xff]
        %v2577 = vld [vmem:[%s2015 + $0x3a] sm:$0xff]
        %v2578 = vld [vmem:[%s2015 + $0x4a] sm:$0xff]
        %v2579 = vld [vmem:[%s2015 + $0x52] sm:$0xff]
        %v2580 = vld [vmem:[%s2015 + $0x62] sm:$0xff]
        %v2581 = vld [vmem:[%s2015 + $0x6a] sm:$0xff]
        %v2582 = vld [vmem:[%s2015 + $0x7a] sm:$0xff]
        %v2583 = vld [vmem:[%s2015 + $0x82] sm:$0xff]
        %v2584 = vld [vmem:[%s2015 + $0x92] sm:$0xff]
        %v2585 = vld [vmem:[%s2015 + $0x9a] sm:$0xff]
        %v2586 = vld [vmem:[%s2015 + $0xaa] sm:$0xff]
        %v2587 = vld [vmem:[%s2015 + $0xb2] sm:$0xff]
        %v2588 = vld [vmem:[%s2015 + $0xc2] sm:$0xff]
        %v2589 = vld [vmem:[%s2015 + $0xca] sm:$0xff]
        %v2590 = vld [vmem:[%s2015 + $0xda] sm:$0xff]
        %v2591 = vld [vmem:[%s2015 + $0xe2] sm:$0xff]
        %v2592 = vld [vmem:[%s2015 + $0xf2] sm:$0xff]
        %v2593 = vld [vmem:[%s2015 + $0xfa] sm:$0xff]
        %v2594 = vld [vmem:[%s2015 + $0x10a] sm:$0xff]
        %v2595 = vld [vmem:[%s2015 + $0x112] sm:$0xff]
        %v2596 = vld [vmem:[%s2015 + $0x122] sm:$0xff]
        %v2597 = vld [vmem:[%s2015 + $0x12a] sm:$0xff]
        %v2598 = vld [vmem:[%s2015 + $0x13a] sm:$0xff]
        %v2599 = vld [vmem:[%s2015 + $0x142] sm:$0xff]
        %v2600 = vld [vmem:[%s2015 + $0x152] sm:$0xff]
        %v2601 = vld [vmem:[%s2015 + $0x15a] sm:$0xff]
        %v2602 = vld [vmem:[%s2015 + $0x16a] sm:$0xff]
        %v2603 = vld [vmem:[%s2015 + $0x172] sm:$0xff]
        %s2604 = scalar_lea.vmem %s1, 256
        %v2605 = vld [vmem:[%s2604] sm:$0xff]
        %v2606 = vld [vmem:[%s2604 + $0x8] sm:$0xff]
        %v2607 = vld [vmem:[%s2604 + $0x10] sm:$0xff]
        %v2608 = vld [vmem:[%s2604 + $0x18] sm:$0xff]
        %v2610 = vsel %vm382, %v2572, 0
        %v2613 = vsel %vm382, %v2573, 0
        %v2616 = vsel %vm382, %v2574, 0
        %v2619 = vsel %vm382, %v2575, 0
        %v2622 = vsel %vm382, %v2576, 0
        %v2625 = vsel %vm382, %v2577, 0
        %v2628 = vsel %vm382, %v2578, 0
        %v2631 = vsel %vm382, %v2579, 0
        %v2634 = vsel %vm382, %v2580, 0
        %v2637 = vsel %vm382, %v2581, 0
        %v2640 = vsel %vm382, %v2582, 0
        %v2643 = vsel %vm382, %v2583, 0
        %v2646 = vsel %vm382, %v2584, 0
        %v2649 = vsel %vm382, %v2585, 0
        %v2652 = vsel %vm382, %v2586, 0
        %v2655 = vsel %vm382, %v2587, 0
        %v2658 = vsel %vm382, %v2588, 0
        %v2661 = vsel %vm382, %v2589, 0
        %v2664 = vsel %vm382, %v2590, 0
        %v2667 = vsel %vm382, %v2591, 0
        %v2670 = vsel %vm382, %v2592, 0
        %v2673 = vsel %vm382, %v2593, 0
        %v2676 = vsel %vm382, %v2594, 0
        %v2679 = vsel %vm382, %v2595, 0
        %v2682 = vsel %vm382, %v2596, 0
        %v2685 = vsel %vm382, %v2597, 0
        %v2688 = vsel %vm382, %v2598, 0
        %v2691 = vsel %vm382, %v2599, 0
        %v2694 = vsel %vm382, %v2600, 0
        %v2697 = vsel %vm382, %v2601, 0
        %v2700 = vsel %vm382, %v2602, 0
        %v2703 = vsel %vm382, %v2603, 0
        %2705 = vmatpush.msra.mxu0 0.0
        %2706 = vmatpush.msra.mxu0 0.0
        %2707 = vmatpush.msra.mxu0 0.0
        %2708 = vmatpush.msra.mxu0 0.0
        %2709 = vmatpush.msra.mxu0 0.0
        %2710 = vmatpush.msra.mxu0 0.0
        %2711 = vmatpush.msra.mxu0 0.0
        %2712 = vmatpush.msra.mxu0 0.0
        %2713 = vmatpush.msra.mxu0 0.0
        %2714 = vmatpush.msra.mxu0 0.0
        %2715 = vmatpush.msra.mxu0 0.0
        %2716 = vmatpush.msra.mxu0 0.0
        %2717 = vmatpush.msra.mxu0 %v2608
        %2718 = vmatpush.msra.mxu0 %v2607
        %2719 = vmatpush.msra.mxu0 %v2606
        %2720 = vmatpush.msra.mxu0 %v2605
        %2721 = vmatmul.f32.gmra.mxu0 %v2610
        %v2722 = vpop.f32.mrf.mxu0
        %v2723 = vadd.f32 0.0, %v2722
        %2724 = vmatmul.f32.gmra.mxu0 %v2613
        %v2725 = vpop.f32.mrf.mxu0
        %v2726 = vadd.f32 0.0, %v2725
        %2727 = vmatmul.f32.gmra.mxu0 %v2616
        %v2728 = vpop.f32.mrf.mxu0
        %v2729 = vadd.f32 0.0, %v2728
        %2730 = vmatmul.f32.gmra.mxu0 %v2619
        %v2731 = vpop.f32.mrf.mxu0
        %v2732 = vadd.f32 0.0, %v2731
        %2733 = vmatmul.f32.gmra.mxu0 %v2622
        %v2734 = vpop.f32.mrf.mxu0
        %v2735 = vadd.f32 0.0, %v2734
        %2736 = vmatmul.f32.gmra.mxu0 %v2625
        %v2737 = vpop.f32.mrf.mxu0
        %v2738 = vadd.f32 0.0, %v2737
        %2739 = vmatmul.f32.gmra.mxu0 %v2628
        %v2740 = vpop.f32.mrf.mxu0
        %v2741 = vadd.f32 0.0, %v2740
        %2742 = vmatmul.f32.gmra.mxu0 %v2631
        %v2743 = vpop.f32.mrf.mxu0
        %v2744 = vadd.f32 0.0, %v2743
        %2745 = vmatmul.f32.gmra.mxu0 %v2634
        %v2746 = vpop.f32.mrf.mxu0
        %v2747 = vadd.f32 0.0, %v2746
        %2748 = vmatmul.f32.gmra.mxu0 %v2637
        %v2749 = vpop.f32.mrf.mxu0
        %v2750 = vadd.f32 0.0, %v2749
        %2751 = vmatmul.f32.gmra.mxu0 %v2640
        %v2752 = vpop.f32.mrf.mxu0
        %v2753 = vadd.f32 0.0, %v2752
        %2754 = vmatmul.f32.gmra.mxu0 %v2643
        %v2755 = vpop.f32.mrf.mxu0
        %v2756 = vadd.f32 0.0, %v2755
        %2757 = vmatmul.f32.gmra.mxu0 %v2646
        %v2758 = vpop.f32.mrf.mxu0
        %v2759 = vadd.f32 0.0, %v2758
        %2760 = vmatmul.f32.gmra.mxu0 %v2649
        %v2761 = vpop.f32.mrf.mxu0
        %v2762 = vadd.f32 0.0, %v2761
        %2763 = vmatmul.f32.gmra.mxu0 %v2652
        %v2764 = vpop.f32.mrf.mxu0
        %v2765 = vadd.f32 0.0, %v2764
        %2766 = vmatmul.f32.gmra.mxu0 %v2655
        %v2767 = vpop.f32.mrf.mxu0
        %v2768 = vadd.f32 0.0, %v2767
        %2769 = vmatmul.f32.gmra.mxu0 %v2658
        %v2770 = vpop.f32.mrf.mxu0
        %v2771 = vadd.f32 0.0, %v2770
        %2772 = vmatmul.f32.gmra.mxu0 %v2661
        %v2773 = vpop.f32.mrf.mxu0
        %v2774 = vadd.f32 0.0, %v2773
        %2775 = vmatmul.f32.gmra.mxu0 %v2664
        %v2776 = vpop.f32.mrf.mxu0
        %v2777 = vadd.f32 0.0, %v2776
        %2778 = vmatmul.f32.gmra.mxu0 %v2667
        %v2779 = vpop.f32.mrf.mxu0
        %v2780 = vadd.f32 0.0, %v2779
        %2781 = vmatmul.f32.gmra.mxu0 %v2670
        %v2782 = vpop.f32.mrf.mxu0
        %v2783 = vadd.f32 0.0, %v2782
        %2784 = vmatmul.f32.gmra.mxu0 %v2673
        %v2785 = vpop.f32.mrf.mxu0
        %v2786 = vadd.f32 0.0, %v2785
        %2787 = vmatmul.f32.gmra.mxu0 %v2676
        %v2788 = vpop.f32.mrf.mxu0
        %v2789 = vadd.f32 0.0, %v2788
        %2790 = vmatmul.f32.gmra.mxu0 %v2679
        %v2791 = vpop.f32.mrf.mxu0
        %v2792 = vadd.f32 0.0, %v2791
        %2793 = vmatmul.f32.gmra.mxu0 %v2682
        %v2794 = vpop.f32.mrf.mxu0
        %v2795 = vadd.f32 0.0, %v2794
        %2796 = vmatmul.f32.gmra.mxu0 %v2685
        %v2797 = vpop.f32.mrf.mxu0
        %v2798 = vadd.f32 0.0, %v2797
        %2799 = vmatmul.f32.gmra.mxu0 %v2688
        %v2800 = vpop.f32.mrf.mxu0
        %v2801 = vadd.f32 0.0, %v2800
        %2802 = vmatmul.f32.gmra.mxu0 %v2691
        %v2803 = vpop.f32.mrf.mxu0
        %v2804 = vadd.f32 0.0, %v2803
        %2805 = vmatmul.f32.gmra.mxu0 %v2694
        %v2806 = vpop.f32.mrf.mxu0
        %v2807 = vadd.f32 0.0, %v2806
        %2808 = vmatmul.f32.gmra.mxu0 %v2697
        %v2809 = vpop.f32.mrf.mxu0
        %v2810 = vadd.f32 0.0, %v2809
        %2811 = vmatmul.f32.gmra.mxu0 %v2700
        %v2812 = vpop.f32.mrf.mxu0
        %v2813 = vadd.f32 0.0, %v2812
        %2814 = vmatmul.f32.gmra.mxu0 %v2703
        %v2815 = vpop.f32.mrf.mxu0
        %v2816 = vadd.f32 0.0, %v2815
        %2817 = vdwg.mxu0
        %v2818 = vadd.f32 %v2540, %v2723
        %v2819 = vadd.f32 %v2541, %v2726
        %v2820 = vadd.f32 %v2542, %v2729
        %v2821 = vadd.f32 %v2543, %v2732
        %v2822 = vadd.f32 %v2544, %v2735
        %v2823 = vadd.f32 %v2545, %v2738
        %v2824 = vadd.f32 %v2546, %v2741
        %v2825 = vadd.f32 %v2547, %v2744
        %v2826 = vadd.f32 %v2548, %v2747
        %v2827 = vadd.f32 %v2549, %v2750
        %v2828 = vadd.f32 %v2550, %v2753
        %v2829 = vadd.f32 %v2551, %v2756
        %v2830 = vadd.f32 %v2552, %v2759
        %v2831 = vadd.f32 %v2553, %v2762
        %v2832 = vadd.f32 %v2554, %v2765
        %v2833 = vadd.f32 %v2555, %v2768
        %v2834 = vadd.f32 %v2556, %v2771
        %v2835 = vadd.f32 %v2557, %v2774
        %v2836 = vadd.f32 %v2558, %v2777
        %v2837 = vadd.f32 %v2559, %v2780
        %v2838 = vadd.f32 %v2560, %v2783
        %v2839 = vadd.f32 %v2561, %v2786
        %v2840 = vadd.f32 %v2562, %v2789
        %v2841 = vadd.f32 %v2563, %v2792
        %v2842 = vadd.f32 %v2564, %v2795
        %v2843 = vadd.f32 %v2565, %v2798
        %v2844 = vadd.f32 %v2566, %v2801
        %v2845 = vadd.f32 %v2567, %v2804
        %v2846 = vadd.f32 %v2568, %v2807
        %v2847 = vadd.f32 %v2569, %v2810
        %v2848 = vadd.f32 %v2570, %v2813
        %v2849 = vadd.f32 %v2571, %v2816
        %v2850 = vxor.u32 %v2818, 2147483648
        %v2851 = vxor.u32 %v2819, 2147483648
        %v2852 = vxor.u32 %v2820, 2147483648
        %v2853 = vxor.u32 %v2821, 2147483648
        %v2854 = vxor.u32 %v2822, 2147483648
        %v2855 = vxor.u32 %v2823, 2147483648
        %v2856 = vxor.u32 %v2824, 2147483648
        %v2857 = vxor.u32 %v2825, 2147483648
        %v2858 = vxor.u32 %v2826, 2147483648
        %v2859 = vxor.u32 %v2827, 2147483648
        %v2860 = vxor.u32 %v2828, 2147483648
        %v2861 = vxor.u32 %v2829, 2147483648
        %v2862 = vxor.u32 %v2830, 2147483648
        %v2863 = vxor.u32 %v2831, 2147483648
        %v2864 = vxor.u32 %v2832, 2147483648
        %v2865 = vxor.u32 %v2833, 2147483648
        %v2866 = vxor.u32 %v2834, 2147483648
        %v2867 = vxor.u32 %v2835, 2147483648
        %v2868 = vxor.u32 %v2836, 2147483648
        %v2869 = vxor.u32 %v2837, 2147483648
        %v2870 = vxor.u32 %v2838, 2147483648
        %v2871 = vxor.u32 %v2839, 2147483648
        %v2872 = vxor.u32 %v2840, 2147483648
        %v2873 = vxor.u32 %v2841, 2147483648
        %v2874 = vxor.u32 %v2842, 2147483648
        %v2875 = vxor.u32 %v2843, 2147483648
        %v2876 = vxor.u32 %v2844, 2147483648
        %v2877 = vxor.u32 %v2845, 2147483648
        %v2878 = vxor.u32 %v2846, 2147483648
        %v2879 = vxor.u32 %v2847, 2147483648
        %v2880 = vxor.u32 %v2848, 2147483648
        %v2881 = vxor.u32 %v2849, 2147483648
        %v2882 = vmul.f32 %v2850, 1.442695
        %v2883 = vpow.pop %v2882
        %v2884 = vmul.f32 %v2851, 1.442695
        %v2885 = vpow.pop %v2884
        %v2886 = vmul.f32 %v2852, 1.442695
        %v2887 = vpow.pop %v2886
        %v2888 = vmul.f32 %v2853, 1.442695
        %v2889 = vpow.pop %v2888
        %v2890 = vmul.f32 %v2854, 1.442695
        %v2891 = vpow.pop %v2890
        %v2892 = vmul.f32 %v2855, 1.442695
        %v2893 = vpow.pop %v2892
        %v2894 = vmul.f32 %v2856, 1.442695
        %v2895 = vpow.pop %v2894
        %v2896 = vmul.f32 %v2857, 1.442695
        %v2897 = vpow.pop %v2896
        %v2898 = vmul.f32 %v2858, 1.442695
        %v2899 = vpow.pop %v2898
        %v2900 = vmul.f32 %v2859, 1.442695
        %v2901 = vpow.pop %v2900
        %v2902 = vmul.f32 %v2860, 1.442695
        %v2903 = vpow.pop %v2902
        %v2904 = vmul.f32 %v2861, 1.442695
        %v2905 = vpow.pop %v2904
        %v2906 = vmul.f32 %v2862, 1.442695
        %v2907 = vpow.pop %v2906
        %v2908 = vmul.f32 %v2863, 1.442695
        %v2909 = vpow.pop %v2908
        %v2910 = vmul.f32 %v2864, 1.442695
        %v2911 = vpow.pop %v2910
        %v2912 = vmul.f32 %v2865, 1.442695
        %v2913 = vpow.pop %v2912
        %v2914 = vmul.f32 %v2866, 1.442695
        %v2915 = vpow.pop %v2914
        %v2916 = vmul.f32 %v2867, 1.442695
        %v2917 = vpow.pop %v2916
        %v2918 = vmul.f32 %v2868, 1.442695
        %v2919 = vpow.pop %v2918
        %v2920 = vmul.f32 %v2869, 1.442695
        %v2921 = vpow.pop %v2920
        %v2922 = vmul.f32 %v2870, 1.442695
        %v2923 = vpow.pop %v2922
        %v2924 = vmul.f32 %v2871, 1.442695
        %v2925 = vpow.pop %v2924
        %v2926 = vmul.f32 %v2872, 1.442695
        %v2927 = vpow.pop %v2926
        %v2928 = vmul.f32 %v2873, 1.442695
        %v2929 = vpow.pop %v2928
        %v2930 = vmul.f32 %v2874, 1.442695
        %v2931 = vpow.pop %v2930
        %v2932 = vmul.f32 %v2875, 1.442695
        %v2933 = vpow.pop %v2932
        %v2934 = vmul.f32 %v2876, 1.442695
        %v2935 = vpow.pop %v2934
        %v2936 = vmul.f32 %v2877, 1.442695
        %v2937 = vpow.pop %v2936
        %v2938 = vmul.f32 %v2878, 1.442695
        %v2939 = vpow.pop %v2938
        %v2940 = vmul.f32 %v2879, 1.442695
        %v2941 = vpow.pop %v2940
        %v2942 = vmul.f32 %v2880, 1.442695
        %v2943 = vpow.pop %v2942
        %v2944 = vmul.f32 %v2881, 1.442695
        %v2945 = vpow.pop %v2944
        %v2946 = vadd.f32 %v2883, 1.0
        %v2947 = vadd.f32 %v2885, 1.0
        %v2948 = vadd.f32 %v2887, 1.0
        %v2949 = vadd.f32 %v2889, 1.0
        %v2950 = vadd.f32 %v2891, 1.0
        %v2951 = vadd.f32 %v2893, 1.0
        %v2952 = vadd.f32 %v2895, 1.0
        %v2953 = vadd.f32 %v2897, 1.0
        %v2954 = vadd.f32 %v2899, 1.0
        %v2955 = vadd.f32 %v2901, 1.0
        %v2956 = vadd.f32 %v2903, 1.0
        %v2957 = vadd.f32 %v2905, 1.0
        %v2958 = vadd.f32 %v2907, 1.0
        %v2959 = vadd.f32 %v2909, 1.0
        %v2960 = vadd.f32 %v2911, 1.0
        %v2961 = vadd.f32 %v2913, 1.0
        %v2962 = vadd.f32 %v2915, 1.0
        %v2963 = vadd.f32 %v2917, 1.0
        %v2964 = vadd.f32 %v2919, 1.0
        %v2965 = vadd.f32 %v2921, 1.0
        %v2966 = vadd.f32 %v2923, 1.0
        %v2967 = vadd.f32 %v2925, 1.0
        %v2968 = vadd.f32 %v2927, 1.0
        %v2969 = vadd.f32 %v2929, 1.0
        %v2970 = vadd.f32 %v2931, 1.0
        %v2971 = vadd.f32 %v2933, 1.0
        %v2972 = vadd.f32 %v2935, 1.0
        %v2973 = vadd.f32 %v2937, 1.0
        %v2974 = vadd.f32 %v2939, 1.0
        %v2975 = vadd.f32 %v2941, 1.0
        %v2976 = vadd.f32 %v2943, 1.0
        %v2977 = vadd.f32 %v2945, 1.0
        %v2978 = vrcp.pop %v2946
        %v2979 = vmul.f32 %v2946, %v2978
        %v2980 = vsub.f32 1.0, %v2979
        %v2981 = vmul.f32 %v2978, %v2980
        %v2982 = vadd.f32 %v2978, %v2981
        %vm2983 = vweird.f32 %v2946
        %vm2984 = vweird.f32 %v2978
        %vm2985 = vmor %vm2983, %vm2984
        %v2986 = vsel %vm2985, %v2978, %v2982
        %v2987 = vand.u32 2147483647, %v2946
        %vm2988 = vcmp.eq.f32.partialorder %v2987, 8.507059e+37
        %v2989 = vand.u32 %v2946, 2147483648
        %v2990 = vor.u32 1.1754944e-38, %v2989
        %v2991 = vsel %vm2988, %v2990, %v2986
        %v2992 = vmul.f32 1.0, %v2991
        %v2993 = vrcp.pop %v2947
        %v2994 = vmul.f32 %v2947, %v2993
        %v2995 = vsub.f32 1.0, %v2994
        %v2996 = vmul.f32 %v2993, %v2995
        %v2997 = vadd.f32 %v2993, %v2996
        %vm2998 = vweird.f32 %v2947
        %vm2999 = vweird.f32 %v2993
        %vm3000 = vmor %vm2998, %vm2999
        %v3001 = vsel %vm3000, %v2993, %v2997
        %v3002 = vand.u32 2147483647, %v2947
        %vm3003 = vcmp.eq.f32.partialorder %v3002, 8.507059e+37
        %v3004 = vand.u32 %v2947, 2147483648
        %v3005 = vor.u32 1.1754944e-38, %v3004
        %v3006 = vsel %vm3003, %v3005, %v3001
        %v3007 = vmul.f32 1.0, %v3006
        %v3008 = vrcp.pop %v2948
        %v3009 = vmul.f32 %v2948, %v3008
        %v3010 = vsub.f32 1.0, %v3009
        %v3011 = vmul.f32 %v3008, %v3010
        %v3012 = vadd.f32 %v3008, %v3011
        %vm3013 = vweird.f32 %v2948
        %vm3014 = vweird.f32 %v3008
        %vm3015 = vmor %vm3013, %vm3014
        %v3016 = vsel %vm3015, %v3008, %v3012
        %v3017 = vand.u32 2147483647, %v2948
        %vm3018 = vcmp.eq.f32.partialorder %v3017, 8.507059e+37
        %v3019 = vand.u32 %v2948, 2147483648
        %v3020 = vor.u32 1.1754944e-38, %v3019
        %v3021 = vsel %vm3018, %v3020, %v3016
        %v3022 = vmul.f32 1.0, %v3021
        %v3023 = vrcp.pop %v2949
        %v3024 = vmul.f32 %v2949, %v3023
        %v3025 = vsub.f32 1.0, %v3024
        %v3026 = vmul.f32 %v3023, %v3025
        %v3027 = vadd.f32 %v3023, %v3026
        %vm3028 = vweird.f32 %v2949
        %vm3029 = vweird.f32 %v3023
        %vm3030 = vmor %vm3028, %vm3029
        %v3031 = vsel %vm3030, %v3023, %v3027
        %v3032 = vand.u32 2147483647, %v2949
        %vm3033 = vcmp.eq.f32.partialorder %v3032, 8.507059e+37
        %v3034 = vand.u32 %v2949, 2147483648
        %v3035 = vor.u32 1.1754944e-38, %v3034
        %v3036 = vsel %vm3033, %v3035, %v3031
        %v3037 = vmul.f32 1.0, %v3036
        %v3038 = vrcp.pop %v2950
        %v3039 = vmul.f32 %v2950, %v3038
        %v3040 = vsub.f32 1.0, %v3039
        %v3041 = vmul.f32 %v3038, %v3040
        %v3042 = vadd.f32 %v3038, %v3041
        %vm3043 = vweird.f32 %v2950
        %vm3044 = vweird.f32 %v3038
        %vm3045 = vmor %vm3043, %vm3044
        %v3046 = vsel %vm3045, %v3038, %v3042
        %v3047 = vand.u32 2147483647, %v2950
        %vm3048 = vcmp.eq.f32.partialorder %v3047, 8.507059e+37
        %v3049 = vand.u32 %v2950, 2147483648
        %v3050 = vor.u32 1.1754944e-38, %v3049
        %v3051 = vsel %vm3048, %v3050, %v3046
        %v3052 = vmul.f32 1.0, %v3051
        %v3053 = vrcp.pop %v2951
        %v3054 = vmul.f32 %v2951, %v3053
        %v3055 = vsub.f32 1.0, %v3054
        %v3056 = vmul.f32 %v3053, %v3055
        %v3057 = vadd.f32 %v3053, %v3056
        %vm3058 = vweird.f32 %v2951
        %vm3059 = vweird.f32 %v3053
        %vm3060 = vmor %vm3058, %vm3059
        %v3061 = vsel %vm3060, %v3053, %v3057
        %v3062 = vand.u32 2147483647, %v2951
        %vm3063 = vcmp.eq.f32.partialorder %v3062, 8.507059e+37
        %v3064 = vand.u32 %v2951, 2147483648
        %v3065 = vor.u32 1.1754944e-38, %v3064
        %v3066 = vsel %vm3063, %v3065, %v3061
        %v3067 = vmul.f32 1.0, %v3066
        %v3068 = vrcp.pop %v2952
        %v3069 = vmul.f32 %v2952, %v3068
        %v3070 = vsub.f32 1.0, %v3069
        %v3071 = vmul.f32 %v3068, %v3070
        %v3072 = vadd.f32 %v3068, %v3071
        %vm3073 = vweird.f32 %v2952
        %vm3074 = vweird.f32 %v3068
        %vm3075 = vmor %vm3073, %vm3074
        %v3076 = vsel %vm3075, %v3068, %v3072
        %v3077 = vand.u32 2147483647, %v2952
        %vm3078 = vcmp.eq.f32.partialorder %v3077, 8.507059e+37
        %v3079 = vand.u32 %v2952, 2147483648
        %v3080 = vor.u32 1.1754944e-38, %v3079
        %v3081 = vsel %vm3078, %v3080, %v3076
        %v3082 = vmul.f32 1.0, %v3081
        %v3083 = vrcp.pop %v2953
        %v3084 = vmul.f32 %v2953, %v3083
        %v3085 = vsub.f32 1.0, %v3084
        %v3086 = vmul.f32 %v3083, %v3085
        %v3087 = vadd.f32 %v3083, %v3086
        %vm3088 = vweird.f32 %v2953
        %vm3089 = vweird.f32 %v3083
        %vm3090 = vmor %vm3088, %vm3089
        %v3091 = vsel %vm3090, %v3083, %v3087
        %v3092 = vand.u32 2147483647, %v2953
        %vm3093 = vcmp.eq.f32.partialorder %v3092, 8.507059e+37
        %v3094 = vand.u32 %v2953, 2147483648
        %v3095 = vor.u32 1.1754944e-38, %v3094
        %v3096 = vsel %vm3093, %v3095, %v3091
        %v3097 = vmul.f32 1.0, %v3096
        %v3098 = vrcp.pop %v2954
        %v3099 = vmul.f32 %v2954, %v3098
        %v3100 = vsub.f32 1.0, %v3099
        %v3101 = vmul.f32 %v3098, %v3100
        %v3102 = vadd.f32 %v3098, %v3101
        %vm3103 = vweird.f32 %v2954
        %vm3104 = vweird.f32 %v3098
        %vm3105 = vmor %vm3103, %vm3104
        %v3106 = vsel %vm3105, %v3098, %v3102
        %v3107 = vand.u32 2147483647, %v2954
        %vm3108 = vcmp.eq.f32.partialorder %v3107, 8.507059e+37
        %v3109 = vand.u32 %v2954, 2147483648
        %v3110 = vor.u32 1.1754944e-38, %v3109
        %v3111 = vsel %vm3108, %v3110, %v3106
        %v3112 = vmul.f32 1.0, %v3111
        %v3113 = vrcp.pop %v2955
        %v3114 = vmul.f32 %v2955, %v3113
        %v3115 = vsub.f32 1.0, %v3114
        %v3116 = vmul.f32 %v3113, %v3115
        %v3117 = vadd.f32 %v3113, %v3116
        %vm3118 = vweird.f32 %v2955
        %vm3119 = vweird.f32 %v3113
        %vm3120 = vmor %vm3118, %vm3119
        %v3121 = vsel %vm3120, %v3113, %v3117
        %v3122 = vand.u32 2147483647, %v2955
        %vm3123 = vcmp.eq.f32.partialorder %v3122, 8.507059e+37
        %v3124 = vand.u32 %v2955, 2147483648
        %v3125 = vor.u32 1.1754944e-38, %v3124
        %v3126 = vsel %vm3123, %v3125, %v3121
        %v3127 = vmul.f32 1.0, %v3126
        %v3128 = vrcp.pop %v2956
        %v3129 = vmul.f32 %v2956, %v3128
        %v3130 = vsub.f32 1.0, %v3129
        %v3131 = vmul.f32 %v3128, %v3130
        %v3132 = vadd.f32 %v3128, %v3131
        %vm3133 = vweird.f32 %v2956
        %vm3134 = vweird.f32 %v3128
        %vm3135 = vmor %vm3133, %vm3134
        %v3136 = vsel %vm3135, %v3128, %v3132
        %v3137 = vand.u32 2147483647, %v2956
        %vm3138 = vcmp.eq.f32.partialorder %v3137, 8.507059e+37
        %v3139 = vand.u32 %v2956, 2147483648
        %v3140 = vor.u32 1.1754944e-38, %v3139
        %v3141 = vsel %vm3138, %v3140, %v3136
        %v3142 = vmul.f32 1.0, %v3141
        %v3143 = vrcp.pop %v2957
        %v3144 = vmul.f32 %v2957, %v3143
        %v3145 = vsub.f32 1.0, %v3144
        %v3146 = vmul.f32 %v3143, %v3145
        %v3147 = vadd.f32 %v3143, %v3146
        %vm3148 = vweird.f32 %v2957
        %vm3149 = vweird.f32 %v3143
        %vm3150 = vmor %vm3148, %vm3149
        %v3151 = vsel %vm3150, %v3143, %v3147
        %v3152 = vand.u32 2147483647, %v2957
        %vm3153 = vcmp.eq.f32.partialorder %v3152, 8.507059e+37
        %v3154 = vand.u32 %v2957, 2147483648
        %v3155 = vor.u32 1.1754944e-38, %v3154
        %v3156 = vsel %vm3153, %v3155, %v3151
        %v3157 = vmul.f32 1.0, %v3156
        %v3158 = vrcp.pop %v2958
        %v3159 = vmul.f32 %v2958, %v3158
        %v3160 = vsub.f32 1.0, %v3159
        %v3161 = vmul.f32 %v3158, %v3160
        %v3162 = vadd.f32 %v3158, %v3161
        %vm3163 = vweird.f32 %v2958
        %vm3164 = vweird.f32 %v3158
        %vm3165 = vmor %vm3163, %vm3164
        %v3166 = vsel %vm3165, %v3158, %v3162
        %v3167 = vand.u32 2147483647, %v2958
        %vm3168 = vcmp.eq.f32.partialorder %v3167, 8.507059e+37
        %v3169 = vand.u32 %v2958, 2147483648
        %v3170 = vor.u32 1.1754944e-38, %v3169
        %v3171 = vsel %vm3168, %v3170, %v3166
        %v3172 = vmul.f32 1.0, %v3171
        %v3173 = vrcp.pop %v2959
        %v3174 = vmul.f32 %v2959, %v3173
        %v3175 = vsub.f32 1.0, %v3174
        %v3176 = vmul.f32 %v3173, %v3175
        %v3177 = vadd.f32 %v3173, %v3176
        %vm3178 = vweird.f32 %v2959
        %vm3179 = vweird.f32 %v3173
        %vm3180 = vmor %vm3178, %vm3179
        %v3181 = vsel %vm3180, %v3173, %v3177
        %v3182 = vand.u32 2147483647, %v2959
        %vm3183 = vcmp.eq.f32.partialorder %v3182, 8.507059e+37
        %v3184 = vand.u32 %v2959, 2147483648
        %v3185 = vor.u32 1.1754944e-38, %v3184
        %v3186 = vsel %vm3183, %v3185, %v3181
        %v3187 = vmul.f32 1.0, %v3186
        %v3188 = vrcp.pop %v2960
        %v3189 = vmul.f32 %v2960, %v3188
        %v3190 = vsub.f32 1.0, %v3189
        %v3191 = vmul.f32 %v3188, %v3190
        %v3192 = vadd.f32 %v3188, %v3191
        %vm3193 = vweird.f32 %v2960
        %vm3194 = vweird.f32 %v3188
        %vm3195 = vmor %vm3193, %vm3194
        %v3196 = vsel %vm3195, %v3188, %v3192
        %v3197 = vand.u32 2147483647, %v2960
        %vm3198 = vcmp.eq.f32.partialorder %v3197, 8.507059e+37
        %v3199 = vand.u32 %v2960, 2147483648
        %v3200 = vor.u32 1.1754944e-38, %v3199
        %v3201 = vsel %vm3198, %v3200, %v3196
        %v3202 = vmul.f32 1.0, %v3201
        %v3203 = vrcp.pop %v2961
        %v3204 = vmul.f32 %v2961, %v3203
        %v3205 = vsub.f32 1.0, %v3204
        %v3206 = vmul.f32 %v3203, %v3205
        %v3207 = vadd.f32 %v3203, %v3206
        %vm3208 = vweird.f32 %v2961
        %vm3209 = vweird.f32 %v3203
        %vm3210 = vmor %vm3208, %vm3209
        %v3211 = vsel %vm3210, %v3203, %v3207
        %v3212 = vand.u32 2147483647, %v2961
        %vm3213 = vcmp.eq.f32.partialorder %v3212, 8.507059e+37
        %v3214 = vand.u32 %v2961, 2147483648
        %v3215 = vor.u32 1.1754944e-38, %v3214
        %v3216 = vsel %vm3213, %v3215, %v3211
        %v3217 = vmul.f32 1.0, %v3216
        %v3218 = vrcp.pop %v2962
        %v3219 = vmul.f32 %v2962, %v3218
        %v3220 = vsub.f32 1.0, %v3219
        %v3221 = vmul.f32 %v3218, %v3220
        %v3222 = vadd.f32 %v3218, %v3221
        %vm3223 = vweird.f32 %v2962
        %vm3224 = vweird.f32 %v3218
        %vm3225 = vmor %vm3223, %vm3224
        %v3226 = vsel %vm3225, %v3218, %v3222
        %v3227 = vand.u32 2147483647, %v2962
        %vm3228 = vcmp.eq.f32.partialorder %v3227, 8.507059e+37
        %v3229 = vand.u32 %v2962, 2147483648
        %v3230 = vor.u32 1.1754944e-38, %v3229
        %v3231 = vsel %vm3228, %v3230, %v3226
        %v3232 = vmul.f32 1.0, %v3231
        %v3233 = vrcp.pop %v2963
        %v3234 = vmul.f32 %v2963, %v3233
        %v3235 = vsub.f32 1.0, %v3234
        %v3236 = vmul.f32 %v3233, %v3235
        %v3237 = vadd.f32 %v3233, %v3236
        %vm3238 = vweird.f32 %v2963
        %vm3239 = vweird.f32 %v3233
        %vm3240 = vmor %vm3238, %vm3239
        %v3241 = vsel %vm3240, %v3233, %v3237
        %v3242 = vand.u32 2147483647, %v2963
        %vm3243 = vcmp.eq.f32.partialorder %v3242, 8.507059e+37
        %v3244 = vand.u32 %v2963, 2147483648
        %v3245 = vor.u32 1.1754944e-38, %v3244
        %v3246 = vsel %vm3243, %v3245, %v3241
        %v3247 = vmul.f32 1.0, %v3246
        %v3248 = vrcp.pop %v2964
        %v3249 = vmul.f32 %v2964, %v3248
        %v3250 = vsub.f32 1.0, %v3249
        %v3251 = vmul.f32 %v3248, %v3250
        %v3252 = vadd.f32 %v3248, %v3251
        %vm3253 = vweird.f32 %v2964
        %vm3254 = vweird.f32 %v3248
        %vm3255 = vmor %vm3253, %vm3254
        %v3256 = vsel %vm3255, %v3248, %v3252
        %v3257 = vand.u32 2147483647, %v2964
        %vm3258 = vcmp.eq.f32.partialorder %v3257, 8.507059e+37
        %v3259 = vand.u32 %v2964, 2147483648
        %v3260 = vor.u32 1.1754944e-38, %v3259
        %v3261 = vsel %vm3258, %v3260, %v3256
        %v3262 = vmul.f32 1.0, %v3261
        %v3263 = vrcp.pop %v2965
        %v3264 = vmul.f32 %v2965, %v3263
        %v3265 = vsub.f32 1.0, %v3264
        %v3266 = vmul.f32 %v3263, %v3265
        %v3267 = vadd.f32 %v3263, %v3266
        %vm3268 = vweird.f32 %v2965
        %vm3269 = vweird.f32 %v3263
        %vm3270 = vmor %vm3268, %vm3269
        %v3271 = vsel %vm3270, %v3263, %v3267
        %v3272 = vand.u32 2147483647, %v2965
        %vm3273 = vcmp.eq.f32.partialorder %v3272, 8.507059e+37
        %v3274 = vand.u32 %v2965, 2147483648
        %v3275 = vor.u32 1.1754944e-38, %v3274
        %v3276 = vsel %vm3273, %v3275, %v3271
        %v3277 = vmul.f32 1.0, %v3276
        %v3278 = vrcp.pop %v2966
        %v3279 = vmul.f32 %v2966, %v3278
        %v3280 = vsub.f32 1.0, %v3279
        %v3281 = vmul.f32 %v3278, %v3280
        %v3282 = vadd.f32 %v3278, %v3281
        %vm3283 = vweird.f32 %v2966
        %vm3284 = vweird.f32 %v3278
        %vm3285 = vmor %vm3283, %vm3284
        %v3286 = vsel %vm3285, %v3278, %v3282
        %v3287 = vand.u32 2147483647, %v2966
        %vm3288 = vcmp.eq.f32.partialorder %v3287, 8.507059e+37
        %v3289 = vand.u32 %v2966, 2147483648
        %v3290 = vor.u32 1.1754944e-38, %v3289
        %v3291 = vsel %vm3288, %v3290, %v3286
        %v3292 = vmul.f32 1.0, %v3291
        %v3293 = vrcp.pop %v2967
        %v3294 = vmul.f32 %v2967, %v3293
        %v3295 = vsub.f32 1.0, %v3294
        %v3296 = vmul.f32 %v3293, %v3295
        %v3297 = vadd.f32 %v3293, %v3296
        %vm3298 = vweird.f32 %v2967
        %vm3299 = vweird.f32 %v3293
        %vm3300 = vmor %vm3298, %vm3299
        %v3301 = vsel %vm3300, %v3293, %v3297
        %v3302 = vand.u32 2147483647, %v2967
        %vm3303 = vcmp.eq.f32.partialorder %v3302, 8.507059e+37
        %v3304 = vand.u32 %v2967, 2147483648
        %v3305 = vor.u32 1.1754944e-38, %v3304
        %v3306 = vsel %vm3303, %v3305, %v3301
        %v3307 = vmul.f32 1.0, %v3306
        %v3308 = vrcp.pop %v2968
        %v3309 = vmul.f32 %v2968, %v3308
        %v3310 = vsub.f32 1.0, %v3309
        %v3311 = vmul.f32 %v3308, %v3310
        %v3312 = vadd.f32 %v3308, %v3311
        %vm3313 = vweird.f32 %v2968
        %vm3314 = vweird.f32 %v3308
        %vm3315 = vmor %vm3313, %vm3314
        %v3316 = vsel %vm3315, %v3308, %v3312
        %v3317 = vand.u32 2147483647, %v2968
        %vm3318 = vcmp.eq.f32.partialorder %v3317, 8.507059e+37
        %v3319 = vand.u32 %v2968, 2147483648
        %v3320 = vor.u32 1.1754944e-38, %v3319
        %v3321 = vsel %vm3318, %v3320, %v3316
        %v3322 = vmul.f32 1.0, %v3321
        %v3323 = vrcp.pop %v2969
        %v3324 = vmul.f32 %v2969, %v3323
        %v3325 = vsub.f32 1.0, %v3324
        %v3326 = vmul.f32 %v3323, %v3325
        %v3327 = vadd.f32 %v3323, %v3326
        %vm3328 = vweird.f32 %v2969
        %vm3329 = vweird.f32 %v3323
        %vm3330 = vmor %vm3328, %vm3329
        %v3331 = vsel %vm3330, %v3323, %v3327
        %v3332 = vand.u32 2147483647, %v2969
        %vm3333 = vcmp.eq.f32.partialorder %v3332, 8.507059e+37
        %v3334 = vand.u32 %v2969, 2147483648
        %v3335 = vor.u32 1.1754944e-38, %v3334
        %v3336 = vsel %vm3333, %v3335, %v3331
        %v3337 = vmul.f32 1.0, %v3336
        %v3338 = vrcp.pop %v2970
        %v3339 = vmul.f32 %v2970, %v3338
        %v3340 = vsub.f32 1.0, %v3339
        %v3341 = vmul.f32 %v3338, %v3340
        %v3342 = vadd.f32 %v3338, %v3341
        %vm3343 = vweird.f32 %v2970
        %vm3344 = vweird.f32 %v3338
        %vm3345 = vmor %vm3343, %vm3344
        %v3346 = vsel %vm3345, %v3338, %v3342
        %v3347 = vand.u32 2147483647, %v2970
        %vm3348 = vcmp.eq.f32.partialorder %v3347, 8.507059e+37
        %v3349 = vand.u32 %v2970, 2147483648
        %v3350 = vor.u32 1.1754944e-38, %v3349
        %v3351 = vsel %vm3348, %v3350, %v3346
        %v3352 = vmul.f32 1.0, %v3351
        %v3353 = vrcp.pop %v2971
        %v3354 = vmul.f32 %v2971, %v3353
        %v3355 = vsub.f32 1.0, %v3354
        %v3356 = vmul.f32 %v3353, %v3355
        %v3357 = vadd.f32 %v3353, %v3356
        %vm3358 = vweird.f32 %v2971
        %vm3359 = vweird.f32 %v3353
        %vm3360 = vmor %vm3358, %vm3359
        %v3361 = vsel %vm3360, %v3353, %v3357
        %v3362 = vand.u32 2147483647, %v2971
        %vm3363 = vcmp.eq.f32.partialorder %v3362, 8.507059e+37
        %v3364 = vand.u32 %v2971, 2147483648
        %v3365 = vor.u32 1.1754944e-38, %v3364
        %v3366 = vsel %vm3363, %v3365, %v3361
        %v3367 = vmul.f32 1.0, %v3366
        %v3368 = vrcp.pop %v2972
        %v3369 = vmul.f32 %v2972, %v3368
        %v3370 = vsub.f32 1.0, %v3369
        %v3371 = vmul.f32 %v3368, %v3370
        %v3372 = vadd.f32 %v3368, %v3371
        %vm3373 = vweird.f32 %v2972
        %vm3374 = vweird.f32 %v3368
        %vm3375 = vmor %vm3373, %vm3374
        %v3376 = vsel %vm3375, %v3368, %v3372
        %v3377 = vand.u32 2147483647, %v2972
        %vm3378 = vcmp.eq.f32.partialorder %v3377, 8.507059e+37
        %v3379 = vand.u32 %v2972, 2147483648
        %v3380 = vor.u32 1.1754944e-38, %v3379
        %v3381 = vsel %vm3378, %v3380, %v3376
        %v3382 = vmul.f32 1.0, %v3381
        %v3383 = vrcp.pop %v2973
        %v3384 = vmul.f32 %v2973, %v3383
        %v3385 = vsub.f32 1.0, %v3384
        %v3386 = vmul.f32 %v3383, %v3385
        %v3387 = vadd.f32 %v3383, %v3386
        %vm3388 = vweird.f32 %v2973
        %vm3389 = vweird.f32 %v3383
        %vm3390 = vmor %vm3388, %vm3389
        %v3391 = vsel %vm3390, %v3383, %v3387
        %v3392 = vand.u32 2147483647, %v2973
        %vm3393 = vcmp.eq.f32.partialorder %v3392, 8.507059e+37
        %v3394 = vand.u32 %v2973, 2147483648
        %v3395 = vor.u32 1.1754944e-38, %v3394
        %v3396 = vsel %vm3393, %v3395, %v3391
        %v3397 = vmul.f32 1.0, %v3396
        %v3398 = vrcp.pop %v2974
        %v3399 = vmul.f32 %v2974, %v3398
        %v3400 = vsub.f32 1.0, %v3399
        %v3401 = vmul.f32 %v3398, %v3400
        %v3402 = vadd.f32 %v3398, %v3401
        %vm3403 = vweird.f32 %v2974
        %vm3404 = vweird.f32 %v3398
        %vm3405 = vmor %vm3403, %vm3404
        %v3406 = vsel %vm3405, %v3398, %v3402
        %v3407 = vand.u32 2147483647, %v2974
        %vm3408 = vcmp.eq.f32.partialorder %v3407, 8.507059e+37
        %v3409 = vand.u32 %v2974, 2147483648
        %v3410 = vor.u32 1.1754944e-38, %v3409
        %v3411 = vsel %vm3408, %v3410, %v3406
        %v3412 = vmul.f32 1.0, %v3411
        %v3413 = vrcp.pop %v2975
        %v3414 = vmul.f32 %v2975, %v3413
        %v3415 = vsub.f32 1.0, %v3414
        %v3416 = vmul.f32 %v3413, %v3415
        %v3417 = vadd.f32 %v3413, %v3416
        %vm3418 = vweird.f32 %v2975
        %vm3419 = vweird.f32 %v3413
        %vm3420 = vmor %vm3418, %vm3419
        %v3421 = vsel %vm3420, %v3413, %v3417
        %v3422 = vand.u32 2147483647, %v2975
        %vm3423 = vcmp.eq.f32.partialorder %v3422, 8.507059e+37
        %v3424 = vand.u32 %v2975, 2147483648
        %v3425 = vor.u32 1.1754944e-38, %v3424
        %v3426 = vsel %vm3423, %v3425, %v3421
        %v3427 = vmul.f32 1.0, %v3426
        %v3428 = vrcp.pop %v2976
        %v3429 = vmul.f32 %v2976, %v3428
        %v3430 = vsub.f32 1.0, %v3429
        %v3431 = vmul.f32 %v3428, %v3430
        %v3432 = vadd.f32 %v3428, %v3431
        %vm3433 = vweird.f32 %v2976
        %vm3434 = vweird.f32 %v3428
        %vm3435 = vmor %vm3433, %vm3434
        %v3436 = vsel %vm3435, %v3428, %v3432
        %v3437 = vand.u32 2147483647, %v2976
        %vm3438 = vcmp.eq.f32.partialorder %v3437, 8.507059e+37
        %v3439 = vand.u32 %v2976, 2147483648
        %v3440 = vor.u32 1.1754944e-38, %v3439
        %v3441 = vsel %vm3438, %v3440, %v3436
        %v3442 = vmul.f32 1.0, %v3441
        %v3443 = vrcp.pop %v2977
        %v3444 = vmul.f32 %v2977, %v3443
        %v3445 = vsub.f32 1.0, %v3444
        %v3446 = vmul.f32 %v3443, %v3445
        %v3447 = vadd.f32 %v3443, %v3446
        %vm3448 = vweird.f32 %v2977
        %vm3449 = vweird.f32 %v3443
        %vm3450 = vmor %vm3448, %vm3449
        %v3451 = vsel %vm3450, %v3443, %v3447
        %v3452 = vand.u32 2147483647, %v2977
        %vm3453 = vcmp.eq.f32.partialorder %v3452, 8.507059e+37
        %v3454 = vand.u32 %v2977, 2147483648
        %v3455 = vor.u32 1.1754944e-38, %v3454
        %v3456 = vsel %vm3453, %v3455, %v3451
        %v3457 = vmul.f32 1.0, %v3456
        %v3458 = vtanh.pop %v2818
        %v3459 = vtanh.pop %v2819
        %v3460 = vtanh.pop %v2820
        %v3461 = vtanh.pop %v2821
        %v3462 = vtanh.pop %v2822
        %v3463 = vtanh.pop %v2823
        %v3464 = vtanh.pop %v2824
        %v3465 = vtanh.pop %v2825
        %v3466 = vtanh.pop %v2826
        %v3467 = vtanh.pop %v2827
        %v3468 = vtanh.pop %v2828
        %v3469 = vtanh.pop %v2829
        %v3470 = vtanh.pop %v2830
        %v3471 = vtanh.pop %v2831
        %v3472 = vtanh.pop %v2832
        %v3473 = vtanh.pop %v2833
        %v3474 = vtanh.pop %v2834
        %v3475 = vtanh.pop %v2835
        %v3476 = vtanh.pop %v2836
        %v3477 = vtanh.pop %v2837
        %v3478 = vtanh.pop %v2838
        %v3479 = vtanh.pop %v2839
        %v3480 = vtanh.pop %v2840
        %v3481 = vtanh.pop %v2841
        %v3482 = vtanh.pop %v2842
        %v3483 = vtanh.pop %v2843
        %v3484 = vtanh.pop %v2844
        %v3485 = vtanh.pop %v2845
        %v3486 = vtanh.pop %v2846
        %v3487 = vtanh.pop %v2847
        %v3488 = vtanh.pop %v2848
        %v3489 = vtanh.pop %v2849
        %v3490 = vld [vmem:[%s200] sm:$0xff]
        %v3491 = vld [vmem:[%s200 + $0x8] sm:$0xff]
        %v3492 = vld [vmem:[%s200 + $0x10] sm:$0xff]
        %v3493 = vld [vmem:[%s200 + $0x18] sm:$0xff]
        %v3494 = vld [vmem:[%s200 + $0x20] sm:$0xff]
        %v3495 = vld [vmem:[%s200 + $0x28] sm:$0xff]
        %v3496 = vld [vmem:[%s200 + $0x30] sm:$0xff]
        %v3497 = vld [vmem:[%s200 + $0x38] sm:$0xff]
        %v3498 = vld [vmem:[%s200 + $0x40] sm:$0xff]
        %v3499 = vld [vmem:[%s200 + $0x48] sm:$0xff]
        %v3500 = vld [vmem:[%s200 + $0x50] sm:$0xff]
        %v3501 = vld [vmem:[%s200 + $0x58] sm:$0xff]
        %v3502 = vld [vmem:[%s200 + $0x60] sm:$0xff]
        %v3503 = vld [vmem:[%s200 + $0x68] sm:$0xff]
        %v3504 = vld [vmem:[%s200 + $0x70] sm:$0xff]
        %v3505 = vld [vmem:[%s200 + $0x78] sm:$0xff]
        %v3506 = vld [vmem:[%s200 + $0x80] sm:$0xff]
        %v3507 = vld [vmem:[%s200 + $0x88] sm:$0xff]
        %v3508 = vld [vmem:[%s200 + $0x90] sm:$0xff]
        %v3509 = vld [vmem:[%s200 + $0x98] sm:$0xff]
        %v3510 = vld [vmem:[%s200 + $0xa0] sm:$0xff]
        %v3511 = vld [vmem:[%s200 + $0xa8] sm:$0xff]
        %v3512 = vld [vmem:[%s200 + $0xb0] sm:$0xff]
        %v3513 = vld [vmem:[%s200 + $0xb8] sm:$0xff]
        %v3514 = vld [vmem:[%s200 + $0xc0] sm:$0xff]
        %v3515 = vld [vmem:[%s200 + $0xc8] sm:$0xff]
        %v3516 = vld [vmem:[%s200 + $0xd0] sm:$0xff]
        %v3517 = vld [vmem:[%s200 + $0xd8] sm:$0xff]
        %v3518 = vld [vmem:[%s200 + $0xe0] sm:$0xff]
        %v3519 = vld [vmem:[%s200 + $0xe8] sm:$0xff]
        %v3520 = vld [vmem:[%s200 + $0xf0] sm:$0xff]
        %v3521 = vld [vmem:[%s200 + $0xf8] sm:$0xff]
        %3554 = vrot.lane.b32.xlu0 %v3490, 32
        %v3555 = vpop.permute.xlu0 %3554
        %3556 = vrot.lane.b32.xlu0 %v3491, 32
        %v3557 = vpop.permute.xlu0 %3556
        %3558 = vrot.lane.b32.xlu0 %v3492, 32
        %v3559 = vpop.permute.xlu0 %3558
        %3560 = vrot.lane.b32.xlu0 %v3493, 32
        %v3561 = vpop.permute.xlu0 %3560
        %3562 = vrot.lane.b32.xlu0 %v3494, 32
        %v3563 = vpop.permute.xlu0 %3562
        %3564 = vrot.lane.b32.xlu0 %v3495, 32
        %v3565 = vpop.permute.xlu0 %3564
        %3566 = vrot.lane.b32.xlu0 %v3496, 32
        %v3567 = vpop.permute.xlu0 %3566
        %3568 = vrot.lane.b32.xlu0 %v3497, 32
        %v3569 = vpop.permute.xlu0 %3568
        %3570 = vrot.lane.b32.xlu0 %v3498, 32
        %v3571 = vpop.permute.xlu0 %3570
        %3572 = vrot.lane.b32.xlu0 %v3499, 32
        %v3573 = vpop.permute.xlu0 %3572
        %3574 = vrot.lane.b32.xlu0 %v3500, 32
        %v3575 = vpop.permute.xlu0 %3574
        %3576 = vrot.lane.b32.xlu0 %v3501, 32
        %v3577 = vpop.permute.xlu0 %3576
        %3578 = vrot.lane.b32.xlu0 %v3502, 32
        %v3579 = vpop.permute.xlu0 %3578
        %3580 = vrot.lane.b32.xlu0 %v3503, 32
        %v3581 = vpop.permute.xlu0 %3580
        %3582 = vrot.lane.b32.xlu0 %v3504, 32
        %v3583 = vpop.permute.xlu0 %3582
        %3584 = vrot.lane.b32.xlu0 %v3505, 32
        %v3585 = vpop.permute.xlu0 %3584
        %3586 = vrot.lane.b32.xlu0 %v3506, 32
        %v3587 = vpop.permute.xlu0 %3586
        %3588 = vrot.lane.b32.xlu0 %v3507, 32
        %v3589 = vpop.permute.xlu0 %3588
        %3590 = vrot.lane.b32.xlu0 %v3508, 32
        %v3591 = vpop.permute.xlu0 %3590
        %3592 = vrot.lane.b32.xlu0 %v3509, 32
        %v3593 = vpop.permute.xlu0 %3592
        %3594 = vrot.lane.b32.xlu0 %v3510, 32
        %v3595 = vpop.permute.xlu0 %3594
        %3596 = vrot.lane.b32.xlu0 %v3511, 32
        %v3597 = vpop.permute.xlu0 %3596
        %3598 = vrot.lane.b32.xlu0 %v3512, 32
        %v3599 = vpop.permute.xlu0 %3598
        %3600 = vrot.lane.b32.xlu0 %v3513, 32
        %v3601 = vpop.permute.xlu0 %3600
        %3602 = vrot.lane.b32.xlu0 %v3514, 32
        %v3603 = vpop.permute.xlu0 %3602
        %3604 = vrot.lane.b32.xlu0 %v3515, 32
        %v3605 = vpop.permute.xlu0 %3604
        %3606 = vrot.lane.b32.xlu0 %v3516, 32
        %v3607 = vpop.permute.xlu0 %3606
        %3608 = vrot.lane.b32.xlu0 %v3517, 32
        %v3609 = vpop.permute.xlu0 %3608
        %3610 = vrot.lane.b32.xlu0 %v3518, 32
        %v3611 = vpop.permute.xlu0 %3610
        %3612 = vrot.lane.b32.xlu0 %v3519, 32
        %v3613 = vpop.permute.xlu0 %3612
        %3614 = vrot.lane.b32.xlu0 %v3520, 32
        %v3615 = vpop.permute.xlu0 %3614
        %3616 = vrot.lane.b32.xlu0 %v3521, 32
        %v3617 = vpop.permute.xlu0 %3616
        %v3650 = vmul.f32 %v2992, %v3555
        %v3651 = vmul.f32 %v3007, %v3557
        %v3652 = vmul.f32 %v3022, %v3559
        %v3653 = vmul.f32 %v3037, %v3561
        %v3654 = vmul.f32 %v3052, %v3563
        %v3655 = vmul.f32 %v3067, %v3565
        %v3656 = vmul.f32 %v3082, %v3567
        %v3657 = vmul.f32 %v3097, %v3569
        %v3658 = vmul.f32 %v3112, %v3571
        %v3659 = vmul.f32 %v3127, %v3573
        %v3660 = vmul.f32 %v3142, %v3575
        %v3661 = vmul.f32 %v3157, %v3577
        %v3662 = vmul.f32 %v3172, %v3579
        %v3663 = vmul.f32 %v3187, %v3581
        %v3664 = vmul.f32 %v3202, %v3583
        %v3665 = vmul.f32 %v3217, %v3585
        %v3666 = vmul.f32 %v3232, %v3587
        %v3667 = vmul.f32 %v3247, %v3589
        %v3668 = vmul.f32 %v3262, %v3591
        %v3669 = vmul.f32 %v3277, %v3593
        %v3670 = vmul.f32 %v3292, %v3595
        %v3671 = vmul.f32 %v3307, %v3597
        %v3672 = vmul.f32 %v3322, %v3599
        %v3673 = vmul.f32 %v3337, %v3601
        %v3674 = vmul.f32 %v3352, %v3603
        %v3675 = vmul.f32 %v3367, %v3605
        %v3676 = vmul.f32 %v3382, %v3607
        %v3677 = vmul.f32 %v3397, %v3609
        %v3678 = vmul.f32 %v3412, %v3611
        %v3679 = vmul.f32 %v3427, %v3613
        %v3680 = vmul.f32 %v3442, %v3615
        %v3681 = vmul.f32 %v3457, %v3617
        %3714 = vrot.lane.b32.xlu0 %v3458, 32
        %v3715 = vpop.permute.xlu0 %3714
        %3716 = vrot.lane.b32.xlu0 %v3459, 32
        %v3717 = vpop.permute.xlu0 %3716
        %3718 = vrot.lane.b32.xlu0 %v3460, 32
        %v3719 = vpop.permute.xlu0 %3718
        %3720 = vrot.lane.b32.xlu0 %v3461, 32
        %v3721 = vpop.permute.xlu0 %3720
        %3722 = vrot.lane.b32.xlu0 %v3462, 32
        %v3723 = vpop.permute.xlu0 %3722
        %3724 = vrot.lane.b32.xlu0 %v3463, 32
        %v3725 = vpop.permute.xlu0 %3724
        %3726 = vrot.lane.b32.xlu0 %v3464, 32
        %v3727 = vpop.permute.xlu0 %3726
        %3728 = vrot.lane.b32.xlu0 %v3465, 32
        %v3729 = vpop.permute.xlu0 %3728
        %3730 = vrot.lane.b32.xlu0 %v3466, 32
        %v3731 = vpop.permute.xlu0 %3730
        %3732 = vrot.lane.b32.xlu0 %v3467, 32
        %v3733 = vpop.permute.xlu0 %3732
        %3734 = vrot.lane.b32.xlu0 %v3468, 32
        %v3735 = vpop.permute.xlu0 %3734
        %3736 = vrot.lane.b32.xlu0 %v3469, 32
        %v3737 = vpop.permute.xlu0 %3736
        %3738 = vrot.lane.b32.xlu0 %v3470, 32
        %v3739 = vpop.permute.xlu0 %3738
        %3740 = vrot.lane.b32.xlu0 %v3471, 32
        %v3741 = vpop.permute.xlu0 %3740
        %3742 = vrot.lane.b32.xlu0 %v3472, 32
        %v3743 = vpop.permute.xlu0 %3742
        %3744 = vrot.lane.b32.xlu0 %v3473, 32
        %v3745 = vpop.permute.xlu0 %3744
        %3746 = vrot.lane.b32.xlu0 %v3474, 32
        %v3747 = vpop.permute.xlu0 %3746
        %3748 = vrot.lane.b32.xlu0 %v3475, 32
        %v3749 = vpop.permute.xlu0 %3748
        %3750 = vrot.lane.b32.xlu0 %v3476, 32
        %v3751 = vpop.permute.xlu0 %3750
        %3752 = vrot.lane.b32.xlu0 %v3477, 32
        %v3753 = vpop.permute.xlu0 %3752
        %3754 = vrot.lane.b32.xlu0 %v3478, 32
        %v3755 = vpop.permute.xlu0 %3754
        %3756 = vrot.lane.b32.xlu0 %v3479, 32
        %v3757 = vpop.permute.xlu0 %3756
        %3758 = vrot.lane.b32.xlu0 %v3480, 32
        %v3759 = vpop.permute.xlu0 %3758
        %3760 = vrot.lane.b32.xlu0 %v3481, 32
        %v3761 = vpop.permute.xlu0 %3760
        %3762 = vrot.lane.b32.xlu0 %v3482, 32
        %v3763 = vpop.permute.xlu0 %3762
        %3764 = vrot.lane.b32.xlu0 %v3483, 32
        %v3765 = vpop.permute.xlu0 %3764
        %3766 = vrot.lane.b32.xlu0 %v3484, 32
        %v3767 = vpop.permute.xlu0 %3766
        %3768 = vrot.lane.b32.xlu0 %v3485, 32
        %v3769 = vpop.permute.xlu0 %3768
        %3770 = vrot.lane.b32.xlu0 %v3486, 32
        %v3771 = vpop.permute.xlu0 %3770
        %3772 = vrot.lane.b32.xlu0 %v3487, 32
        %v3773 = vpop.permute.xlu0 %3772
        %3774 = vrot.lane.b32.xlu0 %v3488, 32
        %v3775 = vpop.permute.xlu0 %3774
        %3776 = vrot.lane.b32.xlu0 %v3489, 32
        %v3777 = vpop.permute.xlu0 %3776
        %v3810 = vmul.f32 %v2992, %v3715
        %v3811 = vmul.f32 %v3007, %v3717
        %v3812 = vmul.f32 %v3022, %v3719
        %v3813 = vmul.f32 %v3037, %v3721
        %v3814 = vmul.f32 %v3052, %v3723
        %v3815 = vmul.f32 %v3067, %v3725
        %v3816 = vmul.f32 %v3082, %v3727
        %v3817 = vmul.f32 %v3097, %v3729
        %v3818 = vmul.f32 %v3112, %v3731
        %v3819 = vmul.f32 %v3127, %v3733
        %v3820 = vmul.f32 %v3142, %v3735
        %v3821 = vmul.f32 %v3157, %v3737
        %v3822 = vmul.f32 %v3172, %v3739
        %v3823 = vmul.f32 %v3187, %v3741
        %v3824 = vmul.f32 %v3202, %v3743
        %v3825 = vmul.f32 %v3217, %v3745
        %v3826 = vmul.f32 %v3232, %v3747
        %v3827 = vmul.f32 %v3247, %v3749
        %v3828 = vmul.f32 %v3262, %v3751
        %v3829 = vmul.f32 %v3277, %v3753
        %v3830 = vmul.f32 %v3292, %v3755
        %v3831 = vmul.f32 %v3307, %v3757
        %v3832 = vmul.f32 %v3322, %v3759
        %v3833 = vmul.f32 %v3337, %v3761
        %v3834 = vmul.f32 %v3352, %v3763
        %v3835 = vmul.f32 %v3367, %v3765
        %v3836 = vmul.f32 %v3382, %v3767
        %v3837 = vmul.f32 %v3397, %v3769
        %v3838 = vmul.f32 %v3412, %v3771
        %v3839 = vmul.f32 %v3427, %v3773
        %v3840 = vmul.f32 %v3442, %v3775
        %v3841 = vmul.f32 %v3457, %v3777
        %3874 = vrot.lane.b32.xlu0 %v3810, 32
        %v3875 = vpop.permute.xlu0 %3874
        %3876 = vrot.lane.b32.xlu0 %v3811, 32
        %v3877 = vpop.permute.xlu0 %3876
        %3878 = vrot.lane.b32.xlu0 %v3812, 32
        %v3879 = vpop.permute.xlu0 %3878
        %3880 = vrot.lane.b32.xlu0 %v3813, 32
        %v3881 = vpop.permute.xlu0 %3880
        %3882 = vrot.lane.b32.xlu0 %v3814, 32
        %v3883 = vpop.permute.xlu0 %3882
        %3884 = vrot.lane.b32.xlu0 %v3815, 32
        %v3885 = vpop.permute.xlu0 %3884
        %3886 = vrot.lane.b32.xlu0 %v3816, 32
        %v3887 = vpop.permute.xlu0 %3886
        %3888 = vrot.lane.b32.xlu0 %v3817, 32
        %v3889 = vpop.permute.xlu0 %3888
        %3890 = vrot.lane.b32.xlu0 %v3818, 32
        %v3891 = vpop.permute.xlu0 %3890
        %3892 = vrot.lane.b32.xlu0 %v3819, 32
        %v3893 = vpop.permute.xlu0 %3892
        %3894 = vrot.lane.b32.xlu0 %v3820, 32
        %v3895 = vpop.permute.xlu0 %3894
        %3896 = vrot.lane.b32.xlu0 %v3821, 32
        %v3897 = vpop.permute.xlu0 %3896
        %3898 = vrot.lane.b32.xlu0 %v3822, 32
        %v3899 = vpop.permute.xlu0 %3898
        %3900 = vrot.lane.b32.xlu0 %v3823, 32
        %v3901 = vpop.permute.xlu0 %3900
        %3902 = vrot.lane.b32.xlu0 %v3824, 32
        %v3903 = vpop.permute.xlu0 %3902
        %3904 = vrot.lane.b32.xlu0 %v3825, 32
        %v3905 = vpop.permute.xlu0 %3904
        %3906 = vrot.lane.b32.xlu0 %v3826, 32
        %v3907 = vpop.permute.xlu0 %3906
        %3908 = vrot.lane.b32.xlu0 %v3827, 32
        %v3909 = vpop.permute.xlu0 %3908
        %3910 = vrot.lane.b32.xlu0 %v3828, 32
        %v3911 = vpop.permute.xlu0 %3910
        %3912 = vrot.lane.b32.xlu0 %v3829, 32
        %v3913 = vpop.permute.xlu0 %3912
        %3914 = vrot.lane.b32.xlu0 %v3830, 32
        %v3915 = vpop.permute.xlu0 %3914
        %3916 = vrot.lane.b32.xlu0 %v3831, 32
        %v3917 = vpop.permute.xlu0 %3916
        %3918 = vrot.lane.b32.xlu0 %v3832, 32
        %v3919 = vpop.permute.xlu0 %3918
        %3920 = vrot.lane.b32.xlu0 %v3833, 32
        %v3921 = vpop.permute.xlu0 %3920
        %3922 = vrot.lane.b32.xlu0 %v3834, 32
        %v3923 = vpop.permute.xlu0 %3922
        %3924 = vrot.lane.b32.xlu0 %v3835, 32
        %v3925 = vpop.permute.xlu0 %3924
        %3926 = vrot.lane.b32.xlu0 %v3836, 32
        %v3927 = vpop.permute.xlu0 %3926
        %3928 = vrot.lane.b32.xlu0 %v3837, 32
        %v3929 = vpop.permute.xlu0 %3928
        %3930 = vrot.lane.b32.xlu0 %v3838, 32
        %v3931 = vpop.permute.xlu0 %3930
        %3932 = vrot.lane.b32.xlu0 %v3839, 32
        %v3933 = vpop.permute.xlu0 %3932
        %3934 = vrot.lane.b32.xlu0 %v3840, 32
        %v3935 = vpop.permute.xlu0 %3934
        %3936 = vrot.lane.b32.xlu0 %v3841, 32
        %v3937 = vpop.permute.xlu0 %3936
        %v3970 = vadd.f32 %v3650, %v3875
        %v3971 = vadd.f32 %v3651, %v3877
        %v3972 = vadd.f32 %v3652, %v3879
        %v3973 = vadd.f32 %v3653, %v3881
        %v3974 = vadd.f32 %v3654, %v3883
        %v3975 = vadd.f32 %v3655, %v3885
        %v3976 = vadd.f32 %v3656, %v3887
        %v3977 = vadd.f32 %v3657, %v3889
        %v3978 = vadd.f32 %v3658, %v3891
        %v3979 = vadd.f32 %v3659, %v3893
        %v3980 = vadd.f32 %v3660, %v3895
        %v3981 = vadd.f32 %v3661, %v3897
        %v3982 = vadd.f32 %v3662, %v3899
        %v3983 = vadd.f32 %v3663, %v3901
        %v3984 = vadd.f32 %v3664, %v3903
        %v3985 = vadd.f32 %v3665, %v3905
        %v3986 = vadd.f32 %v3666, %v3907
        %v3987 = vadd.f32 %v3667, %v3909
        %v3988 = vadd.f32 %v3668, %v3911
        %v3989 = vadd.f32 %v3669, %v3913
        %v3990 = vadd.f32 %v3670, %v3915
        %v3991 = vadd.f32 %v3671, %v3917
        %v3992 = vadd.f32 %v3672, %v3919
        %v3993 = vadd.f32 %v3673, %v3921
        %v3994 = vadd.f32 %v3674, %v3923
        %v3995 = vadd.f32 %v3675, %v3925
        %v3996 = vadd.f32 %v3676, %v3927
        %v3997 = vadd.f32 %v3677, %v3929
        %v3998 = vadd.f32 %v3678, %v3931
        %v3999 = vadd.f32 %v3679, %v3933
        %v4000 = vadd.f32 %v3680, %v3935
        %v4001 = vadd.f32 %v3681, %v3937
        %v4002 = vtanh.pop %v3970
        %v4003 = vtanh.pop %v3971
        %v4004 = vtanh.pop %v3972
        %v4005 = vtanh.pop %v3973
        %v4006 = vtanh.pop %v3974
        %v4007 = vtanh.pop %v3975
        %v4008 = vtanh.pop %v3976
        %v4009 = vtanh.pop %v3977
        %v4010 = vtanh.pop %v3978
        %v4011 = vtanh.pop %v3979
        %v4012 = vtanh.pop %v3980
        %v4013 = vtanh.pop %v3981
        %v4014 = vtanh.pop %v3982
        %v4015 = vtanh.pop %v3983
        %v4016 = vtanh.pop %v3984
        %v4017 = vtanh.pop %v3985
        %v4018 = vtanh.pop %v3986
        %v4019 = vtanh.pop %v3987
        %v4020 = vtanh.pop %v3988
        %v4021 = vtanh.pop %v3989
        %v4022 = vtanh.pop %v3990
        %v4023 = vtanh.pop %v3991
        %v4024 = vtanh.pop %v3992
        %v4025 = vtanh.pop %v3993
        %v4026 = vtanh.pop %v3994
        %v4027 = vtanh.pop %v3995
        %v4028 = vtanh.pop %v3996
        %v4029 = vtanh.pop %v3997
        %v4030 = vtanh.pop %v3998
        %v4031 = vtanh.pop %v3999
        %v4032 = vtanh.pop %v4000
        %v4033 = vtanh.pop %v4001
        %4066 = vrot.lane.b32.xlu0 %v4002, 32
        %v4067 = vpop.permute.xlu0 %4066
        %4068 = vrot.lane.b32.xlu0 %v4003, 32
        %v4069 = vpop.permute.xlu0 %4068
        %4070 = vrot.lane.b32.xlu0 %v4004, 32
        %v4071 = vpop.permute.xlu0 %4070
        %4072 = vrot.lane.b32.xlu0 %v4005, 32
        %v4073 = vpop.permute.xlu0 %4072
        %4074 = vrot.lane.b32.xlu0 %v4006, 32
        %v4075 = vpop.permute.xlu0 %4074
        %4076 = vrot.lane.b32.xlu0 %v4007, 32
        %v4077 = vpop.permute.xlu0 %4076
        %4078 = vrot.lane.b32.xlu0 %v4008, 32
        %v4079 = vpop.permute.xlu0 %4078
        %4080 = vrot.lane.b32.xlu0 %v4009, 32
        %v4081 = vpop.permute.xlu0 %4080
        %4082 = vrot.lane.b32.xlu0 %v4010, 32
        %v4083 = vpop.permute.xlu0 %4082
        %4084 = vrot.lane.b32.xlu0 %v4011, 32
        %v4085 = vpop.permute.xlu0 %4084
        %4086 = vrot.lane.b32.xlu0 %v4012, 32
        %v4087 = vpop.permute.xlu0 %4086
        %4088 = vrot.lane.b32.xlu0 %v4013, 32
        %v4089 = vpop.permute.xlu0 %4088
        %4090 = vrot.lane.b32.xlu0 %v4014, 32
        %v4091 = vpop.permute.xlu0 %4090
        %4092 = vrot.lane.b32.xlu0 %v4015, 32
        %v4093 = vpop.permute.xlu0 %4092
        %4094 = vrot.lane.b32.xlu0 %v4016, 32
        %v4095 = vpop.permute.xlu0 %4094
        %4096 = vrot.lane.b32.xlu0 %v4017, 32
        %v4097 = vpop.permute.xlu0 %4096
        %4098 = vrot.lane.b32.xlu0 %v4018, 32
        %v4099 = vpop.permute.xlu0 %4098
        %4100 = vrot.lane.b32.xlu0 %v4019, 32
        %v4101 = vpop.permute.xlu0 %4100
        %4102 = vrot.lane.b32.xlu0 %v4020, 32
        %v4103 = vpop.permute.xlu0 %4102
        %4104 = vrot.lane.b32.xlu0 %v4021, 32
        %v4105 = vpop.permute.xlu0 %4104
        %4106 = vrot.lane.b32.xlu0 %v4022, 32
        %v4107 = vpop.permute.xlu0 %4106
        %4108 = vrot.lane.b32.xlu0 %v4023, 32
        %v4109 = vpop.permute.xlu0 %4108
        %4110 = vrot.lane.b32.xlu0 %v4024, 32
        %v4111 = vpop.permute.xlu0 %4110
        %4112 = vrot.lane.b32.xlu0 %v4025, 32
        %v4113 = vpop.permute.xlu0 %4112
        %4114 = vrot.lane.b32.xlu0 %v4026, 32
        %v4115 = vpop.permute.xlu0 %4114
        %4116 = vrot.lane.b32.xlu0 %v4027, 32
        %v4117 = vpop.permute.xlu0 %4116
        %4118 = vrot.lane.b32.xlu0 %v4028, 32
        %v4119 = vpop.permute.xlu0 %4118
        %4120 = vrot.lane.b32.xlu0 %v4029, 32
        %v4121 = vpop.permute.xlu0 %4120
        %4122 = vrot.lane.b32.xlu0 %v4030, 32
        %v4123 = vpop.permute.xlu0 %4122
        %4124 = vrot.lane.b32.xlu0 %v4031, 32
        %v4125 = vpop.permute.xlu0 %4124
        %4126 = vrot.lane.b32.xlu0 %v4032, 32
        %v4127 = vpop.permute.xlu0 %4126
        %4128 = vrot.lane.b32.xlu0 %v4033, 32
        %v4129 = vpop.permute.xlu0 %4128
        %v4162 = vmul.f32 %v2992, %v4067
        %v4163 = vmul.f32 %v3007, %v4069
        %v4164 = vmul.f32 %v3022, %v4071
        %v4165 = vmul.f32 %v3037, %v4073
        %v4166 = vmul.f32 %v3052, %v4075
        %v4167 = vmul.f32 %v3067, %v4077
        %v4168 = vmul.f32 %v3082, %v4079
        %v4169 = vmul.f32 %v3097, %v4081
        %v4170 = vmul.f32 %v3112, %v4083
        %v4171 = vmul.f32 %v3127, %v4085
        %v4172 = vmul.f32 %v3142, %v4087
        %v4173 = vmul.f32 %v3157, %v4089
        %v4174 = vmul.f32 %v3172, %v4091
        %v4175 = vmul.f32 %v3187, %v4093
        %v4176 = vmul.f32 %v3202, %v4095
        %v4177 = vmul.f32 %v3217, %v4097
        %v4178 = vmul.f32 %v3232, %v4099
        %v4179 = vmul.f32 %v3247, %v4101
        %v4180 = vmul.f32 %v3262, %v4103
        %v4181 = vmul.f32 %v3277, %v4105
        %v4182 = vmul.f32 %v3292, %v4107
        %v4183 = vmul.f32 %v3307, %v4109
        %v4184 = vmul.f32 %v3322, %v4111
        %v4185 = vmul.f32 %v3337, %v4113
        %v4186 = vmul.f32 %v3352, %v4115
        %v4187 = vmul.f32 %v3367, %v4117
        %v4188 = vmul.f32 %v3382, %v4119
        %v4189 = vmul.f32 %v3397, %v4121
        %v4190 = vmul.f32 %v3412, %v4123
        %v4191 = vmul.f32 %v3427, %v4125
        %v4192 = vmul.f32 %v3442, %v4127
        %v4193 = vmul.f32 %v3457, %v4129
        %4226 = vrot.lane.b32.xlu0 %v3970, 96
        %v4227 = vpop.permute.xlu0 %4226
        %4228 = vrot.lane.b32.xlu0 %v3971, 96
        %v4229 = vpop.permute.xlu0 %4228
        %4230 = vrot.lane.b32.xlu0 %v3972, 96
        %v4231 = vpop.permute.xlu0 %4230
        %4232 = vrot.lane.b32.xlu0 %v3973, 96
        %v4233 = vpop.permute.xlu0 %4232
        %4234 = vrot.lane.b32.xlu0 %v3974, 96
        %v4235 = vpop.permute.xlu0 %4234
        %4236 = vrot.lane.b32.xlu0 %v3975, 96
        %v4237 = vpop.permute.xlu0 %4236
        %4238 = vrot.lane.b32.xlu0 %v3976, 96
        %v4239 = vpop.permute.xlu0 %4238
        %4240 = vrot.lane.b32.xlu0 %v3977, 96
        %v4241 = vpop.permute.xlu0 %4240
        %4242 = vrot.lane.b32.xlu0 %v3978, 96
        %v4243 = vpop.permute.xlu0 %4242
        %4244 = vrot.lane.b32.xlu0 %v3979, 96
        %v4245 = vpop.permute.xlu0 %4244
        %4246 = vrot.lane.b32.xlu0 %v3980, 96
        %v4247 = vpop.permute.xlu0 %4246
        %4248 = vrot.lane.b32.xlu0 %v3981, 96
        %v4249 = vpop.permute.xlu0 %4248
        %4250 = vrot.lane.b32.xlu0 %v3982, 96
        %v4251 = vpop.permute.xlu0 %4250
        %4252 = vrot.lane.b32.xlu0 %v3983, 96
        %v4253 = vpop.permute.xlu0 %4252
        %4254 = vrot.lane.b32.xlu0 %v3984, 96
        %v4255 = vpop.permute.xlu0 %4254
        %4256 = vrot.lane.b32.xlu0 %v3985, 96
        %v4257 = vpop.permute.xlu0 %4256
        %4258 = vrot.lane.b32.xlu0 %v3986, 96
        %v4259 = vpop.permute.xlu0 %4258
        %4260 = vrot.lane.b32.xlu0 %v3987, 96
        %v4261 = vpop.permute.xlu0 %4260
        %4262 = vrot.lane.b32.xlu0 %v3988, 96
        %v4263 = vpop.permute.xlu0 %4262
        %4264 = vrot.lane.b32.xlu0 %v3989, 96
        %v4265 = vpop.permute.xlu0 %4264
        %4266 = vrot.lane.b32.xlu0 %v3990, 96
        %v4267 = vpop.permute.xlu0 %4266
        %4268 = vrot.lane.b32.xlu0 %v3991, 96
        %v4269 = vpop.permute.xlu0 %4268
        %4270 = vrot.lane.b32.xlu0 %v3992, 96
        %v4271 = vpop.permute.xlu0 %4270
        %4272 = vrot.lane.b32.xlu0 %v3993, 96
        %v4273 = vpop.permute.xlu0 %4272
        %4274 = vrot.lane.b32.xlu0 %v3994, 96
        %v4275 = vpop.permute.xlu0 %4274
        %4276 = vrot.lane.b32.xlu0 %v3995, 96
        %v4277 = vpop.permute.xlu0 %4276
        %4278 = vrot.lane.b32.xlu0 %v3996, 96
        %v4279 = vpop.permute.xlu0 %4278
        %4280 = vrot.lane.b32.xlu0 %v3997, 96
        %v4281 = vpop.permute.xlu0 %4280
        %4282 = vrot.lane.b32.xlu0 %v3998, 96
        %v4283 = vpop.permute.xlu0 %4282
        %4284 = vrot.lane.b32.xlu0 %v3999, 96
        %v4285 = vpop.permute.xlu0 %4284
        %4286 = vrot.lane.b32.xlu0 %v4000, 96
        %v4287 = vpop.permute.xlu0 %4286
        %4288 = vrot.lane.b32.xlu0 %v4001, 96
        %v4289 = vpop.permute.xlu0 %4288
        %4322 = vst.msk [vmem:[%s200] sm:$0xff] %vm382, %v4227
        %4323 = vst.msk [vmem:[%s200 + $0x8] sm:$0xff] %vm382, %v4229
        %4324 = vst.msk [vmem:[%s200 + $0x10] sm:$0xff] %vm382, %v4231
        %4325 = vst.msk [vmem:[%s200 + $0x18] sm:$0xff] %vm382, %v4233
        %4326 = vst.msk [vmem:[%s200 + $0x20] sm:$0xff] %vm382, %v4235
        %4327 = vst.msk [vmem:[%s200 + $0x28] sm:$0xff] %vm382, %v4237
        %4328 = vst.msk [vmem:[%s200 + $0x30] sm:$0xff] %vm382, %v4239
        %4329 = vst.msk [vmem:[%s200 + $0x38] sm:$0xff] %vm382, %v4241
        %4330 = vst.msk [vmem:[%s200 + $0x40] sm:$0xff] %vm382, %v4243
        %4331 = vst.msk [vmem:[%s200 + $0x48] sm:$0xff] %vm382, %v4245
        %4332 = vst.msk [vmem:[%s200 + $0x50] sm:$0xff] %vm382, %v4247
        %4333 = vst.msk [vmem:[%s200 + $0x58] sm:$0xff] %vm382, %v4249
        %4334 = vst.msk [vmem:[%s200 + $0x60] sm:$0xff] %vm382, %v4251
        %4335 = vst.msk [vmem:[%s200 + $0x68] sm:$0xff] %vm382, %v4253
        %4336 = vst.msk [vmem:[%s200 + $0x70] sm:$0xff] %vm382, %v4255
        %4337 = vst.msk [vmem:[%s200 + $0x78] sm:$0xff] %vm382, %v4257
        %4338 = vst.msk [vmem:[%s200 + $0x80] sm:$0xff] %vm382, %v4259
        %4339 = vst.msk [vmem:[%s200 + $0x88] sm:$0xff] %vm382, %v4261
        %4340 = vst.msk [vmem:[%s200 + $0x90] sm:$0xff] %vm382, %v4263
        %4341 = vst.msk [vmem:[%s200 + $0x98] sm:$0xff] %vm382, %v4265
        %4342 = vst.msk [vmem:[%s200 + $0xa0] sm:$0xff] %vm382, %v4267
        %4343 = vst.msk [vmem:[%s200 + $0xa8] sm:$0xff] %vm382, %v4269
        %4344 = vst.msk [vmem:[%s200 + $0xb0] sm:$0xff] %vm382, %v4271
        %4345 = vst.msk [vmem:[%s200 + $0xb8] sm:$0xff] %vm382, %v4273
        %4346 = vst.msk [vmem:[%s200 + $0xc0] sm:$0xff] %vm382, %v4275
        %4347 = vst.msk [vmem:[%s200 + $0xc8] sm:$0xff] %vm382, %v4277
        %4348 = vst.msk [vmem:[%s200 + $0xd0] sm:$0xff] %vm382, %v4279
        %4349 = vst.msk [vmem:[%s200 + $0xd8] sm:$0xff] %vm382, %v4281
        %4350 = vst.msk [vmem:[%s200 + $0xe0] sm:$0xff] %vm382, %v4283
        %4351 = vst.msk [vmem:[%s200 + $0xe8] sm:$0xff] %vm382, %v4285
        %4352 = vst.msk [vmem:[%s200 + $0xf0] sm:$0xff] %vm382, %v4287
        %4353 = vst.msk [vmem:[%s200 + $0xf8] sm:$0xff] %vm382, %v4289
        %4386 = vrot.lane.b32.xlu0 %v4162, 64
        %v4387 = vpop.permute.xlu0 %4386
        %4388 = vrot.lane.b32.xlu0 %v4163, 64
        %v4389 = vpop.permute.xlu0 %4388
        %4390 = vrot.lane.b32.xlu0 %v4164, 64
        %v4391 = vpop.permute.xlu0 %4390
        %4392 = vrot.lane.b32.xlu0 %v4165, 64
        %v4393 = vpop.permute.xlu0 %4392
        %4394 = vrot.lane.b32.xlu0 %v4166, 64
        %v4395 = vpop.permute.xlu0 %4394
        %4396 = vrot.lane.b32.xlu0 %v4167, 64
        %v4397 = vpop.permute.xlu0 %4396
        %4398 = vrot.lane.b32.xlu0 %v4168, 64
        %v4399 = vpop.permute.xlu0 %4398
        %4400 = vrot.lane.b32.xlu0 %v4169, 64
        %v4401 = vpop.permute.xlu0 %4400
        %4402 = vrot.lane.b32.xlu0 %v4170, 64
        %v4403 = vpop.permute.xlu0 %4402
        %4404 = vrot.lane.b32.xlu0 %v4171, 64
        %v4405 = vpop.permute.xlu0 %4404
        %4406 = vrot.lane.b32.xlu0 %v4172, 64
        %v4407 = vpop.permute.xlu0 %4406
        %4408 = vrot.lane.b32.xlu0 %v4173, 64
        %v4409 = vpop.permute.xlu0 %4408
        %4410 = vrot.lane.b32.xlu0 %v4174, 64
        %v4411 = vpop.permute.xlu0 %4410
        %4412 = vrot.lane.b32.xlu0 %v4175, 64
        %v4413 = vpop.permute.xlu0 %4412
        %4414 = vrot.lane.b32.xlu0 %v4176, 64
        %v4415 = vpop.permute.xlu0 %4414
        %4416 = vrot.lane.b32.xlu0 %v4177, 64
        %v4417 = vpop.permute.xlu0 %4416
        %4418 = vrot.lane.b32.xlu0 %v4178, 64
        %v4419 = vpop.permute.xlu0 %4418
        %4420 = vrot.lane.b32.xlu0 %v4179, 64
        %v4421 = vpop.permute.xlu0 %4420
        %4422 = vrot.lane.b32.xlu0 %v4180, 64
        %v4423 = vpop.permute.xlu0 %4422
        %4424 = vrot.lane.b32.xlu0 %v4181, 64
        %v4425 = vpop.permute.xlu0 %4424
        %4426 = vrot.lane.b32.xlu0 %v4182, 64
        %v4427 = vpop.permute.xlu0 %4426
        %4428 = vrot.lane.b32.xlu0 %v4183, 64
        %v4429 = vpop.permute.xlu0 %4428
        %4430 = vrot.lane.b32.xlu0 %v4184, 64
        %v4431 = vpop.permute.xlu0 %4430
        %4432 = vrot.lane.b32.xlu0 %v4185, 64
        %v4433 = vpop.permute.xlu0 %4432
        %4434 = vrot.lane.b32.xlu0 %v4186, 64
        %v4435 = vpop.permute.xlu0 %4434
        %4436 = vrot.lane.b32.xlu0 %v4187, 64
        %v4437 = vpop.permute.xlu0 %4436
        %4438 = vrot.lane.b32.xlu0 %v4188, 64
        %v4439 = vpop.permute.xlu0 %4438
        %4440 = vrot.lane.b32.xlu0 %v4189, 64
        %v4441 = vpop.permute.xlu0 %4440
        %4442 = vrot.lane.b32.xlu0 %v4190, 64
        %v4443 = vpop.permute.xlu0 %4442
        %4444 = vrot.lane.b32.xlu0 %v4191, 64
        %v4445 = vpop.permute.xlu0 %4444
        %4446 = vrot.lane.b32.xlu0 %v4192, 64
        %v4447 = vpop.permute.xlu0 %4446
        %4448 = vrot.lane.b32.xlu0 %v4193, 64
        %v4449 = vpop.permute.xlu0 %4448
        %4482 = vst.msk [vmem:[%s1180 + $0x1] sm:$0xff] %vm382, %v4387
        %4483 = vst.msk [vmem:[%s1180 + $0x9] sm:$0xff] %vm382, %v4389
        %4484 = vst.msk [vmem:[%s1180 + $0x19] sm:$0xff] %vm382, %v4391
        %4485 = vst.msk [vmem:[%s1180 + $0x21] sm:$0xff] %vm382, %v4393
        %4486 = vst.msk [vmem:[%s1180 + $0x31] sm:$0xff] %vm382, %v4395
        %4487 = vst.msk [vmem:[%s1180 + $0x39] sm:$0xff] %vm382, %v4397
        %4488 = vst.msk [vmem:[%s1180 + $0x49] sm:$0xff] %vm382, %v4399
        %4489 = vst.msk [vmem:[%s1180 + $0x51] sm:$0xff] %vm382, %v4401
        %4490 = vst.msk [vmem:[%s1180 + $0x61] sm:$0xff] %vm382, %v4403
        %4491 = vst.msk [vmem:[%s1180 + $0x69] sm:$0xff] %vm382, %v4405
        %4492 = vst.msk [vmem:[%s1180 + $0x79] sm:$0xff] %vm382, %v4407
        %4493 = vst.msk [vmem:[%s1180 + $0x81] sm:$0xff] %vm382, %v4409
        %4494 = vst.msk [vmem:[%s1180 + $0x91] sm:$0xff] %vm382, %v4411
        %4495 = vst.msk [vmem:[%s1180 + $0x99] sm:$0xff] %vm382, %v4413
        %4496 = vst.msk [vmem:[%s1180 + $0xa9] sm:$0xff] %vm382, %v4415
        %4497 = vst.msk [vmem:[%s1180 + $0xb1] sm:$0xff] %vm382, %v4417
        %4498 = vst.msk [vmem:[%s1180 + $0xc1] sm:$0xff] %vm382, %v4419
        %4499 = vst.msk [vmem:[%s1180 + $0xc9] sm:$0xff] %vm382, %v4421
        %4500 = vst.msk [vmem:[%s1180 + $0xd9] sm:$0xff] %vm382, %v4423
        %4501 = vst.msk [vmem:[%s1180 + $0xe1] sm:$0xff] %vm382, %v4425
        %4502 = vst.msk [vmem:[%s1180 + $0xf1] sm:$0xff] %vm382, %v4427
        %4503 = vst.msk [vmem:[%s1180 + $0xf9] sm:$0xff] %vm382, %v4429
        %4504 = vst.msk [vmem:[%s1180 + $0x109] sm:$0xff] %vm382, %v4431
        %4505 = vst.msk [vmem:[%s1180 + $0x111] sm:$0xff] %vm382, %v4433
        %4506 = vst.msk [vmem:[%s1180 + $0x121] sm:$0xff] %vm382, %v4435
        %4507 = vst.msk [vmem:[%s1180 + $0x129] sm:$0xff] %vm382, %v4437
        %4508 = vst.msk [vmem:[%s1180 + $0x139] sm:$0xff] %vm382, %v4439
        %4509 = vst.msk [vmem:[%s1180 + $0x141] sm:$0xff] %vm382, %v4441
        %4510 = vst.msk [vmem:[%s1180 + $0x151] sm:$0xff] %vm382, %v4443
        %4511 = vst.msk [vmem:[%s1180 + $0x159] sm:$0xff] %vm382, %v4445
        %4512 = vst.msk [vmem:[%s1180 + $0x169] sm:$0xff] %vm382, %v4447
        %4513 = vst.msk [vmem:[%s1180 + $0x171] sm:$0xff] %vm382, %v4449
        %4514 = vst.msk [vmem:[%s219] sm:$0xff] %vm382, %v4387
        %4515 = vst.msk [vmem:[%s219 + $0x8] sm:$0xff] %vm382, %v4389
        %4516 = vst.msk [vmem:[%s219 + $0x10] sm:$0xff] %vm382, %v4391
        %4517 = vst.msk [vmem:[%s219 + $0x18] sm:$0xff] %vm382, %v4393
        %4518 = vst.msk [vmem:[%s219 + $0x20] sm:$0xff] %vm382, %v4395
        %4519 = vst.msk [vmem:[%s219 + $0x28] sm:$0xff] %vm382, %v4397
        %4520 = vst.msk [vmem:[%s219 + $0x30] sm:$0xff] %vm382, %v4399
        %4521 = vst.msk [vmem:[%s219 + $0x38] sm:$0xff] %vm382, %v4401
        %4522 = vst.msk [vmem:[%s219 + $0x40] sm:$0xff] %vm382, %v4403
        %4523 = vst.msk [vmem:[%s219 + $0x48] sm:$0xff] %vm382, %v4405
        %4524 = vst.msk [vmem:[%s219 + $0x50] sm:$0xff] %vm382, %v4407
        %4525 = vst.msk [vmem:[%s219 + $0x58] sm:$0xff] %vm382, %v4409
        %4526 = vst.msk [vmem:[%s219 + $0x60] sm:$0xff] %vm382, %v4411
        %4527 = vst.msk [vmem:[%s219 + $0x68] sm:$0xff] %vm382, %v4413
        %4528 = vst.msk [vmem:[%s219 + $0x70] sm:$0xff] %vm382, %v4415
        %4529 = vst.msk [vmem:[%s219 + $0x78] sm:$0xff] %vm382, %v4417
        %4530 = vst.msk [vmem:[%s219 + $0x80] sm:$0xff] %vm382, %v4419
        %4531 = vst.msk [vmem:[%s219 + $0x88] sm:$0xff] %vm382, %v4421
        %4532 = vst.msk [vmem:[%s219 + $0x90] sm:$0xff] %vm382, %v4423
        %4533 = vst.msk [vmem:[%s219 + $0x98] sm:$0xff] %vm382, %v4425
        %4534 = vst.msk [vmem:[%s219 + $0xa0] sm:$0xff] %vm382, %v4427
        %4535 = vst.msk [vmem:[%s219 + $0xa8] sm:$0xff] %vm382, %v4429
        %4536 = vst.msk [vmem:[%s219 + $0xb0] sm:$0xff] %vm382, %v4431
        %4537 = vst.msk [vmem:[%s219 + $0xb8] sm:$0xff] %vm382, %v4433
        %4538 = vst.msk [vmem:[%s219 + $0xc0] sm:$0xff] %vm382, %v4435
        %4539 = vst.msk [vmem:[%s219 + $0xc8] sm:$0xff] %vm382, %v4437
        %4540 = vst.msk [vmem:[%s219 + $0xd0] sm:$0xff] %vm382, %v4439
        %4541 = vst.msk [vmem:[%s219 + $0xd8] sm:$0xff] %vm382, %v4441
        %4542 = vst.msk [vmem:[%s219 + $0xe0] sm:$0xff] %vm382, %v4443
        %4543 = vst.msk [vmem:[%s219 + $0xe8] sm:$0xff] %vm382, %v4445
        %4544 = vst.msk [vmem:[%s219 + $0xf0] sm:$0xff] %vm382, %v4447
        %4545 = vst.msk [vmem:[%s219 + $0xf8] sm:$0xff] %vm382, %v4449
        %s4546 = smul.u32 32, %s22
        %p4547 = scmp.lt.s32.totalorder %s23, 7
        %s4548 = scalar_select %p4547, %s23, 7
        %p4549 = scmp.lt.s32.totalorder %s4546, 63
        %s4550 = scalar_select %p4549, %s4546, 63
        %s4551 = smul.addr %s4548, 64
        %s4552 = sadd.s32 %s4550, %s4551
        %s4553 = smul.addr %s4552, 8
        %s4554 = scalar_lea.vmem %s2, %s4553
        %s4555 = sand.u32 %s115, 1
        %s4556 = scalar_lea.sflag [#allocation4], %s4555
        %s4557 = sand.u32 %s115, 1
        %s4558 = smul.addr %s4557, 256
        %s4559 = scalar_lea.vmem [#allocation3], %s4558
        // Predicated region
        $region33: #{convlstm_forward.2} parent=27 // pred_check
          %p4560 = pneg %p99
        $region34: #{convlstm_forward.2} parent=27 // pred_check_branch
          %4562 = sbr.rel (%p4560) target = $region36
        $region35: #{convlstm_forward.2} parent=27 // pred_region
          %s4563 = smul.u32 32, %s22
        $region36: #{convlstm_forward.2} parent=27 // pred_fallthru
          _
        // Predicated region
        $region37: #{convlstm_forward.2} parent=27 // pred_check
          %p4564 = pneg %p125
        $region38: #{convlstm_forward.2} parent=27 // pred_check_branch
          %4566 = sbr.rel (%p4564) target = $region40
        $region39: #{convlstm_forward.2} parent=27 // pred_region
          %s4567 = smul.u32 32, %s22
          %4569 = vsyncadd %s4556, 0
          %s4570 = smul.addr %s4567, 8
          %s4571 = scalar_lea.hbm %s3, %s4570
          %s4572 = sshll.u32 %s4559, 4
          %s4573 = int_to_ptr.vmem [resolvable:$true] %s4572
          %s4574 = sshll.u32 %s4571, 4
          %s4575 = int_to_ptr.hbm [resolvable:$true] %s4574
          %4580 = dma.vmem_to_hbm [thread:$0]  %s4573, 4096, %s4575, %s4556, 128, 128, 8
        $region40: #{convlstm_forward.2} parent=27 // pred_fallthru
          _
      $region28: #{convlstm_forward.2} parent=5 // pred_fallthru
        _
      %p4581 = scmp.le.s32.totalorder 2, %s13
      // Predicated region
      $region41: #{convlstm_forward.2} parent=5 // pred_check
        %p4582 = pneg %p4581
      $region42: #{convlstm_forward.2} parent=5 // pred_check_branch
        %4584 = sbr.rel (%p4582) target = $region44
      $region43: #{convlstm_forward.2} parent=5 // pred_region
        %s4585 = ssub.s32 %s13, 2
        // Predicated region
        $region45: #{convlstm_forward.2} parent=43 // pred_check
          %p4586 = pneg %p105
        $region46: #{convlstm_forward.2} parent=43 // pred_check_branch
          %4588 = sbr.rel (%p4586) target = $region48
        $region47: #{convlstm_forward.2} parent=43 // pred_region
          %s4589 = smul.u32 32, %s24
          %p4590 = scmp.lt.s32.totalorder %s25, 7
          %s4591 = scalar_select %p4590, %s25, 7
          %p4592 = scmp.lt.s32.totalorder %s4589, 63
          %s4593 = scalar_select %p4592, %s4589, 63
          %s4594 = smul.addr %s4591, 64
          %s4595 = sadd.s32 %s4593, %s4594
          %s4596 = smul.addr %s4595, 8
          %s4597 = scalar_lea.vmem %s2, %s4596
        $region48: #{convlstm_forward.2} parent=43 // pred_fallthru
          _
        // Predicated region
        $region49: #{convlstm_forward.2} parent=43 // pred_check
          %p4598 = pneg %p131
        $region50: #{convlstm_forward.2} parent=43 // pred_check_branch
          %4600 = sbr.rel (%p4598) target = $region52
        $region51: #{convlstm_forward.2} parent=43 // pred_region
          %s4601 = sand.u32 %s116, 1
          %s4602 = scalar_lea.sflag [#allocation4], %s4601
          %s4603 = sand.u32 %s116, 1
          %s4604 = smul.addr %s4603, 256
          %s4605 = scalar_lea.vmem [#allocation3], %s4604
          %4607 = dma.done %s4602, 4096
        $region52: #{convlstm_forward.2} parent=43 // pred_fallthru
          _
      $region44: #{convlstm_forward.2} parent=5 // pred_fallthru
        _
    $region6: #{convlstm_forward.2} parent=1 // loop_footer
      %s17 = sadd.s32 1, %s13
    $region7: #{convlstm_forward.2} parent=1 // loop_footer_branch
      %12 = sbr.rel target = $region3
    $region8: #{convlstm_forward.2} parent=1 // loop_exit
      _
    %4608 = vsyncpa [#allocation4], 1
    %s4609 = scalar_lea.sflag [#allocation4], 1
    %4610 = vsyncpa %s4609, 1

// kernel: convlstm_forward.3
$region0: #{convlstm_forward.3}
  #allocation0 [shape = 'u32[]', space=smem, size = 0x4, offset = 0x4, fixed_abs, tag = 'smem constant byte address 0x4 - core index']
  #allocation1 [shape = 'u32[72,128]{1,0:T(1,128)}', space=vmem, size = 0x9000, scoped, tag = 'internal scratch']
  #allocation2 [shape = 'f32[1,18,18,16]{3,2,1,0:T(8,128)}', space=vmem, size = 0x36000, scoped, tag = 'scratch operand']
  %s0 = inlined_call_operand.vmem [shape: f32[8,512,128], index: 0, kind: input, shape index: {}]
  %s1 = inlined_call_operand.vmem [shape: f32[9,16,128], index: 1, kind: input, shape index: {}]
  %s2 = inlined_call_operand.hbm [shape: f32[8,512,16], index: 2, kind: output, shape index: {0}]
  %s3 = inlined_call_operand.vmem [shape: f32[512,16], index: 3, kind: output, shape index: {1}]
  %4 = xla_tuple %s2, %s3
  %s5 = sld [smem:[#allocation0]]
  $region53: #{convlstm_forward.3} parent=0
    _
  %s7 = ssub.s32 1, %s5
  %s8 = scalar_select 0, %s7, %s5
  $region1: #{convlstm_forward.3} parent=0
    #allocation3 [shape = 'u8[262144]{0}', space=vmem, size = 0x40000, scoped, tag = 'output window, operand 0']
    #allocation4 [shape = 's32[2]{0}', space=sflag, size = 0x8, scoped, tag = 'scoped memory for convlstm_forward.3']
    %9 = vsyncpa [#allocation4], 0
    %s10 = scalar_lea.sflag [#allocation4], 1
    %11 = vsyncpa %s10, 0
    loop: start=0, step=1, limit=18
    $region2: #{convlstm_forward.3} parent=1 // loop_pre_header
      _
    $region3: #{convlstm_forward.3} parent=1 // loop_header
      %s13 = sphi 0, %s17
      %p14 = scmp.ge.s32.totalorder %s13, 18
      %s20 = sphi 0, %s32
      %s21 = sphi 0, %s28
      %s22 = sphi 0, %s20
      %s23 = sphi 0, %s21
      %s24 = sphi 0, %s22
      %s25 = sphi 0, %s23
      %s37 = sphi 0, %s39
      %s40 = sphi 0, %s37
      %s41 = sphi 0, %s40
      %s57 = sphi 0, %s41
      %s61 = sphi 0, %s61
      %s63 = sphi 0, %s61
      %s64 = sphi 0, %s63
      %s78 = sphi 0, %s64
      %s86 = sphi 0, %s88
      %s89 = sphi 0, %s86
      %s90 = sphi 0, %s89
      %s106 = sphi 0, %s90
      %s112 = sphi 0, %s114
      %s115 = sphi 0, %s112
      %s116 = sphi 0, %s115
      %s132 = sphi 0, %s116
    $region4: #{convlstm_forward.3} parent=1 // loop_header_branch
      %16 = sbr.rel (%p14) target = $region8
    $region5: #{convlstm_forward.3} parent=1 // loop_body
      %s18 = ssub.s32 %s13, 1
      %s19 = ssub.s32 %s13, 2
      %s26 = sadd.s32 1, %s21
      %p27 = scmp.ge.s32.totalorder %s26, 8
      %s28 = scalar_select %p27, 0, %s26
      %s29 = sadd.s32 1, %s20
      %s30 = scalar_select %p27, %s29, %s20
      %p31 = scmp.ge.s32.totalorder %s30, 2
      %s32 = scalar_select %p31, 0, %s30
      %s33 = ssub.s32 %s21, %s28
      %s34 = ssub.s32 %s20, %s32
      %s35 = sor.u32 %s33, %s34
      %p36 = scmp.eq.s32.totalorder %s35, 0
      %s38 = sadd.s32 %s37, 1
      %s39 = scalar_select %p36, %s37, %s38
      %p42 = pneg %p36
      %p43 = scmp.eq.s32.totalorder %s13, 15
      %p44 = por %p42, %p43
      %p45 = scmp.ne.s32.totalorder %s37, %s40
      %p46 = scmp.eq.s32.totalorder %s13, 0
      %p47 = por %p45, %p46
      %p48 = scmp.ne.s32.totalorder %s37, %s40
      %p49 = scmp.eq.s32.totalorder %s18, 15
      %p50 = por %p48, %p49
      %p51 = scmp.ne.s32.totalorder %s40, %s41
      %p52 = scmp.eq.s32.totalorder %s18, 0
      %p53 = por %p51, %p52
      %p54 = scmp.ne.s32.totalorder %s40, %s41
      %p55 = scmp.eq.s32.totalorder %s19, 15
      %p56 = por %p54, %p55
      %p58 = scmp.ne.s32.totalorder %s41, %s57
      %p59 = scmp.eq.s32.totalorder %s19, 0
      %p60 = por %p58, %p59
      %s62 = sadd.s32 %s61, 1
      %p65 = scmp.eq.s32.totalorder %s13, 15
      %p66 = scmp.ne.s32.totalorder %s61, %s63
      %p67 = scmp.eq.s32.totalorder %s13, 0
      %p68 = por %p66, %p67
      %p69 = scmp.ne.s32.totalorder %s61, %s63
      %p70 = scmp.eq.s32.totalorder %s18, 15
      %p71 = por %p69, %p70
      %p72 = scmp.ne.s32.totalorder %s63, %s64
      %p73 = scmp.eq.s32.totalorder %s18, 0
      %p74 = por %p72, %p73
      %p75 = scmp.ne.s32.totalorder %s63, %s64
      %p76 = scmp.eq.s32.totalorder %s19, 15
      %p77 = por %p75, %p76
      %p79 = scmp.ne.s32.totalorder %s64, %s78
      %p80 = scmp.eq.s32.totalorder %s19, 0
      %p81 = por %p79, %p80
      %s82 = ssub.s32 %s21, %s28
      %s83 = ssub.s32 %s20, %s32
      %s84 = sor.u32 %s82, %s83
      %p85 = scmp.eq.s32.totalorder %s84, 0
      %s87 = sadd.s32 %s86, 1
      %s88 = scalar_select %p85, %s86, %s87
      %p91 = pneg %p85
      %p92 = scmp.eq.s32.totalorder %s13, 15
      %p93 = por %p91, %p92
      %p94 = scmp.ne.s32.totalorder %s86, %s89
      %p95 = scmp.eq.s32.totalorder %s13, 0
      %p96 = por %p94, %p95
      %p97 = scmp.ne.s32.totalorder %s86, %s89
      %p98 = scmp.eq.s32.totalorder %s18, 15
      %p99 = por %p97, %p98
      %p100 = scmp.ne.s32.totalorder %s89, %s90
      %p101 = scmp.eq.s32.totalorder %s18, 0
      %p102 = por %p100, %p101
      %p103 = scmp.ne.s32.totalorder %s89, %s90
      %p104 = scmp.eq.s32.totalorder %s19, 15
      %p105 = por %p103, %p104
      %p107 = scmp.ne.s32.totalorder %s90, %s106
      %p108 = scmp.eq.s32.totalorder %s19, 0
      %p109 = por %p107, %p108
      %s110 = ssub.s32 %s20, %s32
      %p111 = scmp.eq.s32.totalorder %s110, 0
      %s113 = sadd.s32 %s112, 1
      %s114 = scalar_select %p111, %s112, %s113
      %p117 = pneg %p111
      %p118 = scmp.eq.s32.totalorder %s13, 15
      %p119 = por %p117, %p118
      %p120 = scmp.ne.s32.totalorder %s112, %s115
      %p121 = scmp.eq.s32.totalorder %s13, 0
      %p122 = por %p120, %p121
      %p123 = scmp.ne.s32.totalorder %s112, %s115
      %p124 = scmp.eq.s32.totalorder %s18, 15
      %p125 = por %p123, %p124
      %p126 = scmp.ne.s32.totalorder %s115, %s116
      %p127 = scmp.eq.s32.totalorder %s18, 0
      %p128 = por %p126, %p127
      %p129 = scmp.ne.s32.totalorder %s115, %s116
      %p130 = scmp.eq.s32.totalorder %s19, 15
      %p131 = por %p129, %p130
      %p133 = scmp.ne.s32.totalorder %s116, %s132
      %p134 = scmp.eq.s32.totalorder %s19, 0
      %p135 = por %p133, %p134
      %p136 = scmp.le.s32.totalorder 1, %s13
      %p137 = scmp.lt.s32.totalorder %s13, 17
      %p138 = pnand %p136, %p137
      %p139 = pneg %p138
      // Predicated region
      $region9: #{convlstm_forward.3} parent=5 // pred_check
        _
      $region10: #{convlstm_forward.3} parent=5 // pred_check_branch
        %141 = sbr.rel (%p138) target = $region12
      $region11: #{convlstm_forward.3} parent=5 // pred_region
        %s142 = ssub.s32 %s13, 1
        // Predicated region
        $region13: #{convlstm_forward.3} parent=11 // pred_check
          %p143 = pneg %p74
        $region14: #{convlstm_forward.3} parent=11 // pred_check_branch
          %145 = sbr.rel (%p143) target = $region16
        $region15: #{convlstm_forward.3} parent=11 // pred_region
          _
        $region16: #{convlstm_forward.3} parent=11 // pred_fallthru
          _
      $region12: #{convlstm_forward.3} parent=5 // pred_fallthru
        _
      %p146 = scmp.lt.s32.totalorder %s13, 16
      // Predicated region
      $region17: #{convlstm_forward.3} parent=5 // pred_check
        %p147 = pneg %p146
      $region18: #{convlstm_forward.3} parent=5 // pred_check_branch
        %149 = sbr.rel (%p147) target = $region20
      $region19: #{convlstm_forward.3} parent=5 // pred_region
        // Predicated region
        $region21: #{convlstm_forward.3} parent=19 // pred_check
          %p150 = pneg %p47
        $region22: #{convlstm_forward.3} parent=19 // pred_check_branch
          %152 = sbr.rel (%p150) target = $region24
        $region23: #{convlstm_forward.3} parent=19 // pred_region
          %s153 = smul.u32 32, %s20
          %p154 = scmp.lt.s32.totalorder %s21, 7
          %s155 = scalar_select %p154, %s21, 7
          %p156 = scmp.lt.s32.totalorder %s153, 63
          %s157 = scalar_select %p156, %s153, 63
          %s158 = smul.addr %s155, 64
          %s159 = sadd.s32 %s157, %s158
          %s160 = smul.addr %s159, 8
          %s161 = scalar_lea.vmem %s0, %s160
          %s162 = smul.u32 32, %s20
        $region24: #{convlstm_forward.3} parent=19 // pred_fallthru
          _
      $region20: #{convlstm_forward.3} parent=5 // pred_fallthru
        _
      %p163 = scmp.le.s32.totalorder 1, %s13
      %p164 = scmp.lt.s32.totalorder %s13, 17
      %p165 = pnand %p163, %p164
      %p166 = pneg %p165
      // Predicated region
      $region25: #{convlstm_forward.3} parent=5 // pred_check
        _
      $region26: #{convlstm_forward.3} parent=5 // pred_check_branch
        %168 = sbr.rel (%p165) target = $region28
      $region27: #{convlstm_forward.3} parent=5 // pred_region
        %s169 = ssub.s32 %s13, 1
        %s170 = smul.u32 32, %s22
        %p171 = scmp.lt.s32.totalorder %s23, 7
        %s172 = scalar_select %p171, %s23, 7
        %p173 = scmp.lt.s32.totalorder %s170, 63
        %s174 = scalar_select %p173, %s170, 63
        %s175 = smul.addr %s172, 64
        %s176 = sadd.s32 %s174, %s175
        %s177 = smul.addr %s176, 8
        %s178 = scalar_lea.vmem %s0, %s177
        %p179 = pneg %p53
        %p180 = pneg %p50
        %p181 = pneg %p74
        %p182 = pneg %p71
        %p183 = pneg %p102
        %p184 = pneg %p99
        %s185 = sand.u32 %s89, 1
        %s186 = scalar_lea.sflag [#allocation4], %s185
        %s187 = sand.u32 %s89, 1
        %s188 = smul.addr %s187, 256
        %s189 = scalar_lea.vmem [#allocation3], %s188
        %p190 = pneg %p128
        %p191 = pneg %p125
        %s192 = smul.u32 32, %s22
        %p193 = scmp.lt.s32.totalorder %s192, 63
        %s194 = scalar_select %p193, %s192, 63
        %s195 = smul.addr %s194, 8
        %s196 = scalar_lea.vmem %s3, %s195
        %s197 = smul.u32 32, %s22
        %p198 = scmp.lt.s32.totalorder %s23, 7
        %s199 = scalar_select %p198, %s23, 7
        %p200 = scmp.lt.s32.totalorder %s197, 63
        %s201 = scalar_select %p200, %s197, 63
        %s202 = smul.addr %s199, 64
        %s203 = sadd.s32 %s201, %s202
        %s204 = smul.addr %s203, 8
        %s205 = scalar_lea.vmem %s0, %s204
        %s206 = smul.u32 32, %s22
        %s207 = smul.u32 32, %s22
        %s208 = smul.u32 32, %s22
        %p209 = scmp.lt.s32.totalorder %s208, 63
        %s210 = scalar_select %p209, %s208, 63
        %s211 = smul.addr %s210, 8
        %s212 = scalar_lea.vmem %s3, %s211
        %s213 = smul.u32 32, %s22
        %p214 = scmp.eq.s32.totalorder %s23, 0
        // Predicated region
        $region29: #{convlstm_forward.3} parent=27 // pred_check
          %p215 = pneg %p214
        $region30: #{convlstm_forward.3} parent=27 // pred_check_branch
          %217 = sbr.rel (%p215) target = $region32
        $region31: #{convlstm_forward.3} parent=27 // pred_region
          %vm218 = vcmask 130048
          %219 = vst.msk [vmem:[#allocation2] sm:$0xff] %vm218, 0.0
          %220 = vst.msk [vmem:[#allocation2 + $0x8] sm:$0xff] %vm218, 0.0
          %vm221 = vcmask 123904
          %222 = vst.msk [vmem:[#allocation2 + $0x10] sm:$0x3] %vm221, 0.0
          %223 = vst.msk [vmem:[#allocation2 + $0x18] sm:$0xff] %vm218, 0.0
          %224 = vst.msk [vmem:[#allocation2 + $0x20] sm:$0xff] %vm218, 0.0
          %225 = vst.msk [vmem:[#allocation2 + $0x28] sm:$0x3] %vm221, 0.0
          %226 = vst.msk [vmem:[#allocation2 + $0x30] sm:$0xff] %vm218, 0.0
          %227 = vst.msk [vmem:[#allocation2 + $0x38] sm:$0xff] %vm218, 0.0
          %228 = vst.msk [vmem:[#allocation2 + $0x40] sm:$0x3] %vm221, 0.0
          %229 = vst.msk [vmem:[#allocation2 + $0x48] sm:$0xff] %vm218, 0.0
          %230 = vst.msk [vmem:[#allocation2 + $0x50] sm:$0xff] %vm218, 0.0
          %231 = vst.msk [vmem:[#allocation2 + $0x58] sm:$0x3] %vm221, 0.0
          %232 = vst.msk [vmem:[#allocation2 + $0x60] sm:$0xff] %vm218, 0.0
          %233 = vst.msk [vmem:[#allocation2 + $0x68] sm:$0xff] %vm218, 0.0
          %234 = vst.msk [vmem:[#allocation2 + $0x70] sm:$0x3] %vm221, 0.0
          %235 = vst.msk [vmem:[#allocation2 + $0x78] sm:$0xff] %vm218, 0.0
          %236 = vst.msk [vmem:[#allocation2 + $0x80] sm:$0xff] %vm218, 0.0
          %237 = vst.msk [vmem:[#allocation2 + $0x88] sm:$0x3] %vm221, 0.0
          %238 = vst.msk [vmem:[#allocation2 + $0x90] sm:$0xff] %vm218, 0.0
          %239 = vst.msk [vmem:[#allocation2 + $0x98] sm:$0xff] %vm218, 0.0
          %240 = vst.msk [vmem:[#allocation2 + $0xa0] sm:$0x3] %vm221, 0.0
          %241 = vst.msk [vmem:[#allocation2 + $0xa8] sm:$0xff] %vm218, 0.0
          %242 = vst.msk [vmem:[#allocation2 + $0xb0] sm:$0xff] %vm218, 0.0
          %243 = vst.msk [vmem:[#allocation2 + $0xb8] sm:$0x3] %vm221, 0.0
          %244 = vst.msk [vmem:[#allocation2 + $0xc0] sm:$0xff] %vm218, 0.0
          %245 = vst.msk [vmem:[#allocation2 + $0xc8] sm:$0xff] %vm218, 0.0
          %246 = vst.msk [vmem:[#allocation2 + $0xd0] sm:$0x3] %vm221, 0.0
          %247 = vst.msk [vmem:[#allocation2 + $0xd8] sm:$0xff] %vm218, 0.0
          %248 = vst.msk [vmem:[#allocation2 + $0xe0] sm:$0xff] %vm218, 0.0
          %249 = vst.msk [vmem:[#allocation2 + $0xe8] sm:$0x3] %vm221, 0.0
          %250 = vst.msk [vmem:[#allocation2 + $0xf0] sm:$0xff] %vm218, 0.0
          %251 = vst.msk [vmem:[#allocation2 + $0xf8] sm:$0xff] %vm218, 0.0
          %252 = vst.msk [vmem:[#allocation2 + $0x100] sm:$0x3] %vm221, 0.0
          %253 = vst.msk [vmem:[#allocation2 + $0x108] sm:$0xff] %vm218, 0.0
          %254 = vst.msk [vmem:[#allocation2 + $0x110] sm:$0xff] %vm218, 0.0
          %255 = vst.msk [vmem:[#allocation2 + $0x118] sm:$0x3] %vm221, 0.0
          %256 = vst.msk [vmem:[#allocation2 + $0x120] sm:$0xff] %vm218, 0.0
          %257 = vst.msk [vmem:[#allocation2 + $0x128] sm:$0xff] %vm218, 0.0
          %258 = vst.msk [vmem:[#allocation2 + $0x130] sm:$0x3] %vm221, 0.0
          %259 = vst.msk [vmem:[#allocation2 + $0x138] sm:$0xff] %vm218, 0.0
          %260 = vst.msk [vmem:[#allocation2 + $0x140] sm:$0xff] %vm218, 0.0
          %261 = vst.msk [vmem:[#allocation2 + $0x148] sm:$0x3] %vm221, 0.0
          %262 = vst.msk [vmem:[#allocation2 + $0x150] sm:$0xff] %vm218, 0.0
          %263 = vst.msk [vmem:[#allocation2 + $0x158] sm:$0xff] %vm218, 0.0
          %264 = vst.msk [vmem:[#allocation2 + $0x160] sm:$0x3] %vm221, 0.0
          %265 = vst.msk [vmem:[#allocation2 + $0x168] sm:$0xff] %vm218, 0.0
          %266 = vst.msk [vmem:[#allocation2 + $0x170] sm:$0xff] %vm218, 0.0
          %267 = vst.msk [vmem:[#allocation2 + $0x178] sm:$0x3] %vm221, 0.0
          %268 = vst.msk [vmem:[#allocation2 + $0x180] sm:$0xff] %vm218, 0.0
          %269 = vst.msk [vmem:[#allocation2 + $0x188] sm:$0xff] %vm218, 0.0
          %270 = vst.msk [vmem:[#allocation2 + $0x190] sm:$0x3] %vm221, 0.0
          %271 = vst.msk [vmem:[#allocation2 + $0x198] sm:$0xff] %vm218, 0.0
          %272 = vst.msk [vmem:[#allocation2 + $0x1a0] sm:$0xff] %vm218, 0.0
          %273 = vst.msk [vmem:[#allocation2 + $0x1a8] sm:$0x3] %vm221, 0.0
          %274 = vst.msk [vmem:[%s212] sm:$0xff] %vm218, 0.0
          %275 = vst.msk [vmem:[%s212 + $0x8] sm:$0xff] %vm218, 0.0
          %276 = vst.msk [vmem:[%s212 + $0x10] sm:$0xff] %vm218, 0.0
          %277 = vst.msk [vmem:[%s212 + $0x18] sm:$0xff] %vm218, 0.0
          %278 = vst.msk [vmem:[%s212 + $0x20] sm:$0xff] %vm218, 0.0
          %279 = vst.msk [vmem:[%s212 + $0x28] sm:$0xff] %vm218, 0.0
          %280 = vst.msk [vmem:[%s212 + $0x30] sm:$0xff] %vm218, 0.0
          %281 = vst.msk [vmem:[%s212 + $0x38] sm:$0xff] %vm218, 0.0
          %282 = vst.msk [vmem:[%s212 + $0x40] sm:$0xff] %vm218, 0.0
          %283 = vst.msk [vmem:[%s212 + $0x48] sm:$0xff] %vm218, 0.0
          %284 = vst.msk [vmem:[%s212 + $0x50] sm:$0xff] %vm218, 0.0
          %285 = vst.msk [vmem:[%s212 + $0x58] sm:$0xff] %vm218, 0.0
          %286 = vst.msk [vmem:[%s212 + $0x60] sm:$0xff] %vm218, 0.0
          %287 = vst.msk [vmem:[%s212 + $0x68] sm:$0xff] %vm218, 0.0
          %288 = vst.msk [vmem:[%s212 + $0x70] sm:$0xff] %vm218, 0.0
          %289 = vst.msk [vmem:[%s212 + $0x78] sm:$0xff] %vm218, 0.0
          %290 = vst.msk [vmem:[%s212 + $0x80] sm:$0xff] %vm218, 0.0
          %291 = vst.msk [vmem:[%s212 + $0x88] sm:$0xff] %vm218, 0.0
          %292 = vst.msk [vmem:[%s212 + $0x90] sm:$0xff] %vm218, 0.0
          %293 = vst.msk [vmem:[%s212 + $0x98] sm:$0xff] %vm218, 0.0
          %294 = vst.msk [vmem:[%s212 + $0xa0] sm:$0xff] %vm218, 0.0
          %295 = vst.msk [vmem:[%s212 + $0xa8] sm:$0xff] %vm218, 0.0
          %296 = vst.msk [vmem:[%s212 + $0xb0] sm:$0xff] %vm218, 0.0
          %297 = vst.msk [vmem:[%s212 + $0xb8] sm:$0xff] %vm218, 0.0
          %298 = vst.msk [vmem:[%s212 + $0xc0] sm:$0xff] %vm218, 0.0
          %299 = vst.msk [vmem:[%s212 + $0xc8] sm:$0xff] %vm218, 0.0
          %300 = vst.msk [vmem:[%s212 + $0xd0] sm:$0xff] %vm218, 0.0
          %301 = vst.msk [vmem:[%s212 + $0xd8] sm:$0xff] %vm218, 0.0
          %302 = vst.msk [vmem:[%s212 + $0xe0] sm:$0xff] %vm218, 0.0
          %303 = vst.msk [vmem:[%s212 + $0xe8] sm:$0xff] %vm218, 0.0
          %304 = vst.msk [vmem:[%s212 + $0xf0] sm:$0xff] %vm218, 0.0
          %305 = vst.msk [vmem:[%s212 + $0xf8] sm:$0xff] %vm218, 0.0
        $region32: #{convlstm_forward.3} parent=27 // pred_fallthru
          _
        %v306 = vld [vmem:[%s205] sm:$0xff]
        %v307 = vld [vmem:[%s205 + $0x8] sm:$0xff]
        %v308 = vld [vmem:[%s205 + $0x10] sm:$0xff]
        %v309 = vld [vmem:[%s205 + $0x18] sm:$0xff]
        %v310 = vld [vmem:[%s205 + $0x20] sm:$0xff]
        %v311 = vld [vmem:[%s205 + $0x28] sm:$0xff]
        %v312 = vld [vmem:[%s205 + $0x30] sm:$0xff]
        %v313 = vld [vmem:[%s205 + $0x38] sm:$0xff]
        %v314 = vld [vmem:[%s205 + $0x40] sm:$0xff]
        %v315 = vld [vmem:[%s205 + $0x48] sm:$0xff]
        %v316 = vld [vmem:[%s205 + $0x50] sm:$0xff]
        %v317 = vld [vmem:[%s205 + $0x58] sm:$0xff]
        %v318 = vld [vmem:[%s205 + $0x60] sm:$0xff]
        %v319 = vld [vmem:[%s205 + $0x68] sm:$0xff]
        %v320 = vld [vmem:[%s205 + $0x70] sm:$0xff]
        %v321 = vld [vmem:[%s205 + $0x78] sm:$0xff]
        %v322 = vld [vmem:[%s205 + $0x80] sm:$0xff]
        %v323 = vld [vmem:[%s205 + $0x88] sm:$0xff]
        %v324 = vld [vmem:[%s205 + $0x90] sm:$0xff]
        %v325 = vld [vmem:[%s205 + $0x98] sm:$0xff]
        %v326 = vld [vmem:[%s205 + $0xa0] sm:$0xff]
        %v327 = vld [vmem:[%s205 + $0xa8] sm:$0xff]
        %v328 = vld [vmem:[%s205 + $0xb0] sm:$0xff]
        %v329 = vld [vmem:[%s205 + $0xb8] sm:$0xff]
        %v330 = vld [vmem:[%s205 + $0xc0] sm:$0xff]
        %v331 = vld [vmem:[%s205 + $0xc8] sm:$0xff]
        %v332 = vld [vmem:[%s205 + $0xd0] sm:$0xff]
        %v333 = vld [vmem:[%s205 + $0xd8] sm:$0xff]
        %v334 = vld [vmem:[%s205 + $0xe0] sm:$0xff]
        %v335 = vld [vmem:[%s205 + $0xe8] sm:$0xff]
        %v336 = vld [vmem:[%s205 + $0xf0] sm:$0xff]
        %v337 = vld [vmem:[%s205 + $0xf8] sm:$0xff]
        %v338 = vld [vmem:[#allocation2] sm:$0xff]
        %v339 = vld [vmem:[#allocation2 + $0x8] sm:$0xff]
        %v340 = vld [vmem:[#allocation2 + $0x18] sm:$0xff]
        %v341 = vld [vmem:[#allocation2 + $0x20] sm:$0xff]
        %v342 = vld [vmem:[#allocation2 + $0x30] sm:$0xff]
        %v343 = vld [vmem:[#allocation2 + $0x38] sm:$0xff]
        %v344 = vld [vmem:[#allocation2 + $0x48] sm:$0xff]
        %v345 = vld [vmem:[#allocation2 + $0x50] sm:$0xff]
        %v346 = vld [vmem:[#allocation2 + $0x60] sm:$0xff]
        %v347 = vld [vmem:[#allocation2 + $0x68] sm:$0xff]
        %v348 = vld [vmem:[#allocation2 + $0x78] sm:$0xff]
        %v349 = vld [vmem:[#allocation2 + $0x80] sm:$0xff]
        %v350 = vld [vmem:[#allocation2 + $0x90] sm:$0xff]
        %v351 = vld [vmem:[#allocation2 + $0x98] sm:$0xff]
        %v352 = vld [vmem:[#allocation2 + $0xa8] sm:$0xff]
        %v353 = vld [vmem:[#allocation2 + $0xb0] sm:$0xff]
        %v354 = vld [vmem:[#allocation2 + $0xc0] sm:$0xff]
        %v355 = vld [vmem:[#allocation2 + $0xc8] sm:$0xff]
        %v356 = vld [vmem:[#allocation2 + $0xd8] sm:$0xff]
        %v357 = vld [vmem:[#allocation2 + $0xe0] sm:$0xff]
        %v358 = vld [vmem:[#allocation2 + $0xf0] sm:$0xff]
        %v359 = vld [vmem:[#allocation2 + $0xf8] sm:$0xff]
        %v360 = vld [vmem:[#allocation2 + $0x108] sm:$0xff]
        %v361 = vld [vmem:[#allocation2 + $0x110] sm:$0xff]
        %v362 = vld [vmem:[#allocation2 + $0x120] sm:$0xff]
        %v363 = vld [vmem:[#allocation2 + $0x128] sm:$0xff]
        %v364 = vld [vmem:[#allocation2 + $0x138] sm:$0xff]
        %v365 = vld [vmem:[#allocation2 + $0x140] sm:$0xff]
        %v366 = vld [vmem:[#allocation2 + $0x150] sm:$0xff]
        %v367 = vld [vmem:[#allocation2 + $0x158] sm:$0xff]
        %v368 = vld [vmem:[#allocation2 + $0x168] sm:$0xff]
        %v369 = vld [vmem:[#allocation2 + $0x170] sm:$0xff]
        %v370 = vld [vmem:[%s1] sm:$0xff]
        %v371 = vld [vmem:[%s1 + $0x8] sm:$0xff]
        %vm372 = vcmask 130048
        %v374 = vsel %vm372, %v338, 0
        %v377 = vsel %vm372, %v339, 0
        %v380 = vsel %vm372, %v340, 0
        %v383 = vsel %vm372, %v341, 0
        %v386 = vsel %vm372, %v342, 0
        %v389 = vsel %vm372, %v343, 0
        %v392 = vsel %vm372, %v344, 0
        %v395 = vsel %vm372, %v345, 0
        %v398 = vsel %vm372, %v346, 0
        %v401 = vsel %vm372, %v347, 0
        %v404 = vsel %vm372, %v348, 0
        %v407 = vsel %vm372, %v349, 0
        %v410 = vsel %vm372, %v350, 0
        %v413 = vsel %vm372, %v351, 0
        %v416 = vsel %vm372, %v352, 0
        %v419 = vsel %vm372, %v353, 0
        %v422 = vsel %vm372, %v354, 0
        %v425 = vsel %vm372, %v355, 0
        %v428 = vsel %vm372, %v356, 0
        %v431 = vsel %vm372, %v357, 0
        %v434 = vsel %vm372, %v358, 0
        %v437 = vsel %vm372, %v359, 0
        %v440 = vsel %vm372, %v360, 0
        %v443 = vsel %vm372, %v361, 0
        %v446 = vsel %vm372, %v362, 0
        %v449 = vsel %vm372, %v363, 0
        %v452 = vsel %vm372, %v364, 0
        %v455 = vsel %vm372, %v365, 0
        %v458 = vsel %vm372, %v366, 0
        %v461 = vsel %vm372, %v367, 0
        %v464 = vsel %vm372, %v368, 0
        %v467 = vsel %vm372, %v369, 0
        %469 = vmatpush.msra.mxu0 0.0
        %470 = vmatpush.msra.mxu0 0.0
        %471 = vmatpush.msra.mxu0 0.0
        %472 = vmatpush.msra.mxu0 0.0
        %473 = vmatpush.msra.mxu0 0.0
        %474 = vmatpush.msra.mxu0 0.0
        %475 = vmatpush.msra.mxu0 0.0
        %476 = vmatpush.msra.mxu0 0.0
        %477 = vmatpush.msra.mxu0 0.0
        %478 = vmatpush.msra.mxu0 0.0
        %479 = vmatpush.msra.mxu0 0.0
        %480 = vmatpush.msra.mxu0 0.0
        %481 = vmatpush.msra.mxu0 0.0
        %482 = vmatpush.msra.mxu0 0.0
        %483 = vmatpush.msra.mxu0 %v371
        %484 = vmatpush.msra.mxu0 %v370
        %485 = vmatmul.f32.gmra.mxu0 %v374
        %v486 = vpop.f32.mrf.mxu0
        %v487 = vadd.f32 0.0, %v486
        %488 = vmatmul.f32.gmra.mxu0 %v377
        %v489 = vpop.f32.mrf.mxu0
        %v490 = vadd.f32 0.0, %v489
        %491 = vmatmul.f32.gmra.mxu0 %v380
        %v492 = vpop.f32.mrf.mxu0
        %v493 = vadd.f32 0.0, %v492
        %494 = vmatmul.f32.gmra.mxu0 %v383
        %v495 = vpop.f32.mrf.mxu0
        %v496 = vadd.f32 0.0, %v495
        %497 = vmatmul.f32.gmra.mxu0 %v386
        %v498 = vpop.f32.mrf.mxu0
        %v499 = vadd.f32 0.0, %v498
        %500 = vmatmul.f32.gmra.mxu0 %v389
        %v501 = vpop.f32.mrf.mxu0
        %v502 = vadd.f32 0.0, %v501
        %503 = vmatmul.f32.gmra.mxu0 %v392
        %v504 = vpop.f32.mrf.mxu0
        %v505 = vadd.f32 0.0, %v504
        %506 = vmatmul.f32.gmra.mxu0 %v395
        %v507 = vpop.f32.mrf.mxu0
        %v508 = vadd.f32 0.0, %v507
        %509 = vmatmul.f32.gmra.mxu0 %v398
        %v510 = vpop.f32.mrf.mxu0
        %v511 = vadd.f32 0.0, %v510
        %512 = vmatmul.f32.gmra.mxu0 %v401
        %v513 = vpop.f32.mrf.mxu0
        %v514 = vadd.f32 0.0, %v513
        %515 = vmatmul.f32.gmra.mxu0 %v404
        %v516 = vpop.f32.mrf.mxu0
        %v517 = vadd.f32 0.0, %v516
        %518 = vmatmul.f32.gmra.mxu0 %v407
        %v519 = vpop.f32.mrf.mxu0
        %v520 = vadd.f32 0.0, %v519
        %521 = vmatmul.f32.gmra.mxu0 %v410
        %v522 = vpop.f32.mrf.mxu0
        %v523 = vadd.f32 0.0, %v522
        %524 = vmatmul.f32.gmra.mxu0 %v413
        %v525 = vpop.f32.mrf.mxu0
        %v526 = vadd.f32 0.0, %v525
        %527 = vmatmul.f32.gmra.mxu0 %v416
        %v528 = vpop.f32.mrf.mxu0
        %v529 = vadd.f32 0.0, %v528
        %530 = vmatmul.f32.gmra.mxu0 %v419
        %v531 = vpop.f32.mrf.mxu0
        %v532 = vadd.f32 0.0, %v531
        %533 = vmatmul.f32.gmra.mxu0 %v422
        %v534 = vpop.f32.mrf.mxu0
        %v535 = vadd.f32 0.0, %v534
        %536 = vmatmul.f32.gmra.mxu0 %v425
        %v537 = vpop.f32.mrf.mxu0
        %v538 = vadd.f32 0.0, %v537
        %539 = vmatmul.f32.gmra.mxu0 %v428
        %v540 = vpop.f32.mrf.mxu0
        %v541 = vadd.f32 0.0, %v540
        %542 = vmatmul.f32.gmra.mxu0 %v431
        %v543 = vpop.f32.mrf.mxu0
        %v544 = vadd.f32 0.0, %v543
        %545 = vmatmul.f32.gmra.mxu0 %v434
        %v546 = vpop.f32.mrf.mxu0
        %v547 = vadd.f32 0.0, %v546
        %548 = vmatmul.f32.gmra.mxu0 %v437
        %v549 = vpop.f32.mrf.mxu0
        %v550 = vadd.f32 0.0, %v549
        %551 = vmatmul.f32.gmra.mxu0 %v440
        %v552 = vpop.f32.mrf.mxu0
        %v553 = vadd.f32 0.0, %v552
        %554 = vmatmul.f32.gmra.mxu0 %v443
        %v555 = vpop.f32.mrf.mxu0
        %v556 = vadd.f32 0.0, %v555
        %557 = vmatmul.f32.gmra.mxu0 %v446
        %v558 = vpop.f32.mrf.mxu0
        %v559 = vadd.f32 0.0, %v558
        %560 = vmatmul.f32.gmra.mxu0 %v449
        %v561 = vpop.f32.mrf.mxu0
        %v562 = vadd.f32 0.0, %v561
        %563 = vmatmul.f32.gmra.mxu0 %v452
        %v564 = vpop.f32.mrf.mxu0
        %v565 = vadd.f32 0.0, %v564
        %566 = vmatmul.f32.gmra.mxu0 %v455
        %v567 = vpop.f32.mrf.mxu0
        %v568 = vadd.f32 0.0, %v567
        %569 = vmatmul.f32.gmra.mxu0 %v458
        %v570 = vpop.f32.mrf.mxu0
        %v571 = vadd.f32 0.0, %v570
        %572 = vmatmul.f32.gmra.mxu0 %v461
        %v573 = vpop.f32.mrf.mxu0
        %v574 = vadd.f32 0.0, %v573
        %575 = vmatmul.f32.gmra.mxu0 %v464
        %v576 = vpop.f32.mrf.mxu0
        %v577 = vadd.f32 0.0, %v576
        %578 = vmatmul.f32.gmra.mxu0 %v467
        %v579 = vpop.f32.mrf.mxu0
        %v580 = vadd.f32 0.0, %v579
        %581 = vdwg.mxu0
        %v582 = vadd.f32 %v306, %v487
        %v583 = vadd.f32 %v307, %v490
        %v584 = vadd.f32 %v308, %v493
        %v585 = vadd.f32 %v309, %v496
        %v586 = vadd.f32 %v310, %v499
        %v587 = vadd.f32 %v311, %v502
        %v588 = vadd.f32 %v312, %v505
        %v589 = vadd.f32 %v313, %v508
        %v590 = vadd.f32 %v314, %v511
        %v591 = vadd.f32 %v315, %v514
        %v592 = vadd.f32 %v316, %v517
        %v593 = vadd.f32 %v317, %v520
        %v594 = vadd.f32 %v318, %v523
        %v595 = vadd.f32 %v319, %v526
        %v596 = vadd.f32 %v320, %v529
        %v597 = vadd.f32 %v321, %v532
        %v598 = vadd.f32 %v322, %v535
        %v599 = vadd.f32 %v323, %v538
        %v600 = vadd.f32 %v324, %v541
        %v601 = vadd.f32 %v325, %v544
        %v602 = vadd.f32 %v326, %v547
        %v603 = vadd.f32 %v327, %v550
        %v604 = vadd.f32 %v328, %v553
        %v605 = vadd.f32 %v329, %v556
        %v606 = vadd.f32 %v330, %v559
        %v607 = vadd.f32 %v331, %v562
        %v608 = vadd.f32 %v332, %v565
        %v609 = vadd.f32 %v333, %v568
        %v610 = vadd.f32 %v334, %v571
        %v611 = vadd.f32 %v335, %v574
        %v612 = vadd.f32 %v336, %v577
        %v613 = vadd.f32 %v337, %v580
        %v614 = vld [vmem:[#allocation2 + $0x1] sm:$0xff]
        %v615 = vld [vmem:[#allocation2 + $0x9] sm:$0xff]
        %v616 = vld [vmem:[#allocation2 + $0x19] sm:$0xff]
        %v617 = vld [vmem:[#allocation2 + $0x21] sm:$0xff]
        %v618 = vld [vmem:[#allocation2 + $0x31] sm:$0xff]
        %v619 = vld [vmem:[#allocation2 + $0x39] sm:$0xff]
        %v620 = vld [vmem:[#allocation2 + $0x49] sm:$0xff]
        %v621 = vld [vmem:[#allocation2 + $0x51] sm:$0xff]
        %v622 = vld [vmem:[#allocation2 + $0x61] sm:$0xff]
        %v623 = vld [vmem:[#allocation2 + $0x69] sm:$0xff]
        %v624 = vld [vmem:[#allocation2 + $0x79] sm:$0xff]
        %v625 = vld [vmem:[#allocation2 + $0x81] sm:$0xff]
        %v626 = vld [vmem:[#allocation2 + $0x91] sm:$0xff]
        %v627 = vld [vmem:[#allocation2 + $0x99] sm:$0xff]
        %v628 = vld [vmem:[#allocation2 + $0xa9] sm:$0xff]
        %v629 = vld [vmem:[#allocation2 + $0xb1] sm:$0xff]
        %v630 = vld [vmem:[#allocation2 + $0xc1] sm:$0xff]
        %v631 = vld [vmem:[#allocation2 + $0xc9] sm:$0xff]
        %v632 = vld [vmem:[#allocation2 + $0xd9] sm:$0xff]
        %v633 = vld [vmem:[#allocation2 + $0xe1] sm:$0xff]
        %v634 = vld [vmem:[#allocation2 + $0xf1] sm:$0xff]
        %v635 = vld [vmem:[#allocation2 + $0xf9] sm:$0xff]
        %v636 = vld [vmem:[#allocation2 + $0x109] sm:$0xff]
        %v637 = vld [vmem:[#allocation2 + $0x111] sm:$0xff]
        %v638 = vld [vmem:[#allocation2 + $0x121] sm:$0xff]
        %v639 = vld [vmem:[#allocation2 + $0x129] sm:$0xff]
        %v640 = vld [vmem:[#allocation2 + $0x139] sm:$0xff]
        %v641 = vld [vmem:[#allocation2 + $0x141] sm:$0xff]
        %v642 = vld [vmem:[#allocation2 + $0x151] sm:$0xff]
        %v643 = vld [vmem:[#allocation2 + $0x159] sm:$0xff]
        %v644 = vld [vmem:[#allocation2 + $0x169] sm:$0xff]
        %v645 = vld [vmem:[#allocation2 + $0x171] sm:$0xff]
        %s646 = scalar_lea.vmem %s1, 16
        %v647 = vld [vmem:[%s646] sm:$0xff]
        %v648 = vld [vmem:[%s646 + $0x8] sm:$0xff]
        %v650 = vsel %vm372, %v614, 0
        %v653 = vsel %vm372, %v615, 0
        %v656 = vsel %vm372, %v616, 0
        %v659 = vsel %vm372, %v617, 0
        %v662 = vsel %vm372, %v618, 0
        %v665 = vsel %vm372, %v619, 0
        %v668 = vsel %vm372, %v620, 0
        %v671 = vsel %vm372, %v621, 0
        %v674 = vsel %vm372, %v622, 0
        %v677 = vsel %vm372, %v623, 0
        %v680 = vsel %vm372, %v624, 0
        %v683 = vsel %vm372, %v625, 0
        %v686 = vsel %vm372, %v626, 0
        %v689 = vsel %vm372, %v627, 0
        %v692 = vsel %vm372, %v628, 0
        %v695 = vsel %vm372, %v629, 0
        %v698 = vsel %vm372, %v630, 0
        %v701 = vsel %vm372, %v631, 0
        %v704 = vsel %vm372, %v632, 0
        %v707 = vsel %vm372, %v633, 0
        %v710 = vsel %vm372, %v634, 0
        %v713 = vsel %vm372, %v635, 0
        %v716 = vsel %vm372, %v636, 0
        %v719 = vsel %vm372, %v637, 0
        %v722 = vsel %vm372, %v638, 0
        %v725 = vsel %vm372, %v639, 0
        %v728 = vsel %vm372, %v640, 0
        %v731 = vsel %vm372, %v641, 0
        %v734 = vsel %vm372, %v642, 0
        %v737 = vsel %vm372, %v643, 0
        %v740 = vsel %vm372, %v644, 0
        %v743 = vsel %vm372, %v645, 0
        %745 = vmatpush.msra.mxu0 0.0
        %746 = vmatpush.msra.mxu0 0.0
        %747 = vmatpush.msra.mxu0 0.0
        %748 = vmatpush.msra.mxu0 0.0
        %749 = vmatpush.msra.mxu0 0.0
        %750 = vmatpush.msra.mxu0 0.0
        %751 = vmatpush.msra.mxu0 0.0
        %752 = vmatpush.msra.mxu0 0.0
        %753 = vmatpush.msra.mxu0 0.0
        %754 = vmatpush.msra.mxu0 0.0
        %755 = vmatpush.msra.mxu0 0.0
        %756 = vmatpush.msra.mxu0 0.0
        %757 = vmatpush.msra.mxu0 0.0
        %758 = vmatpush.msra.mxu0 0.0
        %759 = vmatpush.msra.mxu0 %v648
        %760 = vmatpush.msra.mxu0 %v647
        %761 = vmatmul.f32.gmra.mxu0 %v650
        %v762 = vpop.f32.mrf.mxu0
        %v763 = vadd.f32 0.0, %v762
        %764 = vmatmul.f32.gmra.mxu0 %v653
        %v765 = vpop.f32.mrf.mxu0
        %v766 = vadd.f32 0.0, %v765
        %767 = vmatmul.f32.gmra.mxu0 %v656
        %v768 = vpop.f32.mrf.mxu0
        %v769 = vadd.f32 0.0, %v768
        %770 = vmatmul.f32.gmra.mxu0 %v659
        %v771 = vpop.f32.mrf.mxu0
        %v772 = vadd.f32 0.0, %v771
        %773 = vmatmul.f32.gmra.mxu0 %v662
        %v774 = vpop.f32.mrf.mxu0
        %v775 = vadd.f32 0.0, %v774
        %776 = vmatmul.f32.gmra.mxu0 %v665
        %v777 = vpop.f32.mrf.mxu0
        %v778 = vadd.f32 0.0, %v777
        %779 = vmatmul.f32.gmra.mxu0 %v668
        %v780 = vpop.f32.mrf.mxu0
        %v781 = vadd.f32 0.0, %v780
        %782 = vmatmul.f32.gmra.mxu0 %v671
        %v783 = vpop.f32.mrf.mxu0
        %v784 = vadd.f32 0.0, %v783
        %785 = vmatmul.f32.gmra.mxu0 %v674
        %v786 = vpop.f32.mrf.mxu0
        %v787 = vadd.f32 0.0, %v786
        %788 = vmatmul.f32.gmra.mxu0 %v677
        %v789 = vpop.f32.mrf.mxu0
        %v790 = vadd.f32 0.0, %v789
        %791 = vmatmul.f32.gmra.mxu0 %v680
        %v792 = vpop.f32.mrf.mxu0
        %v793 = vadd.f32 0.0, %v792
        %794 = vmatmul.f32.gmra.mxu0 %v683
        %v795 = vpop.f32.mrf.mxu0
        %v796 = vadd.f32 0.0, %v795
        %797 = vmatmul.f32.gmra.mxu0 %v686
        %v798 = vpop.f32.mrf.mxu0
        %v799 = vadd.f32 0.0, %v798
        %800 = vmatmul.f32.gmra.mxu0 %v689
        %v801 = vpop.f32.mrf.mxu0
        %v802 = vadd.f32 0.0, %v801
        %803 = vmatmul.f32.gmra.mxu0 %v692
        %v804 = vpop.f32.mrf.mxu0
        %v805 = vadd.f32 0.0, %v804
        %806 = vmatmul.f32.gmra.mxu0 %v695
        %v807 = vpop.f32.mrf.mxu0
        %v808 = vadd.f32 0.0, %v807
        %809 = vmatmul.f32.gmra.mxu0 %v698
        %v810 = vpop.f32.mrf.mxu0
        %v811 = vadd.f32 0.0, %v810
        %812 = vmatmul.f32.gmra.mxu0 %v701
        %v813 = vpop.f32.mrf.mxu0
        %v814 = vadd.f32 0.0, %v813
        %815 = vmatmul.f32.gmra.mxu0 %v704
        %v816 = vpop.f32.mrf.mxu0
        %v817 = vadd.f32 0.0, %v816
        %818 = vmatmul.f32.gmra.mxu0 %v707
        %v819 = vpop.f32.mrf.mxu0
        %v820 = vadd.f32 0.0, %v819
        %821 = vmatmul.f32.gmra.mxu0 %v710
        %v822 = vpop.f32.mrf.mxu0
        %v823 = vadd.f32 0.0, %v822
        %824 = vmatmul.f32.gmra.mxu0 %v713
        %v825 = vpop.f32.mrf.mxu0
        %v826 = vadd.f32 0.0, %v825
        %827 = vmatmul.f32.gmra.mxu0 %v716
        %v828 = vpop.f32.mrf.mxu0
        %v829 = vadd.f32 0.0, %v828
        %830 = vmatmul.f32.gmra.mxu0 %v719
        %v831 = vpop.f32.mrf.mxu0
        %v832 = vadd.f32 0.0, %v831
        %833 = vmatmul.f32.gmra.mxu0 %v722
        %v834 = vpop.f32.mrf.mxu0
        %v835 = vadd.f32 0.0, %v834
        %836 = vmatmul.f32.gmra.mxu0 %v725
        %v837 = vpop.f32.mrf.mxu0
        %v838 = vadd.f32 0.0, %v837
        %839 = vmatmul.f32.gmra.mxu0 %v728
        %v840 = vpop.f32.mrf.mxu0
        %v841 = vadd.f32 0.0, %v840
        %842 = vmatmul.f32.gmra.mxu0 %v731
        %v843 = vpop.f32.mrf.mxu0
        %v844 = vadd.f32 0.0, %v843
        %845 = vmatmul.f32.gmra.mxu0 %v734
        %v846 = vpop.f32.mrf.mxu0
        %v847 = vadd.f32 0.0, %v846
        %848 = vmatmul.f32.gmra.mxu0 %v737
        %v849 = vpop.f32.mrf.mxu0
        %v850 = vadd.f32 0.0, %v849
        %851 = vmatmul.f32.gmra.mxu0 %v740
        %v852 = vpop.f32.mrf.mxu0
        %v853 = vadd.f32 0.0, %v852
        %854 = vmatmul.f32.gmra.mxu0 %v743
        %v855 = vpop.f32.mrf.mxu0
        %v856 = vadd.f32 0.0, %v855
        %857 = vdwg.mxu0
        %v858 = vadd.f32 %v582, %v763
        %v859 = vadd.f32 %v583, %v766
        %v860 = vadd.f32 %v584, %v769
        %v861 = vadd.f32 %v585, %v772
        %v862 = vadd.f32 %v586, %v775
        %v863 = vadd.f32 %v587, %v778
        %v864 = vadd.f32 %v588, %v781
        %v865 = vadd.f32 %v589, %v784
        %v866 = vadd.f32 %v590, %v787
        %v867 = vadd.f32 %v591, %v790
        %v868 = vadd.f32 %v592, %v793
        %v869 = vadd.f32 %v593, %v796
        %v870 = vadd.f32 %v594, %v799
        %v871 = vadd.f32 %v595, %v802
        %v872 = vadd.f32 %v596, %v805
        %v873 = vadd.f32 %v597, %v808
        %v874 = vadd.f32 %v598, %v811
        %v875 = vadd.f32 %v599, %v814
        %v876 = vadd.f32 %v600, %v817
        %v877 = vadd.f32 %v601, %v820
        %v878 = vadd.f32 %v602, %v823
        %v879 = vadd.f32 %v603, %v826
        %v880 = vadd.f32 %v604, %v829
        %v881 = vadd.f32 %v605, %v832
        %v882 = vadd.f32 %v606, %v835
        %v883 = vadd.f32 %v607, %v838
        %v884 = vadd.f32 %v608, %v841
        %v885 = vadd.f32 %v609, %v844
        %v886 = vadd.f32 %v610, %v847
        %v887 = vadd.f32 %v611, %v850
        %v888 = vadd.f32 %v612, %v853
        %v889 = vadd.f32 %v613, %v856
        %v890 = vld [vmem:[#allocation2 + $0x2] sm:$0xff]
        %v891 = vld [vmem:[#allocation2 + $0xa] sm:$0xff]
        %v892 = vld [vmem:[#allocation2 + $0x1a] sm:$0xff]
        %v893 = vld [vmem:[#allocation2 + $0x22] sm:$0xff]
        %v894 = vld [vmem:[#allocation2 + $0x32] sm:$0xff]
        %v895 = vld [vmem:[#allocation2 + $0x3a] sm:$0xff]
        %v896 = vld [vmem:[#allocation2 + $0x4a] sm:$0xff]
        %v897 = vld [vmem:[#allocation2 + $0x52] sm:$0xff]
        %v898 = vld [vmem:[#allocation2 + $0x62] sm:$0xff]
        %v899 = vld [vmem:[#allocation2 + $0x6a] sm:$0xff]
        %v900 = vld [vmem:[#allocation2 + $0x7a] sm:$0xff]
        %v901 = vld [vmem:[#allocation2 + $0x82] sm:$0xff]
        %v902 = vld [vmem:[#allocation2 + $0x92] sm:$0xff]
        %v903 = vld [vmem:[#allocation2 + $0x9a] sm:$0xff]
        %v904 = vld [vmem:[#allocation2 + $0xaa] sm:$0xff]
        %v905 = vld [vmem:[#allocation2 + $0xb2] sm:$0xff]
        %v906 = vld [vmem:[#allocation2 + $0xc2] sm:$0xff]
        %v907 = vld [vmem:[#allocation2 + $0xca] sm:$0xff]
        %v908 = vld [vmem:[#allocation2 + $0xda] sm:$0xff]
        %v909 = vld [vmem:[#allocation2 + $0xe2] sm:$0xff]
        %v910 = vld [vmem:[#allocation2 + $0xf2] sm:$0xff]
        %v911 = vld [vmem:[#allocation2 + $0xfa] sm:$0xff]
        %v912 = vld [vmem:[#allocation2 + $0x10a] sm:$0xff]
        %v913 = vld [vmem:[#allocation2 + $0x112] sm:$0xff]
        %v914 = vld [vmem:[#allocation2 + $0x122] sm:$0xff]
        %v915 = vld [vmem:[#allocation2 + $0x12a] sm:$0xff]
        %v916 = vld [vmem:[#allocation2 + $0x13a] sm:$0xff]
        %v917 = vld [vmem:[#allocation2 + $0x142] sm:$0xff]
        %v918 = vld [vmem:[#allocation2 + $0x152] sm:$0xff]
        %v919 = vld [vmem:[#allocation2 + $0x15a] sm:$0xff]
        %v920 = vld [vmem:[#allocation2 + $0x16a] sm:$0xff]
        %v921 = vld [vmem:[#allocation2 + $0x172] sm:$0xff]
        %s922 = scalar_lea.vmem %s1, 32
        %v923 = vld [vmem:[%s922] sm:$0xff]
        %v924 = vld [vmem:[%s922 + $0x8] sm:$0xff]
        %v926 = vsel %vm372, %v890, 0
        %v929 = vsel %vm372, %v891, 0
        %v932 = vsel %vm372, %v892, 0
        %v935 = vsel %vm372, %v893, 0
        %v938 = vsel %vm372, %v894, 0
        %v941 = vsel %vm372, %v895, 0
        %v944 = vsel %vm372, %v896, 0
        %v947 = vsel %vm372, %v897, 0
        %v950 = vsel %vm372, %v898, 0
        %v953 = vsel %vm372, %v899, 0
        %v956 = vsel %vm372, %v900, 0
        %v959 = vsel %vm372, %v901, 0
        %v962 = vsel %vm372, %v902, 0
        %v965 = vsel %vm372, %v903, 0
        %v968 = vsel %vm372, %v904, 0
        %v971 = vsel %vm372, %v905, 0
        %v974 = vsel %vm372, %v906, 0
        %v977 = vsel %vm372, %v907, 0
        %v980 = vsel %vm372, %v908, 0
        %v983 = vsel %vm372, %v909, 0
        %v986 = vsel %vm372, %v910, 0
        %v989 = vsel %vm372, %v911, 0
        %v992 = vsel %vm372, %v912, 0
        %v995 = vsel %vm372, %v913, 0
        %v998 = vsel %vm372, %v914, 0
        %v1001 = vsel %vm372, %v915, 0
        %v1004 = vsel %vm372, %v916, 0
        %v1007 = vsel %vm372, %v917, 0
        %v1010 = vsel %vm372, %v918, 0
        %v1013 = vsel %vm372, %v919, 0
        %v1016 = vsel %vm372, %v920, 0
        %v1019 = vsel %vm372, %v921, 0
        %1021 = vmatpush.msra.mxu0 0.0
        %1022 = vmatpush.msra.mxu0 0.0
        %1023 = vmatpush.msra.mxu0 0.0
        %1024 = vmatpush.msra.mxu0 0.0
        %1025 = vmatpush.msra.mxu0 0.0
        %1026 = vmatpush.msra.mxu0 0.0
        %1027 = vmatpush.msra.mxu0 0.0
        %1028 = vmatpush.msra.mxu0 0.0
        %1029 = vmatpush.msra.mxu0 0.0
        %1030 = vmatpush.msra.mxu0 0.0
        %1031 = vmatpush.msra.mxu0 0.0
        %1032 = vmatpush.msra.mxu0 0.0
        %1033 = vmatpush.msra.mxu0 0.0
        %1034 = vmatpush.msra.mxu0 0.0
        %1035 = vmatpush.msra.mxu0 %v924
        %1036 = vmatpush.msra.mxu0 %v923
        %1037 = vmatmul.f32.gmra.mxu0 %v926
        %v1038 = vpop.f32.mrf.mxu0
        %v1039 = vadd.f32 0.0, %v1038
        %1040 = vmatmul.f32.gmra.mxu0 %v929
        %v1041 = vpop.f32.mrf.mxu0
        %v1042 = vadd.f32 0.0, %v1041
        %1043 = vmatmul.f32.gmra.mxu0 %v932
        %v1044 = vpop.f32.mrf.mxu0
        %v1045 = vadd.f32 0.0, %v1044
        %1046 = vmatmul.f32.gmra.mxu0 %v935
        %v1047 = vpop.f32.mrf.mxu0
        %v1048 = vadd.f32 0.0, %v1047
        %1049 = vmatmul.f32.gmra.mxu0 %v938
        %v1050 = vpop.f32.mrf.mxu0
        %v1051 = vadd.f32 0.0, %v1050
        %1052 = vmatmul.f32.gmra.mxu0 %v941
        %v1053 = vpop.f32.mrf.mxu0
        %v1054 = vadd.f32 0.0, %v1053
        %1055 = vmatmul.f32.gmra.mxu0 %v944
        %v1056 = vpop.f32.mrf.mxu0
        %v1057 = vadd.f32 0.0, %v1056
        %1058 = vmatmul.f32.gmra.mxu0 %v947
        %v1059 = vpop.f32.mrf.mxu0
        %v1060 = vadd.f32 0.0, %v1059
        %1061 = vmatmul.f32.gmra.mxu0 %v950
        %v1062 = vpop.f32.mrf.mxu0
        %v1063 = vadd.f32 0.0, %v1062
        %1064 = vmatmul.f32.gmra.mxu0 %v953
        %v1065 = vpop.f32.mrf.mxu0
        %v1066 = vadd.f32 0.0, %v1065
        %1067 = vmatmul.f32.gmra.mxu0 %v956
        %v1068 = vpop.f32.mrf.mxu0
        %v1069 = vadd.f32 0.0, %v1068
        %1070 = vmatmul.f32.gmra.mxu0 %v959
        %v1071 = vpop.f32.mrf.mxu0
        %v1072 = vadd.f32 0.0, %v1071
        %1073 = vmatmul.f32.gmra.mxu0 %v962
        %v1074 = vpop.f32.mrf.mxu0
        %v1075 = vadd.f32 0.0, %v1074
        %1076 = vmatmul.f32.gmra.mxu0 %v965
        %v1077 = vpop.f32.mrf.mxu0
        %v1078 = vadd.f32 0.0, %v1077
        %1079 = vmatmul.f32.gmra.mxu0 %v968
        %v1080 = vpop.f32.mrf.mxu0
        %v1081 = vadd.f32 0.0, %v1080
        %1082 = vmatmul.f32.gmra.mxu0 %v971
        %v1083 = vpop.f32.mrf.mxu0
        %v1084 = vadd.f32 0.0, %v1083
        %1085 = vmatmul.f32.gmra.mxu0 %v974
        %v1086 = vpop.f32.mrf.mxu0
        %v1087 = vadd.f32 0.0, %v1086
        %1088 = vmatmul.f32.gmra.mxu0 %v977
        %v1089 = vpop.f32.mrf.mxu0
        %v1090 = vadd.f32 0.0, %v1089
        %1091 = vmatmul.f32.gmra.mxu0 %v980
        %v1092 = vpop.f32.mrf.mxu0
        %v1093 = vadd.f32 0.0, %v1092
        %1094 = vmatmul.f32.gmra.mxu0 %v983
        %v1095 = vpop.f32.mrf.mxu0
        %v1096 = vadd.f32 0.0, %v1095
        %1097 = vmatmul.f32.gmra.mxu0 %v986
        %v1098 = vpop.f32.mrf.mxu0
        %v1099 = vadd.f32 0.0, %v1098
        %1100 = vmatmul.f32.gmra.mxu0 %v989
        %v1101 = vpop.f32.mrf.mxu0
        %v1102 = vadd.f32 0.0, %v1101
        %1103 = vmatmul.f32.gmra.mxu0 %v992
        %v1104 = vpop.f32.mrf.mxu0
        %v1105 = vadd.f32 0.0, %v1104
        %1106 = vmatmul.f32.gmra.mxu0 %v995
        %v1107 = vpop.f32.mrf.mxu0
        %v1108 = vadd.f32 0.0, %v1107
        %1109 = vmatmul.f32.gmra.mxu0 %v998
        %v1110 = vpop.f32.mrf.mxu0
        %v1111 = vadd.f32 0.0, %v1110
        %1112 = vmatmul.f32.gmra.mxu0 %v1001
        %v1113 = vpop.f32.mrf.mxu0
        %v1114 = vadd.f32 0.0, %v1113
        %1115 = vmatmul.f32.gmra.mxu0 %v1004
        %v1116 = vpop.f32.mrf.mxu0
        %v1117 = vadd.f32 0.0, %v1116
        %1118 = vmatmul.f32.gmra.mxu0 %v1007
        %v1119 = vpop.f32.mrf.mxu0
        %v1120 = vadd.f32 0.0, %v1119
        %1121 = vmatmul.f32.gmra.mxu0 %v1010
        %v1122 = vpop.f32.mrf.mxu0
        %v1123 = vadd.f32 0.0, %v1122
        %1124 = vmatmul.f32.gmra.mxu0 %v1013
        %v1125 = vpop.f32.mrf.mxu0
        %v1126 = vadd.f32 0.0, %v1125
        %1127 = vmatmul.f32.gmra.mxu0 %v1016
        %v1128 = vpop.f32.mrf.mxu0
        %v1129 = vadd.f32 0.0, %v1128
        %1130 = vmatmul.f32.gmra.mxu0 %v1019
        %v1131 = vpop.f32.mrf.mxu0
        %v1132 = vadd.f32 0.0, %v1131
        %1133 = vdwg.mxu0
        %v1134 = vadd.f32 %v858, %v1039
        %v1135 = vadd.f32 %v859, %v1042
        %v1136 = vadd.f32 %v860, %v1045
        %v1137 = vadd.f32 %v861, %v1048
        %v1138 = vadd.f32 %v862, %v1051
        %v1139 = vadd.f32 %v863, %v1054
        %v1140 = vadd.f32 %v864, %v1057
        %v1141 = vadd.f32 %v865, %v1060
        %v1142 = vadd.f32 %v866, %v1063
        %v1143 = vadd.f32 %v867, %v1066
        %v1144 = vadd.f32 %v868, %v1069
        %v1145 = vadd.f32 %v869, %v1072
        %v1146 = vadd.f32 %v870, %v1075
        %v1147 = vadd.f32 %v871, %v1078
        %v1148 = vadd.f32 %v872, %v1081
        %v1149 = vadd.f32 %v873, %v1084
        %v1150 = vadd.f32 %v874, %v1087
        %v1151 = vadd.f32 %v875, %v1090
        %v1152 = vadd.f32 %v876, %v1093
        %v1153 = vadd.f32 %v877, %v1096
        %v1154 = vadd.f32 %v878, %v1099
        %v1155 = vadd.f32 %v879, %v1102
        %v1156 = vadd.f32 %v880, %v1105
        %v1157 = vadd.f32 %v881, %v1108
        %v1158 = vadd.f32 %v882, %v1111
        %v1159 = vadd.f32 %v883, %v1114
        %v1160 = vadd.f32 %v884, %v1117
        %v1161 = vadd.f32 %v885, %v1120
        %v1162 = vadd.f32 %v886, %v1123
        %v1163 = vadd.f32 %v887, %v1126
        %v1164 = vadd.f32 %v888, %v1129
        %v1165 = vadd.f32 %v889, %v1132
        %s1166 = scalar_lea.vmem [#allocation2], 24
        %v1167 = vld [vmem:[%s1166] sm:$0xff]
        %v1168 = vld [vmem:[%s1166 + $0x8] sm:$0xff]
        %v1169 = vld [vmem:[%s1166 + $0x18] sm:$0xff]
        %v1170 = vld [vmem:[%s1166 + $0x20] sm:$0xff]
        %v1171 = vld [vmem:[%s1166 + $0x30] sm:$0xff]
        %v1172 = vld [vmem:[%s1166 + $0x38] sm:$0xff]
        %v1173 = vld [vmem:[%s1166 + $0x48] sm:$0xff]
        %v1174 = vld [vmem:[%s1166 + $0x50] sm:$0xff]
        %v1175 = vld [vmem:[%s1166 + $0x60] sm:$0xff]
        %v1176 = vld [vmem:[%s1166 + $0x68] sm:$0xff]
        %v1177 = vld [vmem:[%s1166 + $0x78] sm:$0xff]
        %v1178 = vld [vmem:[%s1166 + $0x80] sm:$0xff]
        %v1179 = vld [vmem:[%s1166 + $0x90] sm:$0xff]
        %v1180 = vld [vmem:[%s1166 + $0x98] sm:$0xff]
        %v1181 = vld [vmem:[%s1166 + $0xa8] sm:$0xff]
        %v1182 = vld [vmem:[%s1166 + $0xb0] sm:$0xff]
        %v1183 = vld [vmem:[%s1166 + $0xc0] sm:$0xff]
        %v1184 = vld [vmem:[%s1166 + $0xc8] sm:$0xff]
        %v1185 = vld [vmem:[%s1166 + $0xd8] sm:$0xff]
        %v1186 = vld [vmem:[%s1166 + $0xe0] sm:$0xff]
        %v1187 = vld [vmem:[%s1166 + $0xf0] sm:$0xff]
        %v1188 = vld [vmem:[%s1166 + $0xf8] sm:$0xff]
        %v1189 = vld [vmem:[%s1166 + $0x108] sm:$0xff]
        %v1190 = vld [vmem:[%s1166 + $0x110] sm:$0xff]
        %v1191 = vld [vmem:[%s1166 + $0x120] sm:$0xff]
        %v1192 = vld [vmem:[%s1166 + $0x128] sm:$0xff]
        %v1193 = vld [vmem:[%s1166 + $0x138] sm:$0xff]
        %v1194 = vld [vmem:[%s1166 + $0x140] sm:$0xff]
        %v1195 = vld [vmem:[%s1166 + $0x150] sm:$0xff]
        %v1196 = vld [vmem:[%s1166 + $0x158] sm:$0xff]
        %v1197 = vld [vmem:[%s1166 + $0x168] sm:$0xff]
        %v1198 = vld [vmem:[%s1166 + $0x170] sm:$0xff]
        %s1199 = scalar_lea.vmem %s1, 48
        %v1200 = vld [vmem:[%s1199] sm:$0xff]
        %v1201 = vld [vmem:[%s1199 + $0x8] sm:$0xff]
        %v1203 = vsel %vm372, %v1167, 0
        %v1206 = vsel %vm372, %v1168, 0
        %v1209 = vsel %vm372, %v1169, 0
        %v1212 = vsel %vm372, %v1170, 0
        %v1215 = vsel %vm372, %v1171, 0
        %v1218 = vsel %vm372, %v1172, 0
        %v1221 = vsel %vm372, %v1173, 0
        %v1224 = vsel %vm372, %v1174, 0
        %v1227 = vsel %vm372, %v1175, 0
        %v1230 = vsel %vm372, %v1176, 0
        %v1233 = vsel %vm372, %v1177, 0
        %v1236 = vsel %vm372, %v1178, 0
        %v1239 = vsel %vm372, %v1179, 0
        %v1242 = vsel %vm372, %v1180, 0
        %v1245 = vsel %vm372, %v1181, 0
        %v1248 = vsel %vm372, %v1182, 0
        %v1251 = vsel %vm372, %v1183, 0
        %v1254 = vsel %vm372, %v1184, 0
        %v1257 = vsel %vm372, %v1185, 0
        %v1260 = vsel %vm372, %v1186, 0
        %v1263 = vsel %vm372, %v1187, 0
        %v1266 = vsel %vm372, %v1188, 0
        %v1269 = vsel %vm372, %v1189, 0
        %v1272 = vsel %vm372, %v1190, 0
        %v1275 = vsel %vm372, %v1191, 0
        %v1278 = vsel %vm372, %v1192, 0
        %v1281 = vsel %vm372, %v1193, 0
        %v1284 = vsel %vm372, %v1194, 0
        %v1287 = vsel %vm372, %v1195, 0
        %v1290 = vsel %vm372, %v1196, 0
        %v1293 = vsel %vm372, %v1197, 0
        %v1296 = vsel %vm372, %v1198, 0
        %1298 = vmatpush.msra.mxu0 0.0
        %1299 = vmatpush.msra.mxu0 0.0
        %1300 = vmatpush.msra.mxu0 0.0
        %1301 = vmatpush.msra.mxu0 0.0
        %1302 = vmatpush.msra.mxu0 0.0
        %1303 = vmatpush.msra.mxu0 0.0
        %1304 = vmatpush.msra.mxu0 0.0
        %1305 = vmatpush.msra.mxu0 0.0
        %1306 = vmatpush.msra.mxu0 0.0
        %1307 = vmatpush.msra.mxu0 0.0
        %1308 = vmatpush.msra.mxu0 0.0
        %1309 = vmatpush.msra.mxu0 0.0
        %1310 = vmatpush.msra.mxu0 0.0
        %1311 = vmatpush.msra.mxu0 0.0
        %1312 = vmatpush.msra.mxu0 %v1201
        %1313 = vmatpush.msra.mxu0 %v1200
        %1314 = vmatmul.f32.gmra.mxu0 %v1203
        %v1315 = vpop.f32.mrf.mxu0
        %v1316 = vadd.f32 0.0, %v1315
        %1317 = vmatmul.f32.gmra.mxu0 %v1206
        %v1318 = vpop.f32.mrf.mxu0
        %v1319 = vadd.f32 0.0, %v1318
        %1320 = vmatmul.f32.gmra.mxu0 %v1209
        %v1321 = vpop.f32.mrf.mxu0
        %v1322 = vadd.f32 0.0, %v1321
        %1323 = vmatmul.f32.gmra.mxu0 %v1212
        %v1324 = vpop.f32.mrf.mxu0
        %v1325 = vadd.f32 0.0, %v1324
        %1326 = vmatmul.f32.gmra.mxu0 %v1215
        %v1327 = vpop.f32.mrf.mxu0
        %v1328 = vadd.f32 0.0, %v1327
        %1329 = vmatmul.f32.gmra.mxu0 %v1218
        %v1330 = vpop.f32.mrf.mxu0
        %v1331 = vadd.f32 0.0, %v1330
        %1332 = vmatmul.f32.gmra.mxu0 %v1221
        %v1333 = vpop.f32.mrf.mxu0
        %v1334 = vadd.f32 0.0, %v1333
        %1335 = vmatmul.f32.gmra.mxu0 %v1224
        %v1336 = vpop.f32.mrf.mxu0
        %v1337 = vadd.f32 0.0, %v1336
        %1338 = vmatmul.f32.gmra.mxu0 %v1227
        %v1339 = vpop.f32.mrf.mxu0
        %v1340 = vadd.f32 0.0, %v1339
        %1341 = vmatmul.f32.gmra.mxu0 %v1230
        %v1342 = vpop.f32.mrf.mxu0
        %v1343 = vadd.f32 0.0, %v1342
        %1344 = vmatmul.f32.gmra.mxu0 %v1233
        %v1345 = vpop.f32.mrf.mxu0
        %v1346 = vadd.f32 0.0, %v1345
        %1347 = vmatmul.f32.gmra.mxu0 %v1236
        %v1348 = vpop.f32.mrf.mxu0
        %v1349 = vadd.f32 0.0, %v1348
        %1350 = vmatmul.f32.gmra.mxu0 %v1239
        %v1351 = vpop.f32.mrf.mxu0
        %v1352 = vadd.f32 0.0, %v1351
        %1353 = vmatmul.f32.gmra.mxu0 %v1242
        %v1354 = vpop.f32.mrf.mxu0
        %v1355 = vadd.f32 0.0, %v1354
        %1356 = vmatmul.f32.gmra.mxu0 %v1245
        %v1357 = vpop.f32.mrf.mxu0
        %v1358 = vadd.f32 0.0, %v1357
        %1359 = vmatmul.f32.gmra.mxu0 %v1248
        %v1360 = vpop.f32.mrf.mxu0
        %v1361 = vadd.f32 0.0, %v1360
        %1362 = vmatmul.f32.gmra.mxu0 %v1251
        %v1363 = vpop.f32.mrf.mxu0
        %v1364 = vadd.f32 0.0, %v1363
        %1365 = vmatmul.f32.gmra.mxu0 %v1254
        %v1366 = vpop.f32.mrf.mxu0
        %v1367 = vadd.f32 0.0, %v1366
        %1368 = vmatmul.f32.gmra.mxu0 %v1257
        %v1369 = vpop.f32.mrf.mxu0
        %v1370 = vadd.f32 0.0, %v1369
        %1371 = vmatmul.f32.gmra.mxu0 %v1260
        %v1372 = vpop.f32.mrf.mxu0
        %v1373 = vadd.f32 0.0, %v1372
        %1374 = vmatmul.f32.gmra.mxu0 %v1263
        %v1375 = vpop.f32.mrf.mxu0
        %v1376 = vadd.f32 0.0, %v1375
        %1377 = vmatmul.f32.gmra.mxu0 %v1266
        %v1378 = vpop.f32.mrf.mxu0
        %v1379 = vadd.f32 0.0, %v1378
        %1380 = vmatmul.f32.gmra.mxu0 %v1269
        %v1381 = vpop.f32.mrf.mxu0
        %v1382 = vadd.f32 0.0, %v1381
        %1383 = vmatmul.f32.gmra.mxu0 %v1272
        %v1384 = vpop.f32.mrf.mxu0
        %v1385 = vadd.f32 0.0, %v1384
        %1386 = vmatmul.f32.gmra.mxu0 %v1275
        %v1387 = vpop.f32.mrf.mxu0
        %v1388 = vadd.f32 0.0, %v1387
        %1389 = vmatmul.f32.gmra.mxu0 %v1278
        %v1390 = vpop.f32.mrf.mxu0
        %v1391 = vadd.f32 0.0, %v1390
        %1392 = vmatmul.f32.gmra.mxu0 %v1281
        %v1393 = vpop.f32.mrf.mxu0
        %v1394 = vadd.f32 0.0, %v1393
        %1395 = vmatmul.f32.gmra.mxu0 %v1284
        %v1396 = vpop.f32.mrf.mxu0
        %v1397 = vadd.f32 0.0, %v1396
        %1398 = vmatmul.f32.gmra.mxu0 %v1287
        %v1399 = vpop.f32.mrf.mxu0
        %v1400 = vadd.f32 0.0, %v1399
        %1401 = vmatmul.f32.gmra.mxu0 %v1290
        %v1402 = vpop.f32.mrf.mxu0
        %v1403 = vadd.f32 0.0, %v1402
        %1404 = vmatmul.f32.gmra.mxu0 %v1293
        %v1405 = vpop.f32.mrf.mxu0
        %v1406 = vadd.f32 0.0, %v1405
        %1407 = vmatmul.f32.gmra.mxu0 %v1296
        %v1408 = vpop.f32.mrf.mxu0
        %v1409 = vadd.f32 0.0, %v1408
        %1410 = vdwg.mxu0
        %v1411 = vadd.f32 %v1134, %v1316
        %v1412 = vadd.f32 %v1135, %v1319
        %v1413 = vadd.f32 %v1136, %v1322
        %v1414 = vadd.f32 %v1137, %v1325
        %v1415 = vadd.f32 %v1138, %v1328
        %v1416 = vadd.f32 %v1139, %v1331
        %v1417 = vadd.f32 %v1140, %v1334
        %v1418 = vadd.f32 %v1141, %v1337
        %v1419 = vadd.f32 %v1142, %v1340
        %v1420 = vadd.f32 %v1143, %v1343
        %v1421 = vadd.f32 %v1144, %v1346
        %v1422 = vadd.f32 %v1145, %v1349
        %v1423 = vadd.f32 %v1146, %v1352
        %v1424 = vadd.f32 %v1147, %v1355
        %v1425 = vadd.f32 %v1148, %v1358
        %v1426 = vadd.f32 %v1149, %v1361
        %v1427 = vadd.f32 %v1150, %v1364
        %v1428 = vadd.f32 %v1151, %v1367
        %v1429 = vadd.f32 %v1152, %v1370
        %v1430 = vadd.f32 %v1153, %v1373
        %v1431 = vadd.f32 %v1154, %v1376
        %v1432 = vadd.f32 %v1155, %v1379
        %v1433 = vadd.f32 %v1156, %v1382
        %v1434 = vadd.f32 %v1157, %v1385
        %v1435 = vadd.f32 %v1158, %v1388
        %v1436 = vadd.f32 %v1159, %v1391
        %v1437 = vadd.f32 %v1160, %v1394
        %v1438 = vadd.f32 %v1161, %v1397
        %v1439 = vadd.f32 %v1162, %v1400
        %v1440 = vadd.f32 %v1163, %v1403
        %v1441 = vadd.f32 %v1164, %v1406
        %v1442 = vadd.f32 %v1165, %v1409
        %v1443 = vld [vmem:[%s1166 + $0x1] sm:$0xff]
        %v1444 = vld [vmem:[%s1166 + $0x9] sm:$0xff]
        %v1445 = vld [vmem:[%s1166 + $0x19] sm:$0xff]
        %v1446 = vld [vmem:[%s1166 + $0x21] sm:$0xff]
        %v1447 = vld [vmem:[%s1166 + $0x31] sm:$0xff]
        %v1448 = vld [vmem:[%s1166 + $0x39] sm:$0xff]
        %v1449 = vld [vmem:[%s1166 + $0x49] sm:$0xff]
        %v1450 = vld [vmem:[%s1166 + $0x51] sm:$0xff]
        %v1451 = vld [vmem:[%s1166 + $0x61] sm:$0xff]
        %v1452 = vld [vmem:[%s1166 + $0x69] sm:$0xff]
        %v1453 = vld [vmem:[%s1166 + $0x79] sm:$0xff]
        %v1454 = vld [vmem:[%s1166 + $0x81] sm:$0xff]
        %v1455 = vld [vmem:[%s1166 + $0x91] sm:$0xff]
        %v1456 = vld [vmem:[%s1166 + $0x99] sm:$0xff]
        %v1457 = vld [vmem:[%s1166 + $0xa9] sm:$0xff]
        %v1458 = vld [vmem:[%s1166 + $0xb1] sm:$0xff]
        %v1459 = vld [vmem:[%s1166 + $0xc1] sm:$0xff]
        %v1460 = vld [vmem:[%s1166 + $0xc9] sm:$0xff]
        %v1461 = vld [vmem:[%s1166 + $0xd9] sm:$0xff]
        %v1462 = vld [vmem:[%s1166 + $0xe1] sm:$0xff]
        %v1463 = vld [vmem:[%s1166 + $0xf1] sm:$0xff]
        %v1464 = vld [vmem:[%s1166 + $0xf9] sm:$0xff]
        %v1465 = vld [vmem:[%s1166 + $0x109] sm:$0xff]
        %v1466 = vld [vmem:[%s1166 + $0x111] sm:$0xff]
        %v1467 = vld [vmem:[%s1166 + $0x121] sm:$0xff]
        %v1468 = vld [vmem:[%s1166 + $0x129] sm:$0xff]
        %v1469 = vld [vmem:[%s1166 + $0x139] sm:$0xff]
        %v1470 = vld [vmem:[%s1166 + $0x141] sm:$0xff]
        %v1471 = vld [vmem:[%s1166 + $0x151] sm:$0xff]
        %v1472 = vld [vmem:[%s1166 + $0x159] sm:$0xff]
        %v1473 = vld [vmem:[%s1166 + $0x169] sm:$0xff]
        %v1474 = vld [vmem:[%s1166 + $0x171] sm:$0xff]
        %s1475 = scalar_lea.vmem %s1, 64
        %v1476 = vld [vmem:[%s1475] sm:$0xff]
        %v1477 = vld [vmem:[%s1475 + $0x8] sm:$0xff]
        %v1479 = vsel %vm372, %v1443, 0
        %v1482 = vsel %vm372, %v1444, 0
        %v1485 = vsel %vm372, %v1445, 0
        %v1488 = vsel %vm372, %v1446, 0
        %v1491 = vsel %vm372, %v1447, 0
        %v1494 = vsel %vm372, %v1448, 0
        %v1497 = vsel %vm372, %v1449, 0
        %v1500 = vsel %vm372, %v1450, 0
        %v1503 = vsel %vm372, %v1451, 0
        %v1506 = vsel %vm372, %v1452, 0
        %v1509 = vsel %vm372, %v1453, 0
        %v1512 = vsel %vm372, %v1454, 0
        %v1515 = vsel %vm372, %v1455, 0
        %v1518 = vsel %vm372, %v1456, 0
        %v1521 = vsel %vm372, %v1457, 0
        %v1524 = vsel %vm372, %v1458, 0
        %v1527 = vsel %vm372, %v1459, 0
        %v1530 = vsel %vm372, %v1460, 0
        %v1533 = vsel %vm372, %v1461, 0
        %v1536 = vsel %vm372, %v1462, 0
        %v1539 = vsel %vm372, %v1463, 0
        %v1542 = vsel %vm372, %v1464, 0
        %v1545 = vsel %vm372, %v1465, 0
        %v1548 = vsel %vm372, %v1466, 0
        %v1551 = vsel %vm372, %v1467, 0
        %v1554 = vsel %vm372, %v1468, 0
        %v1557 = vsel %vm372, %v1469, 0
        %v1560 = vsel %vm372, %v1470, 0
        %v1563 = vsel %vm372, %v1471, 0
        %v1566 = vsel %vm372, %v1472, 0
        %v1569 = vsel %vm372, %v1473, 0
        %v1572 = vsel %vm372, %v1474, 0
        %1574 = vmatpush.msra.mxu0 0.0
        %1575 = vmatpush.msra.mxu0 0.0
        %1576 = vmatpush.msra.mxu0 0.0
        %1577 = vmatpush.msra.mxu0 0.0
        %1578 = vmatpush.msra.mxu0 0.0
        %1579 = vmatpush.msra.mxu0 0.0
        %1580 = vmatpush.msra.mxu0 0.0
        %1581 = vmatpush.msra.mxu0 0.0
        %1582 = vmatpush.msra.mxu0 0.0
        %1583 = vmatpush.msra.mxu0 0.0
        %1584 = vmatpush.msra.mxu0 0.0
        %1585 = vmatpush.msra.mxu0 0.0
        %1586 = vmatpush.msra.mxu0 0.0
        %1587 = vmatpush.msra.mxu0 0.0
        %1588 = vmatpush.msra.mxu0 %v1477
        %1589 = vmatpush.msra.mxu0 %v1476
        %1590 = vmatmul.f32.gmra.mxu0 %v1479
        %v1591 = vpop.f32.mrf.mxu0
        %v1592 = vadd.f32 0.0, %v1591
        %1593 = vmatmul.f32.gmra.mxu0 %v1482
        %v1594 = vpop.f32.mrf.mxu0
        %v1595 = vadd.f32 0.0, %v1594
        %1596 = vmatmul.f32.gmra.mxu0 %v1485
        %v1597 = vpop.f32.mrf.mxu0
        %v1598 = vadd.f32 0.0, %v1597
        %1599 = vmatmul.f32.gmra.mxu0 %v1488
        %v1600 = vpop.f32.mrf.mxu0
        %v1601 = vadd.f32 0.0, %v1600
        %1602 = vmatmul.f32.gmra.mxu0 %v1491
        %v1603 = vpop.f32.mrf.mxu0
        %v1604 = vadd.f32 0.0, %v1603
        %1605 = vmatmul.f32.gmra.mxu0 %v1494
        %v1606 = vpop.f32.mrf.mxu0
        %v1607 = vadd.f32 0.0, %v1606
        %1608 = vmatmul.f32.gmra.mxu0 %v1497
        %v1609 = vpop.f32.mrf.mxu0
        %v1610 = vadd.f32 0.0, %v1609
        %1611 = vmatmul.f32.gmra.mxu0 %v1500
        %v1612 = vpop.f32.mrf.mxu0
        %v1613 = vadd.f32 0.0, %v1612
        %1614 = vmatmul.f32.gmra.mxu0 %v1503
        %v1615 = vpop.f32.mrf.mxu0
        %v1616 = vadd.f32 0.0, %v1615
        %1617 = vmatmul.f32.gmra.mxu0 %v1506
        %v1618 = vpop.f32.mrf.mxu0
        %v1619 = vadd.f32 0.0, %v1618
        %1620 = vmatmul.f32.gmra.mxu0 %v1509
        %v1621 = vpop.f32.mrf.mxu0
        %v1622 = vadd.f32 0.0, %v1621
        %1623 = vmatmul.f32.gmra.mxu0 %v1512
        %v1624 = vpop.f32.mrf.mxu0
        %v1625 = vadd.f32 0.0, %v1624
        %1626 = vmatmul.f32.gmra.mxu0 %v1515
        %v1627 = vpop.f32.mrf.mxu0
        %v1628 = vadd.f32 0.0, %v1627
        %1629 = vmatmul.f32.gmra.mxu0 %v1518
        %v1630 = vpop.f32.mrf.mxu0
        %v1631 = vadd.f32 0.0, %v1630
        %1632 = vmatmul.f32.gmra.mxu0 %v1521
        %v1633 = vpop.f32.mrf.mxu0
        %v1634 = vadd.f32 0.0, %v1633
        %1635 = vmatmul.f32.gmra.mxu0 %v1524
        %v1636 = vpop.f32.mrf.mxu0
        %v1637 = vadd.f32 0.0, %v1636
        %1638 = vmatmul.f32.gmra.mxu0 %v1527
        %v1639 = vpop.f32.mrf.mxu0
        %v1640 = vadd.f32 0.0, %v1639
        %1641 = vmatmul.f32.gmra.mxu0 %v1530
        %v1642 = vpop.f32.mrf.mxu0
        %v1643 = vadd.f32 0.0, %v1642
        %1644 = vmatmul.f32.gmra.mxu0 %v1533
        %v1645 = vpop.f32.mrf.mxu0
        %v1646 = vadd.f32 0.0, %v1645
        %1647 = vmatmul.f32.gmra.mxu0 %v1536
        %v1648 = vpop.f32.mrf.mxu0
        %v1649 = vadd.f32 0.0, %v1648
        %1650 = vmatmul.f32.gmra.mxu0 %v1539
        %v1651 = vpop.f32.mrf.mxu0
        %v1652 = vadd.f32 0.0, %v1651
        %1653 = vmatmul.f32.gmra.mxu0 %v1542
        %v1654 = vpop.f32.mrf.mxu0
        %v1655 = vadd.f32 0.0, %v1654
        %1656 = vmatmul.f32.gmra.mxu0 %v1545
        %v1657 = vpop.f32.mrf.mxu0
        %v1658 = vadd.f32 0.0, %v1657
        %1659 = vmatmul.f32.gmra.mxu0 %v1548
        %v1660 = vpop.f32.mrf.mxu0
        %v1661 = vadd.f32 0.0, %v1660
        %1662 = vmatmul.f32.gmra.mxu0 %v1551
        %v1663 = vpop.f32.mrf.mxu0
        %v1664 = vadd.f32 0.0, %v1663
        %1665 = vmatmul.f32.gmra.mxu0 %v1554
        %v1666 = vpop.f32.mrf.mxu0
        %v1667 = vadd.f32 0.0, %v1666
        %1668 = vmatmul.f32.gmra.mxu0 %v1557
        %v1669 = vpop.f32.mrf.mxu0
        %v1670 = vadd.f32 0.0, %v1669
        %1671 = vmatmul.f32.gmra.mxu0 %v1560
        %v1672 = vpop.f32.mrf.mxu0
        %v1673 = vadd.f32 0.0, %v1672
        %1674 = vmatmul.f32.gmra.mxu0 %v1563
        %v1675 = vpop.f32.mrf.mxu0
        %v1676 = vadd.f32 0.0, %v1675
        %1677 = vmatmul.f32.gmra.mxu0 %v1566
        %v1678 = vpop.f32.mrf.mxu0
        %v1679 = vadd.f32 0.0, %v1678
        %1680 = vmatmul.f32.gmra.mxu0 %v1569
        %v1681 = vpop.f32.mrf.mxu0
        %v1682 = vadd.f32 0.0, %v1681
        %1683 = vmatmul.f32.gmra.mxu0 %v1572
        %v1684 = vpop.f32.mrf.mxu0
        %v1685 = vadd.f32 0.0, %v1684
        %1686 = vdwg.mxu0
        %v1687 = vadd.f32 %v1411, %v1592
        %v1688 = vadd.f32 %v1412, %v1595
        %v1689 = vadd.f32 %v1413, %v1598
        %v1690 = vadd.f32 %v1414, %v1601
        %v1691 = vadd.f32 %v1415, %v1604
        %v1692 = vadd.f32 %v1416, %v1607
        %v1693 = vadd.f32 %v1417, %v1610
        %v1694 = vadd.f32 %v1418, %v1613
        %v1695 = vadd.f32 %v1419, %v1616
        %v1696 = vadd.f32 %v1420, %v1619
        %v1697 = vadd.f32 %v1421, %v1622
        %v1698 = vadd.f32 %v1422, %v1625
        %v1699 = vadd.f32 %v1423, %v1628
        %v1700 = vadd.f32 %v1424, %v1631
        %v1701 = vadd.f32 %v1425, %v1634
        %v1702 = vadd.f32 %v1426, %v1637
        %v1703 = vadd.f32 %v1427, %v1640
        %v1704 = vadd.f32 %v1428, %v1643
        %v1705 = vadd.f32 %v1429, %v1646
        %v1706 = vadd.f32 %v1430, %v1649
        %v1707 = vadd.f32 %v1431, %v1652
        %v1708 = vadd.f32 %v1432, %v1655
        %v1709 = vadd.f32 %v1433, %v1658
        %v1710 = vadd.f32 %v1434, %v1661
        %v1711 = vadd.f32 %v1435, %v1664
        %v1712 = vadd.f32 %v1436, %v1667
        %v1713 = vadd.f32 %v1437, %v1670
        %v1714 = vadd.f32 %v1438, %v1673
        %v1715 = vadd.f32 %v1439, %v1676
        %v1716 = vadd.f32 %v1440, %v1679
        %v1717 = vadd.f32 %v1441, %v1682
        %v1718 = vadd.f32 %v1442, %v1685
        %v1719 = vld [vmem:[%s1166 + $0x2] sm:$0xff]
        %v1720 = vld [vmem:[%s1166 + $0xa] sm:$0xff]
        %v1721 = vld [vmem:[%s1166 + $0x1a] sm:$0xff]
        %v1722 = vld [vmem:[%s1166 + $0x22] sm:$0xff]
        %v1723 = vld [vmem:[%s1166 + $0x32] sm:$0xff]
        %v1724 = vld [vmem:[%s1166 + $0x3a] sm:$0xff]
        %v1725 = vld [vmem:[%s1166 + $0x4a] sm:$0xff]
        %v1726 = vld [vmem:[%s1166 + $0x52] sm:$0xff]
        %v1727 = vld [vmem:[%s1166 + $0x62] sm:$0xff]
        %v1728 = vld [vmem:[%s1166 + $0x6a] sm:$0xff]
        %v1729 = vld [vmem:[%s1166 + $0x7a] sm:$0xff]
        %v1730 = vld [vmem:[%s1166 + $0x82] sm:$0xff]
        %v1731 = vld [vmem:[%s1166 + $0x92] sm:$0xff]
        %v1732 = vld [vmem:[%s1166 + $0x9a] sm:$0xff]
        %v1733 = vld [vmem:[%s1166 + $0xaa] sm:$0xff]
        %v1734 = vld [vmem:[%s1166 + $0xb2] sm:$0xff]
        %v1735 = vld [vmem:[%s1166 + $0xc2] sm:$0xff]
        %v1736 = vld [vmem:[%s1166 + $0xca] sm:$0xff]
        %v1737 = vld [vmem:[%s1166 + $0xda] sm:$0xff]
        %v1738 = vld [vmem:[%s1166 + $0xe2] sm:$0xff]
        %v1739 = vld [vmem:[%s1166 + $0xf2] sm:$0xff]
        %v1740 = vld [vmem:[%s1166 + $0xfa] sm:$0xff]
        %v1741 = vld [vmem:[%s1166 + $0x10a] sm:$0xff]
        %v1742 = vld [vmem:[%s1166 + $0x112] sm:$0xff]
        %v1743 = vld [vmem:[%s1166 + $0x122] sm:$0xff]
        %v1744 = vld [vmem:[%s1166 + $0x12a] sm:$0xff]
        %v1745 = vld [vmem:[%s1166 + $0x13a] sm:$0xff]
        %v1746 = vld [vmem:[%s1166 + $0x142] sm:$0xff]
        %v1747 = vld [vmem:[%s1166 + $0x152] sm:$0xff]
        %v1748 = vld [vmem:[%s1166 + $0x15a] sm:$0xff]
        %v1749 = vld [vmem:[%s1166 + $0x16a] sm:$0xff]
        %v1750 = vld [vmem:[%s1166 + $0x172] sm:$0xff]
        %s1751 = scalar_lea.vmem %s1, 80
        %v1752 = vld [vmem:[%s1751] sm:$0xff]
        %v1753 = vld [vmem:[%s1751 + $0x8] sm:$0xff]
        %v1755 = vsel %vm372, %v1719, 0
        %v1758 = vsel %vm372, %v1720, 0
        %v1761 = vsel %vm372, %v1721, 0
        %v1764 = vsel %vm372, %v1722, 0
        %v1767 = vsel %vm372, %v1723, 0
        %v1770 = vsel %vm372, %v1724, 0
        %v1773 = vsel %vm372, %v1725, 0
        %v1776 = vsel %vm372, %v1726, 0
        %v1779 = vsel %vm372, %v1727, 0
        %v1782 = vsel %vm372, %v1728, 0
        %v1785 = vsel %vm372, %v1729, 0
        %v1788 = vsel %vm372, %v1730, 0
        %v1791 = vsel %vm372, %v1731, 0
        %v1794 = vsel %vm372, %v1732, 0
        %v1797 = vsel %vm372, %v1733, 0
        %v1800 = vsel %vm372, %v1734, 0
        %v1803 = vsel %vm372, %v1735, 0
        %v1806 = vsel %vm372, %v1736, 0
        %v1809 = vsel %vm372, %v1737, 0
        %v1812 = vsel %vm372, %v1738, 0
        %v1815 = vsel %vm372, %v1739, 0
        %v1818 = vsel %vm372, %v1740, 0
        %v1821 = vsel %vm372, %v1741, 0
        %v1824 = vsel %vm372, %v1742, 0
        %v1827 = vsel %vm372, %v1743, 0
        %v1830 = vsel %vm372, %v1744, 0
        %v1833 = vsel %vm372, %v1745, 0
        %v1836 = vsel %vm372, %v1746, 0
        %v1839 = vsel %vm372, %v1747, 0
        %v1842 = vsel %vm372, %v1748, 0
        %v1845 = vsel %vm372, %v1749, 0
        %v1848 = vsel %vm372, %v1750, 0
        %1850 = vmatpush.msra.mxu0 0.0
        %1851 = vmatpush.msra.mxu0 0.0
        %1852 = vmatpush.msra.mxu0 0.0
        %1853 = vmatpush.msra.mxu0 0.0
        %1854 = vmatpush.msra.mxu0 0.0
        %1855 = vmatpush.msra.mxu0 0.0
        %1856 = vmatpush.msra.mxu0 0.0
        %1857 = vmatpush.msra.mxu0 0.0
        %1858 = vmatpush.msra.mxu0 0.0
        %1859 = vmatpush.msra.mxu0 0.0
        %1860 = vmatpush.msra.mxu0 0.0
        %1861 = vmatpush.msra.mxu0 0.0
        %1862 = vmatpush.msra.mxu0 0.0
        %1863 = vmatpush.msra.mxu0 0.0
        %1864 = vmatpush.msra.mxu0 %v1753
        %1865 = vmatpush.msra.mxu0 %v1752
        %1866 = vmatmul.f32.gmra.mxu0 %v1755
        %v1867 = vpop.f32.mrf.mxu0
        %v1868 = vadd.f32 0.0, %v1867
        %1869 = vmatmul.f32.gmra.mxu0 %v1758
        %v1870 = vpop.f32.mrf.mxu0
        %v1871 = vadd.f32 0.0, %v1870
        %1872 = vmatmul.f32.gmra.mxu0 %v1761
        %v1873 = vpop.f32.mrf.mxu0
        %v1874 = vadd.f32 0.0, %v1873
        %1875 = vmatmul.f32.gmra.mxu0 %v1764
        %v1876 = vpop.f32.mrf.mxu0
        %v1877 = vadd.f32 0.0, %v1876
        %1878 = vmatmul.f32.gmra.mxu0 %v1767
        %v1879 = vpop.f32.mrf.mxu0
        %v1880 = vadd.f32 0.0, %v1879
        %1881 = vmatmul.f32.gmra.mxu0 %v1770
        %v1882 = vpop.f32.mrf.mxu0
        %v1883 = vadd.f32 0.0, %v1882
        %1884 = vmatmul.f32.gmra.mxu0 %v1773
        %v1885 = vpop.f32.mrf.mxu0
        %v1886 = vadd.f32 0.0, %v1885
        %1887 = vmatmul.f32.gmra.mxu0 %v1776
        %v1888 = vpop.f32.mrf.mxu0
        %v1889 = vadd.f32 0.0, %v1888
        %1890 = vmatmul.f32.gmra.mxu0 %v1779
        %v1891 = vpop.f32.mrf.mxu0
        %v1892 = vadd.f32 0.0, %v1891
        %1893 = vmatmul.f32.gmra.mxu0 %v1782
        %v1894 = vpop.f32.mrf.mxu0
        %v1895 = vadd.f32 0.0, %v1894
        %1896 = vmatmul.f32.gmra.mxu0 %v1785
        %v1897 = vpop.f32.mrf.mxu0
        %v1898 = vadd.f32 0.0, %v1897
        %1899 = vmatmul.f32.gmra.mxu0 %v1788
        %v1900 = vpop.f32.mrf.mxu0
        %v1901 = vadd.f32 0.0, %v1900
        %1902 = vmatmul.f32.gmra.mxu0 %v1791
        %v1903 = vpop.f32.mrf.mxu0
        %v1904 = vadd.f32 0.0, %v1903
        %1905 = vmatmul.f32.gmra.mxu0 %v1794
        %v1906 = vpop.f32.mrf.mxu0
        %v1907 = vadd.f32 0.0, %v1906
        %1908 = vmatmul.f32.gmra.mxu0 %v1797
        %v1909 = vpop.f32.mrf.mxu0
        %v1910 = vadd.f32 0.0, %v1909
        %1911 = vmatmul.f32.gmra.mxu0 %v1800
        %v1912 = vpop.f32.mrf.mxu0
        %v1913 = vadd.f32 0.0, %v1912
        %1914 = vmatmul.f32.gmra.mxu0 %v1803
        %v1915 = vpop.f32.mrf.mxu0
        %v1916 = vadd.f32 0.0, %v1915
        %1917 = vmatmul.f32.gmra.mxu0 %v1806
        %v1918 = vpop.f32.mrf.mxu0
        %v1919 = vadd.f32 0.0, %v1918
        %1920 = vmatmul.f32.gmra.mxu0 %v1809
        %v1921 = vpop.f32.mrf.mxu0
        %v1922 = vadd.f32 0.0, %v1921
        %1923 = vmatmul.f32.gmra.mxu0 %v1812
        %v1924 = vpop.f32.mrf.mxu0
        %v1925 = vadd.f32 0.0, %v1924
        %1926 = vmatmul.f32.gmra.mxu0 %v1815
        %v1927 = vpop.f32.mrf.mxu0
        %v1928 = vadd.f32 0.0, %v1927
        %1929 = vmatmul.f32.gmra.mxu0 %v1818
        %v1930 = vpop.f32.mrf.mxu0
        %v1931 = vadd.f32 0.0, %v1930
        %1932 = vmatmul.f32.gmra.mxu0 %v1821
        %v1933 = vpop.f32.mrf.mxu0
        %v1934 = vadd.f32 0.0, %v1933
        %1935 = vmatmul.f32.gmra.mxu0 %v1824
        %v1936 = vpop.f32.mrf.mxu0
        %v1937 = vadd.f32 0.0, %v1936
        %1938 = vmatmul.f32.gmra.mxu0 %v1827
        %v1939 = vpop.f32.mrf.mxu0
        %v1940 = vadd.f32 0.0, %v1939
        %1941 = vmatmul.f32.gmra.mxu0 %v1830
        %v1942 = vpop.f32.mrf.mxu0
        %v1943 = vadd.f32 0.0, %v1942
        %1944 = vmatmul.f32.gmra.mxu0 %v1833
        %v1945 = vpop.f32.mrf.mxu0
        %v1946 = vadd.f32 0.0, %v1945
        %1947 = vmatmul.f32.gmra.mxu0 %v1836
        %v1948 = vpop.f32.mrf.mxu0
        %v1949 = vadd.f32 0.0, %v1948
        %1950 = vmatmul.f32.gmra.mxu0 %v1839
        %v1951 = vpop.f32.mrf.mxu0
        %v1952 = vadd.f32 0.0, %v1951
        %1953 = vmatmul.f32.gmra.mxu0 %v1842
        %v1954 = vpop.f32.mrf.mxu0
        %v1955 = vadd.f32 0.0, %v1954
        %1956 = vmatmul.f32.gmra.mxu0 %v1845
        %v1957 = vpop.f32.mrf.mxu0
        %v1958 = vadd.f32 0.0, %v1957
        %1959 = vmatmul.f32.gmra.mxu0 %v1848
        %v1960 = vpop.f32.mrf.mxu0
        %v1961 = vadd.f32 0.0, %v1960
        %1962 = vdwg.mxu0
        %v1963 = vadd.f32 %v1687, %v1868
        %v1964 = vadd.f32 %v1688, %v1871
        %v1965 = vadd.f32 %v1689, %v1874
        %v1966 = vadd.f32 %v1690, %v1877
        %v1967 = vadd.f32 %v1691, %v1880
        %v1968 = vadd.f32 %v1692, %v1883
        %v1969 = vadd.f32 %v1693, %v1886
        %v1970 = vadd.f32 %v1694, %v1889
        %v1971 = vadd.f32 %v1695, %v1892
        %v1972 = vadd.f32 %v1696, %v1895
        %v1973 = vadd.f32 %v1697, %v1898
        %v1974 = vadd.f32 %v1698, %v1901
        %v1975 = vadd.f32 %v1699, %v1904
        %v1976 = vadd.f32 %v1700, %v1907
        %v1977 = vadd.f32 %v1701, %v1910
        %v1978 = vadd.f32 %v1702, %v1913
        %v1979 = vadd.f32 %v1703, %v1916
        %v1980 = vadd.f32 %v1704, %v1919
        %v1981 = vadd.f32 %v1705, %v1922
        %v1982 = vadd.f32 %v1706, %v1925
        %v1983 = vadd.f32 %v1707, %v1928
        %v1984 = vadd.f32 %v1708, %v1931
        %v1985 = vadd.f32 %v1709, %v1934
        %v1986 = vadd.f32 %v1710, %v1937
        %v1987 = vadd.f32 %v1711, %v1940
        %v1988 = vadd.f32 %v1712, %v1943
        %v1989 = vadd.f32 %v1713, %v1946
        %v1990 = vadd.f32 %v1714, %v1949
        %v1991 = vadd.f32 %v1715, %v1952
        %v1992 = vadd.f32 %v1716, %v1955
        %v1993 = vadd.f32 %v1717, %v1958
        %v1994 = vadd.f32 %v1718, %v1961
        %s1995 = scalar_lea.vmem [#allocation2], 48
        %v1996 = vld [vmem:[%s1995] sm:$0xff]
        %v1997 = vld [vmem:[%s1995 + $0x8] sm:$0xff]
        %v1998 = vld [vmem:[%s1995 + $0x18] sm:$0xff]
        %v1999 = vld [vmem:[%s1995 + $0x20] sm:$0xff]
        %v2000 = vld [vmem:[%s1995 + $0x30] sm:$0xff]
        %v2001 = vld [vmem:[%s1995 + $0x38] sm:$0xff]
        %v2002 = vld [vmem:[%s1995 + $0x48] sm:$0xff]
        %v2003 = vld [vmem:[%s1995 + $0x50] sm:$0xff]
        %v2004 = vld [vmem:[%s1995 + $0x60] sm:$0xff]
        %v2005 = vld [vmem:[%s1995 + $0x68] sm:$0xff]
        %v2006 = vld [vmem:[%s1995 + $0x78] sm:$0xff]
        %v2007 = vld [vmem:[%s1995 + $0x80] sm:$0xff]
        %v2008 = vld [vmem:[%s1995 + $0x90] sm:$0xff]
        %v2009 = vld [vmem:[%s1995 + $0x98] sm:$0xff]
        %v2010 = vld [vmem:[%s1995 + $0xa8] sm:$0xff]
        %v2011 = vld [vmem:[%s1995 + $0xb0] sm:$0xff]
        %v2012 = vld [vmem:[%s1995 + $0xc0] sm:$0xff]
        %v2013 = vld [vmem:[%s1995 + $0xc8] sm:$0xff]
        %v2014 = vld [vmem:[%s1995 + $0xd8] sm:$0xff]
        %v2015 = vld [vmem:[%s1995 + $0xe0] sm:$0xff]
        %v2016 = vld [vmem:[%s1995 + $0xf0] sm:$0xff]
        %v2017 = vld [vmem:[%s1995 + $0xf8] sm:$0xff]
        %v2018 = vld [vmem:[%s1995 + $0x108] sm:$0xff]
        %v2019 = vld [vmem:[%s1995 + $0x110] sm:$0xff]
        %v2020 = vld [vmem:[%s1995 + $0x120] sm:$0xff]
        %v2021 = vld [vmem:[%s1995 + $0x128] sm:$0xff]
        %v2022 = vld [vmem:[%s1995 + $0x138] sm:$0xff]
        %v2023 = vld [vmem:[%s1995 + $0x140] sm:$0xff]
        %v2024 = vld [vmem:[%s1995 + $0x150] sm:$0xff]
        %v2025 = vld [vmem:[%s1995 + $0x158] sm:$0xff]
        %v2026 = vld [vmem:[%s1995 + $0x168] sm:$0xff]
        %v2027 = vld [vmem:[%s1995 + $0x170] sm:$0xff]
        %s2028 = scalar_lea.vmem %s1, 96
        %v2029 = vld [vmem:[%s2028] sm:$0xff]
        %v2030 = vld [vmem:[%s2028 + $0x8] sm:$0xff]
        %v2032 = vsel %vm372, %v1996, 0
        %v2035 = vsel %vm372, %v1997, 0
        %v2038 = vsel %vm372, %v1998, 0
        %v2041 = vsel %vm372, %v1999, 0
        %v2044 = vsel %vm372, %v2000, 0
        %v2047 = vsel %vm372, %v2001, 0
        %v2050 = vsel %vm372, %v2002, 0
        %v2053 = vsel %vm372, %v2003, 0
        %v2056 = vsel %vm372, %v2004, 0
        %v2059 = vsel %vm372, %v2005, 0
        %v2062 = vsel %vm372, %v2006, 0
        %v2065 = vsel %vm372, %v2007, 0
        %v2068 = vsel %vm372, %v2008, 0
        %v2071 = vsel %vm372, %v2009, 0
        %v2074 = vsel %vm372, %v2010, 0
        %v2077 = vsel %vm372, %v2011, 0
        %v2080 = vsel %vm372, %v2012, 0
        %v2083 = vsel %vm372, %v2013, 0
        %v2086 = vsel %vm372, %v2014, 0
        %v2089 = vsel %vm372, %v2015, 0
        %v2092 = vsel %vm372, %v2016, 0
        %v2095 = vsel %vm372, %v2017, 0
        %v2098 = vsel %vm372, %v2018, 0
        %v2101 = vsel %vm372, %v2019, 0
        %v2104 = vsel %vm372, %v2020, 0
        %v2107 = vsel %vm372, %v2021, 0
        %v2110 = vsel %vm372, %v2022, 0
        %v2113 = vsel %vm372, %v2023, 0
        %v2116 = vsel %vm372, %v2024, 0
        %v2119 = vsel %vm372, %v2025, 0
        %v2122 = vsel %vm372, %v2026, 0
        %v2125 = vsel %vm372, %v2027, 0
        %2127 = vmatpush.msra.mxu0 0.0
        %2128 = vmatpush.msra.mxu0 0.0
        %2129 = vmatpush.msra.mxu0 0.0
        %2130 = vmatpush.msra.mxu0 0.0
        %2131 = vmatpush.msra.mxu0 0.0
        %2132 = vmatpush.msra.mxu0 0.0
        %2133 = vmatpush.msra.mxu0 0.0
        %2134 = vmatpush.msra.mxu0 0.0
        %2135 = vmatpush.msra.mxu0 0.0
        %2136 = vmatpush.msra.mxu0 0.0
        %2137 = vmatpush.msra.mxu0 0.0
        %2138 = vmatpush.msra.mxu0 0.0
        %2139 = vmatpush.msra.mxu0 0.0
        %2140 = vmatpush.msra.mxu0 0.0
        %2141 = vmatpush.msra.mxu0 %v2030
        %2142 = vmatpush.msra.mxu0 %v2029
        %2143 = vmatmul.f32.gmra.mxu0 %v2032
        %v2144 = vpop.f32.mrf.mxu0
        %v2145 = vadd.f32 0.0, %v2144
        %2146 = vmatmul.f32.gmra.mxu0 %v2035
        %v2147 = vpop.f32.mrf.mxu0
        %v2148 = vadd.f32 0.0, %v2147
        %2149 = vmatmul.f32.gmra.mxu0 %v2038
        %v2150 = vpop.f32.mrf.mxu0
        %v2151 = vadd.f32 0.0, %v2150
        %2152 = vmatmul.f32.gmra.mxu0 %v2041
        %v2153 = vpop.f32.mrf.mxu0
        %v2154 = vadd.f32 0.0, %v2153
        %2155 = vmatmul.f32.gmra.mxu0 %v2044
        %v2156 = vpop.f32.mrf.mxu0
        %v2157 = vadd.f32 0.0, %v2156
        %2158 = vmatmul.f32.gmra.mxu0 %v2047
        %v2159 = vpop.f32.mrf.mxu0
        %v2160 = vadd.f32 0.0, %v2159
        %2161 = vmatmul.f32.gmra.mxu0 %v2050
        %v2162 = vpop.f32.mrf.mxu0
        %v2163 = vadd.f32 0.0, %v2162
        %2164 = vmatmul.f32.gmra.mxu0 %v2053
        %v2165 = vpop.f32.mrf.mxu0
        %v2166 = vadd.f32 0.0, %v2165
        %2167 = vmatmul.f32.gmra.mxu0 %v2056
        %v2168 = vpop.f32.mrf.mxu0
        %v2169 = vadd.f32 0.0, %v2168
        %2170 = vmatmul.f32.gmra.mxu0 %v2059
        %v2171 = vpop.f32.mrf.mxu0
        %v2172 = vadd.f32 0.0, %v2171
        %2173 = vmatmul.f32.gmra.mxu0 %v2062
        %v2174 = vpop.f32.mrf.mxu0
        %v2175 = vadd.f32 0.0, %v2174
        %2176 = vmatmul.f32.gmra.mxu0 %v2065
        %v2177 = vpop.f32.mrf.mxu0
        %v2178 = vadd.f32 0.0, %v2177
        %2179 = vmatmul.f32.gmra.mxu0 %v2068
        %v2180 = vpop.f32.mrf.mxu0
        %v2181 = vadd.f32 0.0, %v2180
        %2182 = vmatmul.f32.gmra.mxu0 %v2071
        %v2183 = vpop.f32.mrf.mxu0
        %v2184 = vadd.f32 0.0, %v2183
        %2185 = vmatmul.f32.gmra.mxu0 %v2074
        %v2186 = vpop.f32.mrf.mxu0
        %v2187 = vadd.f32 0.0, %v2186
        %2188 = vmatmul.f32.gmra.mxu0 %v2077
        %v2189 = vpop.f32.mrf.mxu0
        %v2190 = vadd.f32 0.0, %v2189
        %2191 = vmatmul.f32.gmra.mxu0 %v2080
        %v2192 = vpop.f32.mrf.mxu0
        %v2193 = vadd.f32 0.0, %v2192
        %2194 = vmatmul.f32.gmra.mxu0 %v2083
        %v2195 = vpop.f32.mrf.mxu0
        %v2196 = vadd.f32 0.0, %v2195
        %2197 = vmatmul.f32.gmra.mxu0 %v2086
        %v2198 = vpop.f32.mrf.mxu0
        %v2199 = vadd.f32 0.0, %v2198
        %2200 = vmatmul.f32.gmra.mxu0 %v2089
        %v2201 = vpop.f32.mrf.mxu0
        %v2202 = vadd.f32 0.0, %v2201
        %2203 = vmatmul.f32.gmra.mxu0 %v2092
        %v2204 = vpop.f32.mrf.mxu0
        %v2205 = vadd.f32 0.0, %v2204
        %2206 = vmatmul.f32.gmra.mxu0 %v2095
        %v2207 = vpop.f32.mrf.mxu0
        %v2208 = vadd.f32 0.0, %v2207
        %2209 = vmatmul.f32.gmra.mxu0 %v2098
        %v2210 = vpop.f32.mrf.mxu0
        %v2211 = vadd.f32 0.0, %v2210
        %2212 = vmatmul.f32.gmra.mxu0 %v2101
        %v2213 = vpop.f32.mrf.mxu0
        %v2214 = vadd.f32 0.0, %v2213
        %2215 = vmatmul.f32.gmra.mxu0 %v2104
        %v2216 = vpop.f32.mrf.mxu0
        %v2217 = vadd.f32 0.0, %v2216
        %2218 = vmatmul.f32.gmra.mxu0 %v2107
        %v2219 = vpop.f32.mrf.mxu0
        %v2220 = vadd.f32 0.0, %v2219
        %2221 = vmatmul.f32.gmra.mxu0 %v2110
        %v2222 = vpop.f32.mrf.mxu0
        %v2223 = vadd.f32 0.0, %v2222
        %2224 = vmatmul.f32.gmra.mxu0 %v2113
        %v2225 = vpop.f32.mrf.mxu0
        %v2226 = vadd.f32 0.0, %v2225
        %2227 = vmatmul.f32.gmra.mxu0 %v2116
        %v2228 = vpop.f32.mrf.mxu0
        %v2229 = vadd.f32 0.0, %v2228
        %2230 = vmatmul.f32.gmra.mxu0 %v2119
        %v2231 = vpop.f32.mrf.mxu0
        %v2232 = vadd.f32 0.0, %v2231
        %2233 = vmatmul.f32.gmra.mxu0 %v2122
        %v2234 = vpop.f32.mrf.mxu0
        %v2235 = vadd.f32 0.0, %v2234
        %2236 = vmatmul.f32.gmra.mxu0 %v2125
        %v2237 = vpop.f32.mrf.mxu0
        %v2238 = vadd.f32 0.0, %v2237
        %2239 = vdwg.mxu0
        %v2240 = vadd.f32 %v1963, %v2145
        %v2241 = vadd.f32 %v1964, %v2148
        %v2242 = vadd.f32 %v1965, %v2151
        %v2243 = vadd.f32 %v1966, %v2154
        %v2244 = vadd.f32 %v1967, %v2157
        %v2245 = vadd.f32 %v1968, %v2160
        %v2246 = vadd.f32 %v1969, %v2163
        %v2247 = vadd.f32 %v1970, %v2166
        %v2248 = vadd.f32 %v1971, %v2169
        %v2249 = vadd.f32 %v1972, %v2172
        %v2250 = vadd.f32 %v1973, %v2175
        %v2251 = vadd.f32 %v1974, %v2178
        %v2252 = vadd.f32 %v1975, %v2181
        %v2253 = vadd.f32 %v1976, %v2184
        %v2254 = vadd.f32 %v1977, %v2187
        %v2255 = vadd.f32 %v1978, %v2190
        %v2256 = vadd.f32 %v1979, %v2193
        %v2257 = vadd.f32 %v1980, %v2196
        %v2258 = vadd.f32 %v1981, %v2199
        %v2259 = vadd.f32 %v1982, %v2202
        %v2260 = vadd.f32 %v1983, %v2205
        %v2261 = vadd.f32 %v1984, %v2208
        %v2262 = vadd.f32 %v1985, %v2211
        %v2263 = vadd.f32 %v1986, %v2214
        %v2264 = vadd.f32 %v1987, %v2217
        %v2265 = vadd.f32 %v1988, %v2220
        %v2266 = vadd.f32 %v1989, %v2223
        %v2267 = vadd.f32 %v1990, %v2226
        %v2268 = vadd.f32 %v1991, %v2229
        %v2269 = vadd.f32 %v1992, %v2232
        %v2270 = vadd.f32 %v1993, %v2235
        %v2271 = vadd.f32 %v1994, %v2238
        %v2272 = vld [vmem:[%s1995 + $0x1] sm:$0xff]
        %v2273 = vld [vmem:[%s1995 + $0x9] sm:$0xff]
        %v2274 = vld [vmem:[%s1995 + $0x19] sm:$0xff]
        %v2275 = vld [vmem:[%s1995 + $0x21] sm:$0xff]
        %v2276 = vld [vmem:[%s1995 + $0x31] sm:$0xff]
        %v2277 = vld [vmem:[%s1995 + $0x39] sm:$0xff]
        %v2278 = vld [vmem:[%s1995 + $0x49] sm:$0xff]
        %v2279 = vld [vmem:[%s1995 + $0x51] sm:$0xff]
        %v2280 = vld [vmem:[%s1995 + $0x61] sm:$0xff]
        %v2281 = vld [vmem:[%s1995 + $0x69] sm:$0xff]
        %v2282 = vld [vmem:[%s1995 + $0x79] sm:$0xff]
        %v2283 = vld [vmem:[%s1995 + $0x81] sm:$0xff]
        %v2284 = vld [vmem:[%s1995 + $0x91] sm:$0xff]
        %v2285 = vld [vmem:[%s1995 + $0x99] sm:$0xff]
        %v2286 = vld [vmem:[%s1995 + $0xa9] sm:$0xff]
        %v2287 = vld [vmem:[%s1995 + $0xb1] sm:$0xff]
        %v2288 = vld [vmem:[%s1995 + $0xc1] sm:$0xff]
        %v2289 = vld [vmem:[%s1995 + $0xc9] sm:$0xff]
        %v2290 = vld [vmem:[%s1995 + $0xd9] sm:$0xff]
        %v2291 = vld [vmem:[%s1995 + $0xe1] sm:$0xff]
        %v2292 = vld [vmem:[%s1995 + $0xf1] sm:$0xff]
        %v2293 = vld [vmem:[%s1995 + $0xf9] sm:$0xff]
        %v2294 = vld [vmem:[%s1995 + $0x109] sm:$0xff]
        %v2295 = vld [vmem:[%s1995 + $0x111] sm:$0xff]
        %v2296 = vld [vmem:[%s1995 + $0x121] sm:$0xff]
        %v2297 = vld [vmem:[%s1995 + $0x129] sm:$0xff]
        %v2298 = vld [vmem:[%s1995 + $0x139] sm:$0xff]
        %v2299 = vld [vmem:[%s1995 + $0x141] sm:$0xff]
        %v2300 = vld [vmem:[%s1995 + $0x151] sm:$0xff]
        %v2301 = vld [vmem:[%s1995 + $0x159] sm:$0xff]
        %v2302 = vld [vmem:[%s1995 + $0x169] sm:$0xff]
        %v2303 = vld [vmem:[%s1995 + $0x171] sm:$0xff]
        %s2304 = scalar_lea.vmem %s1, 112
        %v2305 = vld [vmem:[%s2304] sm:$0xff]
        %v2306 = vld [vmem:[%s2304 + $0x8] sm:$0xff]
        %v2308 = vsel %vm372, %v2272, 0
        %v2311 = vsel %vm372, %v2273, 0
        %v2314 = vsel %vm372, %v2274, 0
        %v2317 = vsel %vm372, %v2275, 0
        %v2320 = vsel %vm372, %v2276, 0
        %v2323 = vsel %vm372, %v2277, 0
        %v2326 = vsel %vm372, %v2278, 0
        %v2329 = vsel %vm372, %v2279, 0
        %v2332 = vsel %vm372, %v2280, 0
        %v2335 = vsel %vm372, %v2281, 0
        %v2338 = vsel %vm372, %v2282, 0
        %v2341 = vsel %vm372, %v2283, 0
        %v2344 = vsel %vm372, %v2284, 0
        %v2347 = vsel %vm372, %v2285, 0
        %v2350 = vsel %vm372, %v2286, 0
        %v2353 = vsel %vm372, %v2287, 0
        %v2356 = vsel %vm372, %v2288, 0
        %v2359 = vsel %vm372, %v2289, 0
        %v2362 = vsel %vm372, %v2290, 0
        %v2365 = vsel %vm372, %v2291, 0
        %v2368 = vsel %vm372, %v2292, 0
        %v2371 = vsel %vm372, %v2293, 0
        %v2374 = vsel %vm372, %v2294, 0
        %v2377 = vsel %vm372, %v2295, 0
        %v2380 = vsel %vm372, %v2296, 0
        %v2383 = vsel %vm372, %v2297, 0
        %v2386 = vsel %vm372, %v2298, 0
        %v2389 = vsel %vm372, %v2299, 0
        %v2392 = vsel %vm372, %v2300, 0
        %v2395 = vsel %vm372, %v2301, 0
        %v2398 = vsel %vm372, %v2302, 0
        %v2401 = vsel %vm372, %v2303, 0
        %2403 = vmatpush.msra.mxu0 0.0
        %2404 = vmatpush.msra.mxu0 0.0
        %2405 = vmatpush.msra.mxu0 0.0
        %2406 = vmatpush.msra.mxu0 0.0
        %2407 = vmatpush.msra.mxu0 0.0
        %2408 = vmatpush.msra.mxu0 0.0
        %2409 = vmatpush.msra.mxu0 0.0
        %2410 = vmatpush.msra.mxu0 0.0
        %2411 = vmatpush.msra.mxu0 0.0
        %2412 = vmatpush.msra.mxu0 0.0
        %2413 = vmatpush.msra.mxu0 0.0
        %2414 = vmatpush.msra.mxu0 0.0
        %2415 = vmatpush.msra.mxu0 0.0
        %2416 = vmatpush.msra.mxu0 0.0
        %2417 = vmatpush.msra.mxu0 %v2306
        %2418 = vmatpush.msra.mxu0 %v2305
        %2419 = vmatmul.f32.gmra.mxu0 %v2308
        %v2420 = vpop.f32.mrf.mxu0
        %v2421 = vadd.f32 0.0, %v2420
        %2422 = vmatmul.f32.gmra.mxu0 %v2311
        %v2423 = vpop.f32.mrf.mxu0
        %v2424 = vadd.f32 0.0, %v2423
        %2425 = vmatmul.f32.gmra.mxu0 %v2314
        %v2426 = vpop.f32.mrf.mxu0
        %v2427 = vadd.f32 0.0, %v2426
        %2428 = vmatmul.f32.gmra.mxu0 %v2317
        %v2429 = vpop.f32.mrf.mxu0
        %v2430 = vadd.f32 0.0, %v2429
        %2431 = vmatmul.f32.gmra.mxu0 %v2320
        %v2432 = vpop.f32.mrf.mxu0
        %v2433 = vadd.f32 0.0, %v2432
        %2434 = vmatmul.f32.gmra.mxu0 %v2323
        %v2435 = vpop.f32.mrf.mxu0
        %v2436 = vadd.f32 0.0, %v2435
        %2437 = vmatmul.f32.gmra.mxu0 %v2326
        %v2438 = vpop.f32.mrf.mxu0
        %v2439 = vadd.f32 0.0, %v2438
        %2440 = vmatmul.f32.gmra.mxu0 %v2329
        %v2441 = vpop.f32.mrf.mxu0
        %v2442 = vadd.f32 0.0, %v2441
        %2443 = vmatmul.f32.gmra.mxu0 %v2332
        %v2444 = vpop.f32.mrf.mxu0
        %v2445 = vadd.f32 0.0, %v2444
        %2446 = vmatmul.f32.gmra.mxu0 %v2335
        %v2447 = vpop.f32.mrf.mxu0
        %v2448 = vadd.f32 0.0, %v2447
        %2449 = vmatmul.f32.gmra.mxu0 %v2338
        %v2450 = vpop.f32.mrf.mxu0
        %v2451 = vadd.f32 0.0, %v2450
        %2452 = vmatmul.f32.gmra.mxu0 %v2341
        %v2453 = vpop.f32.mrf.mxu0
        %v2454 = vadd.f32 0.0, %v2453
        %2455 = vmatmul.f32.gmra.mxu0 %v2344
        %v2456 = vpop.f32.mrf.mxu0
        %v2457 = vadd.f32 0.0, %v2456
        %2458 = vmatmul.f32.gmra.mxu0 %v2347
        %v2459 = vpop.f32.mrf.mxu0
        %v2460 = vadd.f32 0.0, %v2459
        %2461 = vmatmul.f32.gmra.mxu0 %v2350
        %v2462 = vpop.f32.mrf.mxu0
        %v2463 = vadd.f32 0.0, %v2462
        %2464 = vmatmul.f32.gmra.mxu0 %v2353
        %v2465 = vpop.f32.mrf.mxu0
        %v2466 = vadd.f32 0.0, %v2465
        %2467 = vmatmul.f32.gmra.mxu0 %v2356
        %v2468 = vpop.f32.mrf.mxu0
        %v2469 = vadd.f32 0.0, %v2468
        %2470 = vmatmul.f32.gmra.mxu0 %v2359
        %v2471 = vpop.f32.mrf.mxu0
        %v2472 = vadd.f32 0.0, %v2471
        %2473 = vmatmul.f32.gmra.mxu0 %v2362
        %v2474 = vpop.f32.mrf.mxu0
        %v2475 = vadd.f32 0.0, %v2474
        %2476 = vmatmul.f32.gmra.mxu0 %v2365
        %v2477 = vpop.f32.mrf.mxu0
        %v2478 = vadd.f32 0.0, %v2477
        %2479 = vmatmul.f32.gmra.mxu0 %v2368
        %v2480 = vpop.f32.mrf.mxu0
        %v2481 = vadd.f32 0.0, %v2480
        %2482 = vmatmul.f32.gmra.mxu0 %v2371
        %v2483 = vpop.f32.mrf.mxu0
        %v2484 = vadd.f32 0.0, %v2483
        %2485 = vmatmul.f32.gmra.mxu0 %v2374
        %v2486 = vpop.f32.mrf.mxu0
        %v2487 = vadd.f32 0.0, %v2486
        %2488 = vmatmul.f32.gmra.mxu0 %v2377
        %v2489 = vpop.f32.mrf.mxu0
        %v2490 = vadd.f32 0.0, %v2489
        %2491 = vmatmul.f32.gmra.mxu0 %v2380
        %v2492 = vpop.f32.mrf.mxu0
        %v2493 = vadd.f32 0.0, %v2492
        %2494 = vmatmul.f32.gmra.mxu0 %v2383
        %v2495 = vpop.f32.mrf.mxu0
        %v2496 = vadd.f32 0.0, %v2495
        %2497 = vmatmul.f32.gmra.mxu0 %v2386
        %v2498 = vpop.f32.mrf.mxu0
        %v2499 = vadd.f32 0.0, %v2498
        %2500 = vmatmul.f32.gmra.mxu0 %v2389
        %v2501 = vpop.f32.mrf.mxu0
        %v2502 = vadd.f32 0.0, %v2501
        %2503 = vmatmul.f32.gmra.mxu0 %v2392
        %v2504 = vpop.f32.mrf.mxu0
        %v2505 = vadd.f32 0.0, %v2504
        %2506 = vmatmul.f32.gmra.mxu0 %v2395
        %v2507 = vpop.f32.mrf.mxu0
        %v2508 = vadd.f32 0.0, %v2507
        %2509 = vmatmul.f32.gmra.mxu0 %v2398
        %v2510 = vpop.f32.mrf.mxu0
        %v2511 = vadd.f32 0.0, %v2510
        %2512 = vmatmul.f32.gmra.mxu0 %v2401
        %v2513 = vpop.f32.mrf.mxu0
        %v2514 = vadd.f32 0.0, %v2513
        %2515 = vdwg.mxu0
        %v2516 = vadd.f32 %v2240, %v2421
        %v2517 = vadd.f32 %v2241, %v2424
        %v2518 = vadd.f32 %v2242, %v2427
        %v2519 = vadd.f32 %v2243, %v2430
        %v2520 = vadd.f32 %v2244, %v2433
        %v2521 = vadd.f32 %v2245, %v2436
        %v2522 = vadd.f32 %v2246, %v2439
        %v2523 = vadd.f32 %v2247, %v2442
        %v2524 = vadd.f32 %v2248, %v2445
        %v2525 = vadd.f32 %v2249, %v2448
        %v2526 = vadd.f32 %v2250, %v2451
        %v2527 = vadd.f32 %v2251, %v2454
        %v2528 = vadd.f32 %v2252, %v2457
        %v2529 = vadd.f32 %v2253, %v2460
        %v2530 = vadd.f32 %v2254, %v2463
        %v2531 = vadd.f32 %v2255, %v2466
        %v2532 = vadd.f32 %v2256, %v2469
        %v2533 = vadd.f32 %v2257, %v2472
        %v2534 = vadd.f32 %v2258, %v2475
        %v2535 = vadd.f32 %v2259, %v2478
        %v2536 = vadd.f32 %v2260, %v2481
        %v2537 = vadd.f32 %v2261, %v2484
        %v2538 = vadd.f32 %v2262, %v2487
        %v2539 = vadd.f32 %v2263, %v2490
        %v2540 = vadd.f32 %v2264, %v2493
        %v2541 = vadd.f32 %v2265, %v2496
        %v2542 = vadd.f32 %v2266, %v2499
        %v2543 = vadd.f32 %v2267, %v2502
        %v2544 = vadd.f32 %v2268, %v2505
        %v2545 = vadd.f32 %v2269, %v2508
        %v2546 = vadd.f32 %v2270, %v2511
        %v2547 = vadd.f32 %v2271, %v2514
        %v2548 = vld [vmem:[%s1995 + $0x2] sm:$0xff]
        %v2549 = vld [vmem:[%s1995 + $0xa] sm:$0xff]
        %v2550 = vld [vmem:[%s1995 + $0x1a] sm:$0xff]
        %v2551 = vld [vmem:[%s1995 + $0x22] sm:$0xff]
        %v2552 = vld [vmem:[%s1995 + $0x32] sm:$0xff]
        %v2553 = vld [vmem:[%s1995 + $0x3a] sm:$0xff]
        %v2554 = vld [vmem:[%s1995 + $0x4a] sm:$0xff]
        %v2555 = vld [vmem:[%s1995 + $0x52] sm:$0xff]
        %v2556 = vld [vmem:[%s1995 + $0x62] sm:$0xff]
        %v2557 = vld [vmem:[%s1995 + $0x6a] sm:$0xff]
        %v2558 = vld [vmem:[%s1995 + $0x7a] sm:$0xff]
        %v2559 = vld [vmem:[%s1995 + $0x82] sm:$0xff]
        %v2560 = vld [vmem:[%s1995 + $0x92] sm:$0xff]
        %v2561 = vld [vmem:[%s1995 + $0x9a] sm:$0xff]
        %v2562 = vld [vmem:[%s1995 + $0xaa] sm:$0xff]
        %v2563 = vld [vmem:[%s1995 + $0xb2] sm:$0xff]
        %v2564 = vld [vmem:[%s1995 + $0xc2] sm:$0xff]
        %v2565 = vld [vmem:[%s1995 + $0xca] sm:$0xff]
        %v2566 = vld [vmem:[%s1995 + $0xda] sm:$0xff]
        %v2567 = vld [vmem:[%s1995 + $0xe2] sm:$0xff]
        %v2568 = vld [vmem:[%s1995 + $0xf2] sm:$0xff]
        %v2569 = vld [vmem:[%s1995 + $0xfa] sm:$0xff]
        %v2570 = vld [vmem:[%s1995 + $0x10a] sm:$0xff]
        %v2571 = vld [vmem:[%s1995 + $0x112] sm:$0xff]
        %v2572 = vld [vmem:[%s1995 + $0x122] sm:$0xff]
        %v2573 = vld [vmem:[%s1995 + $0x12a] sm:$0xff]
        %v2574 = vld [vmem:[%s1995 + $0x13a] sm:$0xff]
        %v2575 = vld [vmem:[%s1995 + $0x142] sm:$0xff]
        %v2576 = vld [vmem:[%s1995 + $0x152] sm:$0xff]
        %v2577 = vld [vmem:[%s1995 + $0x15a] sm:$0xff]
        %v2578 = vld [vmem:[%s1995 + $0x16a] sm:$0xff]
        %v2579 = vld [vmem:[%s1995 + $0x172] sm:$0xff]
        %s2580 = scalar_lea.vmem %s1, 128
        %v2581 = vld [vmem:[%s2580] sm:$0xff]
        %v2582 = vld [vmem:[%s2580 + $0x8] sm:$0xff]
        %v2584 = vsel %vm372, %v2548, 0
        %v2587 = vsel %vm372, %v2549, 0
        %v2590 = vsel %vm372, %v2550, 0
        %v2593 = vsel %vm372, %v2551, 0
        %v2596 = vsel %vm372, %v2552, 0
        %v2599 = vsel %vm372, %v2553, 0
        %v2602 = vsel %vm372, %v2554, 0
        %v2605 = vsel %vm372, %v2555, 0
        %v2608 = vsel %vm372, %v2556, 0
        %v2611 = vsel %vm372, %v2557, 0
        %v2614 = vsel %vm372, %v2558, 0
        %v2617 = vsel %vm372, %v2559, 0
        %v2620 = vsel %vm372, %v2560, 0
        %v2623 = vsel %vm372, %v2561, 0
        %v2626 = vsel %vm372, %v2562, 0
        %v2629 = vsel %vm372, %v2563, 0
        %v2632 = vsel %vm372, %v2564, 0
        %v2635 = vsel %vm372, %v2565, 0
        %v2638 = vsel %vm372, %v2566, 0
        %v2641 = vsel %vm372, %v2567, 0
        %v2644 = vsel %vm372, %v2568, 0
        %v2647 = vsel %vm372, %v2569, 0
        %v2650 = vsel %vm372, %v2570, 0
        %v2653 = vsel %vm372, %v2571, 0
        %v2656 = vsel %vm372, %v2572, 0
        %v2659 = vsel %vm372, %v2573, 0
        %v2662 = vsel %vm372, %v2574, 0
        %v2665 = vsel %vm372, %v2575, 0
        %v2668 = vsel %vm372, %v2576, 0
        %v2671 = vsel %vm372, %v2577, 0
        %v2674 = vsel %vm372, %v2578, 0
        %v2677 = vsel %vm372, %v2579, 0
        %2679 = vmatpush.msra.mxu0 0.0
        %2680 = vmatpush.msra.mxu0 0.0
        %2681 = vmatpush.msra.mxu0 0.0
        %2682 = vmatpush.msra.mxu0 0.0
        %2683 = vmatpush.msra.mxu0 0.0
        %2684 = vmatpush.msra.mxu0 0.0
        %2685 = vmatpush.msra.mxu0 0.0
        %2686 = vmatpush.msra.mxu0 0.0
        %2687 = vmatpush.msra.mxu0 0.0
        %2688 = vmatpush.msra.mxu0 0.0
        %2689 = vmatpush.msra.mxu0 0.0
        %2690 = vmatpush.msra.mxu0 0.0
        %2691 = vmatpush.msra.mxu0 0.0
        %2692 = vmatpush.msra.mxu0 0.0
        %2693 = vmatpush.msra.mxu0 %v2582
        %2694 = vmatpush.msra.mxu0 %v2581
        %2695 = vmatmul.f32.gmra.mxu0 %v2584
        %v2696 = vpop.f32.mrf.mxu0
        %v2697 = vadd.f32 0.0, %v2696
        %2698 = vmatmul.f32.gmra.mxu0 %v2587
        %v2699 = vpop.f32.mrf.mxu0
        %v2700 = vadd.f32 0.0, %v2699
        %2701 = vmatmul.f32.gmra.mxu0 %v2590
        %v2702 = vpop.f32.mrf.mxu0
        %v2703 = vadd.f32 0.0, %v2702
        %2704 = vmatmul.f32.gmra.mxu0 %v2593
        %v2705 = vpop.f32.mrf.mxu0
        %v2706 = vadd.f32 0.0, %v2705
        %2707 = vmatmul.f32.gmra.mxu0 %v2596
        %v2708 = vpop.f32.mrf.mxu0
        %v2709 = vadd.f32 0.0, %v2708
        %2710 = vmatmul.f32.gmra.mxu0 %v2599
        %v2711 = vpop.f32.mrf.mxu0
        %v2712 = vadd.f32 0.0, %v2711
        %2713 = vmatmul.f32.gmra.mxu0 %v2602
        %v2714 = vpop.f32.mrf.mxu0
        %v2715 = vadd.f32 0.0, %v2714
        %2716 = vmatmul.f32.gmra.mxu0 %v2605
        %v2717 = vpop.f32.mrf.mxu0
        %v2718 = vadd.f32 0.0, %v2717
        %2719 = vmatmul.f32.gmra.mxu0 %v2608
        %v2720 = vpop.f32.mrf.mxu0
        %v2721 = vadd.f32 0.0, %v2720
        %2722 = vmatmul.f32.gmra.mxu0 %v2611
        %v2723 = vpop.f32.mrf.mxu0
        %v2724 = vadd.f32 0.0, %v2723
        %2725 = vmatmul.f32.gmra.mxu0 %v2614
        %v2726 = vpop.f32.mrf.mxu0
        %v2727 = vadd.f32 0.0, %v2726
        %2728 = vmatmul.f32.gmra.mxu0 %v2617
        %v2729 = vpop.f32.mrf.mxu0
        %v2730 = vadd.f32 0.0, %v2729
        %2731 = vmatmul.f32.gmra.mxu0 %v2620
        %v2732 = vpop.f32.mrf.mxu0
        %v2733 = vadd.f32 0.0, %v2732
        %2734 = vmatmul.f32.gmra.mxu0 %v2623
        %v2735 = vpop.f32.mrf.mxu0
        %v2736 = vadd.f32 0.0, %v2735
        %2737 = vmatmul.f32.gmra.mxu0 %v2626
        %v2738 = vpop.f32.mrf.mxu0
        %v2739 = vadd.f32 0.0, %v2738
        %2740 = vmatmul.f32.gmra.mxu0 %v2629
        %v2741 = vpop.f32.mrf.mxu0
        %v2742 = vadd.f32 0.0, %v2741
        %2743 = vmatmul.f32.gmra.mxu0 %v2632
        %v2744 = vpop.f32.mrf.mxu0
        %v2745 = vadd.f32 0.0, %v2744
        %2746 = vmatmul.f32.gmra.mxu0 %v2635
        %v2747 = vpop.f32.mrf.mxu0
        %v2748 = vadd.f32 0.0, %v2747
        %2749 = vmatmul.f32.gmra.mxu0 %v2638
        %v2750 = vpop.f32.mrf.mxu0
        %v2751 = vadd.f32 0.0, %v2750
        %2752 = vmatmul.f32.gmra.mxu0 %v2641
        %v2753 = vpop.f32.mrf.mxu0
        %v2754 = vadd.f32 0.0, %v2753
        %2755 = vmatmul.f32.gmra.mxu0 %v2644
        %v2756 = vpop.f32.mrf.mxu0
        %v2757 = vadd.f32 0.0, %v2756
        %2758 = vmatmul.f32.gmra.mxu0 %v2647
        %v2759 = vpop.f32.mrf.mxu0
        %v2760 = vadd.f32 0.0, %v2759
        %2761 = vmatmul.f32.gmra.mxu0 %v2650
        %v2762 = vpop.f32.mrf.mxu0
        %v2763 = vadd.f32 0.0, %v2762
        %2764 = vmatmul.f32.gmra.mxu0 %v2653
        %v2765 = vpop.f32.mrf.mxu0
        %v2766 = vadd.f32 0.0, %v2765
        %2767 = vmatmul.f32.gmra.mxu0 %v2656
        %v2768 = vpop.f32.mrf.mxu0
        %v2769 = vadd.f32 0.0, %v2768
        %2770 = vmatmul.f32.gmra.mxu0 %v2659
        %v2771 = vpop.f32.mrf.mxu0
        %v2772 = vadd.f32 0.0, %v2771
        %2773 = vmatmul.f32.gmra.mxu0 %v2662
        %v2774 = vpop.f32.mrf.mxu0
        %v2775 = vadd.f32 0.0, %v2774
        %2776 = vmatmul.f32.gmra.mxu0 %v2665
        %v2777 = vpop.f32.mrf.mxu0
        %v2778 = vadd.f32 0.0, %v2777
        %2779 = vmatmul.f32.gmra.mxu0 %v2668
        %v2780 = vpop.f32.mrf.mxu0
        %v2781 = vadd.f32 0.0, %v2780
        %2782 = vmatmul.f32.gmra.mxu0 %v2671
        %v2783 = vpop.f32.mrf.mxu0
        %v2784 = vadd.f32 0.0, %v2783
        %2785 = vmatmul.f32.gmra.mxu0 %v2674
        %v2786 = vpop.f32.mrf.mxu0
        %v2787 = vadd.f32 0.0, %v2786
        %2788 = vmatmul.f32.gmra.mxu0 %v2677
        %v2789 = vpop.f32.mrf.mxu0
        %v2790 = vadd.f32 0.0, %v2789
        %2791 = vdwg.mxu0
        %v2792 = vadd.f32 %v2516, %v2697
        %v2793 = vadd.f32 %v2517, %v2700
        %v2794 = vadd.f32 %v2518, %v2703
        %v2795 = vadd.f32 %v2519, %v2706
        %v2796 = vadd.f32 %v2520, %v2709
        %v2797 = vadd.f32 %v2521, %v2712
        %v2798 = vadd.f32 %v2522, %v2715
        %v2799 = vadd.f32 %v2523, %v2718
        %v2800 = vadd.f32 %v2524, %v2721
        %v2801 = vadd.f32 %v2525, %v2724
        %v2802 = vadd.f32 %v2526, %v2727
        %v2803 = vadd.f32 %v2527, %v2730
        %v2804 = vadd.f32 %v2528, %v2733
        %v2805 = vadd.f32 %v2529, %v2736
        %v2806 = vadd.f32 %v2530, %v2739
        %v2807 = vadd.f32 %v2531, %v2742
        %v2808 = vadd.f32 %v2532, %v2745
        %v2809 = vadd.f32 %v2533, %v2748
        %v2810 = vadd.f32 %v2534, %v2751
        %v2811 = vadd.f32 %v2535, %v2754
        %v2812 = vadd.f32 %v2536, %v2757
        %v2813 = vadd.f32 %v2537, %v2760
        %v2814 = vadd.f32 %v2538, %v2763
        %v2815 = vadd.f32 %v2539, %v2766
        %v2816 = vadd.f32 %v2540, %v2769
        %v2817 = vadd.f32 %v2541, %v2772
        %v2818 = vadd.f32 %v2542, %v2775
        %v2819 = vadd.f32 %v2543, %v2778
        %v2820 = vadd.f32 %v2544, %v2781
        %v2821 = vadd.f32 %v2545, %v2784
        %v2822 = vadd.f32 %v2546, %v2787
        %v2823 = vadd.f32 %v2547, %v2790
        %v2824 = vxor.u32 %v2792, 2147483648
        %v2825 = vxor.u32 %v2793, 2147483648
        %v2826 = vxor.u32 %v2794, 2147483648
        %v2827 = vxor.u32 %v2795, 2147483648
        %v2828 = vxor.u32 %v2796, 2147483648
        %v2829 = vxor.u32 %v2797, 2147483648
        %v2830 = vxor.u32 %v2798, 2147483648
        %v2831 = vxor.u32 %v2799, 2147483648
        %v2832 = vxor.u32 %v2800, 2147483648
        %v2833 = vxor.u32 %v2801, 2147483648
        %v2834 = vxor.u32 %v2802, 2147483648
        %v2835 = vxor.u32 %v2803, 2147483648
        %v2836 = vxor.u32 %v2804, 2147483648
        %v2837 = vxor.u32 %v2805, 2147483648
        %v2838 = vxor.u32 %v2806, 2147483648
        %v2839 = vxor.u32 %v2807, 2147483648
        %v2840 = vxor.u32 %v2808, 2147483648
        %v2841 = vxor.u32 %v2809, 2147483648
        %v2842 = vxor.u32 %v2810, 2147483648
        %v2843 = vxor.u32 %v2811, 2147483648
        %v2844 = vxor.u32 %v2812, 2147483648
        %v2845 = vxor.u32 %v2813, 2147483648
        %v2846 = vxor.u32 %v2814, 2147483648
        %v2847 = vxor.u32 %v2815, 2147483648
        %v2848 = vxor.u32 %v2816, 2147483648
        %v2849 = vxor.u32 %v2817, 2147483648
        %v2850 = vxor.u32 %v2818, 2147483648
        %v2851 = vxor.u32 %v2819, 2147483648
        %v2852 = vxor.u32 %v2820, 2147483648
        %v2853 = vxor.u32 %v2821, 2147483648
        %v2854 = vxor.u32 %v2822, 2147483648
        %v2855 = vxor.u32 %v2823, 2147483648
        %v2856 = vmul.f32 %v2824, 1.442695
        %v2857 = vpow.pop %v2856
        %v2858 = vmul.f32 %v2825, 1.442695
        %v2859 = vpow.pop %v2858
        %v2860 = vmul.f32 %v2826, 1.442695
        %v2861 = vpow.pop %v2860
        %v2862 = vmul.f32 %v2827, 1.442695
        %v2863 = vpow.pop %v2862
        %v2864 = vmul.f32 %v2828, 1.442695
        %v2865 = vpow.pop %v2864
        %v2866 = vmul.f32 %v2829, 1.442695
        %v2867 = vpow.pop %v2866
        %v2868 = vmul.f32 %v2830, 1.442695
        %v2869 = vpow.pop %v2868
        %v2870 = vmul.f32 %v2831, 1.442695
        %v2871 = vpow.pop %v2870
        %v2872 = vmul.f32 %v2832, 1.442695
        %v2873 = vpow.pop %v2872
        %v2874 = vmul.f32 %v2833, 1.442695
        %v2875 = vpow.pop %v2874
        %v2876 = vmul.f32 %v2834, 1.442695
        %v2877 = vpow.pop %v2876
        %v2878 = vmul.f32 %v2835, 1.442695
        %v2879 = vpow.pop %v2878
        %v2880 = vmul.f32 %v2836, 1.442695
        %v2881 = vpow.pop %v2880
        %v2882 = vmul.f32 %v2837, 1.442695
        %v2883 = vpow.pop %v2882
        %v2884 = vmul.f32 %v2838, 1.442695
        %v2885 = vpow.pop %v2884
        %v2886 = vmul.f32 %v2839, 1.442695
        %v2887 = vpow.pop %v2886
        %v2888 = vmul.f32 %v2840, 1.442695
        %v2889 = vpow.pop %v2888
        %v2890 = vmul.f32 %v2841, 1.442695
        %v2891 = vpow.pop %v2890
        %v2892 = vmul.f32 %v2842, 1.442695
        %v2893 = vpow.pop %v2892
        %v2894 = vmul.f32 %v2843, 1.442695
        %v2895 = vpow.pop %v2894
        %v2896 = vmul.f32 %v2844, 1.442695
        %v2897 = vpow.pop %v2896
        %v2898 = vmul.f32 %v2845, 1.442695
        %v2899 = vpow.pop %v2898
        %v2900 = vmul.f32 %v2846, 1.442695
        %v2901 = vpow.pop %v2900
        %v2902 = vmul.f32 %v2847, 1.442695
        %v2903 = vpow.pop %v2902
        %v2904 = vmul.f32 %v2848, 1.442695
        %v2905 = vpow.pop %v2904
        %v2906 = vmul.f32 %v2849, 1.442695
        %v2907 = vpow.pop %v2906
        %v2908 = vmul.f32 %v2850, 1.442695
        %v2909 = vpow.pop %v2908
        %v2910 = vmul.f32 %v2851, 1.442695
        %v2911 = vpow.pop %v2910
        %v2912 = vmul.f32 %v2852, 1.442695
        %v2913 = vpow.pop %v2912
        %v2914 = vmul.f32 %v2853, 1.442695
        %v2915 = vpow.pop %v2914
        %v2916 = vmul.f32 %v2854, 1.442695
        %v2917 = vpow.pop %v2916
        %v2918 = vmul.f32 %v2855, 1.442695
        %v2919 = vpow.pop %v2918
        %v2920 = vadd.f32 %v2857, 1.0
        %v2921 = vadd.f32 %v2859, 1.0
        %v2922 = vadd.f32 %v2861, 1.0
        %v2923 = vadd.f32 %v2863, 1.0
        %v2924 = vadd.f32 %v2865, 1.0
        %v2925 = vadd.f32 %v2867, 1.0
        %v2926 = vadd.f32 %v2869, 1.0
        %v2927 = vadd.f32 %v2871, 1.0
        %v2928 = vadd.f32 %v2873, 1.0
        %v2929 = vadd.f32 %v2875, 1.0
        %v2930 = vadd.f32 %v2877, 1.0
        %v2931 = vadd.f32 %v2879, 1.0
        %v2932 = vadd.f32 %v2881, 1.0
        %v2933 = vadd.f32 %v2883, 1.0
        %v2934 = vadd.f32 %v2885, 1.0
        %v2935 = vadd.f32 %v2887, 1.0
        %v2936 = vadd.f32 %v2889, 1.0
        %v2937 = vadd.f32 %v2891, 1.0
        %v2938 = vadd.f32 %v2893, 1.0
        %v2939 = vadd.f32 %v2895, 1.0
        %v2940 = vadd.f32 %v2897, 1.0
        %v2941 = vadd.f32 %v2899, 1.0
        %v2942 = vadd.f32 %v2901, 1.0
        %v2943 = vadd.f32 %v2903, 1.0
        %v2944 = vadd.f32 %v2905, 1.0
        %v2945 = vadd.f32 %v2907, 1.0
        %v2946 = vadd.f32 %v2909, 1.0
        %v2947 = vadd.f32 %v2911, 1.0
        %v2948 = vadd.f32 %v2913, 1.0
        %v2949 = vadd.f32 %v2915, 1.0
        %v2950 = vadd.f32 %v2917, 1.0
        %v2951 = vadd.f32 %v2919, 1.0
        %v2952 = vrcp.pop %v2920
        %v2953 = vmul.f32 %v2920, %v2952
        %v2954 = vsub.f32 1.0, %v2953
        %v2955 = vmul.f32 %v2952, %v2954
        %v2956 = vadd.f32 %v2952, %v2955
        %vm2957 = vweird.f32 %v2920
        %vm2958 = vweird.f32 %v2952
        %vm2959 = vmor %vm2957, %vm2958
        %v2960 = vsel %vm2959, %v2952, %v2956
        %v2961 = vand.u32 2147483647, %v2920
        %vm2962 = vcmp.eq.f32.partialorder %v2961, 8.507059e+37
        %v2963 = vand.u32 %v2920, 2147483648
        %v2964 = vor.u32 1.1754944e-38, %v2963
        %v2965 = vsel %vm2962, %v2964, %v2960
        %v2966 = vmul.f32 1.0, %v2965
        %v2967 = vrcp.pop %v2921
        %v2968 = vmul.f32 %v2921, %v2967
        %v2969 = vsub.f32 1.0, %v2968
        %v2970 = vmul.f32 %v2967, %v2969
        %v2971 = vadd.f32 %v2967, %v2970
        %vm2972 = vweird.f32 %v2921
        %vm2973 = vweird.f32 %v2967
        %vm2974 = vmor %vm2972, %vm2973
        %v2975 = vsel %vm2974, %v2967, %v2971
        %v2976 = vand.u32 2147483647, %v2921
        %vm2977 = vcmp.eq.f32.partialorder %v2976, 8.507059e+37
        %v2978 = vand.u32 %v2921, 2147483648
        %v2979 = vor.u32 1.1754944e-38, %v2978
        %v2980 = vsel %vm2977, %v2979, %v2975
        %v2981 = vmul.f32 1.0, %v2980
        %v2982 = vrcp.pop %v2922
        %v2983 = vmul.f32 %v2922, %v2982
        %v2984 = vsub.f32 1.0, %v2983
        %v2985 = vmul.f32 %v2982, %v2984
        %v2986 = vadd.f32 %v2982, %v2985
        %vm2987 = vweird.f32 %v2922
        %vm2988 = vweird.f32 %v2982
        %vm2989 = vmor %vm2987, %vm2988
        %v2990 = vsel %vm2989, %v2982, %v2986
        %v2991 = vand.u32 2147483647, %v2922
        %vm2992 = vcmp.eq.f32.partialorder %v2991, 8.507059e+37
        %v2993 = vand.u32 %v2922, 2147483648
        %v2994 = vor.u32 1.1754944e-38, %v2993
        %v2995 = vsel %vm2992, %v2994, %v2990
        %v2996 = vmul.f32 1.0, %v2995
        %v2997 = vrcp.pop %v2923
        %v2998 = vmul.f32 %v2923, %v2997
        %v2999 = vsub.f32 1.0, %v2998
        %v3000 = vmul.f32 %v2997, %v2999
        %v3001 = vadd.f32 %v2997, %v3000
        %vm3002 = vweird.f32 %v2923
        %vm3003 = vweird.f32 %v2997
        %vm3004 = vmor %vm3002, %vm3003
        %v3005 = vsel %vm3004, %v2997, %v3001
        %v3006 = vand.u32 2147483647, %v2923
        %vm3007 = vcmp.eq.f32.partialorder %v3006, 8.507059e+37
        %v3008 = vand.u32 %v2923, 2147483648
        %v3009 = vor.u32 1.1754944e-38, %v3008
        %v3010 = vsel %vm3007, %v3009, %v3005
        %v3011 = vmul.f32 1.0, %v3010
        %v3012 = vrcp.pop %v2924
        %v3013 = vmul.f32 %v2924, %v3012
        %v3014 = vsub.f32 1.0, %v3013
        %v3015 = vmul.f32 %v3012, %v3014
        %v3016 = vadd.f32 %v3012, %v3015
        %vm3017 = vweird.f32 %v2924
        %vm3018 = vweird.f32 %v3012
        %vm3019 = vmor %vm3017, %vm3018
        %v3020 = vsel %vm3019, %v3012, %v3016
        %v3021 = vand.u32 2147483647, %v2924
        %vm3022 = vcmp.eq.f32.partialorder %v3021, 8.507059e+37
        %v3023 = vand.u32 %v2924, 2147483648
        %v3024 = vor.u32 1.1754944e-38, %v3023
        %v3025 = vsel %vm3022, %v3024, %v3020
        %v3026 = vmul.f32 1.0, %v3025
        %v3027 = vrcp.pop %v2925
        %v3028 = vmul.f32 %v2925, %v3027
        %v3029 = vsub.f32 1.0, %v3028
        %v3030 = vmul.f32 %v3027, %v3029
        %v3031 = vadd.f32 %v3027, %v3030
        %vm3032 = vweird.f32 %v2925
        %vm3033 = vweird.f32 %v3027
        %vm3034 = vmor %vm3032, %vm3033
        %v3035 = vsel %vm3034, %v3027, %v3031
        %v3036 = vand.u32 2147483647, %v2925
        %vm3037 = vcmp.eq.f32.partialorder %v3036, 8.507059e+37
        %v3038 = vand.u32 %v2925, 2147483648
        %v3039 = vor.u32 1.1754944e-38, %v3038
        %v3040 = vsel %vm3037, %v3039, %v3035
        %v3041 = vmul.f32 1.0, %v3040
        %v3042 = vrcp.pop %v2926
        %v3043 = vmul.f32 %v2926, %v3042
        %v3044 = vsub.f32 1.0, %v3043
        %v3045 = vmul.f32 %v3042, %v3044
        %v3046 = vadd.f32 %v3042, %v3045
        %vm3047 = vweird.f32 %v2926
        %vm3048 = vweird.f32 %v3042
        %vm3049 = vmor %vm3047, %vm3048
        %v3050 = vsel %vm3049, %v3042, %v3046
        %v3051 = vand.u32 2147483647, %v2926
        %vm3052 = vcmp.eq.f32.partialorder %v3051, 8.507059e+37
        %v3053 = vand.u32 %v2926, 2147483648
        %v3054 = vor.u32 1.1754944e-38, %v3053
        %v3055 = vsel %vm3052, %v3054, %v3050
        %v3056 = vmul.f32 1.0, %v3055
        %v3057 = vrcp.pop %v2927
        %v3058 = vmul.f32 %v2927, %v3057
        %v3059 = vsub.f32 1.0, %v3058
        %v3060 = vmul.f32 %v3057, %v3059
        %v3061 = vadd.f32 %v3057, %v3060
        %vm3062 = vweird.f32 %v2927
        %vm3063 = vweird.f32 %v3057
        %vm3064 = vmor %vm3062, %vm3063
        %v3065 = vsel %vm3064, %v3057, %v3061
        %v3066 = vand.u32 2147483647, %v2927
        %vm3067 = vcmp.eq.f32.partialorder %v3066, 8.507059e+37
        %v3068 = vand.u32 %v2927, 2147483648
        %v3069 = vor.u32 1.1754944e-38, %v3068
        %v3070 = vsel %vm3067, %v3069, %v3065
        %v3071 = vmul.f32 1.0, %v3070
        %v3072 = vrcp.pop %v2928
        %v3073 = vmul.f32 %v2928, %v3072
        %v3074 = vsub.f32 1.0, %v3073
        %v3075 = vmul.f32 %v3072, %v3074
        %v3076 = vadd.f32 %v3072, %v3075
        %vm3077 = vweird.f32 %v2928
        %vm3078 = vweird.f32 %v3072
        %vm3079 = vmor %vm3077, %vm3078
        %v3080 = vsel %vm3079, %v3072, %v3076
        %v3081 = vand.u32 2147483647, %v2928
        %vm3082 = vcmp.eq.f32.partialorder %v3081, 8.507059e+37
        %v3083 = vand.u32 %v2928, 2147483648
        %v3084 = vor.u32 1.1754944e-38, %v3083
        %v3085 = vsel %vm3082, %v3084, %v3080
        %v3086 = vmul.f32 1.0, %v3085
        %v3087 = vrcp.pop %v2929
        %v3088 = vmul.f32 %v2929, %v3087
        %v3089 = vsub.f32 1.0, %v3088
        %v3090 = vmul.f32 %v3087, %v3089
        %v3091 = vadd.f32 %v3087, %v3090
        %vm3092 = vweird.f32 %v2929
        %vm3093 = vweird.f32 %v3087
        %vm3094 = vmor %vm3092, %vm3093
        %v3095 = vsel %vm3094, %v3087, %v3091
        %v3096 = vand.u32 2147483647, %v2929
        %vm3097 = vcmp.eq.f32.partialorder %v3096, 8.507059e+37
        %v3098 = vand.u32 %v2929, 2147483648
        %v3099 = vor.u32 1.1754944e-38, %v3098
        %v3100 = vsel %vm3097, %v3099, %v3095
        %v3101 = vmul.f32 1.0, %v3100
        %v3102 = vrcp.pop %v2930
        %v3103 = vmul.f32 %v2930, %v3102
        %v3104 = vsub.f32 1.0, %v3103
        %v3105 = vmul.f32 %v3102, %v3104
        %v3106 = vadd.f32 %v3102, %v3105
        %vm3107 = vweird.f32 %v2930
        %vm3108 = vweird.f32 %v3102
        %vm3109 = vmor %vm3107, %vm3108
        %v3110 = vsel %vm3109, %v3102, %v3106
        %v3111 = vand.u32 2147483647, %v2930
        %vm3112 = vcmp.eq.f32.partialorder %v3111, 8.507059e+37
        %v3113 = vand.u32 %v2930, 2147483648
        %v3114 = vor.u32 1.1754944e-38, %v3113
        %v3115 = vsel %vm3112, %v3114, %v3110
        %v3116 = vmul.f32 1.0, %v3115
        %v3117 = vrcp.pop %v2931
        %v3118 = vmul.f32 %v2931, %v3117
        %v3119 = vsub.f32 1.0, %v3118
        %v3120 = vmul.f32 %v3117, %v3119
        %v3121 = vadd.f32 %v3117, %v3120
        %vm3122 = vweird.f32 %v2931
        %vm3123 = vweird.f32 %v3117
        %vm3124 = vmor %vm3122, %vm3123
        %v3125 = vsel %vm3124, %v3117, %v3121
        %v3126 = vand.u32 2147483647, %v2931
        %vm3127 = vcmp.eq.f32.partialorder %v3126, 8.507059e+37
        %v3128 = vand.u32 %v2931, 2147483648
        %v3129 = vor.u32 1.1754944e-38, %v3128
        %v3130 = vsel %vm3127, %v3129, %v3125
        %v3131 = vmul.f32 1.0, %v3130
        %v3132 = vrcp.pop %v2932
        %v3133 = vmul.f32 %v2932, %v3132
        %v3134 = vsub.f32 1.0, %v3133
        %v3135 = vmul.f32 %v3132, %v3134
        %v3136 = vadd.f32 %v3132, %v3135
        %vm3137 = vweird.f32 %v2932
        %vm3138 = vweird.f32 %v3132
        %vm3139 = vmor %vm3137, %vm3138
        %v3140 = vsel %vm3139, %v3132, %v3136
        %v3141 = vand.u32 2147483647, %v2932
        %vm3142 = vcmp.eq.f32.partialorder %v3141, 8.507059e+37
        %v3143 = vand.u32 %v2932, 2147483648
        %v3144 = vor.u32 1.1754944e-38, %v3143
        %v3145 = vsel %vm3142, %v3144, %v3140
        %v3146 = vmul.f32 1.0, %v3145
        %v3147 = vrcp.pop %v2933
        %v3148 = vmul.f32 %v2933, %v3147
        %v3149 = vsub.f32 1.0, %v3148
        %v3150 = vmul.f32 %v3147, %v3149
        %v3151 = vadd.f32 %v3147, %v3150
        %vm3152 = vweird.f32 %v2933
        %vm3153 = vweird.f32 %v3147
        %vm3154 = vmor %vm3152, %vm3153
        %v3155 = vsel %vm3154, %v3147, %v3151
        %v3156 = vand.u32 2147483647, %v2933
        %vm3157 = vcmp.eq.f32.partialorder %v3156, 8.507059e+37
        %v3158 = vand.u32 %v2933, 2147483648
        %v3159 = vor.u32 1.1754944e-38, %v3158
        %v3160 = vsel %vm3157, %v3159, %v3155
        %v3161 = vmul.f32 1.0, %v3160
        %v3162 = vrcp.pop %v2934
        %v3163 = vmul.f32 %v2934, %v3162
        %v3164 = vsub.f32 1.0, %v3163
        %v3165 = vmul.f32 %v3162, %v3164
        %v3166 = vadd.f32 %v3162, %v3165
        %vm3167 = vweird.f32 %v2934
        %vm3168 = vweird.f32 %v3162
        %vm3169 = vmor %vm3167, %vm3168
        %v3170 = vsel %vm3169, %v3162, %v3166
        %v3171 = vand.u32 2147483647, %v2934
        %vm3172 = vcmp.eq.f32.partialorder %v3171, 8.507059e+37
        %v3173 = vand.u32 %v2934, 2147483648
        %v3174 = vor.u32 1.1754944e-38, %v3173
        %v3175 = vsel %vm3172, %v3174, %v3170
        %v3176 = vmul.f32 1.0, %v3175
        %v3177 = vrcp.pop %v2935
        %v3178 = vmul.f32 %v2935, %v3177
        %v3179 = vsub.f32 1.0, %v3178
        %v3180 = vmul.f32 %v3177, %v3179
        %v3181 = vadd.f32 %v3177, %v3180
        %vm3182 = vweird.f32 %v2935
        %vm3183 = vweird.f32 %v3177
        %vm3184 = vmor %vm3182, %vm3183
        %v3185 = vsel %vm3184, %v3177, %v3181
        %v3186 = vand.u32 2147483647, %v2935
        %vm3187 = vcmp.eq.f32.partialorder %v3186, 8.507059e+37
        %v3188 = vand.u32 %v2935, 2147483648
        %v3189 = vor.u32 1.1754944e-38, %v3188
        %v3190 = vsel %vm3187, %v3189, %v3185
        %v3191 = vmul.f32 1.0, %v3190
        %v3192 = vrcp.pop %v2936
        %v3193 = vmul.f32 %v2936, %v3192
        %v3194 = vsub.f32 1.0, %v3193
        %v3195 = vmul.f32 %v3192, %v3194
        %v3196 = vadd.f32 %v3192, %v3195
        %vm3197 = vweird.f32 %v2936
        %vm3198 = vweird.f32 %v3192
        %vm3199 = vmor %vm3197, %vm3198
        %v3200 = vsel %vm3199, %v3192, %v3196
        %v3201 = vand.u32 2147483647, %v2936
        %vm3202 = vcmp.eq.f32.partialorder %v3201, 8.507059e+37
        %v3203 = vand.u32 %v2936, 2147483648
        %v3204 = vor.u32 1.1754944e-38, %v3203
        %v3205 = vsel %vm3202, %v3204, %v3200
        %v3206 = vmul.f32 1.0, %v3205
        %v3207 = vrcp.pop %v2937
        %v3208 = vmul.f32 %v2937, %v3207
        %v3209 = vsub.f32 1.0, %v3208
        %v3210 = vmul.f32 %v3207, %v3209
        %v3211 = vadd.f32 %v3207, %v3210
        %vm3212 = vweird.f32 %v2937
        %vm3213 = vweird.f32 %v3207
        %vm3214 = vmor %vm3212, %vm3213
        %v3215 = vsel %vm3214, %v3207, %v3211
        %v3216 = vand.u32 2147483647, %v2937
        %vm3217 = vcmp.eq.f32.partialorder %v3216, 8.507059e+37
        %v3218 = vand.u32 %v2937, 2147483648
        %v3219 = vor.u32 1.1754944e-38, %v3218
        %v3220 = vsel %vm3217, %v3219, %v3215
        %v3221 = vmul.f32 1.0, %v3220
        %v3222 = vrcp.pop %v2938
        %v3223 = vmul.f32 %v2938, %v3222
        %v3224 = vsub.f32 1.0, %v3223
        %v3225 = vmul.f32 %v3222, %v3224
        %v3226 = vadd.f32 %v3222, %v3225
        %vm3227 = vweird.f32 %v2938
        %vm3228 = vweird.f32 %v3222
        %vm3229 = vmor %vm3227, %vm3228
        %v3230 = vsel %vm3229, %v3222, %v3226
        %v3231 = vand.u32 2147483647, %v2938
        %vm3232 = vcmp.eq.f32.partialorder %v3231, 8.507059e+37
        %v3233 = vand.u32 %v2938, 2147483648
        %v3234 = vor.u32 1.1754944e-38, %v3233
        %v3235 = vsel %vm3232, %v3234, %v3230
        %v3236 = vmul.f32 1.0, %v3235
        %v3237 = vrcp.pop %v2939
        %v3238 = vmul.f32 %v2939, %v3237
        %v3239 = vsub.f32 1.0, %v3238
        %v3240 = vmul.f32 %v3237, %v3239
        %v3241 = vadd.f32 %v3237, %v3240
        %vm3242 = vweird.f32 %v2939
        %vm3243 = vweird.f32 %v3237
        %vm3244 = vmor %vm3242, %vm3243
        %v3245 = vsel %vm3244, %v3237, %v3241
        %v3246 = vand.u32 2147483647, %v2939
        %vm3247 = vcmp.eq.f32.partialorder %v3246, 8.507059e+37
        %v3248 = vand.u32 %v2939, 2147483648
        %v3249 = vor.u32 1.1754944e-38, %v3248
        %v3250 = vsel %vm3247, %v3249, %v3245
        %v3251 = vmul.f32 1.0, %v3250
        %v3252 = vrcp.pop %v2940
        %v3253 = vmul.f32 %v2940, %v3252
        %v3254 = vsub.f32 1.0, %v3253
        %v3255 = vmul.f32 %v3252, %v3254
        %v3256 = vadd.f32 %v3252, %v3255
        %vm3257 = vweird.f32 %v2940
        %vm3258 = vweird.f32 %v3252
        %vm3259 = vmor %vm3257, %vm3258
        %v3260 = vsel %vm3259, %v3252, %v3256
        %v3261 = vand.u32 2147483647, %v2940
        %vm3262 = vcmp.eq.f32.partialorder %v3261, 8.507059e+37
        %v3263 = vand.u32 %v2940, 2147483648
        %v3264 = vor.u32 1.1754944e-38, %v3263
        %v3265 = vsel %vm3262, %v3264, %v3260
        %v3266 = vmul.f32 1.0, %v3265
        %v3267 = vrcp.pop %v2941
        %v3268 = vmul.f32 %v2941, %v3267
        %v3269 = vsub.f32 1.0, %v3268
        %v3270 = vmul.f32 %v3267, %v3269
        %v3271 = vadd.f32 %v3267, %v3270
        %vm3272 = vweird.f32 %v2941
        %vm3273 = vweird.f32 %v3267
        %vm3274 = vmor %vm3272, %vm3273
        %v3275 = vsel %vm3274, %v3267, %v3271
        %v3276 = vand.u32 2147483647, %v2941
        %vm3277 = vcmp.eq.f32.partialorder %v3276, 8.507059e+37
        %v3278 = vand.u32 %v2941, 2147483648
        %v3279 = vor.u32 1.1754944e-38, %v3278
        %v3280 = vsel %vm3277, %v3279, %v3275
        %v3281 = vmul.f32 1.0, %v3280
        %v3282 = vrcp.pop %v2942
        %v3283 = vmul.f32 %v2942, %v3282
        %v3284 = vsub.f32 1.0, %v3283
        %v3285 = vmul.f32 %v3282, %v3284
        %v3286 = vadd.f32 %v3282, %v3285
        %vm3287 = vweird.f32 %v2942
        %vm3288 = vweird.f32 %v3282
        %vm3289 = vmor %vm3287, %vm3288
        %v3290 = vsel %vm3289, %v3282, %v3286
        %v3291 = vand.u32 2147483647, %v2942
        %vm3292 = vcmp.eq.f32.partialorder %v3291, 8.507059e+37
        %v3293 = vand.u32 %v2942, 2147483648
        %v3294 = vor.u32 1.1754944e-38, %v3293
        %v3295 = vsel %vm3292, %v3294, %v3290
        %v3296 = vmul.f32 1.0, %v3295
        %v3297 = vrcp.pop %v2943
        %v3298 = vmul.f32 %v2943, %v3297
        %v3299 = vsub.f32 1.0, %v3298
        %v3300 = vmul.f32 %v3297, %v3299
        %v3301 = vadd.f32 %v3297, %v3300
        %vm3302 = vweird.f32 %v2943
        %vm3303 = vweird.f32 %v3297
        %vm3304 = vmor %vm3302, %vm3303
        %v3305 = vsel %vm3304, %v3297, %v3301
        %v3306 = vand.u32 2147483647, %v2943
        %vm3307 = vcmp.eq.f32.partialorder %v3306, 8.507059e+37
        %v3308 = vand.u32 %v2943, 2147483648
        %v3309 = vor.u32 1.1754944e-38, %v3308
        %v3310 = vsel %vm3307, %v3309, %v3305
        %v3311 = vmul.f32 1.0, %v3310
        %v3312 = vrcp.pop %v2944
        %v3313 = vmul.f32 %v2944, %v3312
        %v3314 = vsub.f32 1.0, %v3313
        %v3315 = vmul.f32 %v3312, %v3314
        %v3316 = vadd.f32 %v3312, %v3315
        %vm3317 = vweird.f32 %v2944
        %vm3318 = vweird.f32 %v3312
        %vm3319 = vmor %vm3317, %vm3318
        %v3320 = vsel %vm3319, %v3312, %v3316
        %v3321 = vand.u32 2147483647, %v2944
        %vm3322 = vcmp.eq.f32.partialorder %v3321, 8.507059e+37
        %v3323 = vand.u32 %v2944, 2147483648
        %v3324 = vor.u32 1.1754944e-38, %v3323
        %v3325 = vsel %vm3322, %v3324, %v3320
        %v3326 = vmul.f32 1.0, %v3325
        %v3327 = vrcp.pop %v2945
        %v3328 = vmul.f32 %v2945, %v3327
        %v3329 = vsub.f32 1.0, %v3328
        %v3330 = vmul.f32 %v3327, %v3329
        %v3331 = vadd.f32 %v3327, %v3330
        %vm3332 = vweird.f32 %v2945
        %vm3333 = vweird.f32 %v3327
        %vm3334 = vmor %vm3332, %vm3333
        %v3335 = vsel %vm3334, %v3327, %v3331
        %v3336 = vand.u32 2147483647, %v2945
        %vm3337 = vcmp.eq.f32.partialorder %v3336, 8.507059e+37
        %v3338 = vand.u32 %v2945, 2147483648
        %v3339 = vor.u32 1.1754944e-38, %v3338
        %v3340 = vsel %vm3337, %v3339, %v3335
        %v3341 = vmul.f32 1.0, %v3340
        %v3342 = vrcp.pop %v2946
        %v3343 = vmul.f32 %v2946, %v3342
        %v3344 = vsub.f32 1.0, %v3343
        %v3345 = vmul.f32 %v3342, %v3344
        %v3346 = vadd.f32 %v3342, %v3345
        %vm3347 = vweird.f32 %v2946
        %vm3348 = vweird.f32 %v3342
        %vm3349 = vmor %vm3347, %vm3348
        %v3350 = vsel %vm3349, %v3342, %v3346
        %v3351 = vand.u32 2147483647, %v2946
        %vm3352 = vcmp.eq.f32.partialorder %v3351, 8.507059e+37
        %v3353 = vand.u32 %v2946, 2147483648
        %v3354 = vor.u32 1.1754944e-38, %v3353
        %v3355 = vsel %vm3352, %v3354, %v3350
        %v3356 = vmul.f32 1.0, %v3355
        %v3357 = vrcp.pop %v2947
        %v3358 = vmul.f32 %v2947, %v3357
        %v3359 = vsub.f32 1.0, %v3358
        %v3360 = vmul.f32 %v3357, %v3359
        %v3361 = vadd.f32 %v3357, %v3360
        %vm3362 = vweird.f32 %v2947
        %vm3363 = vweird.f32 %v3357
        %vm3364 = vmor %vm3362, %vm3363
        %v3365 = vsel %vm3364, %v3357, %v3361
        %v3366 = vand.u32 2147483647, %v2947
        %vm3367 = vcmp.eq.f32.partialorder %v3366, 8.507059e+37
        %v3368 = vand.u32 %v2947, 2147483648
        %v3369 = vor.u32 1.1754944e-38, %v3368
        %v3370 = vsel %vm3367, %v3369, %v3365
        %v3371 = vmul.f32 1.0, %v3370
        %v3372 = vrcp.pop %v2948
        %v3373 = vmul.f32 %v2948, %v3372
        %v3374 = vsub.f32 1.0, %v3373
        %v3375 = vmul.f32 %v3372, %v3374
        %v3376 = vadd.f32 %v3372, %v3375
        %vm3377 = vweird.f32 %v2948
        %vm3378 = vweird.f32 %v3372
        %vm3379 = vmor %vm3377, %vm3378
        %v3380 = vsel %vm3379, %v3372, %v3376
        %v3381 = vand.u32 2147483647, %v2948
        %vm3382 = vcmp.eq.f32.partialorder %v3381, 8.507059e+37
        %v3383 = vand.u32 %v2948, 2147483648
        %v3384 = vor.u32 1.1754944e-38, %v3383
        %v3385 = vsel %vm3382, %v3384, %v3380
        %v3386 = vmul.f32 1.0, %v3385
        %v3387 = vrcp.pop %v2949
        %v3388 = vmul.f32 %v2949, %v3387
        %v3389 = vsub.f32 1.0, %v3388
        %v3390 = vmul.f32 %v3387, %v3389
        %v3391 = vadd.f32 %v3387, %v3390
        %vm3392 = vweird.f32 %v2949
        %vm3393 = vweird.f32 %v3387
        %vm3394 = vmor %vm3392, %vm3393
        %v3395 = vsel %vm3394, %v3387, %v3391
        %v3396 = vand.u32 2147483647, %v2949
        %vm3397 = vcmp.eq.f32.partialorder %v3396, 8.507059e+37
        %v3398 = vand.u32 %v2949, 2147483648
        %v3399 = vor.u32 1.1754944e-38, %v3398
        %v3400 = vsel %vm3397, %v3399, %v3395
        %v3401 = vmul.f32 1.0, %v3400
        %v3402 = vrcp.pop %v2950
        %v3403 = vmul.f32 %v2950, %v3402
        %v3404 = vsub.f32 1.0, %v3403
        %v3405 = vmul.f32 %v3402, %v3404
        %v3406 = vadd.f32 %v3402, %v3405
        %vm3407 = vweird.f32 %v2950
        %vm3408 = vweird.f32 %v3402
        %vm3409 = vmor %vm3407, %vm3408
        %v3410 = vsel %vm3409, %v3402, %v3406
        %v3411 = vand.u32 2147483647, %v2950
        %vm3412 = vcmp.eq.f32.partialorder %v3411, 8.507059e+37
        %v3413 = vand.u32 %v2950, 2147483648
        %v3414 = vor.u32 1.1754944e-38, %v3413
        %v3415 = vsel %vm3412, %v3414, %v3410
        %v3416 = vmul.f32 1.0, %v3415
        %v3417 = vrcp.pop %v2951
        %v3418 = vmul.f32 %v2951, %v3417
        %v3419 = vsub.f32 1.0, %v3418
        %v3420 = vmul.f32 %v3417, %v3419
        %v3421 = vadd.f32 %v3417, %v3420
        %vm3422 = vweird.f32 %v2951
        %vm3423 = vweird.f32 %v3417
        %vm3424 = vmor %vm3422, %vm3423
        %v3425 = vsel %vm3424, %v3417, %v3421
        %v3426 = vand.u32 2147483647, %v2951
        %vm3427 = vcmp.eq.f32.partialorder %v3426, 8.507059e+37
        %v3428 = vand.u32 %v2951, 2147483648
        %v3429 = vor.u32 1.1754944e-38, %v3428
        %v3430 = vsel %vm3427, %v3429, %v3425
        %v3431 = vmul.f32 1.0, %v3430
        %v3432 = vtanh.pop %v2792
        %v3433 = vtanh.pop %v2793
        %v3434 = vtanh.pop %v2794
        %v3435 = vtanh.pop %v2795
        %v3436 = vtanh.pop %v2796
        %v3437 = vtanh.pop %v2797
        %v3438 = vtanh.pop %v2798
        %v3439 = vtanh.pop %v2799
        %v3440 = vtanh.pop %v2800
        %v3441 = vtanh.pop %v2801
        %v3442 = vtanh.pop %v2802
        %v3443 = vtanh.pop %v2803
        %v3444 = vtanh.pop %v2804
        %v3445 = vtanh.pop %v2805
        %v3446 = vtanh.pop %v2806
        %v3447 = vtanh.pop %v2807
        %v3448 = vtanh.pop %v2808
        %v3449 = vtanh.pop %v2809
        %v3450 = vtanh.pop %v2810
        %v3451 = vtanh.pop %v2811
        %v3452 = vtanh.pop %v2812
        %v3453 = vtanh.pop %v2813
        %v3454 = vtanh.pop %v2814
        %v3455 = vtanh.pop %v2815
        %v3456 = vtanh.pop %v2816
        %v3457 = vtanh.pop %v2817
        %v3458 = vtanh.pop %v2818
        %v3459 = vtanh.pop %v2819
        %v3460 = vtanh.pop %v2820
        %v3461 = vtanh.pop %v2821
        %v3462 = vtanh.pop %v2822
        %v3463 = vtanh.pop %v2823
        %v3464 = vld [vmem:[%s212] sm:$0xff]
        %v3465 = vld [vmem:[%s212 + $0x8] sm:$0xff]
        %v3466 = vld [vmem:[%s212 + $0x10] sm:$0xff]
        %v3467 = vld [vmem:[%s212 + $0x18] sm:$0xff]
        %v3468 = vld [vmem:[%s212 + $0x20] sm:$0xff]
        %v3469 = vld [vmem:[%s212 + $0x28] sm:$0xff]
        %v3470 = vld [vmem:[%s212 + $0x30] sm:$0xff]
        %v3471 = vld [vmem:[%s212 + $0x38] sm:$0xff]
        %v3472 = vld [vmem:[%s212 + $0x40] sm:$0xff]
        %v3473 = vld [vmem:[%s212 + $0x48] sm:$0xff]
        %v3474 = vld [vmem:[%s212 + $0x50] sm:$0xff]
        %v3475 = vld [vmem:[%s212 + $0x58] sm:$0xff]
        %v3476 = vld [vmem:[%s212 + $0x60] sm:$0xff]
        %v3477 = vld [vmem:[%s212 + $0x68] sm:$0xff]
        %v3478 = vld [vmem:[%s212 + $0x70] sm:$0xff]
        %v3479 = vld [vmem:[%s212 + $0x78] sm:$0xff]
        %v3480 = vld [vmem:[%s212 + $0x80] sm:$0xff]
        %v3481 = vld [vmem:[%s212 + $0x88] sm:$0xff]
        %v3482 = vld [vmem:[%s212 + $0x90] sm:$0xff]
        %v3483 = vld [vmem:[%s212 + $0x98] sm:$0xff]
        %v3484 = vld [vmem:[%s212 + $0xa0] sm:$0xff]
        %v3485 = vld [vmem:[%s212 + $0xa8] sm:$0xff]
        %v3486 = vld [vmem:[%s212 + $0xb0] sm:$0xff]
        %v3487 = vld [vmem:[%s212 + $0xb8] sm:$0xff]
        %v3488 = vld [vmem:[%s212 + $0xc0] sm:$0xff]
        %v3489 = vld [vmem:[%s212 + $0xc8] sm:$0xff]
        %v3490 = vld [vmem:[%s212 + $0xd0] sm:$0xff]
        %v3491 = vld [vmem:[%s212 + $0xd8] sm:$0xff]
        %v3492 = vld [vmem:[%s212 + $0xe0] sm:$0xff]
        %v3493 = vld [vmem:[%s212 + $0xe8] sm:$0xff]
        %v3494 = vld [vmem:[%s212 + $0xf0] sm:$0xff]
        %v3495 = vld [vmem:[%s212 + $0xf8] sm:$0xff]
        %3528 = vrot.lane.b32.xlu0 %v3464, 16
        %v3529 = vpop.permute.xlu0 %3528
        %3530 = vrot.lane.b32.xlu0 %v3465, 16
        %v3531 = vpop.permute.xlu0 %3530
        %3532 = vrot.lane.b32.xlu0 %v3466, 16
        %v3533 = vpop.permute.xlu0 %3532
        %3534 = vrot.lane.b32.xlu0 %v3467, 16
        %v3535 = vpop.permute.xlu0 %3534
        %3536 = vrot.lane.b32.xlu0 %v3468, 16
        %v3537 = vpop.permute.xlu0 %3536
        %3538 = vrot.lane.b32.xlu0 %v3469, 16
        %v3539 = vpop.permute.xlu0 %3538
        %3540 = vrot.lane.b32.xlu0 %v3470, 16
        %v3541 = vpop.permute.xlu0 %3540
        %3542 = vrot.lane.b32.xlu0 %v3471, 16
        %v3543 = vpop.permute.xlu0 %3542
        %3544 = vrot.lane.b32.xlu0 %v3472, 16
        %v3545 = vpop.permute.xlu0 %3544
        %3546 = vrot.lane.b32.xlu0 %v3473, 16
        %v3547 = vpop.permute.xlu0 %3546
        %3548 = vrot.lane.b32.xlu0 %v3474, 16
        %v3549 = vpop.permute.xlu0 %3548
        %3550 = vrot.lane.b32.xlu0 %v3475, 16
        %v3551 = vpop.permute.xlu0 %3550
        %3552 = vrot.lane.b32.xlu0 %v3476, 16
        %v3553 = vpop.permute.xlu0 %3552
        %3554 = vrot.lane.b32.xlu0 %v3477, 16
        %v3555 = vpop.permute.xlu0 %3554
        %3556 = vrot.lane.b32.xlu0 %v3478, 16
        %v3557 = vpop.permute.xlu0 %3556
        %3558 = vrot.lane.b32.xlu0 %v3479, 16
        %v3559 = vpop.permute.xlu0 %3558
        %3560 = vrot.lane.b32.xlu0 %v3480, 16
        %v3561 = vpop.permute.xlu0 %3560
        %3562 = vrot.lane.b32.xlu0 %v3481, 16
        %v3563 = vpop.permute.xlu0 %3562
        %3564 = vrot.lane.b32.xlu0 %v3482, 16
        %v3565 = vpop.permute.xlu0 %3564
        %3566 = vrot.lane.b32.xlu0 %v3483, 16
        %v3567 = vpop.permute.xlu0 %3566
        %3568 = vrot.lane.b32.xlu0 %v3484, 16
        %v3569 = vpop.permute.xlu0 %3568
        %3570 = vrot.lane.b32.xlu0 %v3485, 16
        %v3571 = vpop.permute.xlu0 %3570
        %3572 = vrot.lane.b32.xlu0 %v3486, 16
        %v3573 = vpop.permute.xlu0 %3572
        %3574 = vrot.lane.b32.xlu0 %v3487, 16
        %v3575 = vpop.permute.xlu0 %3574
        %3576 = vrot.lane.b32.xlu0 %v3488, 16
        %v3577 = vpop.permute.xlu0 %3576
        %3578 = vrot.lane.b32.xlu0 %v3489, 16
        %v3579 = vpop.permute.xlu0 %3578
        %3580 = vrot.lane.b32.xlu0 %v3490, 16
        %v3581 = vpop.permute.xlu0 %3580
        %3582 = vrot.lane.b32.xlu0 %v3491, 16
        %v3583 = vpop.permute.xlu0 %3582
        %3584 = vrot.lane.b32.xlu0 %v3492, 16
        %v3585 = vpop.permute.xlu0 %3584
        %3586 = vrot.lane.b32.xlu0 %v3493, 16
        %v3587 = vpop.permute.xlu0 %3586
        %3588 = vrot.lane.b32.xlu0 %v3494, 16
        %v3589 = vpop.permute.xlu0 %3588
        %3590 = vrot.lane.b32.xlu0 %v3495, 16
        %v3591 = vpop.permute.xlu0 %3590
        %v3624 = vmul.f32 %v2966, %v3529
        %v3625 = vmul.f32 %v2981, %v3531
        %v3626 = vmul.f32 %v2996, %v3533
        %v3627 = vmul.f32 %v3011, %v3535
        %v3628 = vmul.f32 %v3026, %v3537
        %v3629 = vmul.f32 %v3041, %v3539
        %v3630 = vmul.f32 %v3056, %v3541
        %v3631 = vmul.f32 %v3071, %v3543
        %v3632 = vmul.f32 %v3086, %v3545
        %v3633 = vmul.f32 %v3101, %v3547
        %v3634 = vmul.f32 %v3116, %v3549
        %v3635 = vmul.f32 %v3131, %v3551
        %v3636 = vmul.f32 %v3146, %v3553
        %v3637 = vmul.f32 %v3161, %v3555
        %v3638 = vmul.f32 %v3176, %v3557
        %v3639 = vmul.f32 %v3191, %v3559
        %v3640 = vmul.f32 %v3206, %v3561
        %v3641 = vmul.f32 %v3221, %v3563
        %v3642 = vmul.f32 %v3236, %v3565
        %v3643 = vmul.f32 %v3251, %v3567
        %v3644 = vmul.f32 %v3266, %v3569
        %v3645 = vmul.f32 %v3281, %v3571
        %v3646 = vmul.f32 %v3296, %v3573
        %v3647 = vmul.f32 %v3311, %v3575
        %v3648 = vmul.f32 %v3326, %v3577
        %v3649 = vmul.f32 %v3341, %v3579
        %v3650 = vmul.f32 %v3356, %v3581
        %v3651 = vmul.f32 %v3371, %v3583
        %v3652 = vmul.f32 %v3386, %v3585
        %v3653 = vmul.f32 %v3401, %v3587
        %v3654 = vmul.f32 %v3416, %v3589
        %v3655 = vmul.f32 %v3431, %v3591
        %3688 = vrot.lane.b32.xlu0 %v3432, 80
        %v3689 = vpop.permute.xlu0 %3688
        %3690 = vrot.lane.b32.xlu0 %v3433, 80
        %v3691 = vpop.permute.xlu0 %3690
        %3692 = vrot.lane.b32.xlu0 %v3434, 80
        %v3693 = vpop.permute.xlu0 %3692
        %3694 = vrot.lane.b32.xlu0 %v3435, 80
        %v3695 = vpop.permute.xlu0 %3694
        %3696 = vrot.lane.b32.xlu0 %v3436, 80
        %v3697 = vpop.permute.xlu0 %3696
        %3698 = vrot.lane.b32.xlu0 %v3437, 80
        %v3699 = vpop.permute.xlu0 %3698
        %3700 = vrot.lane.b32.xlu0 %v3438, 80
        %v3701 = vpop.permute.xlu0 %3700
        %3702 = vrot.lane.b32.xlu0 %v3439, 80
        %v3703 = vpop.permute.xlu0 %3702
        %3704 = vrot.lane.b32.xlu0 %v3440, 80
        %v3705 = vpop.permute.xlu0 %3704
        %3706 = vrot.lane.b32.xlu0 %v3441, 80
        %v3707 = vpop.permute.xlu0 %3706
        %3708 = vrot.lane.b32.xlu0 %v3442, 80
        %v3709 = vpop.permute.xlu0 %3708
        %3710 = vrot.lane.b32.xlu0 %v3443, 80
        %v3711 = vpop.permute.xlu0 %3710
        %3712 = vrot.lane.b32.xlu0 %v3444, 80
        %v3713 = vpop.permute.xlu0 %3712
        %3714 = vrot.lane.b32.xlu0 %v3445, 80
        %v3715 = vpop.permute.xlu0 %3714
        %3716 = vrot.lane.b32.xlu0 %v3446, 80
        %v3717 = vpop.permute.xlu0 %3716
        %3718 = vrot.lane.b32.xlu0 %v3447, 80
        %v3719 = vpop.permute.xlu0 %3718
        %3720 = vrot.lane.b32.xlu0 %v3448, 80
        %v3721 = vpop.permute.xlu0 %3720
        %3722 = vrot.lane.b32.xlu0 %v3449, 80
        %v3723 = vpop.permute.xlu0 %3722
        %3724 = vrot.lane.b32.xlu0 %v3450, 80
        %v3725 = vpop.permute.xlu0 %3724
        %3726 = vrot.lane.b32.xlu0 %v3451, 80
        %v3727 = vpop.permute.xlu0 %3726
        %3728 = vrot.lane.b32.xlu0 %v3452, 80
        %v3729 = vpop.permute.xlu0 %3728
        %3730 = vrot.lane.b32.xlu0 %v3453, 80
        %v3731 = vpop.permute.xlu0 %3730
        %3732 = vrot.lane.b32.xlu0 %v3454, 80
        %v3733 = vpop.permute.xlu0 %3732
        %3734 = vrot.lane.b32.xlu0 %v3455, 80
        %v3735 = vpop.permute.xlu0 %3734
        %3736 = vrot.lane.b32.xlu0 %v3456, 80
        %v3737 = vpop.permute.xlu0 %3736
        %3738 = vrot.lane.b32.xlu0 %v3457, 80
        %v3739 = vpop.permute.xlu0 %3738
        %3740 = vrot.lane.b32.xlu0 %v3458, 80
        %v3741 = vpop.permute.xlu0 %3740
        %3742 = vrot.lane.b32.xlu0 %v3459, 80
        %v3743 = vpop.permute.xlu0 %3742
        %3744 = vrot.lane.b32.xlu0 %v3460, 80
        %v3745 = vpop.permute.xlu0 %3744
        %3746 = vrot.lane.b32.xlu0 %v3461, 80
        %v3747 = vpop.permute.xlu0 %3746
        %3748 = vrot.lane.b32.xlu0 %v3462, 80
        %v3749 = vpop.permute.xlu0 %3748
        %3750 = vrot.lane.b32.xlu0 %v3463, 80
        %v3751 = vpop.permute.xlu0 %3750
        %v3784 = vmul.f32 %v2966, %v3689
        %v3785 = vmul.f32 %v2981, %v3691
        %v3786 = vmul.f32 %v2996, %v3693
        %v3787 = vmul.f32 %v3011, %v3695
        %v3788 = vmul.f32 %v3026, %v3697
        %v3789 = vmul.f32 %v3041, %v3699
        %v3790 = vmul.f32 %v3056, %v3701
        %v3791 = vmul.f32 %v3071, %v3703
        %v3792 = vmul.f32 %v3086, %v3705
        %v3793 = vmul.f32 %v3101, %v3707
        %v3794 = vmul.f32 %v3116, %v3709
        %v3795 = vmul.f32 %v3131, %v3711
        %v3796 = vmul.f32 %v3146, %v3713
        %v3797 = vmul.f32 %v3161, %v3715
        %v3798 = vmul.f32 %v3176, %v3717
        %v3799 = vmul.f32 %v3191, %v3719
        %v3800 = vmul.f32 %v3206, %v3721
        %v3801 = vmul.f32 %v3221, %v3723
        %v3802 = vmul.f32 %v3236, %v3725
        %v3803 = vmul.f32 %v3251, %v3727
        %v3804 = vmul.f32 %v3266, %v3729
        %v3805 = vmul.f32 %v3281, %v3731
        %v3806 = vmul.f32 %v3296, %v3733
        %v3807 = vmul.f32 %v3311, %v3735
        %v3808 = vmul.f32 %v3326, %v3737
        %v3809 = vmul.f32 %v3341, %v3739
        %v3810 = vmul.f32 %v3356, %v3741
        %v3811 = vmul.f32 %v3371, %v3743
        %v3812 = vmul.f32 %v3386, %v3745
        %v3813 = vmul.f32 %v3401, %v3747
        %v3814 = vmul.f32 %v3416, %v3749
        %v3815 = vmul.f32 %v3431, %v3751
        %3848 = vrot.lane.b32.xlu0 %v3784, 16
        %v3849 = vpop.permute.xlu0 %3848
        %3850 = vrot.lane.b32.xlu0 %v3785, 16
        %v3851 = vpop.permute.xlu0 %3850
        %3852 = vrot.lane.b32.xlu0 %v3786, 16
        %v3853 = vpop.permute.xlu0 %3852
        %3854 = vrot.lane.b32.xlu0 %v3787, 16
        %v3855 = vpop.permute.xlu0 %3854
        %3856 = vrot.lane.b32.xlu0 %v3788, 16
        %v3857 = vpop.permute.xlu0 %3856
        %3858 = vrot.lane.b32.xlu0 %v3789, 16
        %v3859 = vpop.permute.xlu0 %3858
        %3860 = vrot.lane.b32.xlu0 %v3790, 16
        %v3861 = vpop.permute.xlu0 %3860
        %3862 = vrot.lane.b32.xlu0 %v3791, 16
        %v3863 = vpop.permute.xlu0 %3862
        %3864 = vrot.lane.b32.xlu0 %v3792, 16
        %v3865 = vpop.permute.xlu0 %3864
        %3866 = vrot.lane.b32.xlu0 %v3793, 16
        %v3867 = vpop.permute.xlu0 %3866
        %3868 = vrot.lane.b32.xlu0 %v3794, 16
        %v3869 = vpop.permute.xlu0 %3868
        %3870 = vrot.lane.b32.xlu0 %v3795, 16
        %v3871 = vpop.permute.xlu0 %3870
        %3872 = vrot.lane.b32.xlu0 %v3796, 16
        %v3873 = vpop.permute.xlu0 %3872
        %3874 = vrot.lane.b32.xlu0 %v3797, 16
        %v3875 = vpop.permute.xlu0 %3874
        %3876 = vrot.lane.b32.xlu0 %v3798, 16
        %v3877 = vpop.permute.xlu0 %3876
        %3878 = vrot.lane.b32.xlu0 %v3799, 16
        %v3879 = vpop.permute.xlu0 %3878
        %3880 = vrot.lane.b32.xlu0 %v3800, 16
        %v3881 = vpop.permute.xlu0 %3880
        %3882 = vrot.lane.b32.xlu0 %v3801, 16
        %v3883 = vpop.permute.xlu0 %3882
        %3884 = vrot.lane.b32.xlu0 %v3802, 16
        %v3885 = vpop.permute.xlu0 %3884
        %3886 = vrot.lane.b32.xlu0 %v3803, 16
        %v3887 = vpop.permute.xlu0 %3886
        %3888 = vrot.lane.b32.xlu0 %v3804, 16
        %v3889 = vpop.permute.xlu0 %3888
        %3890 = vrot.lane.b32.xlu0 %v3805, 16
        %v3891 = vpop.permute.xlu0 %3890
        %3892 = vrot.lane.b32.xlu0 %v3806, 16
        %v3893 = vpop.permute.xlu0 %3892
        %3894 = vrot.lane.b32.xlu0 %v3807, 16
        %v3895 = vpop.permute.xlu0 %3894
        %3896 = vrot.lane.b32.xlu0 %v3808, 16
        %v3897 = vpop.permute.xlu0 %3896
        %3898 = vrot.lane.b32.xlu0 %v3809, 16
        %v3899 = vpop.permute.xlu0 %3898
        %3900 = vrot.lane.b32.xlu0 %v3810, 16
        %v3901 = vpop.permute.xlu0 %3900
        %3902 = vrot.lane.b32.xlu0 %v3811, 16
        %v3903 = vpop.permute.xlu0 %3902
        %3904 = vrot.lane.b32.xlu0 %v3812, 16
        %v3905 = vpop.permute.xlu0 %3904
        %3906 = vrot.lane.b32.xlu0 %v3813, 16
        %v3907 = vpop.permute.xlu0 %3906
        %3908 = vrot.lane.b32.xlu0 %v3814, 16
        %v3909 = vpop.permute.xlu0 %3908
        %3910 = vrot.lane.b32.xlu0 %v3815, 16
        %v3911 = vpop.permute.xlu0 %3910
        %v3944 = vadd.f32 %v3624, %v3849
        %v3945 = vadd.f32 %v3625, %v3851
        %v3946 = vadd.f32 %v3626, %v3853
        %v3947 = vadd.f32 %v3627, %v3855
        %v3948 = vadd.f32 %v3628, %v3857
        %v3949 = vadd.f32 %v3629, %v3859
        %v3950 = vadd.f32 %v3630, %v3861
        %v3951 = vadd.f32 %v3631, %v3863
        %v3952 = vadd.f32 %v3632, %v3865
        %v3953 = vadd.f32 %v3633, %v3867
        %v3954 = vadd.f32 %v3634, %v3869
        %v3955 = vadd.f32 %v3635, %v3871
        %v3956 = vadd.f32 %v3636, %v3873
        %v3957 = vadd.f32 %v3637, %v3875
        %v3958 = vadd.f32 %v3638, %v3877
        %v3959 = vadd.f32 %v3639, %v3879
        %v3960 = vadd.f32 %v3640, %v3881
        %v3961 = vadd.f32 %v3641, %v3883
        %v3962 = vadd.f32 %v3642, %v3885
        %v3963 = vadd.f32 %v3643, %v3887
        %v3964 = vadd.f32 %v3644, %v3889
        %v3965 = vadd.f32 %v3645, %v3891
        %v3966 = vadd.f32 %v3646, %v3893
        %v3967 = vadd.f32 %v3647, %v3895
        %v3968 = vadd.f32 %v3648, %v3897
        %v3969 = vadd.f32 %v3649, %v3899
        %v3970 = vadd.f32 %v3650, %v3901
        %v3971 = vadd.f32 %v3651, %v3903
        %v3972 = vadd.f32 %v3652, %v3905
        %v3973 = vadd.f32 %v3653, %v3907
        %v3974 = vadd.f32 %v3654, %v3909
        %v3975 = vadd.f32 %v3655, %v3911
        %v3976 = vtanh.pop %v3944
        %v3977 = vtanh.pop %v3945
        %v3978 = vtanh.pop %v3946
        %v3979 = vtanh.pop %v3947
        %v3980 = vtanh.pop %v3948
        %v3981 = vtanh.pop %v3949
        %v3982 = vtanh.pop %v3950
        %v3983 = vtanh.pop %v3951
        %v3984 = vtanh.pop %v3952
        %v3985 = vtanh.pop %v3953
        %v3986 = vtanh.pop %v3954
        %v3987 = vtanh.pop %v3955
        %v3988 = vtanh.pop %v3956
        %v3989 = vtanh.pop %v3957
        %v3990 = vtanh.pop %v3958
        %v3991 = vtanh.pop %v3959
        %v3992 = vtanh.pop %v3960
        %v3993 = vtanh.pop %v3961
        %v3994 = vtanh.pop %v3962
        %v3995 = vtanh.pop %v3963
        %v3996 = vtanh.pop %v3964
        %v3997 = vtanh.pop %v3965
        %v3998 = vtanh.pop %v3966
        %v3999 = vtanh.pop %v3967
        %v4000 = vtanh.pop %v3968
        %v4001 = vtanh.pop %v3969
        %v4002 = vtanh.pop %v3970
        %v4003 = vtanh.pop %v3971
        %v4004 = vtanh.pop %v3972
        %v4005 = vtanh.pop %v3973
        %v4006 = vtanh.pop %v3974
        %v4007 = vtanh.pop %v3975
        %4040 = vrot.lane.b32.xlu0 %v3976, 16
        %v4041 = vpop.permute.xlu0 %4040
        %4042 = vrot.lane.b32.xlu0 %v3977, 16
        %v4043 = vpop.permute.xlu0 %4042
        %4044 = vrot.lane.b32.xlu0 %v3978, 16
        %v4045 = vpop.permute.xlu0 %4044
        %4046 = vrot.lane.b32.xlu0 %v3979, 16
        %v4047 = vpop.permute.xlu0 %4046
        %4048 = vrot.lane.b32.xlu0 %v3980, 16
        %v4049 = vpop.permute.xlu0 %4048
        %4050 = vrot.lane.b32.xlu0 %v3981, 16
        %v4051 = vpop.permute.xlu0 %4050
        %4052 = vrot.lane.b32.xlu0 %v3982, 16
        %v4053 = vpop.permute.xlu0 %4052
        %4054 = vrot.lane.b32.xlu0 %v3983, 16
        %v4055 = vpop.permute.xlu0 %4054
        %4056 = vrot.lane.b32.xlu0 %v3984, 16
        %v4057 = vpop.permute.xlu0 %4056
        %4058 = vrot.lane.b32.xlu0 %v3985, 16
        %v4059 = vpop.permute.xlu0 %4058
        %4060 = vrot.lane.b32.xlu0 %v3986, 16
        %v4061 = vpop.permute.xlu0 %4060
        %4062 = vrot.lane.b32.xlu0 %v3987, 16
        %v4063 = vpop.permute.xlu0 %4062
        %4064 = vrot.lane.b32.xlu0 %v3988, 16
        %v4065 = vpop.permute.xlu0 %4064
        %4066 = vrot.lane.b32.xlu0 %v3989, 16
        %v4067 = vpop.permute.xlu0 %4066
        %4068 = vrot.lane.b32.xlu0 %v3990, 16
        %v4069 = vpop.permute.xlu0 %4068
        %4070 = vrot.lane.b32.xlu0 %v3991, 16
        %v4071 = vpop.permute.xlu0 %4070
        %4072 = vrot.lane.b32.xlu0 %v3992, 16
        %v4073 = vpop.permute.xlu0 %4072
        %4074 = vrot.lane.b32.xlu0 %v3993, 16
        %v4075 = vpop.permute.xlu0 %4074
        %4076 = vrot.lane.b32.xlu0 %v3994, 16
        %v4077 = vpop.permute.xlu0 %4076
        %4078 = vrot.lane.b32.xlu0 %v3995, 16
        %v4079 = vpop.permute.xlu0 %4078
        %4080 = vrot.lane.b32.xlu0 %v3996, 16
        %v4081 = vpop.permute.xlu0 %4080
        %4082 = vrot.lane.b32.xlu0 %v3997, 16
        %v4083 = vpop.permute.xlu0 %4082
        %4084 = vrot.lane.b32.xlu0 %v3998, 16
        %v4085 = vpop.permute.xlu0 %4084
        %4086 = vrot.lane.b32.xlu0 %v3999, 16
        %v4087 = vpop.permute.xlu0 %4086
        %4088 = vrot.lane.b32.xlu0 %v4000, 16
        %v4089 = vpop.permute.xlu0 %4088
        %4090 = vrot.lane.b32.xlu0 %v4001, 16
        %v4091 = vpop.permute.xlu0 %4090
        %4092 = vrot.lane.b32.xlu0 %v4002, 16
        %v4093 = vpop.permute.xlu0 %4092
        %4094 = vrot.lane.b32.xlu0 %v4003, 16
        %v4095 = vpop.permute.xlu0 %4094
        %4096 = vrot.lane.b32.xlu0 %v4004, 16
        %v4097 = vpop.permute.xlu0 %4096
        %4098 = vrot.lane.b32.xlu0 %v4005, 16
        %v4099 = vpop.permute.xlu0 %4098
        %4100 = vrot.lane.b32.xlu0 %v4006, 16
        %v4101 = vpop.permute.xlu0 %4100
        %4102 = vrot.lane.b32.xlu0 %v4007, 16
        %v4103 = vpop.permute.xlu0 %4102
        %v4136 = vmul.f32 %v2966, %v4041
        %v4137 = vmul.f32 %v2981, %v4043
        %v4138 = vmul.f32 %v2996, %v4045
        %v4139 = vmul.f32 %v3011, %v4047
        %v4140 = vmul.f32 %v3026, %v4049
        %v4141 = vmul.f32 %v3041, %v4051
        %v4142 = vmul.f32 %v3056, %v4053
        %v4143 = vmul.f32 %v3071, %v4055
        %v4144 = vmul.f32 %v3086, %v4057
        %v4145 = vmul.f32 %v3101, %v4059
        %v4146 = vmul.f32 %v3116, %v4061
        %v4147 = vmul.f32 %v3131, %v4063
        %v4148 = vmul.f32 %v3146, %v4065
        %v4149 = vmul.f32 %v3161, %v4067
        %v4150 = vmul.f32 %v3176, %v4069
        %v4151 = vmul.f32 %v3191, %v4071
        %v4152 = vmul.f32 %v3206, %v4073
        %v4153 = vmul.f32 %v3221, %v4075
        %v4154 = vmul.f32 %v3236, %v4077
        %v4155 = vmul.f32 %v3251, %v4079
        %v4156 = vmul.f32 %v3266, %v4081
        %v4157 = vmul.f32 %v3281, %v4083
        %v4158 = vmul.f32 %v3296, %v4085
        %v4159 = vmul.f32 %v3311, %v4087
        %v4160 = vmul.f32 %v3326, %v4089
        %v4161 = vmul.f32 %v3341, %v4091
        %v4162 = vmul.f32 %v3356, %v4093
        %v4163 = vmul.f32 %v3371, %v4095
        %v4164 = vmul.f32 %v3386, %v4097
        %v4165 = vmul.f32 %v3401, %v4099
        %v4166 = vmul.f32 %v3416, %v4101
        %v4167 = vmul.f32 %v3431, %v4103
        %4200 = vrot.lane.b32.xlu0 %v3944, 112
        %v4201 = vpop.permute.xlu0 %4200
        %4202 = vrot.lane.b32.xlu0 %v3945, 112
        %v4203 = vpop.permute.xlu0 %4202
        %4204 = vrot.lane.b32.xlu0 %v3946, 112
        %v4205 = vpop.permute.xlu0 %4204
        %4206 = vrot.lane.b32.xlu0 %v3947, 112
        %v4207 = vpop.permute.xlu0 %4206
        %4208 = vrot.lane.b32.xlu0 %v3948, 112
        %v4209 = vpop.permute.xlu0 %4208
        %4210 = vrot.lane.b32.xlu0 %v3949, 112
        %v4211 = vpop.permute.xlu0 %4210
        %4212 = vrot.lane.b32.xlu0 %v3950, 112
        %v4213 = vpop.permute.xlu0 %4212
        %4214 = vrot.lane.b32.xlu0 %v3951, 112
        %v4215 = vpop.permute.xlu0 %4214
        %4216 = vrot.lane.b32.xlu0 %v3952, 112
        %v4217 = vpop.permute.xlu0 %4216
        %4218 = vrot.lane.b32.xlu0 %v3953, 112
        %v4219 = vpop.permute.xlu0 %4218
        %4220 = vrot.lane.b32.xlu0 %v3954, 112
        %v4221 = vpop.permute.xlu0 %4220
        %4222 = vrot.lane.b32.xlu0 %v3955, 112
        %v4223 = vpop.permute.xlu0 %4222
        %4224 = vrot.lane.b32.xlu0 %v3956, 112
        %v4225 = vpop.permute.xlu0 %4224
        %4226 = vrot.lane.b32.xlu0 %v3957, 112
        %v4227 = vpop.permute.xlu0 %4226
        %4228 = vrot.lane.b32.xlu0 %v3958, 112
        %v4229 = vpop.permute.xlu0 %4228
        %4230 = vrot.lane.b32.xlu0 %v3959, 112
        %v4231 = vpop.permute.xlu0 %4230
        %4232 = vrot.lane.b32.xlu0 %v3960, 112
        %v4233 = vpop.permute.xlu0 %4232
        %4234 = vrot.lane.b32.xlu0 %v3961, 112
        %v4235 = vpop.permute.xlu0 %4234
        %4236 = vrot.lane.b32.xlu0 %v3962, 112
        %v4237 = vpop.permute.xlu0 %4236
        %4238 = vrot.lane.b32.xlu0 %v3963, 112
        %v4239 = vpop.permute.xlu0 %4238
        %4240 = vrot.lane.b32.xlu0 %v3964, 112
        %v4241 = vpop.permute.xlu0 %4240
        %4242 = vrot.lane.b32.xlu0 %v3965, 112
        %v4243 = vpop.permute.xlu0 %4242
        %4244 = vrot.lane.b32.xlu0 %v3966, 112
        %v4245 = vpop.permute.xlu0 %4244
        %4246 = vrot.lane.b32.xlu0 %v3967, 112
        %v4247 = vpop.permute.xlu0 %4246
        %4248 = vrot.lane.b32.xlu0 %v3968, 112
        %v4249 = vpop.permute.xlu0 %4248
        %4250 = vrot.lane.b32.xlu0 %v3969, 112
        %v4251 = vpop.permute.xlu0 %4250
        %4252 = vrot.lane.b32.xlu0 %v3970, 112
        %v4253 = vpop.permute.xlu0 %4252
        %4254 = vrot.lane.b32.xlu0 %v3971, 112
        %v4255 = vpop.permute.xlu0 %4254
        %4256 = vrot.lane.b32.xlu0 %v3972, 112
        %v4257 = vpop.permute.xlu0 %4256
        %4258 = vrot.lane.b32.xlu0 %v3973, 112
        %v4259 = vpop.permute.xlu0 %4258
        %4260 = vrot.lane.b32.xlu0 %v3974, 112
        %v4261 = vpop.permute.xlu0 %4260
        %4262 = vrot.lane.b32.xlu0 %v3975, 112
        %v4263 = vpop.permute.xlu0 %4262
        %4296 = vst.msk [vmem:[%s212] sm:$0xff] %vm372, %v4201
        %4297 = vst.msk [vmem:[%s212 + $0x8] sm:$0xff] %vm372, %v4203
        %4298 = vst.msk [vmem:[%s212 + $0x10] sm:$0xff] %vm372, %v4205
        %4299 = vst.msk [vmem:[%s212 + $0x18] sm:$0xff] %vm372, %v4207
        %4300 = vst.msk [vmem:[%s212 + $0x20] sm:$0xff] %vm372, %v4209
        %4301 = vst.msk [vmem:[%s212 + $0x28] sm:$0xff] %vm372, %v4211
        %4302 = vst.msk [vmem:[%s212 + $0x30] sm:$0xff] %vm372, %v4213
        %4303 = vst.msk [vmem:[%s212 + $0x38] sm:$0xff] %vm372, %v4215
        %4304 = vst.msk [vmem:[%s212 + $0x40] sm:$0xff] %vm372, %v4217
        %4305 = vst.msk [vmem:[%s212 + $0x48] sm:$0xff] %vm372, %v4219
        %4306 = vst.msk [vmem:[%s212 + $0x50] sm:$0xff] %vm372, %v4221
        %4307 = vst.msk [vmem:[%s212 + $0x58] sm:$0xff] %vm372, %v4223
        %4308 = vst.msk [vmem:[%s212 + $0x60] sm:$0xff] %vm372, %v4225
        %4309 = vst.msk [vmem:[%s212 + $0x68] sm:$0xff] %vm372, %v4227
        %4310 = vst.msk [vmem:[%s212 + $0x70] sm:$0xff] %vm372, %v4229
        %4311 = vst.msk [vmem:[%s212 + $0x78] sm:$0xff] %vm372, %v4231
        %4312 = vst.msk [vmem:[%s212 + $0x80] sm:$0xff] %vm372, %v4233
        %4313 = vst.msk [vmem:[%s212 + $0x88] sm:$0xff] %vm372, %v4235
        %4314 = vst.msk [vmem:[%s212 + $0x90] sm:$0xff] %vm372, %v4237
        %4315 = vst.msk [vmem:[%s212 + $0x98] sm:$0xff] %vm372, %v4239
        %4316 = vst.msk [vmem:[%s212 + $0xa0] sm:$0xff] %vm372, %v4241
        %4317 = vst.msk [vmem:[%s212 + $0xa8] sm:$0xff] %vm372, %v4243
        %4318 = vst.msk [vmem:[%s212 + $0xb0] sm:$0xff] %vm372, %v4245
        %4319 = vst.msk [vmem:[%s212 + $0xb8] sm:$0xff] %vm372, %v4247
        %4320 = vst.msk [vmem:[%s212 + $0xc0] sm:$0xff] %vm372, %v4249
        %4321 = vst.msk [vmem:[%s212 + $0xc8] sm:$0xff] %vm372, %v4251
        %4322 = vst.msk [vmem:[%s212 + $0xd0] sm:$0xff] %vm372, %v4253
        %4323 = vst.msk [vmem:[%s212 + $0xd8] sm:$0xff] %vm372, %v4255
        %4324 = vst.msk [vmem:[%s212 + $0xe0] sm:$0xff] %vm372, %v4257
        %4325 = vst.msk [vmem:[%s212 + $0xe8] sm:$0xff] %vm372, %v4259
        %4326 = vst.msk [vmem:[%s212 + $0xf0] sm:$0xff] %vm372, %v4261
        %4327 = vst.msk [vmem:[%s212 + $0xf8] sm:$0xff] %vm372, %v4263
        %4360 = vrot.lane.b32.xlu0 %v4136, 96
        %v4361 = vpop.permute.xlu0 %4360
        %4362 = vrot.lane.b32.xlu0 %v4137, 96
        %v4363 = vpop.permute.xlu0 %4362
        %4364 = vrot.lane.b32.xlu0 %v4138, 96
        %v4365 = vpop.permute.xlu0 %4364
        %4366 = vrot.lane.b32.xlu0 %v4139, 96
        %v4367 = vpop.permute.xlu0 %4366
        %4368 = vrot.lane.b32.xlu0 %v4140, 96
        %v4369 = vpop.permute.xlu0 %4368
        %4370 = vrot.lane.b32.xlu0 %v4141, 96
        %v4371 = vpop.permute.xlu0 %4370
        %4372 = vrot.lane.b32.xlu0 %v4142, 96
        %v4373 = vpop.permute.xlu0 %4372
        %4374 = vrot.lane.b32.xlu0 %v4143, 96
        %v4375 = vpop.permute.xlu0 %4374
        %4376 = vrot.lane.b32.xlu0 %v4144, 96
        %v4377 = vpop.permute.xlu0 %4376
        %4378 = vrot.lane.b32.xlu0 %v4145, 96
        %v4379 = vpop.permute.xlu0 %4378
        %4380 = vrot.lane.b32.xlu0 %v4146, 96
        %v4381 = vpop.permute.xlu0 %4380
        %4382 = vrot.lane.b32.xlu0 %v4147, 96
        %v4383 = vpop.permute.xlu0 %4382
        %4384 = vrot.lane.b32.xlu0 %v4148, 96
        %v4385 = vpop.permute.xlu0 %4384
        %4386 = vrot.lane.b32.xlu0 %v4149, 96
        %v4387 = vpop.permute.xlu0 %4386
        %4388 = vrot.lane.b32.xlu0 %v4150, 96
        %v4389 = vpop.permute.xlu0 %4388
        %4390 = vrot.lane.b32.xlu0 %v4151, 96
        %v4391 = vpop.permute.xlu0 %4390
        %4392 = vrot.lane.b32.xlu0 %v4152, 96
        %v4393 = vpop.permute.xlu0 %4392
        %4394 = vrot.lane.b32.xlu0 %v4153, 96
        %v4395 = vpop.permute.xlu0 %4394
        %4396 = vrot.lane.b32.xlu0 %v4154, 96
        %v4397 = vpop.permute.xlu0 %4396
        %4398 = vrot.lane.b32.xlu0 %v4155, 96
        %v4399 = vpop.permute.xlu0 %4398
        %4400 = vrot.lane.b32.xlu0 %v4156, 96
        %v4401 = vpop.permute.xlu0 %4400
        %4402 = vrot.lane.b32.xlu0 %v4157, 96
        %v4403 = vpop.permute.xlu0 %4402
        %4404 = vrot.lane.b32.xlu0 %v4158, 96
        %v4405 = vpop.permute.xlu0 %4404
        %4406 = vrot.lane.b32.xlu0 %v4159, 96
        %v4407 = vpop.permute.xlu0 %4406
        %4408 = vrot.lane.b32.xlu0 %v4160, 96
        %v4409 = vpop.permute.xlu0 %4408
        %4410 = vrot.lane.b32.xlu0 %v4161, 96
        %v4411 = vpop.permute.xlu0 %4410
        %4412 = vrot.lane.b32.xlu0 %v4162, 96
        %v4413 = vpop.permute.xlu0 %4412
        %4414 = vrot.lane.b32.xlu0 %v4163, 96
        %v4415 = vpop.permute.xlu0 %4414
        %4416 = vrot.lane.b32.xlu0 %v4164, 96
        %v4417 = vpop.permute.xlu0 %4416
        %4418 = vrot.lane.b32.xlu0 %v4165, 96
        %v4419 = vpop.permute.xlu0 %4418
        %4420 = vrot.lane.b32.xlu0 %v4166, 96
        %v4421 = vpop.permute.xlu0 %4420
        %4422 = vrot.lane.b32.xlu0 %v4167, 96
        %v4423 = vpop.permute.xlu0 %4422
        %4456 = vst.msk [vmem:[%s1166 + $0x1] sm:$0xff] %vm372, %v4361
        %4457 = vst.msk [vmem:[%s1166 + $0x9] sm:$0xff] %vm372, %v4363
        %4458 = vst.msk [vmem:[%s1166 + $0x19] sm:$0xff] %vm372, %v4365
        %4459 = vst.msk [vmem:[%s1166 + $0x21] sm:$0xff] %vm372, %v4367
        %4460 = vst.msk [vmem:[%s1166 + $0x31] sm:$0xff] %vm372, %v4369
        %4461 = vst.msk [vmem:[%s1166 + $0x39] sm:$0xff] %vm372, %v4371
        %4462 = vst.msk [vmem:[%s1166 + $0x49] sm:$0xff] %vm372, %v4373
        %4463 = vst.msk [vmem:[%s1166 + $0x51] sm:$0xff] %vm372, %v4375
        %4464 = vst.msk [vmem:[%s1166 + $0x61] sm:$0xff] %vm372, %v4377
        %4465 = vst.msk [vmem:[%s1166 + $0x69] sm:$0xff] %vm372, %v4379
        %4466 = vst.msk [vmem:[%s1166 + $0x79] sm:$0xff] %vm372, %v4381
        %4467 = vst.msk [vmem:[%s1166 + $0x81] sm:$0xff] %vm372, %v4383
        %4468 = vst.msk [vmem:[%s1166 + $0x91] sm:$0xff] %vm372, %v4385
        %4469 = vst.msk [vmem:[%s1166 + $0x99] sm:$0xff] %vm372, %v4387
        %4470 = vst.msk [vmem:[%s1166 + $0xa9] sm:$0xff] %vm372, %v4389
        %4471 = vst.msk [vmem:[%s1166 + $0xb1] sm:$0xff] %vm372, %v4391
        %4472 = vst.msk [vmem:[%s1166 + $0xc1] sm:$0xff] %vm372, %v4393
        %4473 = vst.msk [vmem:[%s1166 + $0xc9] sm:$0xff] %vm372, %v4395
        %4474 = vst.msk [vmem:[%s1166 + $0xd9] sm:$0xff] %vm372, %v4397
        %4475 = vst.msk [vmem:[%s1166 + $0xe1] sm:$0xff] %vm372, %v4399
        %4476 = vst.msk [vmem:[%s1166 + $0xf1] sm:$0xff] %vm372, %v4401
        %4477 = vst.msk [vmem:[%s1166 + $0xf9] sm:$0xff] %vm372, %v4403
        %4478 = vst.msk [vmem:[%s1166 + $0x109] sm:$0xff] %vm372, %v4405
        %4479 = vst.msk [vmem:[%s1166 + $0x111] sm:$0xff] %vm372, %v4407
        %4480 = vst.msk [vmem:[%s1166 + $0x121] sm:$0xff] %vm372, %v4409
        %4481 = vst.msk [vmem:[%s1166 + $0x129] sm:$0xff] %vm372, %v4411
        %4482 = vst.msk [vmem:[%s1166 + $0x139] sm:$0xff] %vm372, %v4413
        %4483 = vst.msk [vmem:[%s1166 + $0x141] sm:$0xff] %vm372, %v4415
        %4484 = vst.msk [vmem:[%s1166 + $0x151] sm:$0xff] %vm372, %v4417
        %4485 = vst.msk [vmem:[%s1166 + $0x159] sm:$0xff] %vm372, %v4419
        %4486 = vst.msk [vmem:[%s1166 + $0x169] sm:$0xff] %vm372, %v4421
        %4487 = vst.msk [vmem:[%s1166 + $0x171] sm:$0xff] %vm372, %v4423
        %4488 = vst.msk [vmem:[%s189] sm:$0xff] %vm372, %v4361
        %4489 = vst.msk [vmem:[%s189 + $0x8] sm:$0xff] %vm372, %v4363
        %4490 = vst.msk [vmem:[%s189 + $0x10] sm:$0xff] %vm372, %v4365
        %4491 = vst.msk [vmem:[%s189 + $0x18] sm:$0xff] %vm372, %v4367
        %4492 = vst.msk [vmem:[%s189 + $0x20] sm:$0xff] %vm372, %v4369
        %4493 = vst.msk [vmem:[%s189 + $0x28] sm:$0xff] %vm372, %v4371
        %4494 = vst.msk [vmem:[%s189 + $0x30] sm:$0xff] %vm372, %v4373
        %4495 = vst.msk [vmem:[%s189 + $0x38] sm:$0xff] %vm372, %v4375
        %4496 = vst.msk [vmem:[%s189 + $0x40] sm:$0xff] %vm372, %v4377
        %4497 = vst.msk [vmem:[%s189 + $0x48] sm:$0xff] %vm372, %v4379
        %4498 = vst.msk [vmem:[%s189 + $0x50] sm:$0xff] %vm372, %v4381
        %4499 = vst.msk [vmem:[%s189 + $0x58] sm:$0xff] %vm372, %v4383
        %4500 = vst.msk [vmem:[%s189 + $0x60] sm:$0xff] %vm372, %v4385
        %4501 = vst.msk [vmem:[%s189 + $0x68] sm:$0xff] %vm372, %v4387
        %4502 = vst.msk [vmem:[%s189 + $0x70] sm:$0xff] %vm372, %v4389
        %4503 = vst.msk [vmem:[%s189 + $0x78] sm:$0xff] %vm372, %v4391
        %4504 = vst.msk [vmem:[%s189 + $0x80] sm:$0xff] %vm372, %v4393
        %4505 = vst.msk [vmem:[%s189 + $0x88] sm:$0xff] %vm372, %v4395
        %4506 = vst.msk [vmem:[%s189 + $0x90] sm:$0xff] %vm372, %v4397
        %4507 = vst.msk [vmem:[%s189 + $0x98] sm:$0xff] %vm372, %v4399
        %4508 = vst.msk [vmem:[%s189 + $0xa0] sm:$0xff] %vm372, %v4401
        %4509 = vst.msk [vmem:[%s189 + $0xa8] sm:$0xff] %vm372, %v4403
        %4510 = vst.msk [vmem:[%s189 + $0xb0] sm:$0xff] %vm372, %v4405
        %4511 = vst.msk [vmem:[%s189 + $0xb8] sm:$0xff] %vm372, %v4407
        %4512 = vst.msk [vmem:[%s189 + $0xc0] sm:$0xff] %vm372, %v4409
        %4513 = vst.msk [vmem:[%s189 + $0xc8] sm:$0xff] %vm372, %v4411
        %4514 = vst.msk [vmem:[%s189 + $0xd0] sm:$0xff] %vm372, %v4413
        %4515 = vst.msk [vmem:[%s189 + $0xd8] sm:$0xff] %vm372, %v4415
        %4516 = vst.msk [vmem:[%s189 + $0xe0] sm:$0xff] %vm372, %v4417
        %4517 = vst.msk [vmem:[%s189 + $0xe8] sm:$0xff] %vm372, %v4419
        %4518 = vst.msk [vmem:[%s189 + $0xf0] sm:$0xff] %vm372, %v4421
        %4519 = vst.msk [vmem:[%s189 + $0xf8] sm:$0xff] %vm372, %v4423
        %s4520 = sand.u32 %s89, 1
        %s4521 = scalar_lea.sflag [#allocation4], %s4520
        %s4522 = sand.u32 %s89, 1
        %s4523 = smul.addr %s4522, 256
        %s4524 = scalar_lea.vmem [#allocation3], %s4523
        %s4525 = smul.u32 32, %s22
        %p4526 = scmp.lt.s32.totalorder %s4525, 63
        %s4527 = scalar_select %p4526, %s4525, 63
        %s4528 = smul.addr %s4527, 8
        %s4529 = scalar_lea.vmem %s3, %s4528
        // Predicated region
        $region33: #{convlstm_forward.3} parent=27 // pred_check
          %p4530 = pneg %p99
        $region34: #{convlstm_forward.3} parent=27 // pred_check_branch
          %4532 = sbr.rel (%p4530) target = $region36
        $region35: #{convlstm_forward.3} parent=27 // pred_region
          %s4533 = smul.u32 32, %s22
          %4535 = vsyncadd %s4521, 0
          %s4536 = smul.addr %s23, 64
          %s4537 = sadd.s32 %s4533, %s4536
          %s4538 = smul.addr %s4537, 8
          %s4539 = scalar_lea.hbm %s2, %s4538
          %s4540 = sshll.u32 %s4524, 4
          %s4541 = int_to_ptr.vmem [resolvable:$true] %s4540
          %s4542 = sshll.u32 %s4539, 4
          %s4543 = int_to_ptr.hbm [resolvable:$true] %s4542
          %4548 = dma.vmem_to_hbm [thread:$0]  %s4541, 4096, %s4543, %s4521, 128, 128, 8
        $region36: #{convlstm_forward.3} parent=27 // pred_fallthru
          _
        // Predicated region
        $region37: #{convlstm_forward.3} parent=27 // pred_check
          %p4549 = pneg %p125
        $region38: #{convlstm_forward.3} parent=27 // pred_check_branch
          %4551 = sbr.rel (%p4549) target = $region40
        $region39: #{convlstm_forward.3} parent=27 // pred_region
          %s4552 = smul.u32 32, %s22
        $region40: #{convlstm_forward.3} parent=27 // pred_fallthru
          _
      $region28: #{convlstm_forward.3} parent=5 // pred_fallthru
        _
      %p4553 = scmp.le.s32.totalorder 2, %s13
      // Predicated region
      $region41: #{convlstm_forward.3} parent=5 // pred_check
        %p4554 = pneg %p4553
      $region42: #{convlstm_forward.3} parent=5 // pred_check_branch
        %4556 = sbr.rel (%p4554) target = $region44
      $region43: #{convlstm_forward.3} parent=5 // pred_region
        %s4557 = ssub.s32 %s13, 2
        // Predicated region
        $region45: #{convlstm_forward.3} parent=43 // pred_check
          %p4558 = pneg %p105
        $region46: #{convlstm_forward.3} parent=43 // pred_check_branch
          %4560 = sbr.rel (%p4558) target = $region48
        $region47: #{convlstm_forward.3} parent=43 // pred_region
          %s4561 = sand.u32 %s90, 1
          %s4562 = scalar_lea.sflag [#allocation4], %s4561
          %s4563 = sand.u32 %s90, 1
          %s4564 = smul.addr %s4563, 256
          %s4565 = scalar_lea.vmem [#allocation3], %s4564
          %4567 = dma.done %s4562, 4096
        $region48: #{convlstm_forward.3} parent=43 // pred_fallthru
          _
        // Predicated region
        $region49: #{convlstm_forward.3} parent=43 // pred_check
          %p4568 = pneg %p131
        $region50: #{convlstm_forward.3} parent=43 // pred_check_branch
          %4570 = sbr.rel (%p4568) target = $region52
        $region51: #{convlstm_forward.3} parent=43 // pred_region
          %s4571 = smul.u32 32, %s24
          %p4572 = scmp.lt.s32.totalorder %s4571, 63
          %s4573 = scalar_select %p4572, %s4571, 63
          %s4574 = smul.addr %s4573, 8
          %s4575 = scalar_lea.vmem %s3, %s4574
        $region52: #{convlstm_forward.3} parent=43 // pred_fallthru
          _
      $region44: #{convlstm_forward.3} parent=5 // pred_fallthru
        _
    $region6: #{convlstm_forward.3} parent=1 // loop_footer
      %s17 = sadd.s32 1, %s13
    $region7: #{convlstm_forward.3} parent=1 // loop_footer_branch
      %12 = sbr.rel target = $region3
    $region8: #{convlstm_forward.3} parent=1 // loop_exit
      _
    %4576 = vsyncpa [#allocation4], 1
    %s4577 = scalar_lea.sflag [#allocation4], 1
    %4578 = vsyncpa %s4577, 1

</llo_original>
